<compile_context>
chip_gen: v7x
topology: tpu7x:2x2x1
jax: 0.10.0
libtpu: 0.0.40
codegen_flags: <defaults>
</compile_context>

<pallas_src>
import numpy as np

import jax
import jax.numpy as jnp
from jax.experimental import pallas as pl
from jax.experimental.pallas import tpu as pltpu


# --------------------------------------------------------------------------
# Pallas kernel: one batch element of Block_3_branches forward (x is not None)
# --------------------------------------------------------------------------
def block3_kernel(
    # inputs
    x_ref, x2_ref, f12_ref, f21_ref,
    ln1g_ref, ln1b_ref,
    wqkv_ref, wproj_ref, bproj_ref,
    ln2g_ref, ln2b_ref,
    wfc1_ref, bfc1_ref, wfc2_ref, bfc2_ref,
    # outputs
    xa_ref, xb_ref, xab_ref, xba_ref,
    a1_ref, a2_ref, a3_ref, a4_ref,
    v1_ref, v2_ref,
    # scratch
    attn_out_ref,
):
    N, C = x_ref.shape[1], x_ref.shape[2]
    H = a1_ref.shape[1]
    D = C // H
    scale = jnp.float32(D ** -0.5)
    eps = jnp.float32(1e-5)

    def layernorm(t, g, b):
        mu = jnp.mean(t, axis=-1, keepdims=True)
        var = jnp.mean((t - mu) ** 2, axis=-1, keepdims=True)
        return (t - mu) * jax.lax.rsqrt(var + eps) * g + b

    def gelu(t):  # exact (erf) GELU, matches nn.GELU default
        return 0.5 * t * (1.0 + jax.lax.erf(t * jnp.float32(0.7071067811865476)))

    def softmax(s):
        s = s - jnp.max(s, axis=-1, keepdims=True)
        e = jnp.exp(s)
        return e * pl.reciprocal(jnp.sum(e, axis=-1, keepdims=True), approx=False)

    x = x_ref[0]
    x2 = x2_ref[0]

    # ---- fused LayerNorm + QKV: one (2N,C) @ (C,3C) matmul for both streams.
    # Operands bf16 (weights already bf16 in VMEM), accumulate in f32.
    x12 = jnp.concatenate([x, x2], axis=0)                       # (2N, C)
    x12n = layernorm(x12, ln1g_ref[...], ln1b_ref[...])
    qkv = jnp.dot(x12n.astype(jnp.bfloat16), wqkv_ref[...],
                  preferred_element_type=jnp.float32)            # (2N, 3C) f32
    q_all = qkv[:, :C]          # rows 0:N -> q1, rows N:2N -> q2
    k_all = qkv[:, C:2 * C]
    v_all = qkv[:, 2 * C:]

    # lane-dense v outputs (head-major channel order); (B,H,N,D) reshape is
    # done in the wrapper outside the kernel.
    v1_ref[0] = v_all[:N]
    v2_ref[0] = v_all[N:]

    v_bf = v_all.astype(jnp.bfloat16)

    def one_head(qh, k1h, k2h, v1h, v2h, h):
        # qh rows: [q1h ; q2h]
        # pA rows: [attn1 (q1@k1) ; attn4 (q2@k1)]  -- both consume v1
        # pB rows: [attn3 (q1@k2) ; attn2 (q2@k2)]  -- both consume v2
        pA = softmax(jnp.dot(qh, k1h.T, preferred_element_type=jnp.float32) * scale)
        pB = softmax(jnp.dot(qh, k2h.T, preferred_element_type=jnp.float32) * scale)
        a1_ref[0, h] = pA[:N]
        a4_ref[0, h] = pA[N:]
        a3_ref[0, h] = pB[:N]
        a2_ref[0, h] = pB[N:]
        oA = jnp.dot(pA.astype(jnp.bfloat16), v1h,
                     preferred_element_type=jnp.float32)         # [o1 ; o4]
        oB = jnp.dot(pB.astype(jnp.bfloat16), v2h,
                     preferred_element_type=jnp.float32)         # [o3 ; o2]
        return oA, oB

    # ---- per-head attention, processed in head PAIRS so that all qkv lane
    # slices and all scratch stores are 2D-wide and 2D-aligned (128 lanes at
    # ViT scale D=64).  Scratch branch-row layout: [o1 ; o4 ; o3 ; o2].
    # TODO(synk): if the bundle dump shows vreg spills at H=12, convert this
    # static loop to lax.fori_loop with a small unroll factor.
    for p_ in range(H // 2):
        h0 = 2 * p_
        col = slice(h0 * D, (h0 + 2) * D)   # 2D-wide, 2D-aligned column slab
        q_pair = q_all[:, col]
        k_pair = k_all[:, col]
        v_pair = v_bf[:, col]
        oA_parts, oB_parts = [], []
        for j in range(2):
            dsl = slice(j * D, (j + 1) * D)
            oA, oB = one_head(q_pair[:, dsl],
                              k_pair[:N, dsl], k_pair[N:, dsl],
                              v_pair[:N, dsl], v_pair[N:, dsl], h0 + j)
            oA_parts.append(oA)
            oB_parts.append(oB)
        attn_out_ref[0:2 * N, col] = jnp.concatenate(oA_parts, axis=1)
        attn_out_ref[2 * N:4 * N, col] = jnp.concatenate(oB_parts, axis=1)

    if H % 2 == 1:  # odd number of heads: last head processed alone
        h = H - 1
        sl = slice(h * D, (h + 1) * D)
        oA, oB = one_head(q_all[:, sl], k_all[:N, sl], k_all[N:, sl],
                          v_bf[:N, sl], v_bf[N:, sl], h)
        attn_out_ref[0:2 * N, sl] = oA
        attn_out_ref[2 * N:4 * N, sl] = oB

    # ---- batched proj over all 4 branches (4N rows), bf16 operands / f32 acc
    proj_out = jnp.dot(attn_out_ref[...].astype(jnp.bfloat16), wproj_ref[...],
                       preferred_element_type=jnp.float32) + bproj_ref[...]

    # ---- per-branch residual + LN2 + MLP, row-tiled to N rows per pass so the
    # (rows, 4C) fc1 intermediate stays bounded.  Row layout matches the
    # scratch branch layout [o1 ; o4 ; o3 ; o2].
    ln2g = ln2g_ref[...]
    ln2b = ln2b_ref[...]
    bfc1 = bfc1_ref[...]
    bfc2 = bfc2_ref[...]

    def branch_out(residual, rows):
        y = residual + proj_out[rows]                            # (N, C) f32
        yn = layernorm(y, ln2g, ln2b).astype(jnp.bfloat16)
        h1 = gelu(jnp.dot(yn, wfc1_ref[...],
                          preferred_element_type=jnp.float32) + bfc1)
        mlp_out = jnp.dot(h1.astype(jnp.bfloat16), wfc2_ref[...],
                          preferred_element_type=jnp.float32) + bfc2
        return y + mlp_out

    xa_ref[0] = branch_out(x, slice(0, N))                  # o1 + x
    xba_ref[0] = branch_out(f21_ref[0], slice(N, 2 * N))    # o4 + x2_x1_fusion
    xab_ref[0] = branch_out(f12_ref[0], slice(2 * N, 3 * N))  # o3 + x1_x2_fusion
    xb_ref[0] = branch_out(x2, slice(3 * N, 4 * N))         # o2 + x2


# --------------------------------------------------------------------------
# Wrapper
# --------------------------------------------------------------------------
def block_3_branches(x, x2, x1_x2_fusion, x2_x1_fusion, params, num_heads):
    B, N, C = x.shape
    H = num_heads
    assert C % H == 0, "dim must be divisible by num_heads (scratch coverage)"
    D = C // H
    # TODO(synk): at real ViT sizes pad N to a multiple of 128 so the (N,N)
    # attention-map and (N,C) token output blocks are lane-dense.

    # matmul weights travel as bf16 (halves DMA bytes + VMEM); accum stays f32
    w_qkv = params["w_qkv"].astype(jnp.bfloat16)
    w_proj = params["w_proj"].astype(jnp.bfloat16)
    w_fc1 = params["w_fc1"].astype(jnp.bfloat16)
    w_fc2 = params["w_fc2"].astype(jnp.bfloat16)

    weight_args = (
        params["ln1_g"], params["ln1_b"],
        w_qkv, w_proj, params["b_proj"],
        params["ln2_g"], params["ln2_b"],
        w_fc1, params["b_fc1"], w_fc2, params["b_fc2"],
    )

    tok_spec = pl.BlockSpec((1, N, C), lambda b: (b, 0, 0))
    attn_spec = pl.BlockSpec((1, H, N, N), lambda b: (b, 0, 0, 0))
    out_specs = (tok_spec,) * 4 + (attn_spec,) * 4 + (tok_spec,) * 2
    out_shape = (
        (jax.ShapeDtypeStruct((B, N, C), jnp.float32),) * 4
        + (jax.ShapeDtypeStruct((B, H, N, N), jnp.float32),) * 4
        + (jax.ShapeDtypeStruct((B, N, C), jnp.float32),) * 2
    )

    def run(weight_pmode):
        def w_spec(arr):
            nd = arr.ndim
            idx = lambda b, _nd=nd: (0,) * _nd
            if weight_pmode is None:
                return pl.BlockSpec(arr.shape, idx)
            # grid-invariant weights: single-buffer (no 2x VMEM)
            return pl.BlockSpec(arr.shape, idx, pipeline_mode=weight_pmode)

        in_specs = [tok_spec, tok_spec, tok_spec, tok_spec] + \
                   [w_spec(a) for a in weight_args]

        fn = pl.pallas_call(
            block3_kernel,
            grid=(B,),
            in_specs=in_specs,
            out_specs=out_specs,
            out_shape=out_shape,
            scratch_shapes=[pltpu.VMEM((4 * N, C), jnp.float32)],
            compiler_params=pltpu.CompilerParams(
                dimension_semantics=("parallel",),
                # leave headroom below v7x's 64 MiB physical VMEM
                vmem_limit_bytes=48 * 1024 * 1024,
            ),
        )
        return fn(x, x2, x1_x2_fusion, x2_x1_fusion, *weight_args)

    try:
        outs = run(pl.Buffered(1))
    except Exception:
        # TODO(synk): fallback for JAX builds that reject single-buffered specs
        outs = run(None)

    xa, xb, xab, xba, a1, a2, a3, a4, v1f, v2f = outs
    # lane-dense (B,N,C) -> (B,H,N,D) outside the kernel (cheap XLA transpose)
    v1 = v1f.reshape(B, N, H, D).transpose(0, 2, 1, 3)
    v2 = v2f.reshape(B, N, H, D).transpose(0, 2, 1, 3)
    # matches: return ([xa, xb, xab, xba], atts, vs)
    return [xa, xb, xab, xba], [a1, a2, a3, a4], [v1, v2]


# --------------------------------------------------------------------------
# Pure-JAX reference (mirrors the PyTorch forward, drop=0, use_attn=True)
# --------------------------------------------------------------------------
def reference(x, x2, f12, f21, p, H):
    hp = jax.lax.Precision.HIGHEST

    def ln(t, g, b):
        mu = t.mean(-1, keepdims=True)
        var = ((t - mu) ** 2).mean(-1, keepdims=True)
        return (t - mu) / jnp.sqrt(var + 1e-5) * g + b

    def heads(t):  # (B,N,C) -> (B,H,N,D)
        B, N, C = t.shape
        return t.reshape(B, N, H, C // H).transpose(0, 2, 1, 3)

    def merge(t):  # (B,H,N,D) -> (B,N,C)
        B, Hh, N, Dd = t.shape
        return t.transpose(0, 2, 1, 3).reshape(B, N, Hh * Dd)

    def proj(t):
        return jnp.einsum("bnc,cd->bnd", t, p["w_proj"], precision=hp) + p["b_proj"][0]

    def mlp(t):
        h = jnp.einsum("bnc,ch->bnh", t, p["w_fc1"], precision=hp) + p["b_fc1"][0]
        h = jax.nn.gelu(h, approximate=False)
        return jnp.einsum("bnh,hc->bnc", h, p["w_fc2"], precision=hp) + p["b_fc2"][0]

    C = x.shape[-1]
    D = C // H
    scale = D ** -0.5
    xn, x2n = ln(x, p["ln1_g"][0], p["ln1_b"][0]), ln(x2, p["ln1_g"][0], p["ln1_b"][0])
    qkv1 = jnp.einsum("bnc,cd->bnd", xn, p["w_qkv"], precision=hp)
    qkv2 = jnp.einsum("bnc,cd->bnd", x2n, p["w_qkv"], precision=hp)
    q1, k1, v1 = heads(qkv1[..., :C]), heads(qkv1[..., C:2 * C]), heads(qkv1[..., 2 * C:])
    q2, k2, v2 = heads(qkv2[..., :C]), heads(qkv2[..., C:2 * C]), heads(qkv2[..., 2 * C:])

    def attn(q, k):
        s = jnp.einsum("bhnd,bhmd->bhnm", q, k, precision=hp) * scale
        return jax.nn.softmax(s, axis=-1)

    a1, a2, a3, a4 = attn(q1, k1), attn(q2, k2), attn(q1, k2), attn(q2, k1)
    o1 = merge(jnp.einsum("bhnm,bhmd->bhnd", a1, v1, precision=hp))
    o2 = merge(jnp.einsum("bhnm,bhmd->bhnd", a2, v2, precision=hp))
    o3 = merge(jnp.einsum("bhnm,bhmd->bhnd", a3, v2, precision=hp))
    o4 = merge(jnp.einsum("bhnm,bhmd->bhnd", a4, v1, precision=hp))

    xa = x + proj(o1)
    xb = x2 + proj(o2)
    xab = f12 + proj(o3)
    xba = f21 + proj(o4)
    g2, b2 = p["ln2_g"][0], p["ln2_b"][0]
    xa = xa + mlp(ln(xa, g2, b2))
    xb = xb + mlp(ln(xb, g2, b2))
    xab = xab + mlp(ln(xab, g2, b2))
    xba = xba + mlp(ln(xba, g2, b2))
    return [xa, xb, xab, xba], [a1, a2, a3, a4], [v1, v2]


# --------------------------------------------------------------------------
def init_params(key, dim, mlp_ratio=4.0):
    hid = int(dim * mlp_ratio)
    ks = jax.random.split(key, 10)
    s = 0.02
    return {
        "ln1_g": 1.0 + s * jax.random.normal(ks[0], (1, dim), jnp.float32),
        "ln1_b": s * jax.random.normal(ks[1], (1, dim), jnp.float32),
        "ln2_g": 1.0 + s * jax.random.normal(ks[2], (1, dim), jnp.float32),
        "ln2_b": s * jax.random.normal(ks[3], (1, dim), jnp.float32),
        # linear weights stored as (in, out) so kernel does x @ W + b
        "w_qkv": s * jax.random.normal(ks[4], (dim, 3 * dim), jnp.float32),
        "w_proj": s * jax.random.normal(ks[5], (dim, dim), jnp.float32),
        "b_proj": s * jax.random.normal(ks[6], (1, dim), jnp.float32),
        "w_fc1": s * jax.random.normal(ks[7], (dim, hid), jnp.float32),
        "b_fc1": s * jax.random.normal(ks[8], (1, hid), jnp.float32),
        "w_fc2": s * jax.random.normal(ks[9], (hid, dim), jnp.float32),
        "b_fc2": jnp.zeros((1, dim), jnp.float32),
    }


if __name__ == "__main__":
    B, N, dim, num_heads = 2, 8, 32, 4

    key = jax.random.PRNGKey(0)
    kx, kx2, kf12, kf21, kp = jax.random.split(key, 5)
    x = jax.random.normal(kx, (B, N, dim), jnp.float32)
    x2 = jax.random.normal(kx2, (B, N, dim), jnp.float32)
    f12 = jax.random.normal(kf12, (B, N, dim), jnp.float32)
    f21 = jax.random.normal(kf21, (B, N, dim), jnp.float32)
    params = init_params(kp, dim)

    xs, atts, vs = block_3_branches(x, x2, f12, f21, params, num_heads)
    jax.block_until_ready(xs)

    xs_r, atts_r, vs_r = reference(x, x2, f12, f21, params, num_heads)
    # tolerance slightly relaxed vs pure-f32 because the kernel uses bf16
    # matmul operands with f32 accumulation (per perf review).
    for got, want in zip(xs + atts + vs, xs_r + atts_r + vs_r):
        np.testing.assert_allclose(np.asarray(got), np.asarray(want),
                                   rtol=5e-2, atol=2e-3)

    print("KERNEL_OK")
</pallas_src>

<mosaic_0001>
module attributes {stable_mosaic.version = 11 : i64} {
  func.func @block3_kernel(%arg0: i32, %arg1: memref<1x8x32xf32, #tpu.memory_space<vmem>>, %arg2: memref<1x8x32xf32, #tpu.memory_space<vmem>>, %arg3: memref<1x8x32xf32, #tpu.memory_space<vmem>>, %arg4: memref<1x8x32xf32, #tpu.memory_space<vmem>>, %arg5: memref<1x32xf32, #tpu.memory_space<vmem>>, %arg6: memref<1x32xf32, #tpu.memory_space<vmem>>, %arg7: memref<32x96xbf16, #tpu.memory_space<vmem>>, %arg8: memref<32x32xbf16, #tpu.memory_space<vmem>>, %arg9: memref<1x32xf32, #tpu.memory_space<vmem>>, %arg10: memref<1x32xf32, #tpu.memory_space<vmem>>, %arg11: memref<1x32xf32, #tpu.memory_space<vmem>>, %arg12: memref<32x128xbf16, #tpu.memory_space<vmem>>, %arg13: memref<1x128xf32, #tpu.memory_space<vmem>>, %arg14: memref<128x32xbf16, #tpu.memory_space<vmem>>, %arg15: memref<1x32xf32, #tpu.memory_space<vmem>>, %arg16: memref<1x8x32xf32, #tpu.memory_space<vmem>>, %arg17: memref<1x8x32xf32, #tpu.memory_space<vmem>>, %arg18: memref<1x8x32xf32, #tpu.memory_space<vmem>>, %arg19: memref<1x8x32xf32, #tpu.memory_space<vmem>>, %arg20: memref<1x4x8x8xf32, #tpu.memory_space<vmem>>, %arg21: memref<1x4x8x8xf32, #tpu.memory_space<vmem>>, %arg22: memref<1x4x8x8xf32, #tpu.memory_space<vmem>>, %arg23: memref<1x4x8x8xf32, #tpu.memory_space<vmem>>, %arg24: memref<1x8x32xf32, #tpu.memory_space<vmem>>, %arg25: memref<1x8x32xf32, #tpu.memory_space<vmem>>, %arg26: memref<32x32xf32, #tpu.memory_space<vmem>>) attributes {dimension_semantics = [#tpu.dimension_semantics<parallel>], iteration_bounds = array<i64: 2>, scalar_prefetch = 0 : i64, scratch_operands = 1 : i64, tpu.core_type = #tpu.core_type<tc>, window_params = [{transform_indices = @transform_0, window_bounds = array<i64: 1, 8, 32>}, {transform_indices = @transform_1, window_bounds = array<i64: 1, 8, 32>}, {transform_indices = @transform_2, window_bounds = array<i64: 1, 8, 32>}, {transform_indices = @transform_3, window_bounds = array<i64: 1, 8, 32>}, {pipeline_mode = #tpu.pipeline_mode<synchronous>, transform_indices = @transform_4, window_bounds = array<i64: 1, 32>}, {pipeline_mode = #tpu.pipeline_mode<synchronous>, transform_indices = @transform_5, window_bounds = array<i64: 1, 32>}, {pipeline_mode = #tpu.pipeline_mode<synchronous>, transform_indices = @transform_6, window_bounds = array<i64: 32, 96>}, {pipeline_mode = #tpu.pipeline_mode<synchronous>, transform_indices = @transform_7, window_bounds = array<i64: 32, 32>}, {pipeline_mode = #tpu.pipeline_mode<synchronous>, transform_indices = @transform_8, window_bounds = array<i64: 1, 32>}, {pipeline_mode = #tpu.pipeline_mode<synchronous>, transform_indices = @transform_9, window_bounds = array<i64: 1, 32>}, {pipeline_mode = #tpu.pipeline_mode<synchronous>, transform_indices = @transform_10, window_bounds = array<i64: 1, 32>}, {pipeline_mode = #tpu.pipeline_mode<synchronous>, transform_indices = @transform_11, window_bounds = array<i64: 32, 128>}, {pipeline_mode = #tpu.pipeline_mode<synchronous>, transform_indices = @transform_12, window_bounds = array<i64: 1, 128>}, {pipeline_mode = #tpu.pipeline_mode<synchronous>, transform_indices = @transform_13, window_bounds = array<i64: 128, 32>}, {pipeline_mode = #tpu.pipeline_mode<synchronous>, transform_indices = @transform_14, window_bounds = array<i64: 1, 32>}, {transform_indices = @transform_15, window_bounds = array<i64: 1, 8, 32>}, {transform_indices = @transform_16, window_bounds = array<i64: 1, 8, 32>}, {transform_indices = @transform_17, window_bounds = array<i64: 1, 8, 32>}, {transform_indices = @transform_18, window_bounds = array<i64: 1, 8, 32>}, {transform_indices = @transform_19, window_bounds = array<i64: 1, 4, 8, 8>}, {transform_indices = @transform_20, window_bounds = array<i64: 1, 4, 8, 8>}, {transform_indices = @transform_21, window_bounds = array<i64: 1, 4, 8, 8>}, {transform_indices = @transform_22, window_bounds = array<i64: 1, 4, 8, 8>}, {transform_indices = @transform_23, window_bounds = array<i64: 1, 8, 32>}, {transform_indices = @transform_24, window_bounds = array<i64: 1, 8, 32>}]} {
    %c0 = arith.constant 0 : index
    %c0_0 = arith.constant 0 : index
    %c0_1 = arith.constant 0 : index
    %0 = vector.load %arg1[%c0, %c0_0, %c0_1] : memref<1x8x32xf32, #tpu.memory_space<vmem>>, vector<1x8x32xf32>
    %1 = vector.shape_cast %0 : vector<1x8x32xf32> to vector<8x32xf32>
    %c0_2 = arith.constant 0 : index
    %c0_3 = arith.constant 0 : index
    %c0_4 = arith.constant 0 : index
    %2 = vector.load %arg2[%c0_2, %c0_3, %c0_4] : memref<1x8x32xf32, #tpu.memory_space<vmem>>, vector<1x8x32xf32>
    %3 = vector.shape_cast %2 : vector<1x8x32xf32> to vector<8x32xf32>
    %4 = tpu.concatenate %1, %3 in 0 : vector<8x32xf32>, vector<8x32xf32> -> vector<16x32xf32>
    %c0_5 = arith.constant 0 : index
    %c0_6 = arith.constant 0 : index
    %5 = vector.load %arg5[%c0_5, %c0_6] : memref<1x32xf32, #tpu.memory_space<vmem>>, vector<1x32xf32>
    %c0_7 = arith.constant 0 : index
    %c0_8 = arith.constant 0 : index
    %6 = vector.load %arg6[%c0_7, %c0_8] : memref<1x32xf32, #tpu.memory_space<vmem>>, vector<1x32xf32>
    %cst = arith.constant dense<0.000000e+00> : vector<16xf32>
    %7 = vector.multi_reduction <add>, %4, %cst [1] : vector<16x32xf32> to vector<16xf32>
    %8 = vector.shape_cast %7 : vector<16xf32> to vector<16x1xf32>
    %cst_9 = arith.constant 3.200000e+01 : f32
    %9 = vector.broadcast %cst_9 : f32 to vector<16x1xf32>
    %10 = arith.divf %8, %9 : vector<16x1xf32>
    %11 = vector.broadcast %10 : vector<16x1xf32> to vector<16x32xf32>
    %12 = arith.subf %4, %11 : vector<16x32xf32>
    %13 = arith.mulf %12, %12 : vector<16x32xf32>
    %cst_10 = arith.constant dense<0.000000e+00> : vector<16xf32>
    %14 = vector.multi_reduction <add>, %13, %cst_10 [1] : vector<16x32xf32> to vector<16xf32>
    %15 = vector.shape_cast %14 : vector<16xf32> to vector<16x1xf32>
    %cst_11 = arith.constant 3.200000e+01 : f32
    %16 = vector.broadcast %cst_11 : f32 to vector<16x1xf32>
    %17 = arith.divf %15, %16 : vector<16x1xf32>
    %18 = vector.broadcast %10 : vector<16x1xf32> to vector<16x32xf32>
    %19 = arith.subf %4, %18 : vector<16x32xf32>
    %cst_12 = arith.constant 9.99999974E-6 : f32
    %20 = vector.broadcast %cst_12 : f32 to vector<16x1xf32>
    %21 = arith.addf %17, %20 : vector<16x1xf32>
    %22 = math.rsqrt %21 : vector<16x1xf32>
    %23 = vector.broadcast %22 : vector<16x1xf32> to vector<16x32xf32>
    %24 = arith.mulf %19, %23 : vector<16x32xf32>
    %25 = vector.broadcast %5 : vector<1x32xf32> to vector<16x32xf32>
    %26 = arith.mulf %24, %25 : vector<16x32xf32>
    %27 = vector.broadcast %6 : vector<1x32xf32> to vector<16x32xf32>
    %28 = arith.addf %26, %27 : vector<16x32xf32>
    %29 = arith.truncf %28 : vector<16x32xf32> to vector<16x32xbf16>
    %c0_13 = arith.constant 0 : index
    %c0_14 = arith.constant 0 : index
    %30 = vector.load %arg7[%c0_13, %c0_14] : memref<32x96xbf16, #tpu.memory_space<vmem>>, vector<32x96xbf16>
    %cst_15 = arith.constant dense<0.000000e+00> : vector<16x96xf32>
    %31 = tpu.matmul %29, %30, %cst_15 {dimension_numbers = #tpu.dot_dimension_numbers<[1], [0], [0], [1], [0, 0, 1, 1], [], []>} : vector<16x32xbf16>, vector<32x96xbf16>, vector<16x96xf32> -> vector<16x96xf32>
    %32 = vector.extract_strided_slice %31 {offsets = [0, 0], sizes = [16, 32], strides = [1, 1]} : vector<16x96xf32> to vector<16x32xf32>
    %33 = vector.extract_strided_slice %31 {offsets = [0, 32], sizes = [16, 32], strides = [1, 1]} : vector<16x96xf32> to vector<16x32xf32>
    %34 = vector.extract_strided_slice %31 {offsets = [0, 64], sizes = [16, 32], strides = [1, 1]} : vector<16x96xf32> to vector<16x32xf32>
    %35 = vector.extract_strided_slice %34 {offsets = [0, 0], sizes = [8, 32], strides = [1, 1]} : vector<16x32xf32> to vector<8x32xf32>
    %c0_16 = arith.constant 0 : index
    %c0_17 = arith.constant 0 : index
    %c0_18 = arith.constant 0 : index
    %36 = vector.load %arg24[%c0_16, %c0_17, %c0_18] : memref<1x8x32xf32, #tpu.memory_space<vmem>>, vector<1x8x32xf32>
    %37 = vector.shape_cast %36 : vector<1x8x32xf32> to vector<8x32xf32>
    %38 = vector.shape_cast %35 : vector<8x32xf32> to vector<1x8x32xf32>
    tpu.vector_store %arg24[%c0_16, %c0_17, %c0_18], %38 {strides = array<i32>} : memref<1x8x32xf32, #tpu.memory_space<vmem>>, vector<1x8x32xf32>,
    %39 = vector.extract_strided_slice %34 {offsets = [8, 0], sizes = [8, 32], strides = [1, 1]} : vector<16x32xf32> to vector<8x32xf32>
    %c0_19 = arith.constant 0 : index
    %c0_20 = arith.constant 0 : index
    %c0_21 = arith.constant 0 : index
    %40 = vector.load %arg25[%c0_19, %c0_20, %c0_21] : memref<1x8x32xf32, #tpu.memory_space<vmem>>, vector<1x8x32xf32>
    %41 = vector.shape_cast %40 : vector<1x8x32xf32> to vector<8x32xf32>
    %42 = vector.shape_cast %39 : vector<8x32xf32> to vector<1x8x32xf32>
    tpu.vector_store %arg25[%c0_19, %c0_20, %c0_21], %42 {strides = array<i32>} : memref<1x8x32xf32, #tpu.memory_space<vmem>>, vector<1x8x32xf32>,
    %43 = arith.truncf %34 : vector<16x32xf32> to vector<16x32xbf16>
    %44 = vector.extract_strided_slice %32 {offsets = [0, 0], sizes = [16, 16], strides = [1, 1]} : vector<16x32xf32> to vector<16x16xf32>
    %45 = vector.extract_strided_slice %33 {offsets = [0, 0], sizes = [16, 16], strides = [1, 1]} : vector<16x32xf32> to vector<16x16xf32>
    %46 = vector.extract_strided_slice %43 {offsets = [0, 0], sizes = [16, 16], strides = [1, 1]} : vector<16x32xbf16> to vector<16x16xbf16>
    %47 = vector.extract_strided_slice %44 {offsets = [0, 0], sizes = [16, 8], strides = [1, 1]} : vector<16x16xf32> to vector<16x8xf32>
    %48 = vector.extract_strided_slice %45 {offsets = [0, 0], sizes = [8, 8], strides = [1, 1]} : vector<16x16xf32> to vector<8x8xf32>
    %49 = vector.extract_strided_slice %45 {offsets = [8, 0], sizes = [8, 8], strides = [1, 1]} : vector<16x16xf32> to vector<8x8xf32>
    %50 = vector.extract_strided_slice %46 {offsets = [0, 0], sizes = [8, 8], strides = [1, 1]} : vector<16x16xbf16> to vector<8x8xbf16>
    %51 = vector.extract_strided_slice %46 {offsets = [8, 0], sizes = [8, 8], strides = [1, 1]} : vector<16x16xbf16> to vector<8x8xbf16>
    %52 = tpu.transpose %48, [1, 0] : vector<8x8xf32> -> vector<8x8xf32>
    %cst_22 = arith.constant dense<0.000000e+00> : vector<16x8xf32>
    %53 = tpu.matmul %47, %52, %cst_22 {dimension_numbers = #tpu.dot_dimension_numbers<[1], [0], [0], [1], [0, 0, 1, 1], [], []>} : vector<16x8xf32>, vector<8x8xf32>, vector<16x8xf32> -> vector<16x8xf32>
    %cst_23 = arith.constant 0.353553385 : f32
    %54 = vector.broadcast %cst_23 : f32 to vector<16x8xf32>
    %55 = arith.mulf %53, %54 : vector<16x8xf32>
    %cst_24 = arith.constant dense<0xFF800000> : vector<16xf32>
    %56 = vector.multi_reduction <maximumf>, %55, %cst_24 [1] : vector<16x8xf32> to vector<16xf32>
    %57 = vector.shape_cast %56 : vector<16xf32> to vector<16x1xf32>
    %58 = vector.broadcast %57 : vector<16x1xf32> to vector<16x8xf32>
    %59 = arith.subf %55, %58 : vector<16x8xf32>
    %60 = math.exp %59 : vector<16x8xf32>
    %cst_25 = arith.constant dense<0.000000e+00> : vector<16xf32>
    %61 = vector.multi_reduction <add>, %60, %cst_25 [1] : vector<16x8xf32> to vector<16xf32>
    %62 = vector.shape_cast %61 : vector<16xf32> to vector<16x1xf32>
    %63 = tpu.reciprocal %62 : vector<16x1xf32> -> vector<16x1xf32>
    %64 = vector.broadcast %63 : vector<16x1xf32> to vector<16x8xf32>
    %65 = arith.mulf %60, %64 : vector<16x8xf32>
    %66 = tpu.transpose %49, [1, 0] : vector<8x8xf32> -> vector<8x8xf32>
    %cst_26 = arith.constant dense<0.000000e+00> : vector<16x8xf32>
    %67 = tpu.matmul %47, %66, %cst_26 {dimension_numbers = #tpu.dot_dimension_numbers<[1], [0], [0], [1], [0, 0, 1, 1], [], []>} : vector<16x8xf32>, vector<8x8xf32>, vector<16x8xf32> -> vector<16x8xf32>
    %cst_27 = arith.constant 0.353553385 : f32
    %68 = vector.broadcast %cst_27 : f32 to vector<16x8xf32>
    %69 = arith.mulf %67, %68 : vector<16x8xf32>
    %cst_28 = arith.constant dense<0xFF800000> : vector<16xf32>
    %70 = vector.multi_reduction <maximumf>, %69, %cst_28 [1] : vector<16x8xf32> to vector<16xf32>
    %71 = vector.shape_cast %70 : vector<16xf32> to vector<16x1xf32>
    %72 = vector.broadcast %71 : vector<16x1xf32> to vector<16x8xf32>
    %73 = arith.subf %69, %72 : vector<16x8xf32>
    %74 = math.exp %73 : vector<16x8xf32>
    %cst_29 = arith.constant dense<0.000000e+00> : vector<16xf32>
    %75 = vector.multi_reduction <add>, %74, %cst_29 [1] : vector<16x8xf32> to vector<16xf32>
    %76 = vector.shape_cast %75 : vector<16xf32> to vector<16x1xf32>
    %77 = tpu.reciprocal %76 : vector<16x1xf32> -> vector<16x1xf32>
    %78 = vector.broadcast %77 : vector<16x1xf32> to vector<16x8xf32>
    %79 = arith.mulf %74, %78 : vector<16x8xf32>
    %80 = vector.extract_strided_slice %65 {offsets = [0, 0], sizes = [8, 8], strides = [1, 1]} : vector<16x8xf32> to vector<8x8xf32>
    %c0_30 = arith.constant 0 : index
    %c0_31 = arith.constant 0 : index
    %c0_32 = arith.constant 0 : index
    %c0_33 = arith.constant 0 : index
    %81 = vector.load %arg20[%c0_30, %c0_31, %c0_32, %c0_33] : memref<1x4x8x8xf32, #tpu.memory_space<vmem>>, vector<1x1x8x8xf32>
    %82 = vector.shape_cast %81 : vector<1x1x8x8xf32> to vector<8x8xf32>
    %83 = vector.shape_cast %80 : vector<8x8xf32> to vector<1x1x8x8xf32>
    tpu.vector_store %arg20[%c0_30, %c0_31, %c0_32, %c0_33], %83 {strides = array<i32>} : memref<1x4x8x8xf32, #tpu.memory_space<vmem>>, vector<1x1x8x8xf32>,
    %84 = vector.extract_strided_slice %65 {offsets = [8, 0], sizes = [8, 8], strides = [1, 1]} : vector<16x8xf32> to vector<8x8xf32>
    %c0_34 = arith.constant 0 : index
    %c0_35 = arith.constant 0 : index
    %c0_36 = arith.constant 0 : index
    %c0_37 = arith.constant 0 : index
    %85 = vector.load %arg23[%c0_34, %c0_35, %c0_36, %c0_37] : memref<1x4x8x8xf32, #tpu.memory_space<vmem>>, vector<1x1x8x8xf32>
    %86 = vector.shape_cast %85 : vector<1x1x8x8xf32> to vector<8x8xf32>
    %87 = vector.shape_cast %84 : vector<8x8xf32> to vector<1x1x8x8xf32>
    tpu.vector_store %arg23[%c0_34, %c0_35, %c0_36, %c0_37], %87 {strides = array<i32>} : memref<1x4x8x8xf32, #tpu.memory_space<vmem>>, vector<1x1x8x8xf32>,
    %88 = vector.extract_strided_slice %79 {offsets = [0, 0], sizes = [8, 8], strides = [1, 1]} : vector<16x8xf32> to vector<8x8xf32>
    %c0_38 = arith.constant 0 : index
    %c0_39 = arith.constant 0 : index
    %c0_40 = arith.constant 0 : index
    %c0_41 = arith.constant 0 : index
    %89 = vector.load %arg22[%c0_38, %c0_39, %c0_40, %c0_41] : memref<1x4x8x8xf32, #tpu.memory_space<vmem>>, vector<1x1x8x8xf32>
    %90 = vector.shape_cast %89 : vector<1x1x8x8xf32> to vector<8x8xf32>
    %91 = vector.shape_cast %88 : vector<8x8xf32> to vector<1x1x8x8xf32>
    tpu.vector_store %arg22[%c0_38, %c0_39, %c0_40, %c0_41], %91 {strides = array<i32>} : memref<1x4x8x8xf32, #tpu.memory_space<vmem>>, vector<1x1x8x8xf32>,
    %92 = vector.extract_strided_slice %79 {offsets = [8, 0], sizes = [8, 8], strides = [1, 1]} : vector<16x8xf32> to vector<8x8xf32>
    %c0_42 = arith.constant 0 : index
    %c0_43 = arith.constant 0 : index
    %c0_44 = arith.constant 0 : index
    %c0_45 = arith.constant 0 : index
    %93 = vector.load %arg21[%c0_42, %c0_43, %c0_44, %c0_45] : memref<1x4x8x8xf32, #tpu.memory_space<vmem>>, vector<1x1x8x8xf32>
    %94 = vector.shape_cast %93 : vector<1x1x8x8xf32> to vector<8x8xf32>
    %95 = vector.shape_cast %92 : vector<8x8xf32> to vector<1x1x8x8xf32>
    tpu.vector_store %arg21[%c0_42, %c0_43, %c0_44, %c0_45], %95 {strides = array<i32>} : memref<1x4x8x8xf32, #tpu.memory_space<vmem>>, vector<1x1x8x8xf32>,
    %96 = arith.truncf %65 : vector<16x8xf32> to vector<16x8xbf16>
    %cst_46 = arith.constant dense<0.000000e+00> : vector<16x8xf32>
    %97 = tpu.matmul %96, %50, %cst_46 {dimension_numbers = #tpu.dot_dimension_numbers<[1], [0], [0], [1], [0, 0, 1, 1], [], []>} : vector<16x8xbf16>, vector<8x8xbf16>, vector<16x8xf32> -> vector<16x8xf32>
    %98 = arith.truncf %79 : vector<16x8xf32> to vector<16x8xbf16>
    %cst_47 = arith.constant dense<0.000000e+00> : vector<16x8xf32>
    %99 = tpu.matmul %98, %51, %cst_47 {dimension_numbers = #tpu.dot_dimension_numbers<[1], [0], [0], [1], [0, 0, 1, 1], [], []>} : vector<16x8xbf16>, vector<8x8xbf16>, vector<16x8xf32> -> vector<16x8xf32>
    %100 = vector.extract_strided_slice %44 {offsets = [0, 8], sizes = [16, 8], strides = [1, 1]} : vector<16x16xf32> to vector<16x8xf32>
    %101 = vector.extract_strided_slice %45 {offsets = [0, 8], sizes = [8, 8], strides = [1, 1]} : vector<16x16xf32> to vector<8x8xf32>
    %102 = vector.extract_strided_slice %45 {offsets = [8, 8], sizes = [8, 8], strides = [1, 1]} : vector<16x16xf32> to vector<8x8xf32>
    %103 = vector.extract_strided_slice %46 {offsets = [0, 8], sizes = [8, 8], strides = [1, 1]} : vector<16x16xbf16> to vector<8x8xbf16>
    %104 = vector.extract_strided_slice %46 {offsets = [8, 8], sizes = [8, 8], strides = [1, 1]} : vector<16x16xbf16> to vector<8x8xbf16>
    %105 = tpu.transpose %101, [1, 0] : vector<8x8xf32> -> vector<8x8xf32>
    %cst_48 = arith.constant dense<0.000000e+00> : vector<16x8xf32>
    %106 = tpu.matmul %100, %105, %cst_48 {dimension_numbers = #tpu.dot_dimension_numbers<[1], [0], [0], [1], [0, 0, 1, 1], [], []>} : vector<16x8xf32>, vector<8x8xf32>, vector<16x8xf32> -> vector<16x8xf32>
    %cst_49 = arith.constant 0.353553385 : f32
    %107 = vector.broadcast %cst_49 : f32 to vector<16x8xf32>
    %108 = arith.mulf %106, %107 : vector<16x8xf32>
    %cst_50 = arith.constant dense<0xFF800000> : vector<16xf32>
    %109 = vector.multi_reduction <maximumf>, %108, %cst_50 [1] : vector<16x8xf32> to vector<16xf32>
    %110 = vector.shape_cast %109 : vector<16xf32> to vector<16x1xf32>
    %111 = vector.broadcast %110 : vector<16x1xf32> to vector<16x8xf32>
    %112 = arith.subf %108, %111 : vector<16x8xf32>
    %113 = math.exp %112 : vector<16x8xf32>
    %cst_51 = arith.constant dense<0.000000e+00> : vector<16xf32>
    %114 = vector.multi_reduction <add>, %113, %cst_51 [1] : vector<16x8xf32> to vector<16xf32>
    %115 = vector.shape_cast %114 : vector<16xf32> to vector<16x1xf32>
    %116 = tpu.reciprocal %115 : vector<16x1xf32> -> vector<16x1xf32>
    %117 = vector.broadcast %116 : vector<16x1xf32> to vector<16x8xf32>
    %118 = arith.mulf %113, %117 : vector<16x8xf32>
    %119 = tpu.transpose %102, [1, 0] : vector<8x8xf32> -> vector<8x8xf32>
    %cst_52 = arith.constant dense<0.000000e+00> : vector<16x8xf32>
    %120 = tpu.matmul %100, %119, %cst_52 {dimension_numbers = #tpu.dot_dimension_numbers<[1], [0], [0], [1], [0, 0, 1, 1], [], []>} : vector<16x8xf32>, vector<8x8xf32>, vector<16x8xf32> -> vector<16x8xf32>
    %cst_53 = arith.constant 0.353553385 : f32
    %121 = vector.broadcast %cst_53 : f32 to vector<16x8xf32>
    %122 = arith.mulf %120, %121 : vector<16x8xf32>
    %cst_54 = arith.constant dense<0xFF800000> : vector<16xf32>
    %123 = vector.multi_reduction <maximumf>, %122, %cst_54 [1] : vector<16x8xf32> to vector<16xf32>
    %124 = vector.shape_cast %123 : vector<16xf32> to vector<16x1xf32>
    %125 = vector.broadcast %124 : vector<16x1xf32> to vector<16x8xf32>
    %126 = arith.subf %122, %125 : vector<16x8xf32>
    %127 = math.exp %126 : vector<16x8xf32>
    %cst_55 = arith.constant dense<0.000000e+00> : vector<16xf32>
    %128 = vector.multi_reduction <add>, %127, %cst_55 [1] : vector<16x8xf32> to vector<16xf32>
    %129 = vector.shape_cast %128 : vector<16xf32> to vector<16x1xf32>
    %130 = tpu.reciprocal %129 : vector<16x1xf32> -> vector<16x1xf32>
    %131 = vector.broadcast %130 : vector<16x1xf32> to vector<16x8xf32>
    %132 = arith.mulf %127, %131 : vector<16x8xf32>
    %133 = vector.extract_strided_slice %118 {offsets = [0, 0], sizes = [8, 8], strides = [1, 1]} : vector<16x8xf32> to vector<8x8xf32>
    %c0_56 = arith.constant 0 : index
    %c1 = arith.constant 1 : index
    %c0_57 = arith.constant 0 : index
    %c0_58 = arith.constant 0 : index
    %134 = vector.load %arg20[%c0_56, %c1, %c0_57, %c0_58] : memref<1x4x8x8xf32, #tpu.memory_space<vmem>>, vector<1x1x8x8xf32>
    %135 = vector.shape_cast %134 : vector<1x1x8x8xf32> to vector<8x8xf32>
    %136 = vector.shape_cast %133 : vector<8x8xf32> to vector<1x1x8x8xf32>
    tpu.vector_store %arg20[%c0_56, %c1, %c0_57, %c0_58], %136 {strides = array<i32>} : memref<1x4x8x8xf32, #tpu.memory_space<vmem>>, vector<1x1x8x8xf32>,
    %137 = vector.extract_strided_slice %118 {offsets = [8, 0], sizes = [8, 8], strides = [1, 1]} : vector<16x8xf32> to vector<8x8xf32>
    %c0_59 = arith.constant 0 : index
    %c1_60 = arith.constant 1 : index
    %c0_61 = arith.constant 0 : index
    %c0_62 = arith.constant 0 : index
    %138 = vector.load %arg23[%c0_59, %c1_60, %c0_61, %c0_62] : memref<1x4x8x8xf32, #tpu.memory_space<vmem>>, vector<1x1x8x8xf32>
    %139 = vector.shape_cast %138 : vector<1x1x8x8xf32> to vector<8x8xf32>
    %140 = vector.shape_cast %137 : vector<8x8xf32> to vector<1x1x8x8xf32>
    tpu.vector_store %arg23[%c0_59, %c1_60, %c0_61, %c0_62], %140 {strides = array<i32>} : memref<1x4x8x8xf32, #tpu.memory_space<vmem>>, vector<1x1x8x8xf32>,
    %141 = vector.extract_strided_slice %132 {offsets = [0, 0], sizes = [8, 8], strides = [1, 1]} : vector<16x8xf32> to vector<8x8xf32>
    %c0_63 = arith.constant 0 : index
    %c1_64 = arith.constant 1 : index
    %c0_65 = arith.constant 0 : index
    %c0_66 = arith.constant 0 : index
    %142 = vector.load %arg22[%c0_63, %c1_64, %c0_65, %c0_66] : memref<1x4x8x8xf32, #tpu.memory_space<vmem>>, vector<1x1x8x8xf32>
    %143 = vector.shape_cast %142 : vector<1x1x8x8xf32> to vector<8x8xf32>
    %144 = vector.shape_cast %141 : vector<8x8xf32> to vector<1x1x8x8xf32>
    tpu.vector_store %arg22[%c0_63, %c1_64, %c0_65, %c0_66], %144 {strides = array<i32>} : memref<1x4x8x8xf32, #tpu.memory_space<vmem>>, vector<1x1x8x8xf32>,
    %145 = vector.extract_strided_slice %132 {offsets = [8, 0], sizes = [8, 8], strides = [1, 1]} : vector<16x8xf32> to vector<8x8xf32>
    %c0_67 = arith.constant 0 : index
    %c1_68 = arith.constant 1 : index
    %c0_69 = arith.constant 0 : index
    %c0_70 = arith.constant 0 : index
    %146 = vector.load %arg21[%c0_67, %c1_68, %c0_69, %c0_70] : memref<1x4x8x8xf32, #tpu.memory_space<vmem>>, vector<1x1x8x8xf32>
    %147 = vector.shape_cast %146 : vector<1x1x8x8xf32> to vector<8x8xf32>
    %148 = vector.shape_cast %145 : vector<8x8xf32> to vector<1x1x8x8xf32>
    tpu.vector_store %arg21[%c0_67, %c1_68, %c0_69, %c0_70], %148 {strides = array<i32>} : memref<1x4x8x8xf32, #tpu.memory_space<vmem>>, vector<1x1x8x8xf32>,
    %149 = arith.truncf %118 : vector<16x8xf32> to vector<16x8xbf16>
    %cst_71 = arith.constant dense<0.000000e+00> : vector<16x8xf32>
    %150 = tpu.matmul %149, %103, %cst_71 {dimension_numbers = #tpu.dot_dimension_numbers<[1], [0], [0], [1], [0, 0, 1, 1], [], []>} : vector<16x8xbf16>, vector<8x8xbf16>, vector<16x8xf32> -> vector<16x8xf32>
    %151 = arith.truncf %132 : vector<16x8xf32> to vector<16x8xbf16>
    %cst_72 = arith.constant dense<0.000000e+00> : vector<16x8xf32>
    %152 = tpu.matmul %151, %104, %cst_72 {dimension_numbers = #tpu.dot_dimension_numbers<[1], [0], [0], [1], [0, 0, 1, 1], [], []>} : vector<16x8xbf16>, vector<8x8xbf16>, vector<16x8xf32> -> vector<16x8xf32>
    %153 = tpu.concatenate %97, %150 in 1 : vector<16x8xf32>, vector<16x8xf32> -> vector<16x16xf32>
    %c0_73 = arith.constant 0 : index
    %c0_74 = arith.constant 0 : index
    %154 = vector.load %arg26[%c0_73, %c0_74] : memref<32x32xf32, #tpu.memory_space<vmem>>, vector<16x16xf32>
    tpu.vector_store %arg26[%c0_73, %c0_74], %153 {strides = array<i32>} : memref<32x32xf32, #tpu.memory_space<vmem>>, vector<16x16xf32>,
    %155 = tpu.concatenate %99, %152 in 1 : vector<16x8xf32>, vector<16x8xf32> -> vector<16x16xf32>
    %c16 = arith.constant 16 : index
    %c0_75 = arith.constant 0 : index
    %156 = vector.load %arg26[%c16, %c0_75] : memref<32x32xf32, #tpu.memory_space<vmem>>, vector<16x16xf32>
    tpu.vector_store %arg26[%c16, %c0_75], %155 {strides = array<i32>} : memref<32x32xf32, #tpu.memory_space<vmem>>, vector<16x16xf32>,
    %157 = vector.extract_strided_slice %32 {offsets = [0, 16], sizes = [16, 16], strides = [1, 1]} : vector<16x32xf32> to vector<16x16xf32>
    %158 = vector.extract_strided_slice %33 {offsets = [0, 16], sizes = [16, 16], strides = [1, 1]} : vector<16x32xf32> to vector<16x16xf32>
    %159 = vector.extract_strided_slice %43 {offsets = [0, 16], sizes = [16, 16], strides = [1, 1]} : vector<16x32xbf16> to vector<16x16xbf16>
    %160 = vector.extract_strided_slice %157 {offsets = [0, 0], sizes = [16, 8], strides = [1, 1]} : vector<16x16xf32> to vector<16x8xf32>
    %161 = vector.extract_strided_slice %158 {offsets = [0, 0], sizes = [8, 8], strides = [1, 1]} : vector<16x16xf32> to vector<8x8xf32>
    %162 = vector.extract_strided_slice %158 {offsets = [8, 0], sizes = [8, 8], strides = [1, 1]} : vector<16x16xf32> to vector<8x8xf32>
    %163 = vector.extract_strided_slice %159 {offsets = [0, 0], sizes = [8, 8], strides = [1, 1]} : vector<16x16xbf16> to vector<8x8xbf16>
    %164 = vector.extract_strided_slice %159 {offsets = [8, 0], sizes = [8, 8], strides = [1, 1]} : vector<16x16xbf16> to vector<8x8xbf16>
    %165 = tpu.transpose %161, [1, 0] : vector<8x8xf32> -> vector<8x8xf32>
    %cst_76 = arith.constant dense<0.000000e+00> : vector<16x8xf32>
    %166 = tpu.matmul %160, %165, %cst_76 {dimension_numbers = #tpu.dot_dimension_numbers<[1], [0], [0], [1], [0, 0, 1, 1], [], []>} : vector<16x8xf32>, vector<8x8xf32>, vector<16x8xf32> -> vector<16x8xf32>
    %cst_77 = arith.constant 0.353553385 : f32
    %167 = vector.broadcast %cst_77 : f32 to vector<16x8xf32>
    %168 = arith.mulf %166, %167 : vector<16x8xf32>
    %cst_78 = arith.constant dense<0xFF800000> : vector<16xf32>
    %169 = vector.multi_reduction <maximumf>, %168, %cst_78 [1] : vector<16x8xf32> to vector<16xf32>
    %170 = vector.shape_cast %169 : vector<16xf32> to vector<16x1xf32>
    %171 = vector.broadcast %170 : vector<16x1xf32> to vector<16x8xf32>
    %172 = arith.subf %168, %171 : vector<16x8xf32>
    %173 = math.exp %172 : vector<16x8xf32>
    %cst_79 = arith.constant dense<0.000000e+00> : vector<16xf32>
    %174 = vector.multi_reduction <add>, %173, %cst_79 [1] : vector<16x8xf32> to vector<16xf32>
    %175 = vector.shape_cast %174 : vector<16xf32> to vector<16x1xf32>
    %176 = tpu.reciprocal %175 : vector<16x1xf32> -> vector<16x1xf32>
    %177 = vector.broadcast %176 : vector<16x1xf32> to vector<16x8xf32>
    %178 = arith.mulf %173, %177 : vector<16x8xf32>
    %179 = tpu.transpose %162, [1, 0] : vector<8x8xf32> -> vector<8x8xf32>
    %cst_80 = arith.constant dense<0.000000e+00> : vector<16x8xf32>
    %180 = tpu.matmul %160, %179, %cst_80 {dimension_numbers = #tpu.dot_dimension_numbers<[1], [0], [0], [1], [0, 0, 1, 1], [], []>} : vector<16x8xf32>, vector<8x8xf32>, vector<16x8xf32> -> vector<16x8xf32>
    %cst_81 = arith.constant 0.353553385 : f32
    %181 = vector.broadcast %cst_81 : f32 to vector<16x8xf32>
    %182 = arith.mulf %180, %181 : vector<16x8xf32>
    %cst_82 = arith.constant dense<0xFF800000> : vector<16xf32>
    %183 = vector.multi_reduction <maximumf>, %182, %cst_82 [1] : vector<16x8xf32> to vector<16xf32>
    %184 = vector.shape_cast %183 : vector<16xf32> to vector<16x1xf32>
    %185 = vector.broadcast %184 : vector<16x1xf32> to vector<16x8xf32>
    %186 = arith.subf %182, %185 : vector<16x8xf32>
    %187 = math.exp %186 : vector<16x8xf32>
    %cst_83 = arith.constant dense<0.000000e+00> : vector<16xf32>
    %188 = vector.multi_reduction <add>, %187, %cst_83 [1] : vector<16x8xf32> to vector<16xf32>
    %189 = vector.shape_cast %188 : vector<16xf32> to vector<16x1xf32>
    %190 = tpu.reciprocal %189 : vector<16x1xf32> -> vector<16x1xf32>
    %191 = vector.broadcast %190 : vector<16x1xf32> to vector<16x8xf32>
    %192 = arith.mulf %187, %191 : vector<16x8xf32>
    %193 = vector.extract_strided_slice %178 {offsets = [0, 0], sizes = [8, 8], strides = [1, 1]} : vector<16x8xf32> to vector<8x8xf32>
    %c0_84 = arith.constant 0 : index
    %c2 = arith.constant 2 : index
    %c0_85 = arith.constant 0 : index
    %c0_86 = arith.constant 0 : index
    %194 = vector.load %arg20[%c0_84, %c2, %c0_85, %c0_86] : memref<1x4x8x8xf32, #tpu.memory_space<vmem>>, vector<1x1x8x8xf32>
    %195 = vector.shape_cast %194 : vector<1x1x8x8xf32> to vector<8x8xf32>
    %196 = vector.shape_cast %193 : vector<8x8xf32> to vector<1x1x8x8xf32>
    tpu.vector_store %arg20[%c0_84, %c2, %c0_85, %c0_86], %196 {strides = array<i32>} : memref<1x4x8x8xf32, #tpu.memory_space<vmem>>, vector<1x1x8x8xf32>,
    %197 = vector.extract_strided_slice %178 {offsets = [8, 0], sizes = [8, 8], strides = [1, 1]} : vector<16x8xf32> to vector<8x8xf32>
    %c0_87 = arith.constant 0 : index
    %c2_88 = arith.constant 2 : index
    %c0_89 = arith.constant 0 : index
    %c0_90 = arith.constant 0 : index
    %198 = vector.load %arg23[%c0_87, %c2_88, %c0_89, %c0_90] : memref<1x4x8x8xf32, #tpu.memory_space<vmem>>, vector<1x1x8x8xf32>
    %199 = vector.shape_cast %198 : vector<1x1x8x8xf32> to vector<8x8xf32>
    %200 = vector.shape_cast %197 : vector<8x8xf32> to vector<1x1x8x8xf32>
    tpu.vector_store %arg23[%c0_87, %c2_88, %c0_89, %c0_90], %200 {strides = array<i32>} : memref<1x4x8x8xf32, #tpu.memory_space<vmem>>, vector<1x1x8x8xf32>,
    %201 = vector.extract_strided_slice %192 {offsets = [0, 0], sizes = [8, 8], strides = [1, 1]} : vector<16x8xf32> to vector<8x8xf32>
    %c0_91 = arith.constant 0 : index
    %c2_92 = arith.constant 2 : index
    %c0_93 = arith.constant 0 : index
    %c0_94 = arith.constant 0 : index
    %202 = vector.load %arg22[%c0_91, %c2_92, %c0_93, %c0_94] : memref<1x4x8x8xf32, #tpu.memory_space<vmem>>, vector<1x1x8x8xf32>
    %203 = vector.shape_cast %202 : vector<1x1x8x8xf32> to vector<8x8xf32>
    %204 = vector.shape_cast %201 : vector<8x8xf32> to vector<1x1x8x8xf32>
    tpu.vector_store %arg22[%c0_91, %c2_92, %c0_93, %c0_94], %204 {strides = array<i32>} : memref<1x4x8x8xf32, #tpu.memory_space<vmem>>, vector<1x1x8x8xf32>,
    %205 = vector.extract_strided_slice %192 {offsets = [8, 0], sizes = [8, 8], strides = [1, 1]} : vector<16x8xf32> to vector<8x8xf32>
    %c0_95 = arith.constant 0 : index
    %c2_96 = arith.constant 2 : index
    %c0_97 = arith.constant 0 : index
    %c0_98 = arith.constant 0 : index
    %206 = vector.load %arg21[%c0_95, %c2_96, %c0_97, %c0_98] : memref<1x4x8x8xf32, #tpu.memory_space<vmem>>, vector<1x1x8x8xf32>
    %207 = vector.shape_cast %206 : vector<1x1x8x8xf32> to vector<8x8xf32>
    %208 = vector.shape_cast %205 : vector<8x8xf32> to vector<1x1x8x8xf32>
    tpu.vector_store %arg21[%c0_95, %c2_96, %c0_97, %c0_98], %208 {strides = array<i32>} : memref<1x4x8x8xf32, #tpu.memory_space<vmem>>, vector<1x1x8x8xf32>,
    %209 = arith.truncf %178 : vector<16x8xf32> to vector<16x8xbf16>
    %cst_99 = arith.constant dense<0.000000e+00> : vector<16x8xf32>
    %210 = tpu.matmul %209, %163, %cst_99 {dimension_numbers = #tpu.dot_dimension_numbers<[1], [0], [0], [1], [0, 0, 1, 1], [], []>} : vector<16x8xbf16>, vector<8x8xbf16>, vector<16x8xf32> -> vector<16x8xf32>
    %211 = arith.truncf %192 : vector<16x8xf32> to vector<16x8xbf16>
    %cst_100 = arith.constant dense<0.000000e+00> : vector<16x8xf32>
    %212 = tpu.matmul %211, %164, %cst_100 {dimension_numbers = #tpu.dot_dimension_numbers<[1], [0], [0], [1], [0, 0, 1, 1], [], []>} : vector<16x8xbf16>, vector<8x8xbf16>, vector<16x8xf32> -> vector<16x8xf32>
    %213 = vector.extract_strided_slice %157 {offsets = [0, 8], sizes = [16, 8], strides = [1, 1]} : vector<16x16xf32> to vector<16x8xf32>
    %214 = vector.extract_strided_slice %158 {offsets = [0, 8], sizes = [8, 8], strides = [1, 1]} : vector<16x16xf32> to vector<8x8xf32>
    %215 = vector.extract_strided_slice %158 {offsets = [8, 8], sizes = [8, 8], strides = [1, 1]} : vector<16x16xf32> to vector<8x8xf32>
    %216 = vector.extract_strided_slice %159 {offsets = [0, 8], sizes = [8, 8], strides = [1, 1]} : vector<16x16xbf16> to vector<8x8xbf16>
    %217 = vector.extract_strided_slice %159 {offsets = [8, 8], sizes = [8, 8], strides = [1, 1]} : vector<16x16xbf16> to vector<8x8xbf16>
    %218 = tpu.transpose %214, [1, 0] : vector<8x8xf32> -> vector<8x8xf32>
    %cst_101 = arith.constant dense<0.000000e+00> : vector<16x8xf32>
    %219 = tpu.matmul %213, %218, %cst_101 {dimension_numbers = #tpu.dot_dimension_numbers<[1], [0], [0], [1], [0, 0, 1, 1], [], []>} : vector<16x8xf32>, vector<8x8xf32>, vector<16x8xf32> -> vector<16x8xf32>
    %cst_102 = arith.constant 0.353553385 : f32
    %220 = vector.broadcast %cst_102 : f32 to vector<16x8xf32>
    %221 = arith.mulf %219, %220 : vector<16x8xf32>
    %cst_103 = arith.constant dense<0xFF800000> : vector<16xf32>
    %222 = vector.multi_reduction <maximumf>, %221, %cst_103 [1] : vector<16x8xf32> to vector<16xf32>
    %223 = vector.shape_cast %222 : vector<16xf32> to vector<16x1xf32>
    %224 = vector.broadcast %223 : vector<16x1xf32> to vector<16x8xf32>
    %225 = arith.subf %221, %224 : vector<16x8xf32>
    %226 = math.exp %225 : vector<16x8xf32>
    %cst_104 = arith.constant dense<0.000000e+00> : vector<16xf32>
    %227 = vector.multi_reduction <add>, %226, %cst_104 [1] : vector<16x8xf32> to vector<16xf32>
    %228 = vector.shape_cast %227 : vector<16xf32> to vector<16x1xf32>
    %229 = tpu.reciprocal %228 : vector<16x1xf32> -> vector<16x1xf32>
    %230 = vector.broadcast %229 : vector<16x1xf32> to vector<16x8xf32>
    %231 = arith.mulf %226, %230 : vector<16x8xf32>
    %232 = tpu.transpose %215, [1, 0] : vector<8x8xf32> -> vector<8x8xf32>
    %cst_105 = arith.constant dense<0.000000e+00> : vector<16x8xf32>
    %233 = tpu.matmul %213, %232, %cst_105 {dimension_numbers = #tpu.dot_dimension_numbers<[1], [0], [0], [1], [0, 0, 1, 1], [], []>} : vector<16x8xf32>, vector<8x8xf32>, vector<16x8xf32> -> vector<16x8xf32>
    %cst_106 = arith.constant 0.353553385 : f32
    %234 = vector.broadcast %cst_106 : f32 to vector<16x8xf32>
    %235 = arith.mulf %233, %234 : vector<16x8xf32>
    %cst_107 = arith.constant dense<0xFF800000> : vector<16xf32>
    %236 = vector.multi_reduction <maximumf>, %235, %cst_107 [1] : vector<16x8xf32> to vector<16xf32>
    %237 = vector.shape_cast %236 : vector<16xf32> to vector<16x1xf32>
    %238 = vector.broadcast %237 : vector<16x1xf32> to vector<16x8xf32>
    %239 = arith.subf %235, %238 : vector<16x8xf32>
    %240 = math.exp %239 : vector<16x8xf32>
    %cst_108 = arith.constant dense<0.000000e+00> : vector<16xf32>
    %241 = vector.multi_reduction <add>, %240, %cst_108 [1] : vector<16x8xf32> to vector<16xf32>
    %242 = vector.shape_cast %241 : vector<16xf32> to vector<16x1xf32>
    %243 = tpu.reciprocal %242 : vector<16x1xf32> -> vector<16x1xf32>
    %244 = vector.broadcast %243 : vector<16x1xf32> to vector<16x8xf32>
    %245 = arith.mulf %240, %244 : vector<16x8xf32>
    %246 = vector.extract_strided_slice %231 {offsets = [0, 0], sizes = [8, 8], strides = [1, 1]} : vector<16x8xf32> to vector<8x8xf32>
    %c0_109 = arith.constant 0 : index
    %c3 = arith.constant 3 : index
    %c0_110 = arith.constant 0 : index
    %c0_111 = arith.constant 0 : index
    %247 = vector.load %arg20[%c0_109, %c3, %c0_110, %c0_111] : memref<1x4x8x8xf32, #tpu.memory_space<vmem>>, vector<1x1x8x8xf32>
    %248 = vector.shape_cast %247 : vector<1x1x8x8xf32> to vector<8x8xf32>
    %249 = vector.shape_cast %246 : vector<8x8xf32> to vector<1x1x8x8xf32>
    tpu.vector_store %arg20[%c0_109, %c3, %c0_110, %c0_111], %249 {strides = array<i32>} : memref<1x4x8x8xf32, #tpu.memory_space<vmem>>, vector<1x1x8x8xf32>,
    %250 = vector.extract_strided_slice %231 {offsets = [8, 0], sizes = [8, 8], strides = [1, 1]} : vector<16x8xf32> to vector<8x8xf32>
    %c0_112 = arith.constant 0 : index
    %c3_113 = arith.constant 3 : index
    %c0_114 = arith.constant 0 : index
    %c0_115 = arith.constant 0 : index
    %251 = vector.load %arg23[%c0_112, %c3_113, %c0_114, %c0_115] : memref<1x4x8x8xf32, #tpu.memory_space<vmem>>, vector<1x1x8x8xf32>
    %252 = vector.shape_cast %251 : vector<1x1x8x8xf32> to vector<8x8xf32>
    %253 = vector.shape_cast %250 : vector<8x8xf32> to vector<1x1x8x8xf32>
    tpu.vector_store %arg23[%c0_112, %c3_113, %c0_114, %c0_115], %253 {strides = array<i32>} : memref<1x4x8x8xf32, #tpu.memory_space<vmem>>, vector<1x1x8x8xf32>,
    %254 = vector.extract_strided_slice %245 {offsets = [0, 0], sizes = [8, 8], strides = [1, 1]} : vector<16x8xf32> to vector<8x8xf32>
    %c0_116 = arith.constant 0 : index
    %c3_117 = arith.constant 3 : index
    %c0_118 = arith.constant 0 : index
    %c0_119 = arith.constant 0 : index
    %255 = vector.load %arg22[%c0_116, %c3_117, %c0_118, %c0_119] : memref<1x4x8x8xf32, #tpu.memory_space<vmem>>, vector<1x1x8x8xf32>
    %256 = vector.shape_cast %255 : vector<1x1x8x8xf32> to vector<8x8xf32>
    %257 = vector.shape_cast %254 : vector<8x8xf32> to vector<1x1x8x8xf32>
    tpu.vector_store %arg22[%c0_116, %c3_117, %c0_118, %c0_119], %257 {strides = array<i32>} : memref<1x4x8x8xf32, #tpu.memory_space<vmem>>, vector<1x1x8x8xf32>,
    %258 = vector.extract_strided_slice %245 {offsets = [8, 0], sizes = [8, 8], strides = [1, 1]} : vector<16x8xf32> to vector<8x8xf32>
    %c0_120 = arith.constant 0 : index
    %c3_121 = arith.constant 3 : index
    %c0_122 = arith.constant 0 : index
    %c0_123 = arith.constant 0 : index
    %259 = vector.load %arg21[%c0_120, %c3_121, %c0_122, %c0_123] : memref<1x4x8x8xf32, #tpu.memory_space<vmem>>, vector<1x1x8x8xf32>
    %260 = vector.shape_cast %259 : vector<1x1x8x8xf32> to vector<8x8xf32>
    %261 = vector.shape_cast %258 : vector<8x8xf32> to vector<1x1x8x8xf32>
    tpu.vector_store %arg21[%c0_120, %c3_121, %c0_122, %c0_123], %261 {strides = array<i32>} : memref<1x4x8x8xf32, #tpu.memory_space<vmem>>, vector<1x1x8x8xf32>,
    %262 = arith.truncf %231 : vector<16x8xf32> to vector<16x8xbf16>
    %cst_124 = arith.constant dense<0.000000e+00> : vector<16x8xf32>
    %263 = tpu.matmul %262, %216, %cst_124 {dimension_numbers = #tpu.dot_dimension_numbers<[1], [0], [0], [1], [0, 0, 1, 1], [], []>} : vector<16x8xbf16>, vector<8x8xbf16>, vector<16x8xf32> -> vector<16x8xf32>
    %264 = arith.truncf %245 : vector<16x8xf32> to vector<16x8xbf16>
    %cst_125 = arith.constant dense<0.000000e+00> : vector<16x8xf32>
    %265 = tpu.matmul %264, %217, %cst_125 {dimension_numbers = #tpu.dot_dimension_numbers<[1], [0], [0], [1], [0, 0, 1, 1], [], []>} : vector<16x8xbf16>, vector<8x8xbf16>, vector<16x8xf32> -> vector<16x8xf32>
    %266 = tpu.concatenate %210, %263 in 1 : vector<16x8xf32>, vector<16x8xf32> -> vector<16x16xf32>
    %c0_126 = arith.constant 0 : index
    %c16_127 = arith.constant 16 : index
    %267 = vector.load %arg26[%c0_126, %c16_127] : memref<32x32xf32, #tpu.memory_space<vmem>>, vector<16x16xf32>
    tpu.vector_store %arg26[%c0_126, %c16_127], %266 {strides = array<i32>} : memref<32x32xf32, #tpu.memory_space<vmem>>, vector<16x16xf32>,
    %268 = tpu.concatenate %212, %265 in 1 : vector<16x8xf32>, vector<16x8xf32> -> vector<16x16xf32>
    %c16_128 = arith.constant 16 : index
    %c16_129 = arith.constant 16 : index
    %269 = vector.load %arg26[%c16_128, %c16_129] : memref<32x32xf32, #tpu.memory_space<vmem>>, vector<16x16xf32>
    tpu.vector_store %arg26[%c16_128, %c16_129], %268 {strides = array<i32>} : memref<32x32xf32, #tpu.memory_space<vmem>>, vector<16x16xf32>,
    %c0_130 = arith.constant 0 : index
    %c0_131 = arith.constant 0 : index
    %270 = vector.load %arg26[%c0_130, %c0_131] : memref<32x32xf32, #tpu.memory_space<vmem>>, vector<32x32xf32>
    %271 = arith.truncf %270 : vector<32x32xf32> to vector<32x32xbf16>
    %c0_132 = arith.constant 0 : index
    %c0_133 = arith.constant 0 : index
    %272 = vector.load %arg8[%c0_132, %c0_133] : memref<32x32xbf16, #tpu.memory_space<vmem>>, vector<32x32xbf16>
    %cst_134 = arith.constant dense<0.000000e+00> : vector<32x32xf32>
    %273 = tpu.matmul %271, %272, %cst_134 {dimension_numbers = #tpu.dot_dimension_numbers<[1], [0], [0], [1], [0, 0, 1, 1], [], []>} : vector<32x32xbf16>, vector<32x32xbf16>, vector<32x32xf32> -> vector<32x32xf32>
    %c0_135 = arith.constant 0 : index
    %c0_136 = arith.constant 0 : index
    %274 = vector.load %arg9[%c0_135, %c0_136] : memref<1x32xf32, #tpu.memory_space<vmem>>, vector<1x32xf32>
    %275 = vector.broadcast %274 : vector<1x32xf32> to vector<32x32xf32>
    %276 = arith.addf %273, %275 : vector<32x32xf32>
    %c0_137 = arith.constant 0 : index
    %c0_138 = arith.constant 0 : index
    %277 = vector.load %arg10[%c0_137, %c0_138] : memref<1x32xf32, #tpu.memory_space<vmem>>, vector<1x32xf32>
    %c0_139 = arith.constant 0 : index
    %c0_140 = arith.constant 0 : index
    %278 = vector.load %arg11[%c0_139, %c0_140] : memref<1x32xf32, #tpu.memory_space<vmem>>, vector<1x32xf32>
    %c0_141 = arith.constant 0 : index
    %c0_142 = arith.constant 0 : index
    %279 = vector.load %arg13[%c0_141, %c0_142] : memref<1x128xf32, #tpu.memory_space<vmem>>, vector<1x128xf32>
    %c0_143 = arith.constant 0 : index
    %c0_144 = arith.constant 0 : index
    %280 = vector.load %arg15[%c0_143, %c0_144] : memref<1x32xf32, #tpu.memory_space<vmem>>, vector<1x32xf32>
    %281 = vector.extract_strided_slice %276 {offsets = [0, 0], sizes = [8, 32], strides = [1, 1]} : vector<32x32xf32> to vector<8x32xf32>
    %282 = arith.addf %1, %281 : vector<8x32xf32>
    %cst_145 = arith.constant dense<0.000000e+00> : vector<8xf32>
    %283 = vector.multi_reduction <add>, %282, %cst_145 [1] : vector<8x32xf32> to vector<8xf32>
    %284 = vector.shape_cast %283 : vector<8xf32> to vector<8x1xf32>
    %cst_146 = arith.constant 3.200000e+01 : f32
    %285 = vector.broadcast %cst_146 : f32 to vector<8x1xf32>
    %286 = arith.divf %284, %285 : vector<8x1xf32>
    %287 = vector.broadcast %286 : vector<8x1xf32> to vector<8x32xf32>
    %288 = arith.subf %282, %287 : vector<8x32xf32>
    %289 = arith.mulf %288, %288 : vector<8x32xf32>
    %cst_147 = arith.constant dense<0.000000e+00> : vector<8xf32>
    %290 = vector.multi_reduction <add>, %289, %cst_147 [1] : vector<8x32xf32> to vector<8xf32>
    %291 = vector.shape_cast %290 : vector<8xf32> to vector<8x1xf32>
    %cst_148 = arith.constant 3.200000e+01 : f32
    %292 = vector.broadcast %cst_148 : f32 to vector<8x1xf32>
    %293 = arith.divf %291, %292 : vector<8x1xf32>
    %294 = vector.broadcast %286 : vector<8x1xf32> to vector<8x32xf32>
    %295 = arith.subf %282, %294 : vector<8x32xf32>
    %cst_149 = arith.constant 9.99999974E-6 : f32
    %296 = vector.broadcast %cst_149 : f32 to vector<8x1xf32>
    %297 = arith.addf %293, %296 : vector<8x1xf32>
    %298 = math.rsqrt %297 : vector<8x1xf32>
    %299 = vector.broadcast %298 : vector<8x1xf32> to vector<8x32xf32>
    %300 = arith.mulf %295, %299 : vector<8x32xf32>
    %301 = vector.broadcast %277 : vector<1x32xf32> to vector<8x32xf32>
    %302 = arith.mulf %300, %301 : vector<8x32xf32>
    %303 = vector.broadcast %278 : vector<1x32xf32> to vector<8x32xf32>
    %304 = arith.addf %302, %303 : vector<8x32xf32>
    %305 = arith.truncf %304 : vector<8x32xf32> to vector<8x32xbf16>
    %c0_150 = arith.constant 0 : index
    %c0_151 = arith.constant 0 : index
    %306 = vector.load %arg12[%c0_150, %c0_151] : memref<32x128xbf16, #tpu.memory_space<vmem>>, vector<32x128xbf16>
    %cst_152 = arith.constant dense<0.000000e+00> : vector<8x128xf32>
    %307 = tpu.matmul %305, %306, %cst_152 {dimension_numbers = #tpu.dot_dimension_numbers<[1], [0], [0], [1], [0, 0, 1, 1], [], []>} : vector<8x32xbf16>, vector<32x128xbf16>, vector<8x128xf32> -> vector<8x128xf32>
    %308 = vector.broadcast %279 : vector<1x128xf32> to vector<8x128xf32>
    %309 = arith.addf %307, %308 : vector<8x128xf32>
    %cst_153 = arith.constant 5.000000e-01 : f32
    %310 = vector.broadcast %cst_153 : f32 to vector<8x128xf32>
    %311 = arith.mulf %310, %309 : vector<8x128xf32>
    %cst_154 = arith.constant 0.707106769 : f32
    %312 = vector.broadcast %cst_154 : f32 to vector<8x128xf32>
    %313 = arith.mulf %309, %312 : vector<8x128xf32>
    %314 = math.erf %313 : vector<8x128xf32>
    %cst_155 = arith.constant 1.000000e+00 : f32
    %315 = vector.broadcast %cst_155 : f32 to vector<8x128xf32>
    %316 = arith.addf %315, %314 : vector<8x128xf32>
    %317 = arith.mulf %311, %316 : vector<8x128xf32>
    %318 = arith.truncf %317 : vector<8x128xf32> to vector<8x128xbf16>
    %c0_156 = arith.constant 0 : index
    %c0_157 = arith.constant 0 : index
    %319 = vector.load %arg14[%c0_156, %c0_157] : memref<128x32xbf16, #tpu.memory_space<vmem>>, vector<128x32xbf16>
    %cst_158 = arith.constant dense<0.000000e+00> : vector<8x32xf32>
    %320 = tpu.matmul %318, %319, %cst_158 {dimension_numbers = #tpu.dot_dimension_numbers<[1], [0], [0], [1], [0, 0, 1, 1], [], []>} : vector<8x128xbf16>, vector<128x32xbf16>, vector<8x32xf32> -> vector<8x32xf32>
    %321 = vector.broadcast %280 : vector<1x32xf32> to vector<8x32xf32>
    %322 = arith.addf %320, %321 : vector<8x32xf32>
    %323 = arith.addf %282, %322 : vector<8x32xf32>
    %c0_159 = arith.constant 0 : index
    %c0_160 = arith.constant 0 : index
    %c0_161 = arith.constant 0 : index
    %324 = vector.load %arg16[%c0_159, %c0_160, %c0_161] : memref<1x8x32xf32, #tpu.memory_space<vmem>>, vector<1x8x32xf32>
    %325 = vector.shape_cast %324 : vector<1x8x32xf32> to vector<8x32xf32>
    %326 = vector.shape_cast %323 : vector<8x32xf32> to vector<1x8x32xf32>
    tpu.vector_store %arg16[%c0_159, %c0_160, %c0_161], %326 {strides = array<i32>} : memref<1x8x32xf32, #tpu.memory_space<vmem>>, vector<1x8x32xf32>,
    %c0_162 = arith.constant 0 : index
    %c0_163 = arith.constant 0 : index
    %c0_164 = arith.constant 0 : index
    %327 = vector.load %arg4[%c0_162, %c0_163, %c0_164] : memref<1x8x32xf32, #tpu.memory_space<vmem>>, vector<1x8x32xf32>
    %328 = vector.shape_cast %327 : vector<1x8x32xf32> to vector<8x32xf32>
    %329 = vector.extract_strided_slice %276 {offsets = [8, 0], sizes = [8, 32], strides = [1, 1]} : vector<32x32xf32> to vector<8x32xf32>
    %330 = arith.addf %328, %329 : vector<8x32xf32>
    %cst_165 = arith.constant dense<0.000000e+00> : vector<8xf32>
    %331 = vector.multi_reduction <add>, %330, %cst_165 [1] : vector<8x32xf32> to vector<8xf32>
    %332 = vector.shape_cast %331 : vector<8xf32> to vector<8x1xf32>
    %cst_166 = arith.constant 3.200000e+01 : f32
    %333 = vector.broadcast %cst_166 : f32 to vector<8x1xf32>
    %334 = arith.divf %332, %333 : vector<8x1xf32>
    %335 = vector.broadcast %334 : vector<8x1xf32> to vector<8x32xf32>
    %336 = arith.subf %330, %335 : vector<8x32xf32>
    %337 = arith.mulf %336, %336 : vector<8x32xf32>
    %cst_167 = arith.constant dense<0.000000e+00> : vector<8xf32>
    %338 = vector.multi_reduction <add>, %337, %cst_167 [1] : vector<8x32xf32> to vector<8xf32>
    %339 = vector.shape_cast %338 : vector<8xf32> to vector<8x1xf32>
    %cst_168 = arith.constant 3.200000e+01 : f32
    %340 = vector.broadcast %cst_168 : f32 to vector<8x1xf32>
    %341 = arith.divf %339, %340 : vector<8x1xf32>
    %342 = vector.broadcast %334 : vector<8x1xf32> to vector<8x32xf32>
    %343 = arith.subf %330, %342 : vector<8x32xf32>
    %cst_169 = arith.constant 9.99999974E-6 : f32
    %344 = vector.broadcast %cst_169 : f32 to vector<8x1xf32>
    %345 = arith.addf %341, %344 : vector<8x1xf32>
    %346 = math.rsqrt %345 : vector<8x1xf32>
    %347 = vector.broadcast %346 : vector<8x1xf32> to vector<8x32xf32>
    %348 = arith.mulf %343, %347 : vector<8x32xf32>
    %349 = vector.broadcast %277 : vector<1x32xf32> to vector<8x32xf32>
    %350 = arith.mulf %348, %349 : vector<8x32xf32>
    %351 = vector.broadcast %278 : vector<1x32xf32> to vector<8x32xf32>
    %352 = arith.addf %350, %351 : vector<8x32xf32>
    %353 = arith.truncf %352 : vector<8x32xf32> to vector<8x32xbf16>
    %c0_170 = arith.constant 0 : index
    %c0_171 = arith.constant 0 : index
    %354 = vector.load %arg12[%c0_170, %c0_171] : memref<32x128xbf16, #tpu.memory_space<vmem>>, vector<32x128xbf16>
    %cst_172 = arith.constant dense<0.000000e+00> : vector<8x128xf32>
    %355 = tpu.matmul %353, %354, %cst_172 {dimension_numbers = #tpu.dot_dimension_numbers<[1], [0], [0], [1], [0, 0, 1, 1], [], []>} : vector<8x32xbf16>, vector<32x128xbf16>, vector<8x128xf32> -> vector<8x128xf32>
    %356 = vector.broadcast %279 : vector<1x128xf32> to vector<8x128xf32>
    %357 = arith.addf %355, %356 : vector<8x128xf32>
    %cst_173 = arith.constant 5.000000e-01 : f32
    %358 = vector.broadcast %cst_173 : f32 to vector<8x128xf32>
    %359 = arith.mulf %358, %357 : vector<8x128xf32>
    %cst_174 = arith.constant 0.707106769 : f32
    %360 = vector.broadcast %cst_174 : f32 to vector<8x128xf32>
    %361 = arith.mulf %357, %360 : vector<8x128xf32>
    %362 = math.erf %361 : vector<8x128xf32>
    %cst_175 = arith.constant 1.000000e+00 : f32
    %363 = vector.broadcast %cst_175 : f32 to vector<8x128xf32>
    %364 = arith.addf %363, %362 : vector<8x128xf32>
    %365 = arith.mulf %359, %364 : vector<8x128xf32>
    %366 = arith.truncf %365 : vector<8x128xf32> to vector<8x128xbf16>
    %c0_176 = arith.constant 0 : index
    %c0_177 = arith.constant 0 : index
    %367 = vector.load %arg14[%c0_176, %c0_177] : memref<128x32xbf16, #tpu.memory_space<vmem>>, vector<128x32xbf16>
    %cst_178 = arith.constant dense<0.000000e+00> : vector<8x32xf32>
    %368 = tpu.matmul %366, %367, %cst_178 {dimension_numbers = #tpu.dot_dimension_numbers<[1], [0], [0], [1], [0, 0, 1, 1], [], []>} : vector<8x128xbf16>, vector<128x32xbf16>, vector<8x32xf32> -> vector<8x32xf32>
    %369 = vector.broadcast %280 : vector<1x32xf32> to vector<8x32xf32>
    %370 = arith.addf %368, %369 : vector<8x32xf32>
    %371 = arith.addf %330, %370 : vector<8x32xf32>
    %c0_179 = arith.constant 0 : index
    %c0_180 = arith.constant 0 : index
    %c0_181 = arith.constant 0 : index
    %372 = vector.load %arg19[%c0_179, %c0_180, %c0_181] : memref<1x8x32xf32, #tpu.memory_space<vmem>>, vector<1x8x32xf32>
    %373 = vector.shape_cast %372 : vector<1x8x32xf32> to vector<8x32xf32>
    %374 = vector.shape_cast %371 : vector<8x32xf32> to vector<1x8x32xf32>
    tpu.vector_store %arg19[%c0_179, %c0_180, %c0_181], %374 {strides = array<i32>} : memref<1x8x32xf32, #tpu.memory_space<vmem>>, vector<1x8x32xf32>,
    %c0_182 = arith.constant 0 : index
    %c0_183 = arith.constant 0 : index
    %c0_184 = arith.constant 0 : index
    %375 = vector.load %arg3[%c0_182, %c0_183, %c0_184] : memref<1x8x32xf32, #tpu.memory_space<vmem>>, vector<1x8x32xf32>
    %376 = vector.shape_cast %375 : vector<1x8x32xf32> to vector<8x32xf32>
    %377 = vector.extract_strided_slice %276 {offsets = [16, 0], sizes = [8, 32], strides = [1, 1]} : vector<32x32xf32> to vector<8x32xf32>
    %378 = arith.addf %376, %377 : vector<8x32xf32>
    %cst_185 = arith.constant dense<0.000000e+00> : vector<8xf32>
    %379 = vector.multi_reduction <add>, %378, %cst_185 [1] : vector<8x32xf32> to vector<8xf32>
    %380 = vector.shape_cast %379 : vector<8xf32> to vector<8x1xf32>
    %cst_186 = arith.constant 3.200000e+01 : f32
    %381 = vector.broadcast %cst_186 : f32 to vector<8x1xf32>
    %382 = arith.divf %380, %381 : vector<8x1xf32>
    %383 = vector.broadcast %382 : vector<8x1xf32> to vector<8x32xf32>
    %384 = arith.subf %378, %383 : vector<8x32xf32>
    %385 = arith.mulf %384, %384 : vector<8x32xf32>
    %cst_187 = arith.constant dense<0.000000e+00> : vector<8xf32>
    %386 = vector.multi_reduction <add>, %385, %cst_187 [1] : vector<8x32xf32> to vector<8xf32>
    %387 = vector.shape_cast %386 : vector<8xf32> to vector<8x1xf32>
    %cst_188 = arith.constant 3.200000e+01 : f32
    %388 = vector.broadcast %cst_188 : f32 to vector<8x1xf32>
    %389 = arith.divf %387, %388 : vector<8x1xf32>
    %390 = vector.broadcast %382 : vector<8x1xf32> to vector<8x32xf32>
    %391 = arith.subf %378, %390 : vector<8x32xf32>
    %cst_189 = arith.constant 9.99999974E-6 : f32
    %392 = vector.broadcast %cst_189 : f32 to vector<8x1xf32>
    %393 = arith.addf %389, %392 : vector<8x1xf32>
    %394 = math.rsqrt %393 : vector<8x1xf32>
    %395 = vector.broadcast %394 : vector<8x1xf32> to vector<8x32xf32>
    %396 = arith.mulf %391, %395 : vector<8x32xf32>
    %397 = vector.broadcast %277 : vector<1x32xf32> to vector<8x32xf32>
    %398 = arith.mulf %396, %397 : vector<8x32xf32>
    %399 = vector.broadcast %278 : vector<1x32xf32> to vector<8x32xf32>
    %400 = arith.addf %398, %399 : vector<8x32xf32>
    %401 = arith.truncf %400 : vector<8x32xf32> to vector<8x32xbf16>
    %c0_190 = arith.constant 0 : index
    %c0_191 = arith.constant 0 : index
    %402 = vector.load %arg12[%c0_190, %c0_191] : memref<32x128xbf16, #tpu.memory_space<vmem>>, vector<32x128xbf16>
    %cst_192 = arith.constant dense<0.000000e+00> : vector<8x128xf32>
    %403 = tpu.matmul %401, %402, %cst_192 {dimension_numbers = #tpu.dot_dimension_numbers<[1], [0], [0], [1], [0, 0, 1, 1], [], []>} : vector<8x32xbf16>, vector<32x128xbf16>, vector<8x128xf32> -> vector<8x128xf32>
    %404 = vector.broadcast %279 : vector<1x128xf32> to vector<8x128xf32>
    %405 = arith.addf %403, %404 : vector<8x128xf32>
    %cst_193 = arith.constant 5.000000e-01 : f32
    %406 = vector.broadcast %cst_193 : f32 to vector<8x128xf32>
    %407 = arith.mulf %406, %405 : vector<8x128xf32>
    %cst_194 = arith.constant 0.707106769 : f32
    %408 = vector.broadcast %cst_194 : f32 to vector<8x128xf32>
    %409 = arith.mulf %405, %408 : vector<8x128xf32>
    %410 = math.erf %409 : vector<8x128xf32>
    %cst_195 = arith.constant 1.000000e+00 : f32
    %411 = vector.broadcast %cst_195 : f32 to vector<8x128xf32>
    %412 = arith.addf %411, %410 : vector<8x128xf32>
    %413 = arith.mulf %407, %412 : vector<8x128xf32>
    %414 = arith.truncf %413 : vector<8x128xf32> to vector<8x128xbf16>
    %c0_196 = arith.constant 0 : index
    %c0_197 = arith.constant 0 : index
    %415 = vector.load %arg14[%c0_196, %c0_197] : memref<128x32xbf16, #tpu.memory_space<vmem>>, vector<128x32xbf16>
    %cst_198 = arith.constant dense<0.000000e+00> : vector<8x32xf32>
    %416 = tpu.matmul %414, %415, %cst_198 {dimension_numbers = #tpu.dot_dimension_numbers<[1], [0], [0], [1], [0, 0, 1, 1], [], []>} : vector<8x128xbf16>, vector<128x32xbf16>, vector<8x32xf32> -> vector<8x32xf32>
    %417 = vector.broadcast %280 : vector<1x32xf32> to vector<8x32xf32>
    %418 = arith.addf %416, %417 : vector<8x32xf32>
    %419 = arith.addf %378, %418 : vector<8x32xf32>
    %c0_199 = arith.constant 0 : index
    %c0_200 = arith.constant 0 : index
    %c0_201 = arith.constant 0 : index
    %420 = vector.load %arg18[%c0_199, %c0_200, %c0_201] : memref<1x8x32xf32, #tpu.memory_space<vmem>>, vector<1x8x32xf32>
    %421 = vector.shape_cast %420 : vector<1x8x32xf32> to vector<8x32xf32>
    %422 = vector.shape_cast %419 : vector<8x32xf32> to vector<1x8x32xf32>
    tpu.vector_store %arg18[%c0_199, %c0_200, %c0_201], %422 {strides = array<i32>} : memref<1x8x32xf32, #tpu.memory_space<vmem>>, vector<1x8x32xf32>,
    %423 = vector.extract_strided_slice %276 {offsets = [24, 0], sizes = [8, 32], strides = [1, 1]} : vector<32x32xf32> to vector<8x32xf32>
    %424 = arith.addf %3, %423 : vector<8x32xf32>
    %cst_202 = arith.constant dense<0.000000e+00> : vector<8xf32>
    %425 = vector.multi_reduction <add>, %424, %cst_202 [1] : vector<8x32xf32> to vector<8xf32>
    %426 = vector.shape_cast %425 : vector<8xf32> to vector<8x1xf32>
    %cst_203 = arith.constant 3.200000e+01 : f32
    %427 = vector.broadcast %cst_203 : f32 to vector<8x1xf32>
    %428 = arith.divf %426, %427 : vector<8x1xf32>
    %429 = vector.broadcast %428 : vector<8x1xf32> to vector<8x32xf32>
    %430 = arith.subf %424, %429 : vector<8x32xf32>
    %431 = arith.mulf %430, %430 : vector<8x32xf32>
    %cst_204 = arith.constant dense<0.000000e+00> : vector<8xf32>
    %432 = vector.multi_reduction <add>, %431, %cst_204 [1] : vector<8x32xf32> to vector<8xf32>
    %433 = vector.shape_cast %432 : vector<8xf32> to vector<8x1xf32>
    %cst_205 = arith.constant 3.200000e+01 : f32
    %434 = vector.broadcast %cst_205 : f32 to vector<8x1xf32>
    %435 = arith.divf %433, %434 : vector<8x1xf32>
    %436 = vector.broadcast %428 : vector<8x1xf32> to vector<8x32xf32>
    %437 = arith.subf %424, %436 : vector<8x32xf32>
    %cst_206 = arith.constant 9.99999974E-6 : f32
    %438 = vector.broadcast %cst_206 : f32 to vector<8x1xf32>
    %439 = arith.addf %435, %438 : vector<8x1xf32>
    %440 = math.rsqrt %439 : vector<8x1xf32>
    %441 = vector.broadcast %440 : vector<8x1xf32> to vector<8x32xf32>
    %442 = arith.mulf %437, %441 : vector<8x32xf32>
    %443 = vector.broadcast %277 : vector<1x32xf32> to vector<8x32xf32>
    %444 = arith.mulf %442, %443 : vector<8x32xf32>
    %445 = vector.broadcast %278 : vector<1x32xf32> to vector<8x32xf32>
    %446 = arith.addf %444, %445 : vector<8x32xf32>
    %447 = arith.truncf %446 : vector<8x32xf32> to vector<8x32xbf16>
    %c0_207 = arith.constant 0 : index
    %c0_208 = arith.constant 0 : index
    %448 = vector.load %arg12[%c0_207, %c0_208] : memref<32x128xbf16, #tpu.memory_space<vmem>>, vector<32x128xbf16>
    %cst_209 = arith.constant dense<0.000000e+00> : vector<8x128xf32>
    %449 = tpu.matmul %447, %448, %cst_209 {dimension_numbers = #tpu.dot_dimension_numbers<[1], [0], [0], [1], [0, 0, 1, 1], [], []>} : vector<8x32xbf16>, vector<32x128xbf16>, vector<8x128xf32> -> vector<8x128xf32>
    %450 = vector.broadcast %279 : vector<1x128xf32> to vector<8x128xf32>
    %451 = arith.addf %449, %450 : vector<8x128xf32>
    %cst_210 = arith.constant 5.000000e-01 : f32
    %452 = vector.broadcast %cst_210 : f32 to vector<8x128xf32>
    %453 = arith.mulf %452, %451 : vector<8x128xf32>
    %cst_211 = arith.constant 0.707106769 : f32
    %454 = vector.broadcast %cst_211 : f32 to vector<8x128xf32>
    %455 = arith.mulf %451, %454 : vector<8x128xf32>
    %456 = math.erf %455 : vector<8x128xf32>
    %cst_212 = arith.constant 1.000000e+00 : f32
    %457 = vector.broadcast %cst_212 : f32 to vector<8x128xf32>
    %458 = arith.addf %457, %456 : vector<8x128xf32>
    %459 = arith.mulf %453, %458 : vector<8x128xf32>
    %460 = arith.truncf %459 : vector<8x128xf32> to vector<8x128xbf16>
    %c0_213 = arith.constant 0 : index
    %c0_214 = arith.constant 0 : index
    %461 = vector.load %arg14[%c0_213, %c0_214] : memref<128x32xbf16, #tpu.memory_space<vmem>>, vector<128x32xbf16>
    %cst_215 = arith.constant dense<0.000000e+00> : vector<8x32xf32>
    %462 = tpu.matmul %460, %461, %cst_215 {dimension_numbers = #tpu.dot_dimension_numbers<[1], [0], [0], [1], [0, 0, 1, 1], [], []>} : vector<8x128xbf16>, vector<128x32xbf16>, vector<8x32xf32> -> vector<8x32xf32>
    %463 = vector.broadcast %280 : vector<1x32xf32> to vector<8x32xf32>
    %464 = arith.addf %462, %463 : vector<8x32xf32>
    %465 = arith.addf %424, %464 : vector<8x32xf32>
    %c0_216 = arith.constant 0 : index
    %c0_217 = arith.constant 0 : index
    %c0_218 = arith.constant 0 : index
    %466 = vector.load %arg17[%c0_216, %c0_217, %c0_218] : memref<1x8x32xf32, #tpu.memory_space<vmem>>, vector<1x8x32xf32>
    %467 = vector.shape_cast %466 : vector<1x8x32xf32> to vector<8x32xf32>
    %468 = vector.shape_cast %465 : vector<8x32xf32> to vector<1x8x32xf32>
    tpu.vector_store %arg17[%c0_216, %c0_217, %c0_218], %468 {strides = array<i32>} : memref<1x8x32xf32, #tpu.memory_space<vmem>>, vector<1x8x32xf32>,
    return
  }
  func.func @transform_0(%arg0: i32) -> (i32, i32, i32) {
    %c0_i32 = arith.constant 0 : i32
    %c0_i32_0 = arith.constant 0 : i32
    %c0_i32_1 = arith.constant 0 : i32
    return %arg0, %c0_i32, %c0_i32_0 : i32, i32, i32
  }
  func.func @transform_1(%arg0: i32) -> (i32, i32, i32) {
    %c0_i32 = arith.constant 0 : i32
    %c0_i32_0 = arith.constant 0 : i32
    %c0_i32_1 = arith.constant 0 : i32
    return %arg0, %c0_i32, %c0_i32_0 : i32, i32, i32
  }
  func.func @transform_2(%arg0: i32) -> (i32, i32, i32) {
    %c0_i32 = arith.constant 0 : i32
    %c0_i32_0 = arith.constant 0 : i32
    %c0_i32_1 = arith.constant 0 : i32
    return %arg0, %c0_i32, %c0_i32_0 : i32, i32, i32
  }
  func.func @transform_3(%arg0: i32) -> (i32, i32, i32) {
    %c0_i32 = arith.constant 0 : i32
    %c0_i32_0 = arith.constant 0 : i32
    %c0_i32_1 = arith.constant 0 : i32
    return %arg0, %c0_i32, %c0_i32_0 : i32, i32, i32
  }
  func.func @transform_4(%arg0: i32) -> (i32, i32) {
    %c0_i32 = arith.constant 0 : i32
    %c0_i32_0 = arith.constant 0 : i32
    %c0_i32_1 = arith.constant 0 : i32
    return %c0_i32, %c0_i32_0 : i32, i32
  }
  func.func @transform_5(%arg0: i32) -> (i32, i32) {
    %c0_i32 = arith.constant 0 : i32
    %c0_i32_0 = arith.constant 0 : i32
    %c0_i32_1 = arith.constant 0 : i32
    return %c0_i32, %c0_i32_0 : i32, i32
  }
  func.func @transform_6(%arg0: i32) -> (i32, i32) {
    %c0_i32 = arith.constant 0 : i32
    %c0_i32_0 = arith.constant 0 : i32
    %c0_i32_1 = arith.constant 0 : i32
    return %c0_i32, %c0_i32_0 : i32, i32
  }
  func.func @transform_7(%arg0: i32) -> (i32, i32) {
    %c0_i32 = arith.constant 0 : i32
    %c0_i32_0 = arith.constant 0 : i32
    %c0_i32_1 = arith.constant 0 : i32
    return %c0_i32, %c0_i32_0 : i32, i32
  }
  func.func @transform_8(%arg0: i32) -> (i32, i32) {
    %c0_i32 = arith.constant 0 : i32
    %c0_i32_0 = arith.constant 0 : i32
    %c0_i32_1 = arith.constant 0 : i32
    return %c0_i32, %c0_i32_0 : i32, i32
  }
  func.func @transform_9(%arg0: i32) -> (i32, i32) {
    %c0_i32 = arith.constant 0 : i32
    %c0_i32_0 = arith.constant 0 : i32
    %c0_i32_1 = arith.constant 0 : i32
    return %c0_i32, %c0_i32_0 : i32, i32
  }
  func.func @transform_10(%arg0: i32) -> (i32, i32) {
    %c0_i32 = arith.constant 0 : i32
    %c0_i32_0 = arith.constant 0 : i32
    %c0_i32_1 = arith.constant 0 : i32
    return %c0_i32, %c0_i32_0 : i32, i32
  }
  func.func @transform_11(%arg0: i32) -> (i32, i32) {
    %c0_i32 = arith.constant 0 : i32
    %c0_i32_0 = arith.constant 0 : i32
    %c0_i32_1 = arith.constant 0 : i32
    return %c0_i32, %c0_i32_0 : i32, i32
  }
  func.func @transform_12(%arg0: i32) -> (i32, i32) {
    %c0_i32 = arith.constant 0 : i32
    %c0_i32_0 = arith.constant 0 : i32
    %c0_i32_1 = arith.constant 0 : i32
    return %c0_i32, %c0_i32_0 : i32, i32
  }
  func.func @transform_13(%arg0: i32) -> (i32, i32) {
    %c0_i32 = arith.constant 0 : i32
    %c0_i32_0 = arith.constant 0 : i32
    %c0_i32_1 = arith.constant 0 : i32
    return %c0_i32, %c0_i32_0 : i32, i32
  }
  func.func @transform_14(%arg0: i32) -> (i32, i32) {
    %c0_i32 = arith.constant 0 : i32
    %c0_i32_0 = arith.constant 0 : i32
    %c0_i32_1 = arith.constant 0 : i32
    return %c0_i32, %c0_i32_0 : i32, i32
  }
  func.func @transform_15(%arg0: i32) -> (i32, i32, i32) {
    %c0_i32 = arith.constant 0 : i32
    %c0_i32_0 = arith.constant 0 : i32
    %c0_i32_1 = arith.constant 0 : i32
    return %arg0, %c0_i32, %c0_i32_0 : i32, i32, i32
  }
  func.func @transform_16(%arg0: i32) -> (i32, i32, i32) {
    %c0_i32 = arith.constant 0 : i32
    %c0_i32_0 = arith.constant 0 : i32
    %c0_i32_1 = arith.constant 0 : i32
    return %arg0, %c0_i32, %c0_i32_0 : i32, i32, i32
  }
  func.func @transform_17(%arg0: i32) -> (i32, i32, i32) {
    %c0_i32 = arith.constant 0 : i32
    %c0_i32_0 = arith.constant 0 : i32
    %c0_i32_1 = arith.constant 0 : i32
    return %arg0, %c0_i32, %c0_i32_0 : i32, i32, i32
  }
  func.func @transform_18(%arg0: i32) -> (i32, i32, i32) {
    %c0_i32 = arith.constant 0 : i32
    %c0_i32_0 = arith.constant 0 : i32
    %c0_i32_1 = arith.constant 0 : i32
    return %arg0, %c0_i32, %c0_i32_0 : i32, i32, i32
  }
  func.func @transform_19(%arg0: i32) -> (i32, i32, i32, i32) {
    %c0_i32 = arith.constant 0 : i32
    %c0_i32_0 = arith.constant 0 : i32
    %c0_i32_1 = arith.constant 0 : i32
    %c0_i32_2 = arith.constant 0 : i32
    return %arg0, %c0_i32, %c0_i32_0, %c0_i32_1 : i32, i32, i32, i32
  }
  func.func @transform_20(%arg0: i32) -> (i32, i32, i32, i32) {
    %c0_i32 = arith.constant 0 : i32
    %c0_i32_0 = arith.constant 0 : i32
    %c0_i32_1 = arith.constant 0 : i32
    %c0_i32_2 = arith.constant 0 : i32
    return %arg0, %c0_i32, %c0_i32_0, %c0_i32_1 : i32, i32, i32, i32
  }
  func.func @transform_21(%arg0: i32) -> (i32, i32, i32, i32) {
    %c0_i32 = arith.constant 0 : i32
    %c0_i32_0 = arith.constant 0 : i32
    %c0_i32_1 = arith.constant 0 : i32
    %c0_i32_2 = arith.constant 0 : i32
    return %arg0, %c0_i32, %c0_i32_0, %c0_i32_1 : i32, i32, i32, i32
  }
  func.func @transform_22(%arg0: i32) -> (i32, i32, i32, i32) {
    %c0_i32 = arith.constant 0 : i32
    %c0_i32_0 = arith.constant 0 : i32
    %c0_i32_1 = arith.constant 0 : i32
    %c0_i32_2 = arith.constant 0 : i32
    return %arg0, %c0_i32, %c0_i32_0, %c0_i32_1 : i32, i32, i32, i32
  }
  func.func @transform_23(%arg0: i32) -> (i32, i32, i32) {
    %c0_i32 = arith.constant 0 : i32
    %c0_i32_0 = arith.constant 0 : i32
    %c0_i32_1 = arith.constant 0 : i32
    return %arg0, %c0_i32, %c0_i32_0 : i32, i32, i32
  }
  func.func @transform_24(%arg0: i32) -> (i32, i32, i32) {
    %c0_i32 = arith.constant 0 : i32
    %c0_i32_0 = arith.constant 0 : i32
    %c0_i32_1 = arith.constant 0 : i32
    return %arg0, %c0_i32, %c0_i32_0 : i32, i32, i32
  }
}

module attributes {stable_mosaic.version = 11 : i64} {
  func.func @block3_kernel(%arg0: i32, %arg1: memref<1x8x32xf32, #tpu.memory_space<vmem>>, %arg2: memref<1x8x32xf32, #tpu.memory_space<vmem>>, %arg3: memref<1x8x32xf32, #tpu.memory_space<vmem>>, %arg4: memref<1x8x32xf32, #tpu.memory_space<vmem>>, %arg5: memref<1x32xf32, #tpu.memory_space<vmem>>, %arg6: memref<1x32xf32, #tpu.memory_space<vmem>>, %arg7: memref<32x96xbf16, #tpu.memory_space<vmem>>, %arg8: memref<32x32xbf16, #tpu.memory_space<vmem>>, %arg9: memref<1x32xf32, #tpu.memory_space<vmem>>, %arg10: memref<1x32xf32, #tpu.memory_space<vmem>>, %arg11: memref<1x32xf32, #tpu.memory_space<vmem>>, %arg12: memref<32x128xbf16, #tpu.memory_space<vmem>>, %arg13: memref<1x128xf32, #tpu.memory_space<vmem>>, %arg14: memref<128x32xbf16, #tpu.memory_space<vmem>>, %arg15: memref<1x32xf32, #tpu.memory_space<vmem>>, %arg16: memref<1x8x32xf32, #tpu.memory_space<vmem>>, %arg17: memref<1x8x32xf32, #tpu.memory_space<vmem>>, %arg18: memref<1x8x32xf32, #tpu.memory_space<vmem>>, %arg19: memref<1x8x32xf32, #tpu.memory_space<vmem>>, %arg20: memref<1x4x8x8xf32, #tpu.memory_space<vmem>>, %arg21: memref<1x4x8x8xf32, #tpu.memory_space<vmem>>, %arg22: memref<1x4x8x8xf32, #tpu.memory_space<vmem>>, %arg23: memref<1x4x8x8xf32, #tpu.memory_space<vmem>>, %arg24: memref<1x8x32xf32, #tpu.memory_space<vmem>>, %arg25: memref<1x8x32xf32, #tpu.memory_space<vmem>>, %arg26: memref<32x32xf32, #tpu.memory_space<vmem>>) attributes {dimension_semantics = [#tpu.dimension_semantics<parallel>], iteration_bounds = array<i64: 2>, scalar_prefetch = 0 : i64, scratch_operands = 1 : i64, tpu.core_type = #tpu.core_type<tc>, window_params = [{transform_indices = @transform_0, window_bounds = array<i64: 1, 8, 32>}, {transform_indices = @transform_1, window_bounds = array<i64: 1, 8, 32>}, {transform_indices = @transform_2, window_bounds = array<i64: 1, 8, 32>}, {transform_indices = @transform_3, window_bounds = array<i64: 1, 8, 32>}, {pipeline_mode = #tpu.pipeline_mode<synchronous>, transform_indices = @transform_4, window_bounds = array<i64: 1, 32>}, {pipeline_mode = #tpu.pipeline_mode<synchronous>, transform_indices = @transform_5, window_bounds = array<i64: 1, 32>}, {pipeline_mode = #tpu.pipeline_mode<synchronous>, transform_indices = @transform_6, window_bounds = array<i64: 32, 96>}, {pipeline_mode = #tpu.pipeline_mode<synchronous>, transform_indices = @transform_7, window_bounds = array<i64: 32, 32>}, {pipeline_mode = #tpu.pipeline_mode<synchronous>, transform_indices = @transform_8, window_bounds = array<i64: 1, 32>}, {pipeline_mode = #tpu.pipeline_mode<synchronous>, transform_indices = @transform_9, window_bounds = array<i64: 1, 32>}, {pipeline_mode = #tpu.pipeline_mode<synchronous>, transform_indices = @transform_10, window_bounds = array<i64: 1, 32>}, {pipeline_mode = #tpu.pipeline_mode<synchronous>, transform_indices = @transform_11, window_bounds = array<i64: 32, 128>}, {pipeline_mode = #tpu.pipeline_mode<synchronous>, transform_indices = @transform_12, window_bounds = array<i64: 1, 128>}, {pipeline_mode = #tpu.pipeline_mode<synchronous>, transform_indices = @transform_13, window_bounds = array<i64: 128, 32>}, {pipeline_mode = #tpu.pipeline_mode<synchronous>, transform_indices = @transform_14, window_bounds = array<i64: 1, 32>}, {transform_indices = @transform_15, window_bounds = array<i64: 1, 8, 32>}, {transform_indices = @transform_16, window_bounds = array<i64: 1, 8, 32>}, {transform_indices = @transform_17, window_bounds = array<i64: 1, 8, 32>}, {transform_indices = @transform_18, window_bounds = array<i64: 1, 8, 32>}, {transform_indices = @transform_19, window_bounds = array<i64: 1, 4, 8, 8>}, {transform_indices = @transform_20, window_bounds = array<i64: 1, 4, 8, 8>}, {transform_indices = @transform_21, window_bounds = array<i64: 1, 4, 8, 8>}, {transform_indices = @transform_22, window_bounds = array<i64: 1, 4, 8, 8>}, {transform_indices = @transform_23, window_bounds = array<i64: 1, 8, 32>}, {transform_indices = @transform_24, window_bounds = array<i64: 1, 8, 32>}]} {
    %c0 = arith.constant 0 : index
    %c0_0 = arith.constant 0 : index
    %c0_1 = arith.constant 0 : index
    %0 = vector.load %arg1[%c0, %c0_0, %c0_1] : memref<1x8x32xf32, #tpu.memory_space<vmem>>, vector<1x8x32xf32>
    %1 = vector.shape_cast %0 : vector<1x8x32xf32> to vector<8x32xf32>
    %c0_2 = arith.constant 0 : index
    %c0_3 = arith.constant 0 : index
    %c0_4 = arith.constant 0 : index
    %2 = vector.load %arg2[%c0_2, %c0_3, %c0_4] : memref<1x8x32xf32, #tpu.memory_space<vmem>>, vector<1x8x32xf32>
    %3 = vector.shape_cast %2 : vector<1x8x32xf32> to vector<8x32xf32>
    %4 = tpu.concatenate %1, %3 in 0 : vector<8x32xf32>, vector<8x32xf32> -> vector<16x32xf32>
    %c0_5 = arith.constant 0 : index
    %c0_6 = arith.constant 0 : index
    %5 = vector.load %arg5[%c0_5, %c0_6] : memref<1x32xf32, #tpu.memory_space<vmem>>, vector<1x32xf32>
    %c0_7 = arith.constant 0 : index
    %c0_8 = arith.constant 0 : index
    %6 = vector.load %arg6[%c0_7, %c0_8] : memref<1x32xf32, #tpu.memory_space<vmem>>, vector<1x32xf32>
    %cst = arith.constant dense<0.000000e+00> : vector<16xf32>
    %7 = vector.multi_reduction <add>, %4, %cst [1] : vector<16x32xf32> to vector<16xf32>
    %8 = vector.shape_cast %7 : vector<16xf32> to vector<16x1xf32>
    %cst_9 = arith.constant 3.200000e+01 : f32
    %9 = vector.broadcast %cst_9 : f32 to vector<16x1xf32>
    %10 = arith.divf %8, %9 : vector<16x1xf32>
    %11 = vector.broadcast %10 : vector<16x1xf32> to vector<16x32xf32>
    %12 = arith.subf %4, %11 : vector<16x32xf32>
    %13 = arith.mulf %12, %12 : vector<16x32xf32>
    %cst_10 = arith.constant dense<0.000000e+00> : vector<16xf32>
    %14 = vector.multi_reduction <add>, %13, %cst_10 [1] : vector<16x32xf32> to vector<16xf32>
    %15 = vector.shape_cast %14 : vector<16xf32> to vector<16x1xf32>
    %cst_11 = arith.constant 3.200000e+01 : f32
    %16 = vector.broadcast %cst_11 : f32 to vector<16x1xf32>
    %17 = arith.divf %15, %16 : vector<16x1xf32>
    %18 = vector.broadcast %10 : vector<16x1xf32> to vector<16x32xf32>
    %19 = arith.subf %4, %18 : vector<16x32xf32>
    %cst_12 = arith.constant 9.99999974E-6 : f32
    %20 = vector.broadcast %cst_12 : f32 to vector<16x1xf32>
    %21 = arith.addf %17, %20 : vector<16x1xf32>
    %22 = math.rsqrt %21 : vector<16x1xf32>
    %23 = vector.broadcast %22 : vector<16x1xf32> to vector<16x32xf32>
    %24 = arith.mulf %19, %23 : vector<16x32xf32>
    %25 = vector.broadcast %5 : vector<1x32xf32> to vector<16x32xf32>
    %26 = arith.mulf %24, %25 : vector<16x32xf32>
    %27 = vector.broadcast %6 : vector<1x32xf32> to vector<16x32xf32>
    %28 = arith.addf %26, %27 : vector<16x32xf32>
    %29 = arith.truncf %28 : vector<16x32xf32> to vector<16x32xbf16>
    %c0_13 = arith.constant 0 : index
    %c0_14 = arith.constant 0 : index
    %30 = vector.load %arg7[%c0_13, %c0_14] : memref<32x96xbf16, #tpu.memory_space<vmem>>, vector<32x96xbf16>
    %cst_15 = arith.constant dense<0.000000e+00> : vector<16x96xf32>
    %31 = tpu.matmul %29, %30, %cst_15 {dimension_numbers = #tpu.dot_dimension_numbers<[1], [0], [0], [1], [0, 0, 1, 1], [], []>} : vector<16x32xbf16>, vector<32x96xbf16>, vector<16x96xf32> -> vector<16x96xf32>
    %32 = vector.extract_strided_slice %31 {offsets = [0, 0], sizes = [16, 32], strides = [1, 1]} : vector<16x96xf32> to vector<16x32xf32>
    %33 = vector.extract_strided_slice %31 {offsets = [0, 32], sizes = [16, 32], strides = [1, 1]} : vector<16x96xf32> to vector<16x32xf32>
    %34 = vector.extract_strided_slice %31 {offsets = [0, 64], sizes = [16, 32], strides = [1, 1]} : vector<16x96xf32> to vector<16x32xf32>
    %35 = vector.extract_strided_slice %34 {offsets = [0, 0], sizes = [8, 32], strides = [1, 1]} : vector<16x32xf32> to vector<8x32xf32>
    %c0_16 = arith.constant 0 : index
    %c0_17 = arith.constant 0 : index
    %c0_18 = arith.constant 0 : index
    %36 = vector.load %arg24[%c0_16, %c0_17, %c0_18] : memref<1x8x32xf32, #tpu.memory_space<vmem>>, vector<1x8x32xf32>
    %37 = vector.shape_cast %36 : vector<1x8x32xf32> to vector<8x32xf32>
    %38 = vector.shape_cast %35 : vector<8x32xf32> to vector<1x8x32xf32>
    tpu.vector_store %arg24[%c0_16, %c0_17, %c0_18], %38 {strides = array<i32>} : memref<1x8x32xf32, #tpu.memory_space<vmem>>, vector<1x8x32xf32>,
    %39 = vector.extract_strided_slice %34 {offsets = [8, 0], sizes = [8, 32], strides = [1, 1]} : vector<16x32xf32> to vector<8x32xf32>
    %c0_19 = arith.constant 0 : index
    %c0_20 = arith.constant 0 : index
    %c0_21 = arith.constant 0 : index
    %40 = vector.load %arg25[%c0_19, %c0_20, %c0_21] : memref<1x8x32xf32, #tpu.memory_space<vmem>>, vector<1x8x32xf32>
    %41 = vector.shape_cast %40 : vector<1x8x32xf32> to vector<8x32xf32>
    %42 = vector.shape_cast %39 : vector<8x32xf32> to vector<1x8x32xf32>
    tpu.vector_store %arg25[%c0_19, %c0_20, %c0_21], %42 {strides = array<i32>} : memref<1x8x32xf32, #tpu.memory_space<vmem>>, vector<1x8x32xf32>,
    %43 = arith.truncf %34 : vector<16x32xf32> to vector<16x32xbf16>
    %44 = vector.extract_strided_slice %32 {offsets = [0, 0], sizes = [16, 16], strides = [1, 1]} : vector<16x32xf32> to vector<16x16xf32>
    %45 = vector.extract_strided_slice %33 {offsets = [0, 0], sizes = [16, 16], strides = [1, 1]} : vector<16x32xf32> to vector<16x16xf32>
    %46 = vector.extract_strided_slice %43 {offsets = [0, 0], sizes = [16, 16], strides = [1, 1]} : vector<16x32xbf16> to vector<16x16xbf16>
    %47 = vector.extract_strided_slice %44 {offsets = [0, 0], sizes = [16, 8], strides = [1, 1]} : vector<16x16xf32> to vector<16x8xf32>
    %48 = vector.extract_strided_slice %45 {offsets = [0, 0], sizes = [8, 8], strides = [1, 1]} : vector<16x16xf32> to vector<8x8xf32>
    %49 = vector.extract_strided_slice %45 {offsets = [8, 0], sizes = [8, 8], strides = [1, 1]} : vector<16x16xf32> to vector<8x8xf32>
    %50 = vector.extract_strided_slice %46 {offsets = [0, 0], sizes = [8, 8], strides = [1, 1]} : vector<16x16xbf16> to vector<8x8xbf16>
    %51 = vector.extract_strided_slice %46 {offsets = [8, 0], sizes = [8, 8], strides = [1, 1]} : vector<16x16xbf16> to vector<8x8xbf16>
    %52 = tpu.transpose %48, [1, 0] : vector<8x8xf32> -> vector<8x8xf32>
    %cst_22 = arith.constant dense<0.000000e+00> : vector<16x8xf32>
    %53 = tpu.matmul %47, %52, %cst_22 {dimension_numbers = #tpu.dot_dimension_numbers<[1], [0], [0], [1], [0, 0, 1, 1], [], []>} : vector<16x8xf32>, vector<8x8xf32>, vector<16x8xf32> -> vector<16x8xf32>
    %cst_23 = arith.constant 0.353553385 : f32
    %54 = vector.broadcast %cst_23 : f32 to vector<16x8xf32>
    %55 = arith.mulf %53, %54 : vector<16x8xf32>
    %cst_24 = arith.constant dense<0xFF800000> : vector<16xf32>
    %56 = vector.multi_reduction <maximumf>, %55, %cst_24 [1] : vector<16x8xf32> to vector<16xf32>
    %57 = vector.shape_cast %56 : vector<16xf32> to vector<16x1xf32>
    %58 = vector.broadcast %57 : vector<16x1xf32> to vector<16x8xf32>
    %59 = arith.subf %55, %58 : vector<16x8xf32>
    %60 = math.exp %59 : vector<16x8xf32>
    %cst_25 = arith.constant dense<0.000000e+00> : vector<16xf32>
    %61 = vector.multi_reduction <add>, %60, %cst_25 [1] : vector<16x8xf32> to vector<16xf32>
    %62 = vector.shape_cast %61 : vector<16xf32> to vector<16x1xf32>
    %63 = tpu.reciprocal %62 : vector<16x1xf32> -> vector<16x1xf32>
    %64 = vector.broadcast %63 : vector<16x1xf32> to vector<16x8xf32>
    %65 = arith.mulf %60, %64 : vector<16x8xf32>
    %66 = tpu.transpose %49, [1, 0] : vector<8x8xf32> -> vector<8x8xf32>
    %cst_26 = arith.constant dense<0.000000e+00> : vector<16x8xf32>
    %67 = tpu.matmul %47, %66, %cst_26 {dimension_numbers = #tpu.dot_dimension_numbers<[1], [0], [0], [1], [0, 0, 1, 1], [], []>} : vector<16x8xf32>, vector<8x8xf32>, vector<16x8xf32> -> vector<16x8xf32>
    %cst_27 = arith.constant 0.353553385 : f32
    %68 = vector.broadcast %cst_27 : f32 to vector<16x8xf32>
    %69 = arith.mulf %67, %68 : vector<16x8xf32>
    %cst_28 = arith.constant dense<0xFF800000> : vector<16xf32>
    %70 = vector.multi_reduction <maximumf>, %69, %cst_28 [1] : vector<16x8xf32> to vector<16xf32>
    %71 = vector.shape_cast %70 : vector<16xf32> to vector<16x1xf32>
    %72 = vector.broadcast %71 : vector<16x1xf32> to vector<16x8xf32>
    %73 = arith.subf %69, %72 : vector<16x8xf32>
    %74 = math.exp %73 : vector<16x8xf32>
    %cst_29 = arith.constant dense<0.000000e+00> : vector<16xf32>
    %75 = vector.multi_reduction <add>, %74, %cst_29 [1] : vector<16x8xf32> to vector<16xf32>
    %76 = vector.shape_cast %75 : vector<16xf32> to vector<16x1xf32>
    %77 = tpu.reciprocal %76 : vector<16x1xf32> -> vector<16x1xf32>
    %78 = vector.broadcast %77 : vector<16x1xf32> to vector<16x8xf32>
    %79 = arith.mulf %74, %78 : vector<16x8xf32>
    %80 = vector.extract_strided_slice %65 {offsets = [0, 0], sizes = [8, 8], strides = [1, 1]} : vector<16x8xf32> to vector<8x8xf32>
    %c0_30 = arith.constant 0 : index
    %c0_31 = arith.constant 0 : index
    %c0_32 = arith.constant 0 : index
    %c0_33 = arith.constant 0 : index
    %81 = vector.load %arg20[%c0_30, %c0_31, %c0_32, %c0_33] : memref<1x4x8x8xf32, #tpu.memory_space<vmem>>, vector<1x1x8x8xf32>
    %82 = vector.shape_cast %81 : vector<1x1x8x8xf32> to vector<8x8xf32>
    %83 = vector.shape_cast %80 : vector<8x8xf32> to vector<1x1x8x8xf32>
    tpu.vector_store %arg20[%c0_30, %c0_31, %c0_32, %c0_33], %83 {strides = array<i32>} : memref<1x4x8x8xf32, #tpu.memory_space<vmem>>, vector<1x1x8x8xf32>,
    %84 = vector.extract_strided_slice %65 {offsets = [8, 0], sizes = [8, 8], strides = [1, 1]} : vector<16x8xf32> to vector<8x8xf32>
    %c0_34 = arith.constant 0 : index
    %c0_35 = arith.constant 0 : index
    %c0_36 = arith.constant 0 : index
    %c0_37 = arith.constant 0 : index
    %85 = vector.load %arg23[%c0_34, %c0_35, %c0_36, %c0_37] : memref<1x4x8x8xf32, #tpu.memory_space<vmem>>, vector<1x1x8x8xf32>
    %86 = vector.shape_cast %85 : vector<1x1x8x8xf32> to vector<8x8xf32>
    %87 = vector.shape_cast %84 : vector<8x8xf32> to vector<1x1x8x8xf32>
    tpu.vector_store %arg23[%c0_34, %c0_35, %c0_36, %c0_37], %87 {strides = array<i32>} : memref<1x4x8x8xf32, #tpu.memory_space<vmem>>, vector<1x1x8x8xf32>,
    %88 = vector.extract_strided_slice %79 {offsets = [0, 0], sizes = [8, 8], strides = [1, 1]} : vector<16x8xf32> to vector<8x8xf32>
    %c0_38 = arith.constant 0 : index
    %c0_39 = arith.constant 0 : index
    %c0_40 = arith.constant 0 : index
    %c0_41 = arith.constant 0 : index
    %89 = vector.load %arg22[%c0_38, %c0_39, %c0_40, %c0_41] : memref<1x4x8x8xf32, #tpu.memory_space<vmem>>, vector<1x1x8x8xf32>
    %90 = vector.shape_cast %89 : vector<1x1x8x8xf32> to vector<8x8xf32>
    %91 = vector.shape_cast %88 : vector<8x8xf32> to vector<1x1x8x8xf32>
    tpu.vector_store %arg22[%c0_38, %c0_39, %c0_40, %c0_41], %91 {strides = array<i32>} : memref<1x4x8x8xf32, #tpu.memory_space<vmem>>, vector<1x1x8x8xf32>,
    %92 = vector.extract_strided_slice %79 {offsets = [8, 0], sizes = [8, 8], strides = [1, 1]} : vector<16x8xf32> to vector<8x8xf32>
    %c0_42 = arith.constant 0 : index
    %c0_43 = arith.constant 0 : index
    %c0_44 = arith.constant 0 : index
    %c0_45 = arith.constant 0 : index
    %93 = vector.load %arg21[%c0_42, %c0_43, %c0_44, %c0_45] : memref<1x4x8x8xf32, #tpu.memory_space<vmem>>, vector<1x1x8x8xf32>
    %94 = vector.shape_cast %93 : vector<1x1x8x8xf32> to vector<8x8xf32>
    %95 = vector.shape_cast %92 : vector<8x8xf32> to vector<1x1x8x8xf32>
    tpu.vector_store %arg21[%c0_42, %c0_43, %c0_44, %c0_45], %95 {strides = array<i32>} : memref<1x4x8x8xf32, #tpu.memory_space<vmem>>, vector<1x1x8x8xf32>,
    %96 = arith.truncf %65 : vector<16x8xf32> to vector<16x8xbf16>
    %cst_46 = arith.constant dense<0.000000e+00> : vector<16x8xf32>
    %97 = tpu.matmul %96, %50, %cst_46 {dimension_numbers = #tpu.dot_dimension_numbers<[1], [0], [0], [1], [0, 0, 1, 1], [], []>} : vector<16x8xbf16>, vector<8x8xbf16>, vector<16x8xf32> -> vector<16x8xf32>
    %98 = arith.truncf %79 : vector<16x8xf32> to vector<16x8xbf16>
    %cst_47 = arith.constant dense<0.000000e+00> : vector<16x8xf32>
    %99 = tpu.matmul %98, %51, %cst_47 {dimension_numbers = #tpu.dot_dimension_numbers<[1], [0], [0], [1], [0, 0, 1, 1], [], []>} : vector<16x8xbf16>, vector<8x8xbf16>, vector<16x8xf32> -> vector<16x8xf32>
    %100 = vector.extract_strided_slice %44 {offsets = [0, 8], sizes = [16, 8], strides = [1, 1]} : vector<16x16xf32> to vector<16x8xf32>
    %101 = vector.extract_strided_slice %45 {offsets = [0, 8], sizes = [8, 8], strides = [1, 1]} : vector<16x16xf32> to vector<8x8xf32>
    %102 = vector.extract_strided_slice %45 {offsets = [8, 8], sizes = [8, 8], strides = [1, 1]} : vector<16x16xf32> to vector<8x8xf32>
    %103 = vector.extract_strided_slice %46 {offsets = [0, 8], sizes = [8, 8], strides = [1, 1]} : vector<16x16xbf16> to vector<8x8xbf16>
    %104 = vector.extract_strided_slice %46 {offsets = [8, 8], sizes = [8, 8], strides = [1, 1]} : vector<16x16xbf16> to vector<8x8xbf16>
    %105 = tpu.transpose %101, [1, 0] : vector<8x8xf32> -> vector<8x8xf32>
    %cst_48 = arith.constant dense<0.000000e+00> : vector<16x8xf32>
    %106 = tpu.matmul %100, %105, %cst_48 {dimension_numbers = #tpu.dot_dimension_numbers<[1], [0], [0], [1], [0, 0, 1, 1], [], []>} : vector<16x8xf32>, vector<8x8xf32>, vector<16x8xf32> -> vector<16x8xf32>
    %cst_49 = arith.constant 0.353553385 : f32
    %107 = vector.broadcast %cst_49 : f32 to vector<16x8xf32>
    %108 = arith.mulf %106, %107 : vector<16x8xf32>
    %cst_50 = arith.constant dense<0xFF800000> : vector<16xf32>
    %109 = vector.multi_reduction <maximumf>, %108, %cst_50 [1] : vector<16x8xf32> to vector<16xf32>
    %110 = vector.shape_cast %109 : vector<16xf32> to vector<16x1xf32>
    %111 = vector.broadcast %110 : vector<16x1xf32> to vector<16x8xf32>
    %112 = arith.subf %108, %111 : vector<16x8xf32>
    %113 = math.exp %112 : vector<16x8xf32>
    %cst_51 = arith.constant dense<0.000000e+00> : vector<16xf32>
    %114 = vector.multi_reduction <add>, %113, %cst_51 [1] : vector<16x8xf32> to vector<16xf32>
    %115 = vector.shape_cast %114 : vector<16xf32> to vector<16x1xf32>
    %116 = tpu.reciprocal %115 : vector<16x1xf32> -> vector<16x1xf32>
    %117 = vector.broadcast %116 : vector<16x1xf32> to vector<16x8xf32>
    %118 = arith.mulf %113, %117 : vector<16x8xf32>
    %119 = tpu.transpose %102, [1, 0] : vector<8x8xf32> -> vector<8x8xf32>
    %cst_52 = arith.constant dense<0.000000e+00> : vector<16x8xf32>
    %120 = tpu.matmul %100, %119, %cst_52 {dimension_numbers = #tpu.dot_dimension_numbers<[1], [0], [0], [1], [0, 0, 1, 1], [], []>} : vector<16x8xf32>, vector<8x8xf32>, vector<16x8xf32> -> vector<16x8xf32>
    %cst_53 = arith.constant 0.353553385 : f32
    %121 = vector.broadcast %cst_53 : f32 to vector<16x8xf32>
    %122 = arith.mulf %120, %121 : vector<16x8xf32>
    %cst_54 = arith.constant dense<0xFF800000> : vector<16xf32>
    %123 = vector.multi_reduction <maximumf>, %122, %cst_54 [1] : vector<16x8xf32> to vector<16xf32>
    %124 = vector.shape_cast %123 : vector<16xf32> to vector<16x1xf32>
    %125 = vector.broadcast %124 : vector<16x1xf32> to vector<16x8xf32>
    %126 = arith.subf %122, %125 : vector<16x8xf32>
    %127 = math.exp %126 : vector<16x8xf32>
    %cst_55 = arith.constant dense<0.000000e+00> : vector<16xf32>
    %128 = vector.multi_reduction <add>, %127, %cst_55 [1] : vector<16x8xf32> to vector<16xf32>
    %129 = vector.shape_cast %128 : vector<16xf32> to vector<16x1xf32>
    %130 = tpu.reciprocal %129 : vector<16x1xf32> -> vector<16x1xf32>
    %131 = vector.broadcast %130 : vector<16x1xf32> to vector<16x8xf32>
    %132 = arith.mulf %127, %131 : vector<16x8xf32>
    %133 = vector.extract_strided_slice %118 {offsets = [0, 0], sizes = [8, 8], strides = [1, 1]} : vector<16x8xf32> to vector<8x8xf32>
    %c0_56 = arith.constant 0 : index
    %c1 = arith.constant 1 : index
    %c0_57 = arith.constant 0 : index
    %c0_58 = arith.constant 0 : index
    %134 = vector.load %arg20[%c0_56, %c1, %c0_57, %c0_58] : memref<1x4x8x8xf32, #tpu.memory_space<vmem>>, vector<1x1x8x8xf32>
    %135 = vector.shape_cast %134 : vector<1x1x8x8xf32> to vector<8x8xf32>
    %136 = vector.shape_cast %133 : vector<8x8xf32> to vector<1x1x8x8xf32>
    tpu.vector_store %arg20[%c0_56, %c1, %c0_57, %c0_58], %136 {strides = array<i32>} : memref<1x4x8x8xf32, #tpu.memory_space<vmem>>, vector<1x1x8x8xf32>,
    %137 = vector.extract_strided_slice %118 {offsets = [8, 0], sizes = [8, 8], strides = [1, 1]} : vector<16x8xf32> to vector<8x8xf32>
    %c0_59 = arith.constant 0 : index
    %c1_60 = arith.constant 1 : index
    %c0_61 = arith.constant 0 : index
    %c0_62 = arith.constant 0 : index
    %138 = vector.load %arg23[%c0_59, %c1_60, %c0_61, %c0_62] : memref<1x4x8x8xf32, #tpu.memory_space<vmem>>, vector<1x1x8x8xf32>
    %139 = vector.shape_cast %138 : vector<1x1x8x8xf32> to vector<8x8xf32>
    %140 = vector.shape_cast %137 : vector<8x8xf32> to vector<1x1x8x8xf32>
    tpu.vector_store %arg23[%c0_59, %c1_60, %c0_61, %c0_62], %140 {strides = array<i32>} : memref<1x4x8x8xf32, #tpu.memory_space<vmem>>, vector<1x1x8x8xf32>,
    %141 = vector.extract_strided_slice %132 {offsets = [0, 0], sizes = [8, 8], strides = [1, 1]} : vector<16x8xf32> to vector<8x8xf32>
    %c0_63 = arith.constant 0 : index
    %c1_64 = arith.constant 1 : index
    %c0_65 = arith.constant 0 : index
    %c0_66 = arith.constant 0 : index
    %142 = vector.load %arg22[%c0_63, %c1_64, %c0_65, %c0_66] : memref<1x4x8x8xf32, #tpu.memory_space<vmem>>, vector<1x1x8x8xf32>
    %143 = vector.shape_cast %142 : vector<1x1x8x8xf32> to vector<8x8xf32>
    %144 = vector.shape_cast %141 : vector<8x8xf32> to vector<1x1x8x8xf32>
    tpu.vector_store %arg22[%c0_63, %c1_64, %c0_65, %c0_66], %144 {strides = array<i32>} : memref<1x4x8x8xf32, #tpu.memory_space<vmem>>, vector<1x1x8x8xf32>,
    %145 = vector.extract_strided_slice %132 {offsets = [8, 0], sizes = [8, 8], strides = [1, 1]} : vector<16x8xf32> to vector<8x8xf32>
    %c0_67 = arith.constant 0 : index
    %c1_68 = arith.constant 1 : index
    %c0_69 = arith.constant 0 : index
    %c0_70 = arith.constant 0 : index
    %146 = vector.load %arg21[%c0_67, %c1_68, %c0_69, %c0_70] : memref<1x4x8x8xf32, #tpu.memory_space<vmem>>, vector<1x1x8x8xf32>
    %147 = vector.shape_cast %146 : vector<1x1x8x8xf32> to vector<8x8xf32>
    %148 = vector.shape_cast %145 : vector<8x8xf32> to vector<1x1x8x8xf32>
    tpu.vector_store %arg21[%c0_67, %c1_68, %c0_69, %c0_70], %148 {strides = array<i32>} : memref<1x4x8x8xf32, #tpu.memory_space<vmem>>, vector<1x1x8x8xf32>,
    %149 = arith.truncf %118 : vector<16x8xf32> to vector<16x8xbf16>
    %cst_71 = arith.constant dense<0.000000e+00> : vector<16x8xf32>
    %150 = tpu.matmul %149, %103, %cst_71 {dimension_numbers = #tpu.dot_dimension_numbers<[1], [0], [0], [1], [0, 0, 1, 1], [], []>} : vector<16x8xbf16>, vector<8x8xbf16>, vector<16x8xf32> -> vector<16x8xf32>
    %151 = arith.truncf %132 : vector<16x8xf32> to vector<16x8xbf16>
    %cst_72 = arith.constant dense<0.000000e+00> : vector<16x8xf32>
    %152 = tpu.matmul %151, %104, %cst_72 {dimension_numbers = #tpu.dot_dimension_numbers<[1], [0], [0], [1], [0, 0, 1, 1], [], []>} : vector<16x8xbf16>, vector<8x8xbf16>, vector<16x8xf32> -> vector<16x8xf32>
    %153 = tpu.concatenate %97, %150 in 1 : vector<16x8xf32>, vector<16x8xf32> -> vector<16x16xf32>
    %c0_73 = arith.constant 0 : index
    %c0_74 = arith.constant 0 : index
    %154 = vector.load %arg26[%c0_73, %c0_74] : memref<32x32xf32, #tpu.memory_space<vmem>>, vector<16x16xf32>
    tpu.vector_store %arg26[%c0_73, %c0_74], %153 {strides = array<i32>} : memref<32x32xf32, #tpu.memory_space<vmem>>, vector<16x16xf32>,
    %155 = tpu.concatenate %99, %152 in 1 : vector<16x8xf32>, vector<16x8xf32> -> vector<16x16xf32>
    %c16 = arith.constant 16 : index
    %c0_75 = arith.constant 0 : index
    %156 = vector.load %arg26[%c16, %c0_75] : memref<32x32xf32, #tpu.memory_space<vmem>>, vector<16x16xf32>
    tpu.vector_store %arg26[%c16, %c0_75], %155 {strides = array<i32>} : memref<32x32xf32, #tpu.memory_space<vmem>>, vector<16x16xf32>,
    %157 = vector.extract_strided_slice %32 {offsets = [0, 16], sizes = [16, 16], strides = [1, 1]} : vector<16x32xf32> to vector<16x16xf32>
    %158 = vector.extract_strided_slice %33 {offsets = [0, 16], sizes = [16, 16], strides = [1, 1]} : vector<16x32xf32> to vector<16x16xf32>
    %159 = vector.extract_strided_slice %43 {offsets = [0, 16], sizes = [16, 16], strides = [1, 1]} : vector<16x32xbf16> to vector<16x16xbf16>
    %160 = vector.extract_strided_slice %157 {offsets = [0, 0], sizes = [16, 8], strides = [1, 1]} : vector<16x16xf32> to vector<16x8xf32>
    %161 = vector.extract_strided_slice %158 {offsets = [0, 0], sizes = [8, 8], strides = [1, 1]} : vector<16x16xf32> to vector<8x8xf32>
    %162 = vector.extract_strided_slice %158 {offsets = [8, 0], sizes = [8, 8], strides = [1, 1]} : vector<16x16xf32> to vector<8x8xf32>
    %163 = vector.extract_strided_slice %159 {offsets = [0, 0], sizes = [8, 8], strides = [1, 1]} : vector<16x16xbf16> to vector<8x8xbf16>
    %164 = vector.extract_strided_slice %159 {offsets = [8, 0], sizes = [8, 8], strides = [1, 1]} : vector<16x16xbf16> to vector<8x8xbf16>
    %165 = tpu.transpose %161, [1, 0] : vector<8x8xf32> -> vector<8x8xf32>
    %cst_76 = arith.constant dense<0.000000e+00> : vector<16x8xf32>
    %166 = tpu.matmul %160, %165, %cst_76 {dimension_numbers = #tpu.dot_dimension_numbers<[1], [0], [0], [1], [0, 0, 1, 1], [], []>} : vector<16x8xf32>, vector<8x8xf32>, vector<16x8xf32> -> vector<16x8xf32>
    %cst_77 = arith.constant 0.353553385 : f32
    %167 = vector.broadcast %cst_77 : f32 to vector<16x8xf32>
    %168 = arith.mulf %166, %167 : vector<16x8xf32>
    %cst_78 = arith.constant dense<0xFF800000> : vector<16xf32>
    %169 = vector.multi_reduction <maximumf>, %168, %cst_78 [1] : vector<16x8xf32> to vector<16xf32>
    %170 = vector.shape_cast %169 : vector<16xf32> to vector<16x1xf32>
    %171 = vector.broadcast %170 : vector<16x1xf32> to vector<16x8xf32>
    %172 = arith.subf %168, %171 : vector<16x8xf32>
    %173 = math.exp %172 : vector<16x8xf32>
    %cst_79 = arith.constant dense<0.000000e+00> : vector<16xf32>
    %174 = vector.multi_reduction <add>, %173, %cst_79 [1] : vector<16x8xf32> to vector<16xf32>
    %175 = vector.shape_cast %174 : vector<16xf32> to vector<16x1xf32>
    %176 = tpu.reciprocal %175 : vector<16x1xf32> -> vector<16x1xf32>
    %177 = vector.broadcast %176 : vector<16x1xf32> to vector<16x8xf32>
    %178 = arith.mulf %173, %177 : vector<16x8xf32>
    %179 = tpu.transpose %162, [1, 0] : vector<8x8xf32> -> vector<8x8xf32>
    %cst_80 = arith.constant dense<0.000000e+00> : vector<16x8xf32>
    %180 = tpu.matmul %160, %179, %cst_80 {dimension_numbers = #tpu.dot_dimension_numbers<[1], [0], [0], [1], [0, 0, 1, 1], [], []>} : vector<16x8xf32>, vector<8x8xf32>, vector<16x8xf32> -> vector<16x8xf32>
    %cst_81 = arith.constant 0.353553385 : f32
    %181 = vector.broadcast %cst_81 : f32 to vector<16x8xf32>
    %182 = arith.mulf %180, %181 : vector<16x8xf32>
    %cst_82 = arith.constant dense<0xFF800000> : vector<16xf32>
    %183 = vector.multi_reduction <maximumf>, %182, %cst_82 [1] : vector<16x8xf32> to vector<16xf32>
    %184 = vector.shape_cast %183 : vector<16xf32> to vector<16x1xf32>
    %185 = vector.broadcast %184 : vector<16x1xf32> to vector<16x8xf32>
    %186 = arith.subf %182, %185 : vector<16x8xf32>
    %187 = math.exp %186 : vector<16x8xf32>
    %cst_83 = arith.constant dense<0.000000e+00> : vector<16xf32>
    %188 = vector.multi_reduction <add>, %187, %cst_83 [1] : vector<16x8xf32> to vector<16xf32>
    %189 = vector.shape_cast %188 : vector<16xf32> to vector<16x1xf32>
    %190 = tpu.reciprocal %189 : vector<16x1xf32> -> vector<16x1xf32>
    %191 = vector.broadcast %190 : vector<16x1xf32> to vector<16x8xf32>
    %192 = arith.mulf %187, %191 : vector<16x8xf32>
    %193 = vector.extract_strided_slice %178 {offsets = [0, 0], sizes = [8, 8], strides = [1, 1]} : vector<16x8xf32> to vector<8x8xf32>
    %c0_84 = arith.constant 0 : index
    %c2 = arith.constant 2 : index
    %c0_85 = arith.constant 0 : index
    %c0_86 = arith.constant 0 : index
    %194 = vector.load %arg20[%c0_84, %c2, %c0_85, %c0_86] : memref<1x4x8x8xf32, #tpu.memory_space<vmem>>, vector<1x1x8x8xf32>
    %195 = vector.shape_cast %194 : vector<1x1x8x8xf32> to vector<8x8xf32>
    %196 = vector.shape_cast %193 : vector<8x8xf32> to vector<1x1x8x8xf32>
    tpu.vector_store %arg20[%c0_84, %c2, %c0_85, %c0_86], %196 {strides = array<i32>} : memref<1x4x8x8xf32, #tpu.memory_space<vmem>>, vector<1x1x8x8xf32>,
    %197 = vector.extract_strided_slice %178 {offsets = [8, 0], sizes = [8, 8], strides = [1, 1]} : vector<16x8xf32> to vector<8x8xf32>
    %c0_87 = arith.constant 0 : index
    %c2_88 = arith.constant 2 : index
    %c0_89 = arith.constant 0 : index
    %c0_90 = arith.constant 0 : index
    %198 = vector.load %arg23[%c0_87, %c2_88, %c0_89, %c0_90] : memref<1x4x8x8xf32, #tpu.memory_space<vmem>>, vector<1x1x8x8xf32>
    %199 = vector.shape_cast %198 : vector<1x1x8x8xf32> to vector<8x8xf32>
    %200 = vector.shape_cast %197 : vector<8x8xf32> to vector<1x1x8x8xf32>
    tpu.vector_store %arg23[%c0_87, %c2_88, %c0_89, %c0_90], %200 {strides = array<i32>} : memref<1x4x8x8xf32, #tpu.memory_space<vmem>>, vector<1x1x8x8xf32>,
    %201 = vector.extract_strided_slice %192 {offsets = [0, 0], sizes = [8, 8], strides = [1, 1]} : vector<16x8xf32> to vector<8x8xf32>
    %c0_91 = arith.constant 0 : index
    %c2_92 = arith.constant 2 : index
    %c0_93 = arith.constant 0 : index
    %c0_94 = arith.constant 0 : index
    %202 = vector.load %arg22[%c0_91, %c2_92, %c0_93, %c0_94] : memref<1x4x8x8xf32, #tpu.memory_space<vmem>>, vector<1x1x8x8xf32>
    %203 = vector.shape_cast %202 : vector<1x1x8x8xf32> to vector<8x8xf32>
    %204 = vector.shape_cast %201 : vector<8x8xf32> to vector<1x1x8x8xf32>
    tpu.vector_store %arg22[%c0_91, %c2_92, %c0_93, %c0_94], %204 {strides = array<i32>} : memref<1x4x8x8xf32, #tpu.memory_space<vmem>>, vector<1x1x8x8xf32>,
    %205 = vector.extract_strided_slice %192 {offsets = [8, 0], sizes = [8, 8], strides = [1, 1]} : vector<16x8xf32> to vector<8x8xf32>
    %c0_95 = arith.constant 0 : index
    %c2_96 = arith.constant 2 : index
    %c0_97 = arith.constant 0 : index
    %c0_98 = arith.constant 0 : index
    %206 = vector.load %arg21[%c0_95, %c2_96, %c0_97, %c0_98] : memref<1x4x8x8xf32, #tpu.memory_space<vmem>>, vector<1x1x8x8xf32>
    %207 = vector.shape_cast %206 : vector<1x1x8x8xf32> to vector<8x8xf32>
    %208 = vector.shape_cast %205 : vector<8x8xf32> to vector<1x1x8x8xf32>
    tpu.vector_store %arg21[%c0_95, %c2_96, %c0_97, %c0_98], %208 {strides = array<i32>} : memref<1x4x8x8xf32, #tpu.memory_space<vmem>>, vector<1x1x8x8xf32>,
    %209 = arith.truncf %178 : vector<16x8xf32> to vector<16x8xbf16>
    %cst_99 = arith.constant dense<0.000000e+00> : vector<16x8xf32>
    %210 = tpu.matmul %209, %163, %cst_99 {dimension_numbers = #tpu.dot_dimension_numbers<[1], [0], [0], [1], [0, 0, 1, 1], [], []>} : vector<16x8xbf16>, vector<8x8xbf16>, vector<16x8xf32> -> vector<16x8xf32>
    %211 = arith.truncf %192 : vector<16x8xf32> to vector<16x8xbf16>
    %cst_100 = arith.constant dense<0.000000e+00> : vector<16x8xf32>
    %212 = tpu.matmul %211, %164, %cst_100 {dimension_numbers = #tpu.dot_dimension_numbers<[1], [0], [0], [1], [0, 0, 1, 1], [], []>} : vector<16x8xbf16>, vector<8x8xbf16>, vector<16x8xf32> -> vector<16x8xf32>
    %213 = vector.extract_strided_slice %157 {offsets = [0, 8], sizes = [16, 8], strides = [1, 1]} : vector<16x16xf32> to vector<16x8xf32>
    %214 = vector.extract_strided_slice %158 {offsets = [0, 8], sizes = [8, 8], strides = [1, 1]} : vector<16x16xf32> to vector<8x8xf32>
    %215 = vector.extract_strided_slice %158 {offsets = [8, 8], sizes = [8, 8], strides = [1, 1]} : vector<16x16xf32> to vector<8x8xf32>
    %216 = vector.extract_strided_slice %159 {offsets = [0, 8], sizes = [8, 8], strides = [1, 1]} : vector<16x16xbf16> to vector<8x8xbf16>
    %217 = vector.extract_strided_slice %159 {offsets = [8, 8], sizes = [8, 8], strides = [1, 1]} : vector<16x16xbf16> to vector<8x8xbf16>
    %218 = tpu.transpose %214, [1, 0] : vector<8x8xf32> -> vector<8x8xf32>
    %cst_101 = arith.constant dense<0.000000e+00> : vector<16x8xf32>
    %219 = tpu.matmul %213, %218, %cst_101 {dimension_numbers = #tpu.dot_dimension_numbers<[1], [0], [0], [1], [0, 0, 1, 1], [], []>} : vector<16x8xf32>, vector<8x8xf32>, vector<16x8xf32> -> vector<16x8xf32>
    %cst_102 = arith.constant 0.353553385 : f32
    %220 = vector.broadcast %cst_102 : f32 to vector<16x8xf32>
    %221 = arith.mulf %219, %220 : vector<16x8xf32>
    %cst_103 = arith.constant dense<0xFF800000> : vector<16xf32>
    %222 = vector.multi_reduction <maximumf>, %221, %cst_103 [1] : vector<16x8xf32> to vector<16xf32>
    %223 = vector.shape_cast %222 : vector<16xf32> to vector<16x1xf32>
    %224 = vector.broadcast %223 : vector<16x1xf32> to vector<16x8xf32>
    %225 = arith.subf %221, %224 : vector<16x8xf32>
    %226 = math.exp %225 : vector<16x8xf32>
    %cst_104 = arith.constant dense<0.000000e+00> : vector<16xf32>
    %227 = vector.multi_reduction <add>, %226, %cst_104 [1] : vector<16x8xf32> to vector<16xf32>
    %228 = vector.shape_cast %227 : vector<16xf32> to vector<16x1xf32>
    %229 = tpu.reciprocal %228 : vector<16x1xf32> -> vector<16x1xf32>
    %230 = vector.broadcast %229 : vector<16x1xf32> to vector<16x8xf32>
    %231 = arith.mulf %226, %230 : vector<16x8xf32>
    %232 = tpu.transpose %215, [1, 0] : vector<8x8xf32> -> vector<8x8xf32>
    %cst_105 = arith.constant dense<0.000000e+00> : vector<16x8xf32>
    %233 = tpu.matmul %213, %232, %cst_105 {dimension_numbers = #tpu.dot_dimension_numbers<[1], [0], [0], [1], [0, 0, 1, 1], [], []>} : vector<16x8xf32>, vector<8x8xf32>, vector<16x8xf32> -> vector<16x8xf32>
    %cst_106 = arith.constant 0.353553385 : f32
    %234 = vector.broadcast %cst_106 : f32 to vector<16x8xf32>
    %235 = arith.mulf %233, %234 : vector<16x8xf32>
    %cst_107 = arith.constant dense<0xFF800000> : vector<16xf32>
    %236 = vector.multi_reduction <maximumf>, %235, %cst_107 [1] : vector<16x8xf32> to vector<16xf32>
    %237 = vector.shape_cast %236 : vector<16xf32> to vector<16x1xf32>
    %238 = vector.broadcast %237 : vector<16x1xf32> to vector<16x8xf32>
    %239 = arith.subf %235, %238 : vector<16x8xf32>
    %240 = math.exp %239 : vector<16x8xf32>
    %cst_108 = arith.constant dense<0.000000e+00> : vector<16xf32>
    %241 = vector.multi_reduction <add>, %240, %cst_108 [1] : vector<16x8xf32> to vector<16xf32>
    %242 = vector.shape_cast %241 : vector<16xf32> to vector<16x1xf32>
    %243 = tpu.reciprocal %242 : vector<16x1xf32> -> vector<16x1xf32>
    %244 = vector.broadcast %243 : vector<16x1xf32> to vector<16x8xf32>
    %245 = arith.mulf %240, %244 : vector<16x8xf32>
    %246 = vector.extract_strided_slice %231 {offsets = [0, 0], sizes = [8, 8], strides = [1, 1]} : vector<16x8xf32> to vector<8x8xf32>
    %c0_109 = arith.constant 0 : index
    %c3 = arith.constant 3 : index
    %c0_110 = arith.constant 0 : index
    %c0_111 = arith.constant 0 : index
    %247 = vector.load %arg20[%c0_109, %c3, %c0_110, %c0_111] : memref<1x4x8x8xf32, #tpu.memory_space<vmem>>, vector<1x1x8x8xf32>
    %248 = vector.shape_cast %247 : vector<1x1x8x8xf32> to vector<8x8xf32>
    %249 = vector.shape_cast %246 : vector<8x8xf32> to vector<1x1x8x8xf32>
    tpu.vector_store %arg20[%c0_109, %c3, %c0_110, %c0_111], %249 {strides = array<i32>} : memref<1x4x8x8xf32, #tpu.memory_space<vmem>>, vector<1x1x8x8xf32>,
    %250 = vector.extract_strided_slice %231 {offsets = [8, 0], sizes = [8, 8], strides = [1, 1]} : vector<16x8xf32> to vector<8x8xf32>
    %c0_112 = arith.constant 0 : index
    %c3_113 = arith.constant 3 : index
    %c0_114 = arith.constant 0 : index
    %c0_115 = arith.constant 0 : index
    %251 = vector.load %arg23[%c0_112, %c3_113, %c0_114, %c0_115] : memref<1x4x8x8xf32, #tpu.memory_space<vmem>>, vector<1x1x8x8xf32>
    %252 = vector.shape_cast %251 : vector<1x1x8x8xf32> to vector<8x8xf32>
    %253 = vector.shape_cast %250 : vector<8x8xf32> to vector<1x1x8x8xf32>
    tpu.vector_store %arg23[%c0_112, %c3_113, %c0_114, %c0_115], %253 {strides = array<i32>} : memref<1x4x8x8xf32, #tpu.memory_space<vmem>>, vector<1x1x8x8xf32>,
    %254 = vector.extract_strided_slice %245 {offsets = [0, 0], sizes = [8, 8], strides = [1, 1]} : vector<16x8xf32> to vector<8x8xf32>
    %c0_116 = arith.constant 0 : index
    %c3_117 = arith.constant 3 : index
    %c0_118 = arith.constant 0 : index
    %c0_119 = arith.constant 0 : index
    %255 = vector.load %arg22[%c0_116, %c3_117, %c0_118, %c0_119] : memref<1x4x8x8xf32, #tpu.memory_space<vmem>>, vector<1x1x8x8xf32>
    %256 = vector.shape_cast %255 : vector<1x1x8x8xf32> to vector<8x8xf32>
    %257 = vector.shape_cast %254 : vector<8x8xf32> to vector<1x1x8x8xf32>
    tpu.vector_store %arg22[%c0_116, %c3_117, %c0_118, %c0_119], %257 {strides = array<i32>} : memref<1x4x8x8xf32, #tpu.memory_space<vmem>>, vector<1x1x8x8xf32>,
    %258 = vector.extract_strided_slice %245 {offsets = [8, 0], sizes = [8, 8], strides = [1, 1]} : vector<16x8xf32> to vector<8x8xf32>
    %c0_120 = arith.constant 0 : index
    %c3_121 = arith.constant 3 : index
    %c0_122 = arith.constant 0 : index
    %c0_123 = arith.constant 0 : index
    %259 = vector.load %arg21[%c0_120, %c3_121, %c0_122, %c0_123] : memref<1x4x8x8xf32, #tpu.memory_space<vmem>>, vector<1x1x8x8xf32>
    %260 = vector.shape_cast %259 : vector<1x1x8x8xf32> to vector<8x8xf32>
    %261 = vector.shape_cast %258 : vector<8x8xf32> to vector<1x1x8x8xf32>
    tpu.vector_store %arg21[%c0_120, %c3_121, %c0_122, %c0_123], %261 {strides = array<i32>} : memref<1x4x8x8xf32, #tpu.memory_space<vmem>>, vector<1x1x8x8xf32>,
    %262 = arith.truncf %231 : vector<16x8xf32> to vector<16x8xbf16>
    %cst_124 = arith.constant dense<0.000000e+00> : vector<16x8xf32>
    %263 = tpu.matmul %262, %216, %cst_124 {dimension_numbers = #tpu.dot_dimension_numbers<[1], [0], [0], [1], [0, 0, 1, 1], [], []>} : vector<16x8xbf16>, vector<8x8xbf16>, vector<16x8xf32> -> vector<16x8xf32>
    %264 = arith.truncf %245 : vector<16x8xf32> to vector<16x8xbf16>
    %cst_125 = arith.constant dense<0.000000e+00> : vector<16x8xf32>
    %265 = tpu.matmul %264, %217, %cst_125 {dimension_numbers = #tpu.dot_dimension_numbers<[1], [0], [0], [1], [0, 0, 1, 1], [], []>} : vector<16x8xbf16>, vector<8x8xbf16>, vector<16x8xf32> -> vector<16x8xf32>
    %266 = tpu.concatenate %210, %263 in 1 : vector<16x8xf32>, vector<16x8xf32> -> vector<16x16xf32>
    %c0_126 = arith.constant 0 : index
    %c16_127 = arith.constant 16 : index
    %267 = vector.load %arg26[%c0_126, %c16_127] : memref<32x32xf32, #tpu.memory_space<vmem>>, vector<16x16xf32>
    tpu.vector_store %arg26[%c0_126, %c16_127], %266 {strides = array<i32>} : memref<32x32xf32, #tpu.memory_space<vmem>>, vector<16x16xf32>,
    %268 = tpu.concatenate %212, %265 in 1 : vector<16x8xf32>, vector<16x8xf32> -> vector<16x16xf32>
    %c16_128 = arith.constant 16 : index
    %c16_129 = arith.constant 16 : index
    %269 = vector.load %arg26[%c16_128, %c16_129] : memref<32x32xf32, #tpu.memory_space<vmem>>, vector<16x16xf32>
    tpu.vector_store %arg26[%c16_128, %c16_129], %268 {strides = array<i32>} : memref<32x32xf32, #tpu.memory_space<vmem>>, vector<16x16xf32>,
    %c0_130 = arith.constant 0 : index
    %c0_131 = arith.constant 0 : index
    %270 = vector.load %arg26[%c0_130, %c0_131] : memref<32x32xf32, #tpu.memory_space<vmem>>, vector<32x32xf32>
    %271 = arith.truncf %270 : vector<32x32xf32> to vector<32x32xbf16>
    %c0_132 = arith.constant 0 : index
    %c0_133 = arith.constant 0 : index
    %272 = vector.load %arg8[%c0_132, %c0_133] : memref<32x32xbf16, #tpu.memory_space<vmem>>, vector<32x32xbf16>
    %cst_134 = arith.constant dense<0.000000e+00> : vector<32x32xf32>
    %273 = tpu.matmul %271, %272, %cst_134 {dimension_numbers = #tpu.dot_dimension_numbers<[1], [0], [0], [1], [0, 0, 1, 1], [], []>} : vector<32x32xbf16>, vector<32x32xbf16>, vector<32x32xf32> -> vector<32x32xf32>
    %c0_135 = arith.constant 0 : index
    %c0_136 = arith.constant 0 : index
    %274 = vector.load %arg9[%c0_135, %c0_136] : memref<1x32xf32, #tpu.memory_space<vmem>>, vector<1x32xf32>
    %275 = vector.broadcast %274 : vector<1x32xf32> to vector<32x32xf32>
    %276 = arith.addf %273, %275 : vector<32x32xf32>
    %c0_137 = arith.constant 0 : index
    %c0_138 = arith.constant 0 : index
    %277 = vector.load %arg10[%c0_137, %c0_138] : memref<1x32xf32, #tpu.memory_space<vmem>>, vector<1x32xf32>
    %c0_139 = arith.constant 0 : index
    %c0_140 = arith.constant 0 : index
    %278 = vector.load %arg11[%c0_139, %c0_140] : memref<1x32xf32, #tpu.memory_space<vmem>>, vector<1x32xf32>
    %c0_141 = arith.constant 0 : index
    %c0_142 = arith.constant 0 : index
    %279 = vector.load %arg13[%c0_141, %c0_142] : memref<1x128xf32, #tpu.memory_space<vmem>>, vector<1x128xf32>
    %c0_143 = arith.constant 0 : index
    %c0_144 = arith.constant 0 : index
    %280 = vector.load %arg15[%c0_143, %c0_144] : memref<1x32xf32, #tpu.memory_space<vmem>>, vector<1x32xf32>
    %281 = vector.extract_strided_slice %276 {offsets = [0, 0], sizes = [8, 32], strides = [1, 1]} : vector<32x32xf32> to vector<8x32xf32>
    %282 = arith.addf %1, %281 : vector<8x32xf32>
    %cst_145 = arith.constant dense<0.000000e+00> : vector<8xf32>
    %283 = vector.multi_reduction <add>, %282, %cst_145 [1] : vector<8x32xf32> to vector<8xf32>
    %284 = vector.shape_cast %283 : vector<8xf32> to vector<8x1xf32>
    %cst_146 = arith.constant 3.200000e+01 : f32
    %285 = vector.broadcast %cst_146 : f32 to vector<8x1xf32>
    %286 = arith.divf %284, %285 : vector<8x1xf32>
    %287 = vector.broadcast %286 : vector<8x1xf32> to vector<8x32xf32>
    %288 = arith.subf %282, %287 : vector<8x32xf32>
    %289 = arith.mulf %288, %288 : vector<8x32xf32>
    %cst_147 = arith.constant dense<0.000000e+00> : vector<8xf32>
    %290 = vector.multi_reduction <add>, %289, %cst_147 [1] : vector<8x32xf32> to vector<8xf32>
    %291 = vector.shape_cast %290 : vector<8xf32> to vector<8x1xf32>
    %cst_148 = arith.constant 3.200000e+01 : f32
    %292 = vector.broadcast %cst_148 : f32 to vector<8x1xf32>
    %293 = arith.divf %291, %292 : vector<8x1xf32>
    %294 = vector.broadcast %286 : vector<8x1xf32> to vector<8x32xf32>
    %295 = arith.subf %282, %294 : vector<8x32xf32>
    %cst_149 = arith.constant 9.99999974E-6 : f32
    %296 = vector.broadcast %cst_149 : f32 to vector<8x1xf32>
    %297 = arith.addf %293, %296 : vector<8x1xf32>
    %298 = math.rsqrt %297 : vector<8x1xf32>
    %299 = vector.broadcast %298 : vector<8x1xf32> to vector<8x32xf32>
    %300 = arith.mulf %295, %299 : vector<8x32xf32>
    %301 = vector.broadcast %277 : vector<1x32xf32> to vector<8x32xf32>
    %302 = arith.mulf %300, %301 : vector<8x32xf32>
    %303 = vector.broadcast %278 : vector<1x32xf32> to vector<8x32xf32>
    %304 = arith.addf %302, %303 : vector<8x32xf32>
    %305 = arith.truncf %304 : vector<8x32xf32> to vector<8x32xbf16>
    %c0_150 = arith.constant 0 : index
    %c0_151 = arith.constant 0 : index
    %306 = vector.load %arg12[%c0_150, %c0_151] : memref<32x128xbf16, #tpu.memory_space<vmem>>, vector<32x128xbf16>
    %cst_152 = arith.constant dense<0.000000e+00> : vector<8x128xf32>
    %307 = tpu.matmul %305, %306, %cst_152 {dimension_numbers = #tpu.dot_dimension_numbers<[1], [0], [0], [1], [0, 0, 1, 1], [], []>} : vector<8x32xbf16>, vector<32x128xbf16>, vector<8x128xf32> -> vector<8x128xf32>
    %308 = vector.broadcast %279 : vector<1x128xf32> to vector<8x128xf32>
    %309 = arith.addf %307, %308 : vector<8x128xf32>
    %cst_153 = arith.constant 5.000000e-01 : f32
    %310 = vector.broadcast %cst_153 : f32 to vector<8x128xf32>
    %311 = arith.mulf %310, %309 : vector<8x128xf32>
    %cst_154 = arith.constant 0.707106769 : f32
    %312 = vector.broadcast %cst_154 : f32 to vector<8x128xf32>
    %313 = arith.mulf %309, %312 : vector<8x128xf32>
    %314 = math.erf %313 : vector<8x128xf32>
    %cst_155 = arith.constant 1.000000e+00 : f32
    %315 = vector.broadcast %cst_155 : f32 to vector<8x128xf32>
    %316 = arith.addf %315, %314 : vector<8x128xf32>
    %317 = arith.mulf %311, %316 : vector<8x128xf32>
    %318 = arith.truncf %317 : vector<8x128xf32> to vector<8x128xbf16>
    %c0_156 = arith.constant 0 : index
    %c0_157 = arith.constant 0 : index
    %319 = vector.load %arg14[%c0_156, %c0_157] : memref<128x32xbf16, #tpu.memory_space<vmem>>, vector<128x32xbf16>
    %cst_158 = arith.constant dense<0.000000e+00> : vector<8x32xf32>
    %320 = tpu.matmul %318, %319, %cst_158 {dimension_numbers = #tpu.dot_dimension_numbers<[1], [0], [0], [1], [0, 0, 1, 1], [], []>} : vector<8x128xbf16>, vector<128x32xbf16>, vector<8x32xf32> -> vector<8x32xf32>
    %321 = vector.broadcast %280 : vector<1x32xf32> to vector<8x32xf32>
    %322 = arith.addf %320, %321 : vector<8x32xf32>
    %323 = arith.addf %282, %322 : vector<8x32xf32>
    %c0_159 = arith.constant 0 : index
    %c0_160 = arith.constant 0 : index
    %c0_161 = arith.constant 0 : index
    %324 = vector.load %arg16[%c0_159, %c0_160, %c0_161] : memref<1x8x32xf32, #tpu.memory_space<vmem>>, vector<1x8x32xf32>
    %325 = vector.shape_cast %324 : vector<1x8x32xf32> to vector<8x32xf32>
    %326 = vector.shape_cast %323 : vector<8x32xf32> to vector<1x8x32xf32>
    tpu.vector_store %arg16[%c0_159, %c0_160, %c0_161], %326 {strides = array<i32>} : memref<1x8x32xf32, #tpu.memory_space<vmem>>, vector<1x8x32xf32>,
    %c0_162 = arith.constant 0 : index
    %c0_163 = arith.constant 0 : index
    %c0_164 = arith.constant 0 : index
    %327 = vector.load %arg4[%c0_162, %c0_163, %c0_164] : memref<1x8x32xf32, #tpu.memory_space<vmem>>, vector<1x8x32xf32>
    %328 = vector.shape_cast %327 : vector<1x8x32xf32> to vector<8x32xf32>
    %329 = vector.extract_strided_slice %276 {offsets = [8, 0], sizes = [8, 32], strides = [1, 1]} : vector<32x32xf32> to vector<8x32xf32>
    %330 = arith.addf %328, %329 : vector<8x32xf32>
    %cst_165 = arith.constant dense<0.000000e+00> : vector<8xf32>
    %331 = vector.multi_reduction <add>, %330, %cst_165 [1] : vector<8x32xf32> to vector<8xf32>
    %332 = vector.shape_cast %331 : vector<8xf32> to vector<8x1xf32>
    %cst_166 = arith.constant 3.200000e+01 : f32
    %333 = vector.broadcast %cst_166 : f32 to vector<8x1xf32>
    %334 = arith.divf %332, %333 : vector<8x1xf32>
    %335 = vector.broadcast %334 : vector<8x1xf32> to vector<8x32xf32>
    %336 = arith.subf %330, %335 : vector<8x32xf32>
    %337 = arith.mulf %336, %336 : vector<8x32xf32>
    %cst_167 = arith.constant dense<0.000000e+00> : vector<8xf32>
    %338 = vector.multi_reduction <add>, %337, %cst_167 [1] : vector<8x32xf32> to vector<8xf32>
    %339 = vector.shape_cast %338 : vector<8xf32> to vector<8x1xf32>
    %cst_168 = arith.constant 3.200000e+01 : f32
    %340 = vector.broadcast %cst_168 : f32 to vector<8x1xf32>
    %341 = arith.divf %339, %340 : vector<8x1xf32>
    %342 = vector.broadcast %334 : vector<8x1xf32> to vector<8x32xf32>
    %343 = arith.subf %330, %342 : vector<8x32xf32>
    %cst_169 = arith.constant 9.99999974E-6 : f32
    %344 = vector.broadcast %cst_169 : f32 to vector<8x1xf32>
    %345 = arith.addf %341, %344 : vector<8x1xf32>
    %346 = math.rsqrt %345 : vector<8x1xf32>
    %347 = vector.broadcast %346 : vector<8x1xf32> to vector<8x32xf32>
    %348 = arith.mulf %343, %347 : vector<8x32xf32>
    %349 = vector.broadcast %277 : vector<1x32xf32> to vector<8x32xf32>
    %350 = arith.mulf %348, %349 : vector<8x32xf32>
    %351 = vector.broadcast %278 : vector<1x32xf32> to vector<8x32xf32>
    %352 = arith.addf %350, %351 : vector<8x32xf32>
    %353 = arith.truncf %352 : vector<8x32xf32> to vector<8x32xbf16>
    %c0_170 = arith.constant 0 : index
    %c0_171 = arith.constant 0 : index
    %354 = vector.load %arg12[%c0_170, %c0_171] : memref<32x128xbf16, #tpu.memory_space<vmem>>, vector<32x128xbf16>
    %cst_172 = arith.constant dense<0.000000e+00> : vector<8x128xf32>
    %355 = tpu.matmul %353, %354, %cst_172 {dimension_numbers = #tpu.dot_dimension_numbers<[1], [0], [0], [1], [0, 0, 1, 1], [], []>} : vector<8x32xbf16>, vector<32x128xbf16>, vector<8x128xf32> -> vector<8x128xf32>
    %356 = vector.broadcast %279 : vector<1x128xf32> to vector<8x128xf32>
    %357 = arith.addf %355, %356 : vector<8x128xf32>
    %cst_173 = arith.constant 5.000000e-01 : f32
    %358 = vector.broadcast %cst_173 : f32 to vector<8x128xf32>
    %359 = arith.mulf %358, %357 : vector<8x128xf32>
    %cst_174 = arith.constant 0.707106769 : f32
    %360 = vector.broadcast %cst_174 : f32 to vector<8x128xf32>
    %361 = arith.mulf %357, %360 : vector<8x128xf32>
    %362 = math.erf %361 : vector<8x128xf32>
    %cst_175 = arith.constant 1.000000e+00 : f32
    %363 = vector.broadcast %cst_175 : f32 to vector<8x128xf32>
    %364 = arith.addf %363, %362 : vector<8x128xf32>
    %365 = arith.mulf %359, %364 : vector<8x128xf32>
    %366 = arith.truncf %365 : vector<8x128xf32> to vector<8x128xbf16>
    %c0_176 = arith.constant 0 : index
    %c0_177 = arith.constant 0 : index
    %367 = vector.load %arg14[%c0_176, %c0_177] : memref<128x32xbf16, #tpu.memory_space<vmem>>, vector<128x32xbf16>
    %cst_178 = arith.constant dense<0.000000e+00> : vector<8x32xf32>
    %368 = tpu.matmul %366, %367, %cst_178 {dimension_numbers = #tpu.dot_dimension_numbers<[1], [0], [0], [1], [0, 0, 1, 1], [], []>} : vector<8x128xbf16>, vector<128x32xbf16>, vector<8x32xf32> -> vector<8x32xf32>
    %369 = vector.broadcast %280 : vector<1x32xf32> to vector<8x32xf32>
    %370 = arith.addf %368, %369 : vector<8x32xf32>
    %371 = arith.addf %330, %370 : vector<8x32xf32>
    %c0_179 = arith.constant 0 : index
    %c0_180 = arith.constant 0 : index
    %c0_181 = arith.constant 0 : index
    %372 = vector.load %arg19[%c0_179, %c0_180, %c0_181] : memref<1x8x32xf32, #tpu.memory_space<vmem>>, vector<1x8x32xf32>
    %373 = vector.shape_cast %372 : vector<1x8x32xf32> to vector<8x32xf32>
    %374 = vector.shape_cast %371 : vector<8x32xf32> to vector<1x8x32xf32>
    tpu.vector_store %arg19[%c0_179, %c0_180, %c0_181], %374 {strides = array<i32>} : memref<1x8x32xf32, #tpu.memory_space<vmem>>, vector<1x8x32xf32>,
    %c0_182 = arith.constant 0 : index
    %c0_183 = arith.constant 0 : index
    %c0_184 = arith.constant 0 : index
    %375 = vector.load %arg3[%c0_182, %c0_183, %c0_184] : memref<1x8x32xf32, #tpu.memory_space<vmem>>, vector<1x8x32xf32>
    %376 = vector.shape_cast %375 : vector<1x8x32xf32> to vector<8x32xf32>
    %377 = vector.extract_strided_slice %276 {offsets = [16, 0], sizes = [8, 32], strides = [1, 1]} : vector<32x32xf32> to vector<8x32xf32>
    %378 = arith.addf %376, %377 : vector<8x32xf32>
    %cst_185 = arith.constant dense<0.000000e+00> : vector<8xf32>
    %379 = vector.multi_reduction <add>, %378, %cst_185 [1] : vector<8x32xf32> to vector<8xf32>
    %380 = vector.shape_cast %379 : vector<8xf32> to vector<8x1xf32>
    %cst_186 = arith.constant 3.200000e+01 : f32
    %381 = vector.broadcast %cst_186 : f32 to vector<8x1xf32>
    %382 = arith.divf %380, %381 : vector<8x1xf32>
    %383 = vector.broadcast %382 : vector<8x1xf32> to vector<8x32xf32>
    %384 = arith.subf %378, %383 : vector<8x32xf32>
    %385 = arith.mulf %384, %384 : vector<8x32xf32>
    %cst_187 = arith.constant dense<0.000000e+00> : vector<8xf32>
    %386 = vector.multi_reduction <add>, %385, %cst_187 [1] : vector<8x32xf32> to vector<8xf32>
    %387 = vector.shape_cast %386 : vector<8xf32> to vector<8x1xf32>
    %cst_188 = arith.constant 3.200000e+01 : f32
    %388 = vector.broadcast %cst_188 : f32 to vector<8x1xf32>
    %389 = arith.divf %387, %388 : vector<8x1xf32>
    %390 = vector.broadcast %382 : vector<8x1xf32> to vector<8x32xf32>
    %391 = arith.subf %378, %390 : vector<8x32xf32>
    %cst_189 = arith.constant 9.99999974E-6 : f32
    %392 = vector.broadcast %cst_189 : f32 to vector<8x1xf32>
    %393 = arith.addf %389, %392 : vector<8x1xf32>
    %394 = math.rsqrt %393 : vector<8x1xf32>
    %395 = vector.broadcast %394 : vector<8x1xf32> to vector<8x32xf32>
    %396 = arith.mulf %391, %395 : vector<8x32xf32>
    %397 = vector.broadcast %277 : vector<1x32xf32> to vector<8x32xf32>
    %398 = arith.mulf %396, %397 : vector<8x32xf32>
    %399 = vector.broadcast %278 : vector<1x32xf32> to vector<8x32xf32>
    %400 = arith.addf %398, %399 : vector<8x32xf32>
    %401 = arith.truncf %400 : vector<8x32xf32> to vector<8x32xbf16>
    %c0_190 = arith.constant 0 : index
    %c0_191 = arith.constant 0 : index
    %402 = vector.load %arg12[%c0_190, %c0_191] : memref<32x128xbf16, #tpu.memory_space<vmem>>, vector<32x128xbf16>
    %cst_192 = arith.constant dense<0.000000e+00> : vector<8x128xf32>
    %403 = tpu.matmul %401, %402, %cst_192 {dimension_numbers = #tpu.dot_dimension_numbers<[1], [0], [0], [1], [0, 0, 1, 1], [], []>} : vector<8x32xbf16>, vector<32x128xbf16>, vector<8x128xf32> -> vector<8x128xf32>
    %404 = vector.broadcast %279 : vector<1x128xf32> to vector<8x128xf32>
    %405 = arith.addf %403, %404 : vector<8x128xf32>
    %cst_193 = arith.constant 5.000000e-01 : f32
    %406 = vector.broadcast %cst_193 : f32 to vector<8x128xf32>
    %407 = arith.mulf %406, %405 : vector<8x128xf32>
    %cst_194 = arith.constant 0.707106769 : f32
    %408 = vector.broadcast %cst_194 : f32 to vector<8x128xf32>
    %409 = arith.mulf %405, %408 : vector<8x128xf32>
    %410 = math.erf %409 : vector<8x128xf32>
    %cst_195 = arith.constant 1.000000e+00 : f32
    %411 = vector.broadcast %cst_195 : f32 to vector<8x128xf32>
    %412 = arith.addf %411, %410 : vector<8x128xf32>
    %413 = arith.mulf %407, %412 : vector<8x128xf32>
    %414 = arith.truncf %413 : vector<8x128xf32> to vector<8x128xbf16>
    %c0_196 = arith.constant 0 : index
    %c0_197 = arith.constant 0 : index
    %415 = vector.load %arg14[%c0_196, %c0_197] : memref<128x32xbf16, #tpu.memory_space<vmem>>, vector<128x32xbf16>
    %cst_198 = arith.constant dense<0.000000e+00> : vector<8x32xf32>
    %416 = tpu.matmul %414, %415, %cst_198 {dimension_numbers = #tpu.dot_dimension_numbers<[1], [0], [0], [1], [0, 0, 1, 1], [], []>} : vector<8x128xbf16>, vector<128x32xbf16>, vector<8x32xf32> -> vector<8x32xf32>
    %417 = vector.broadcast %280 : vector<1x32xf32> to vector<8x32xf32>
    %418 = arith.addf %416, %417 : vector<8x32xf32>
    %419 = arith.addf %378, %418 : vector<8x32xf32>
    %c0_199 = arith.constant 0 : index
    %c0_200 = arith.constant 0 : index
    %c0_201 = arith.constant 0 : index
    %420 = vector.load %arg18[%c0_199, %c0_200, %c0_201] : memref<1x8x32xf32, #tpu.memory_space<vmem>>, vector<1x8x32xf32>
    %421 = vector.shape_cast %420 : vector<1x8x32xf32> to vector<8x32xf32>
    %422 = vector.shape_cast %419 : vector<8x32xf32> to vector<1x8x32xf32>
    tpu.vector_store %arg18[%c0_199, %c0_200, %c0_201], %422 {strides = array<i32>} : memref<1x8x32xf32, #tpu.memory_space<vmem>>, vector<1x8x32xf32>,
    %423 = vector.extract_strided_slice %276 {offsets = [24, 0], sizes = [8, 32], strides = [1, 1]} : vector<32x32xf32> to vector<8x32xf32>
    %424 = arith.addf %3, %423 : vector<8x32xf32>
    %cst_202 = arith.constant dense<0.000000e+00> : vector<8xf32>
    %425 = vector.multi_reduction <add>, %424, %cst_202 [1] : vector<8x32xf32> to vector<8xf32>
    %426 = vector.shape_cast %425 : vector<8xf32> to vector<8x1xf32>
    %cst_203 = arith.constant 3.200000e+01 : f32
    %427 = vector.broadcast %cst_203 : f32 to vector<8x1xf32>
    %428 = arith.divf %426, %427 : vector<8x1xf32>
    %429 = vector.broadcast %428 : vector<8x1xf32> to vector<8x32xf32>
    %430 = arith.subf %424, %429 : vector<8x32xf32>
    %431 = arith.mulf %430, %430 : vector<8x32xf32>
    %cst_204 = arith.constant dense<0.000000e+00> : vector<8xf32>
    %432 = vector.multi_reduction <add>, %431, %cst_204 [1] : vector<8x32xf32> to vector<8xf32>
    %433 = vector.shape_cast %432 : vector<8xf32> to vector<8x1xf32>
    %cst_205 = arith.constant 3.200000e+01 : f32
    %434 = vector.broadcast %cst_205 : f32 to vector<8x1xf32>
    %435 = arith.divf %433, %434 : vector<8x1xf32>
    %436 = vector.broadcast %428 : vector<8x1xf32> to vector<8x32xf32>
    %437 = arith.subf %424, %436 : vector<8x32xf32>
    %cst_206 = arith.constant 9.99999974E-6 : f32
    %438 = vector.broadcast %cst_206 : f32 to vector<8x1xf32>
    %439 = arith.addf %435, %438 : vector<8x1xf32>
    %440 = math.rsqrt %439 : vector<8x1xf32>
    %441 = vector.broadcast %440 : vector<8x1xf32> to vector<8x32xf32>
    %442 = arith.mulf %437, %441 : vector<8x32xf32>
    %443 = vector.broadcast %277 : vector<1x32xf32> to vector<8x32xf32>
    %444 = arith.mulf %442, %443 : vector<8x32xf32>
    %445 = vector.broadcast %278 : vector<1x32xf32> to vector<8x32xf32>
    %446 = arith.addf %444, %445 : vector<8x32xf32>
    %447 = arith.truncf %446 : vector<8x32xf32> to vector<8x32xbf16>
    %c0_207 = arith.constant 0 : index
    %c0_208 = arith.constant 0 : index
    %448 = vector.load %arg12[%c0_207, %c0_208] : memref<32x128xbf16, #tpu.memory_space<vmem>>, vector<32x128xbf16>
    %cst_209 = arith.constant dense<0.000000e+00> : vector<8x128xf32>
    %449 = tpu.matmul %447, %448, %cst_209 {dimension_numbers = #tpu.dot_dimension_numbers<[1], [0], [0], [1], [0, 0, 1, 1], [], []>} : vector<8x32xbf16>, vector<32x128xbf16>, vector<8x128xf32> -> vector<8x128xf32>
    %450 = vector.broadcast %279 : vector<1x128xf32> to vector<8x128xf32>
    %451 = arith.addf %449, %450 : vector<8x128xf32>
    %cst_210 = arith.constant 5.000000e-01 : f32
    %452 = vector.broadcast %cst_210 : f32 to vector<8x128xf32>
    %453 = arith.mulf %452, %451 : vector<8x128xf32>
    %cst_211 = arith.constant 0.707106769 : f32
    %454 = vector.broadcast %cst_211 : f32 to vector<8x128xf32>
    %455 = arith.mulf %451, %454 : vector<8x128xf32>
    %456 = math.erf %455 : vector<8x128xf32>
    %cst_212 = arith.constant 1.000000e+00 : f32
    %457 = vector.broadcast %cst_212 : f32 to vector<8x128xf32>
    %458 = arith.addf %457, %456 : vector<8x128xf32>
    %459 = arith.mulf %453, %458 : vector<8x128xf32>
    %460 = arith.truncf %459 : vector<8x128xf32> to vector<8x128xbf16>
    %c0_213 = arith.constant 0 : index
    %c0_214 = arith.constant 0 : index
    %461 = vector.load %arg14[%c0_213, %c0_214] : memref<128x32xbf16, #tpu.memory_space<vmem>>, vector<128x32xbf16>
    %cst_215 = arith.constant dense<0.000000e+00> : vector<8x32xf32>
    %462 = tpu.matmul %460, %461, %cst_215 {dimension_numbers = #tpu.dot_dimension_numbers<[1], [0], [0], [1], [0, 0, 1, 1], [], []>} : vector<8x128xbf16>, vector<128x32xbf16>, vector<8x32xf32> -> vector<8x32xf32>
    %463 = vector.broadcast %280 : vector<1x32xf32> to vector<8x32xf32>
    %464 = arith.addf %462, %463 : vector<8x32xf32>
    %465 = arith.addf %424, %464 : vector<8x32xf32>
    %c0_216 = arith.constant 0 : index
    %c0_217 = arith.constant 0 : index
    %c0_218 = arith.constant 0 : index
    %466 = vector.load %arg17[%c0_216, %c0_217, %c0_218] : memref<1x8x32xf32, #tpu.memory_space<vmem>>, vector<1x8x32xf32>
    %467 = vector.shape_cast %466 : vector<1x8x32xf32> to vector<8x32xf32>
    %468 = vector.shape_cast %465 : vector<8x32xf32> to vector<1x8x32xf32>
    tpu.vector_store %arg17[%c0_216, %c0_217, %c0_218], %468 {strides = array<i32>} : memref<1x8x32xf32, #tpu.memory_space<vmem>>, vector<1x8x32xf32>,
    return
  }
  func.func @transform_0(%arg0: i32) -> (i32, i32, i32) {
    %c0_i32 = arith.constant 0 : i32
    %c0_i32_0 = arith.constant 0 : i32
    %c0_i32_1 = arith.constant 0 : i32
    return %arg0, %c0_i32, %c0_i32_0 : i32, i32, i32
  }
  func.func @transform_1(%arg0: i32) -> (i32, i32, i32) {
    %c0_i32 = arith.constant 0 : i32
    %c0_i32_0 = arith.constant 0 : i32
    %c0_i32_1 = arith.constant 0 : i32
    return %arg0, %c0_i32, %c0_i32_0 : i32, i32, i32
  }
  func.func @transform_2(%arg0: i32) -> (i32, i32, i32) {
    %c0_i32 = arith.constant 0 : i32
    %c0_i32_0 = arith.constant 0 : i32
    %c0_i32_1 = arith.constant 0 : i32
    return %arg0, %c0_i32, %c0_i32_0 : i32, i32, i32
  }
  func.func @transform_3(%arg0: i32) -> (i32, i32, i32) {
    %c0_i32 = arith.constant 0 : i32
    %c0_i32_0 = arith.constant 0 : i32
    %c0_i32_1 = arith.constant 0 : i32
    return %arg0, %c0_i32, %c0_i32_0 : i32, i32, i32
  }
  func.func @transform_4(%arg0: i32) -> (i32, i32) {
    %c0_i32 = arith.constant 0 : i32
    %c0_i32_0 = arith.constant 0 : i32
    %c0_i32_1 = arith.constant 0 : i32
    return %c0_i32, %c0_i32_0 : i32, i32
  }
  func.func @transform_5(%arg0: i32) -> (i32, i32) {
    %c0_i32 = arith.constant 0 : i32
    %c0_i32_0 = arith.constant 0 : i32
    %c0_i32_1 = arith.constant 0 : i32
    return %c0_i32, %c0_i32_0 : i32, i32
  }
  func.func @transform_6(%arg0: i32) -> (i32, i32) {
    %c0_i32 = arith.constant 0 : i32
    %c0_i32_0 = arith.constant 0 : i32
    %c0_i32_1 = arith.constant 0 : i32
    return %c0_i32, %c0_i32_0 : i32, i32
  }
  func.func @transform_7(%arg0: i32) -> (i32, i32) {
    %c0_i32 = arith.constant 0 : i32
    %c0_i32_0 = arith.constant 0 : i32
    %c0_i32_1 = arith.constant 0 : i32
    return %c0_i32, %c0_i32_0 : i32, i32
  }
  func.func @transform_8(%arg0: i32) -> (i32, i32) {
    %c0_i32 = arith.constant 0 : i32
    %c0_i32_0 = arith.constant 0 : i32
    %c0_i32_1 = arith.constant 0 : i32
    return %c0_i32, %c0_i32_0 : i32, i32
  }
  func.func @transform_9(%arg0: i32) -> (i32, i32) {
    %c0_i32 = arith.constant 0 : i32
    %c0_i32_0 = arith.constant 0 : i32
    %c0_i32_1 = arith.constant 0 : i32
    return %c0_i32, %c0_i32_0 : i32, i32
  }
  func.func @transform_10(%arg0: i32) -> (i32, i32) {
    %c0_i32 = arith.constant 0 : i32
    %c0_i32_0 = arith.constant 0 : i32
    %c0_i32_1 = arith.constant 0 : i32
    return %c0_i32, %c0_i32_0 : i32, i32
  }
  func.func @transform_11(%arg0: i32) -> (i32, i32) {
    %c0_i32 = arith.constant 0 : i32
    %c0_i32_0 = arith.constant 0 : i32
    %c0_i32_1 = arith.constant 0 : i32
    return %c0_i32, %c0_i32_0 : i32, i32
  }
  func.func @transform_12(%arg0: i32) -> (i32, i32) {
    %c0_i32 = arith.constant 0 : i32
    %c0_i32_0 = arith.constant 0 : i32
    %c0_i32_1 = arith.constant 0 : i32
    return %c0_i32, %c0_i32_0 : i32, i32
  }
  func.func @transform_13(%arg0: i32) -> (i32, i32) {
    %c0_i32 = arith.constant 0 : i32
    %c0_i32_0 = arith.constant 0 : i32
    %c0_i32_1 = arith.constant 0 : i32
    return %c0_i32, %c0_i32_0 : i32, i32
  }
  func.func @transform_14(%arg0: i32) -> (i32, i32) {
    %c0_i32 = arith.constant 0 : i32
    %c0_i32_0 = arith.constant 0 : i32
    %c0_i32_1 = arith.constant 0 : i32
    return %c0_i32, %c0_i32_0 : i32, i32
  }
  func.func @transform_15(%arg0: i32) -> (i32, i32, i32) {
    %c0_i32 = arith.constant 0 : i32
    %c0_i32_0 = arith.constant 0 : i32
    %c0_i32_1 = arith.constant 0 : i32
    return %arg0, %c0_i32, %c0_i32_0 : i32, i32, i32
  }
  func.func @transform_16(%arg0: i32) -> (i32, i32, i32) {
    %c0_i32 = arith.constant 0 : i32
    %c0_i32_0 = arith.constant 0 : i32
    %c0_i32_1 = arith.constant 0 : i32
    return %arg0, %c0_i32, %c0_i32_0 : i32, i32, i32
  }
  func.func @transform_17(%arg0: i32) -> (i32, i32, i32) {
    %c0_i32 = arith.constant 0 : i32
    %c0_i32_0 = arith.constant 0 : i32
    %c0_i32_1 = arith.constant 0 : i32
    return %arg0, %c0_i32, %c0_i32_0 : i32, i32, i32
  }
  func.func @transform_18(%arg0: i32) -> (i32, i32, i32) {
    %c0_i32 = arith.constant 0 : i32
    %c0_i32_0 = arith.constant 0 : i32
    %c0_i32_1 = arith.constant 0 : i32
    return %arg0, %c0_i32, %c0_i32_0 : i32, i32, i32
  }
  func.func @transform_19(%arg0: i32) -> (i32, i32, i32, i32) {
    %c0_i32 = arith.constant 0 : i32
    %c0_i32_0 = arith.constant 0 : i32
    %c0_i32_1 = arith.constant 0 : i32
    %c0_i32_2 = arith.constant 0 : i32
    return %arg0, %c0_i32, %c0_i32_0, %c0_i32_1 : i32, i32, i32, i32
  }
  func.func @transform_20(%arg0: i32) -> (i32, i32, i32, i32) {
    %c0_i32 = arith.constant 0 : i32
    %c0_i32_0 = arith.constant 0 : i32
    %c0_i32_1 = arith.constant 0 : i32
    %c0_i32_2 = arith.constant 0 : i32
    return %arg0, %c0_i32, %c0_i32_0, %c0_i32_1 : i32, i32, i32, i32
  }
  func.func @transform_21(%arg0: i32) -> (i32, i32, i32, i32) {
    %c0_i32 = arith.constant 0 : i32
    %c0_i32_0 = arith.constant 0 : i32
    %c0_i32_1 = arith.constant 0 : i32
    %c0_i32_2 = arith.constant 0 : i32
    return %arg0, %c0_i32, %c0_i32_0, %c0_i32_1 : i32, i32, i32, i32
  }
  func.func @transform_22(%arg0: i32) -> (i32, i32, i32, i32) {
    %c0_i32 = arith.constant 0 : i32
    %c0_i32_0 = arith.constant 0 : i32
    %c0_i32_1 = arith.constant 0 : i32
    %c0_i32_2 = arith.constant 0 : i32
    return %arg0, %c0_i32, %c0_i32_0, %c0_i32_1 : i32, i32, i32, i32
  }
  func.func @transform_23(%arg0: i32) -> (i32, i32, i32) {
    %c0_i32 = arith.constant 0 : i32
    %c0_i32_0 = arith.constant 0 : i32
    %c0_i32_1 = arith.constant 0 : i32
    return %arg0, %c0_i32, %c0_i32_0 : i32, i32, i32
  }
  func.func @transform_24(%arg0: i32) -> (i32, i32, i32) {
    %c0_i32 = arith.constant 0 : i32
    %c0_i32_0 = arith.constant 0 : i32
    %c0_i32_1 = arith.constant 0 : i32
    return %arg0, %c0_i32, %c0_i32_0 : i32, i32, i32
  }
}

</mosaic_0001>

<llo_original>
// kernel: tpu_custom_call.1
$region0: #{tpu_custom_call.1}
  #allocation0 [shape = 'u32[]', space=smem, size = 0x4, offset = 0x4, fixed_abs, tag = 'smem constant byte address 0x4 - core index']
  #allocation1 [shape = 'u32[144,128]{1,0:T(1,128)}', space=vmem, size = 0x12000, scoped, tag = 'internal scratch']
  #allocation2 [shape = 'f32[32,32]{1,0:T(8,128)}', space=vmem, size = 0x4000, scoped, tag = 'scratch operand']
  %s0 = inlined_call_operand.vmem [shape: f32[2,8,32], index: 0, kind: input, shape index: {}]
  %s1 = inlined_call_operand.vmem [shape: f32[2,8,32], index: 1, kind: input, shape index: {}]
  %s2 = inlined_call_operand.vmem [shape: f32[2,8,32], index: 2, kind: input, shape index: {}]
  %s3 = inlined_call_operand.vmem [shape: f32[2,8,32], index: 3, kind: input, shape index: {}]
  %s4 = inlined_call_operand.vmem [shape: f32[1,32], index: 4, kind: input, shape index: {}]
  %s5 = inlined_call_operand.vmem [shape: f32[1,32], index: 5, kind: input, shape index: {}]
  %s6 = inlined_call_operand.vmem [shape: bf16[32,96], index: 6, kind: input, shape index: {}]
  %s7 = inlined_call_operand.hbm [shape: bf16[32,32], index: 7, kind: input, shape index: {}]
  %s8 = inlined_call_operand.hbm [shape: f32[1,32], index: 8, kind: input, shape index: {}]
  %s9 = inlined_call_operand.hbm [shape: f32[1,32], index: 9, kind: input, shape index: {}]
  %s10 = inlined_call_operand.vmem [shape: f32[1,32], index: 10, kind: input, shape index: {}]
  %s11 = inlined_call_operand.vmem [shape: bf16[32,128], index: 11, kind: input, shape index: {}]
  %s12 = inlined_call_operand.vmem [shape: f32[1,128], index: 12, kind: input, shape index: {}]
  %s13 = inlined_call_operand.vmem [shape: bf16[128,32], index: 13, kind: input, shape index: {}]
  %s14 = inlined_call_operand.vmem [shape: f32[1,32], index: 14, kind: input, shape index: {}]
  %s15 = inlined_call_operand.hbm [shape: f32[2,8,32], index: 15, kind: output, shape index: {0}]
  %s16 = inlined_call_operand.hbm [shape: f32[2,8,32], index: 16, kind: output, shape index: {1}]
  %s17 = inlined_call_operand.hbm [shape: f32[2,8,32], index: 17, kind: output, shape index: {2}]
  %s18 = inlined_call_operand.hbm [shape: f32[2,8,32], index: 18, kind: output, shape index: {3}]
  %s19 = inlined_call_operand.hbm [shape: f32[2,4,8,8], index: 19, kind: output, shape index: {4}]
  %s20 = inlined_call_operand.hbm [shape: f32[2,4,8,8], index: 20, kind: output, shape index: {5}]
  %s21 = inlined_call_operand.hbm [shape: f32[2,4,8,8], index: 21, kind: output, shape index: {6}]
  %s22 = inlined_call_operand.hbm [shape: f32[2,4,8,8], index: 22, kind: output, shape index: {7}]
  %s23 = inlined_call_operand.hbm [shape: f32[2,8,32], index: 23, kind: output, shape index: {8}]
  %s24 = inlined_call_operand.hbm [shape: f32[2,8,32], index: 24, kind: output, shape index: {9}]
  %25 = xla_tuple %s15, %s16, %s17, %s18, %s19, %s20, %s21, %s22, %s23, %s24
  %s26 = sld [smem:[#allocation0]]
  $region177: #{tpu_custom_call.1} parent=0
    _
  %s28 = ssub.s32 1, %s26
  %s29 = scalar_select 0, %s28, %s26
  $region1: #{tpu_custom_call.1} parent=0
    #allocation3 [shape = 'u8[8192]{0}', space=vmem, size = 0x2000, scoped, tag = 'input window, operand 7, single buffered']
    #allocation4 [shape = 's32[2]{0}', space=sflag, size = 0x8, scoped, tag = 'scoped memory for tpu_custom_call.1']
    #allocation5 [shape = 's32[2]{0}', space=sflag, size = 0x8, scoped, tag = 'scoped memory for tpu_custom_call.1']
    #allocation6 [shape = 'u8[512]{0}', space=vmem, size = 0x400, scoped, tag = 'input window, operand 8, single buffered']
    #allocation7 [shape = 's32[1]{0}', space=sflag, size = 0x4, scoped, tag = 'scoped memory for tpu_custom_call.1']
    #allocation8 [shape = 'u8[512]{0}', space=vmem, size = 0x400, scoped, tag = 'input window, operand 9, single buffered']
    #allocation9 [shape = 'u8[8192]{0}', space=vmem, size = 0x2000, scoped, tag = 'output window, operand 0']
    #allocation10 [shape = 'u8[8192]{0}', space=vmem, size = 0x2000, scoped, tag = 'output window, operand 1']
    #allocation11 [shape = 's32[2]{0}', space=sflag, size = 0x8, scoped, tag = 'scoped memory for tpu_custom_call.1']
    #allocation12 [shape = 'u8[8192]{0}', space=vmem, size = 0x2000, scoped, tag = 'output window, operand 2']
    #allocation13 [shape = 'u8[8192]{0}', space=vmem, size = 0x2000, scoped, tag = 'output window, operand 3']
    #allocation14 [shape = 's32[2]{0}', space=sflag, size = 0x8, scoped, tag = 'scoped memory for tpu_custom_call.1']
    #allocation15 [shape = 'u8[32768]{0}', space=vmem, size = 0x8000, scoped, tag = 'output window, operand 4']
    #allocation16 [shape = 'u8[32768]{0}', space=vmem, size = 0x8000, scoped, tag = 'output window, operand 5']
    #allocation17 [shape = 's32[2]{0}', space=sflag, size = 0x8, scoped, tag = 'scoped memory for tpu_custom_call.1']
    #allocation18 [shape = 'u8[32768]{0}', space=vmem, size = 0x8000, scoped, tag = 'output window, operand 6']
    #allocation19 [shape = 'u8[32768]{0}', space=vmem, size = 0x8000, scoped, tag = 'output window, operand 7']
    #allocation20 [shape = 's32[2]{0}', space=sflag, size = 0x8, scoped, tag = 'scoped memory for tpu_custom_call.1']
    #allocation21 [shape = 'u8[8192]{0}', space=vmem, size = 0x2000, scoped, tag = 'output window, operand 8']
    #allocation22 [shape = 'u8[8192]{0}', space=vmem, size = 0x2000, scoped, tag = 'output window, operand 9']
    #allocation23 [shape = 's32[2]{0}', space=sflag, size = 0x8, scoped, tag = 'scoped memory for tpu_custom_call.1']
    %30 = vsyncpa [#allocation4], 0
    %31 = vsyncpa [#allocation7], 0
    %32 = vsyncpa [#allocation5], 0
    %s33 = scalar_lea.sflag [#allocation5], 1
    %34 = vsyncpa %s33, 0
    %35 = vsyncpa [#allocation11], 0
    %s36 = scalar_lea.sflag [#allocation11], 1
    %37 = vsyncpa %s36, 0
    %38 = vsyncpa [#allocation14], 0
    %s39 = scalar_lea.sflag [#allocation14], 1
    %40 = vsyncpa %s39, 0
    %41 = vsyncpa [#allocation17], 0
    %s42 = scalar_lea.sflag [#allocation17], 1
    %43 = vsyncpa %s42, 0
    %44 = vsyncpa [#allocation20], 0
    %s45 = scalar_lea.sflag [#allocation20], 1
    %46 = vsyncpa %s45, 0
    %47 = vsyncpa [#allocation23], 0
    %s48 = scalar_lea.sflag [#allocation23], 1
    %49 = vsyncpa %s48, 0
    loop: start=0, step=1, limit=4
    $region2: #{tpu_custom_call.1} parent=1 // loop_pre_header
      _
    $region3: #{tpu_custom_call.1} parent=1 // loop_header
      %s51 = sphi 0, %s55
      %p52 = scmp.ge.s32.totalorder %s51, 4
      %s61 = sphi 0, %s63
      %s64 = sphi 0, %s61
      %s65 = sphi 0, %s64
      %s81 = sphi 0, %s65
      %s87 = sphi 0, %s89
      %s90 = sphi 0, %s87
      %s91 = sphi 0, %s90
      %s107 = sphi 0, %s91
      %s113 = sphi 0, %s115
      %s116 = sphi 0, %s113
      %s117 = sphi 0, %s116
      %s133 = sphi 0, %s117
      %s139 = sphi 0, %s141
      %s142 = sphi 0, %s139
      %s143 = sphi 0, %s142
      %s159 = sphi 0, %s143
      %s163 = sphi 0, %s163
      %s165 = sphi 0, %s163
      %s166 = sphi 0, %s165
      %s180 = sphi 0, %s166
      %s184 = sphi 0, %s184
      %s186 = sphi 0, %s184
      %s187 = sphi 0, %s186
      %s201 = sphi 0, %s187
      %s205 = sphi 0, %s205
      %s207 = sphi 0, %s205
      %s208 = sphi 0, %s207
      %s222 = sphi 0, %s208
      %s226 = sphi 0, %s226
      %s228 = sphi 0, %s226
      %s229 = sphi 0, %s228
      %s243 = sphi 0, %s229
      %s247 = sphi 0, %s247
      %s249 = sphi 0, %s247
      %s250 = sphi 0, %s249
      %s264 = sphi 0, %s250
      %s268 = sphi 0, %s268
      %s270 = sphi 0, %s268
      %s271 = sphi 0, %s270
      %s285 = sphi 0, %s271
      %s289 = sphi 0, %s289
      %s291 = sphi 0, %s289
      %s292 = sphi 0, %s291
      %s306 = sphi 0, %s292
      %s310 = sphi 0, %s310
      %s312 = sphi 0, %s310
      %s313 = sphi 0, %s312
      %s327 = sphi 0, %s313
      %s331 = sphi 0, %s331
      %s333 = sphi 0, %s331
      %s334 = sphi 0, %s333
      %s348 = sphi 0, %s334
      %s352 = sphi 0, %s352
      %s354 = sphi 0, %s352
      %s355 = sphi 0, %s354
      %s369 = sphi 0, %s355
      %s373 = sphi 0, %s373
      %s375 = sphi 0, %s373
      %s376 = sphi 0, %s375
      %s390 = sphi 0, %s376
      %s396 = sphi 0, %s398
      %s399 = sphi 0, %s396
      %s400 = sphi 0, %s399
      %s416 = sphi 0, %s400
      %s422 = sphi 0, %s424
      %s425 = sphi 0, %s422
      %s426 = sphi 0, %s425
      %s442 = sphi 0, %s426
      %s448 = sphi 0, %s450
      %s451 = sphi 0, %s448
      %s452 = sphi 0, %s451
      %s468 = sphi 0, %s452
      %s474 = sphi 0, %s476
      %s477 = sphi 0, %s474
      %s478 = sphi 0, %s477
      %s494 = sphi 0, %s478
      %s500 = sphi 0, %s502
      %s503 = sphi 0, %s500
      %s504 = sphi 0, %s503
      %s520 = sphi 0, %s504
      %s526 = sphi 0, %s528
      %s529 = sphi 0, %s526
      %s530 = sphi 0, %s529
      %s546 = sphi 0, %s530
      %s552 = sphi 0, %s554
      %s555 = sphi 0, %s552
      %s556 = sphi 0, %s555
      %s572 = sphi 0, %s556
      %s578 = sphi 0, %s580
      %s581 = sphi 0, %s578
      %s582 = sphi 0, %s581
      %s598 = sphi 0, %s582
      %s604 = sphi 0, %s606
      %s607 = sphi 0, %s604
      %s608 = sphi 0, %s607
      %s624 = sphi 0, %s608
      %s630 = sphi 0, %s632
      %s633 = sphi 0, %s630
      %s634 = sphi 0, %s633
      %s650 = sphi 0, %s634
    $region4: #{tpu_custom_call.1} parent=1 // loop_header_branch
      %54 = sbr.rel (%p52) target = $region8
    $region5: #{tpu_custom_call.1} parent=1 // loop_body
      %s56 = ssub.s32 %s51, 1
      %s57 = ssub.s32 %s51, 2
      %s58 = sadd.s32 %s51, 1
      %s59 = ssub.s32 %s51, %s58
      %p60 = scmp.eq.s32.totalorder %s59, 0
      %s62 = sadd.s32 %s61, 1
      %s63 = scalar_select %p60, %s61, %s62
      %p66 = pneg %p60
      %p67 = scmp.eq.s32.totalorder %s51, 1
      %p68 = por %p66, %p67
      %p69 = scmp.ne.s32.totalorder %s61, %s64
      %p70 = scmp.eq.s32.totalorder %s51, 0
      %p71 = por %p69, %p70
      %p72 = scmp.ne.s32.totalorder %s61, %s64
      %p73 = scmp.eq.s32.totalorder %s56, 1
      %p74 = por %p72, %p73
      %p75 = scmp.ne.s32.totalorder %s64, %s65
      %p76 = scmp.eq.s32.totalorder %s56, 0
      %p77 = por %p75, %p76
      %p78 = scmp.ne.s32.totalorder %s64, %s65
      %p79 = scmp.eq.s32.totalorder %s57, 1
      %p80 = por %p78, %p79
      %p82 = scmp.ne.s32.totalorder %s65, %s81
      %p83 = scmp.eq.s32.totalorder %s57, 0
      %p84 = por %p82, %p83
      %s85 = ssub.s32 %s51, %s58
      %p86 = scmp.eq.s32.totalorder %s85, 0
      %s88 = sadd.s32 %s87, 1
      %s89 = scalar_select %p86, %s87, %s88
      %p92 = pneg %p86
      %p93 = scmp.eq.s32.totalorder %s51, 1
      %p94 = por %p92, %p93
      %p95 = scmp.ne.s32.totalorder %s87, %s90
      %p96 = scmp.eq.s32.totalorder %s51, 0
      %p97 = por %p95, %p96
      %p98 = scmp.ne.s32.totalorder %s87, %s90
      %p99 = scmp.eq.s32.totalorder %s56, 1
      %p100 = por %p98, %p99
      %p101 = scmp.ne.s32.totalorder %s90, %s91
      %p102 = scmp.eq.s32.totalorder %s56, 0
      %p103 = por %p101, %p102
      %p104 = scmp.ne.s32.totalorder %s90, %s91
      %p105 = scmp.eq.s32.totalorder %s57, 1
      %p106 = por %p104, %p105
      %p108 = scmp.ne.s32.totalorder %s91, %s107
      %p109 = scmp.eq.s32.totalorder %s57, 0
      %p110 = por %p108, %p109
      %s111 = ssub.s32 %s51, %s58
      %p112 = scmp.eq.s32.totalorder %s111, 0
      %s114 = sadd.s32 %s113, 1
      %s115 = scalar_select %p112, %s113, %s114
      %p118 = pneg %p112
      %p119 = scmp.eq.s32.totalorder %s51, 1
      %p120 = por %p118, %p119
      %p121 = scmp.ne.s32.totalorder %s113, %s116
      %p122 = scmp.eq.s32.totalorder %s51, 0
      %p123 = por %p121, %p122
      %p124 = scmp.ne.s32.totalorder %s113, %s116
      %p125 = scmp.eq.s32.totalorder %s56, 1
      %p126 = por %p124, %p125
      %p127 = scmp.ne.s32.totalorder %s116, %s117
      %p128 = scmp.eq.s32.totalorder %s56, 0
      %p129 = por %p127, %p128
      %p130 = scmp.ne.s32.totalorder %s116, %s117
      %p131 = scmp.eq.s32.totalorder %s57, 1
      %p132 = por %p130, %p131
      %p134 = scmp.ne.s32.totalorder %s117, %s133
      %p135 = scmp.eq.s32.totalorder %s57, 0
      %p136 = por %p134, %p135
      %s137 = ssub.s32 %s51, %s58
      %p138 = scmp.eq.s32.totalorder %s137, 0
      %s140 = sadd.s32 %s139, 1
      %s141 = scalar_select %p138, %s139, %s140
      %p144 = pneg %p138
      %p145 = scmp.eq.s32.totalorder %s51, 1
      %p146 = por %p144, %p145
      %p147 = scmp.ne.s32.totalorder %s139, %s142
      %p148 = scmp.eq.s32.totalorder %s51, 0
      %p149 = por %p147, %p148
      %p150 = scmp.ne.s32.totalorder %s139, %s142
      %p151 = scmp.eq.s32.totalorder %s56, 1
      %p152 = por %p150, %p151
      %p153 = scmp.ne.s32.totalorder %s142, %s143
      %p154 = scmp.eq.s32.totalorder %s56, 0
      %p155 = por %p153, %p154
      %p156 = scmp.ne.s32.totalorder %s142, %s143
      %p157 = scmp.eq.s32.totalorder %s57, 1
      %p158 = por %p156, %p157
      %p160 = scmp.ne.s32.totalorder %s143, %s159
      %p161 = scmp.eq.s32.totalorder %s57, 0
      %p162 = por %p160, %p161
      %s164 = sadd.s32 %s163, 1
      %p167 = scmp.eq.s32.totalorder %s51, 1
      %p168 = scmp.ne.s32.totalorder %s163, %s165
      %p169 = scmp.eq.s32.totalorder %s51, 0
      %p170 = por %p168, %p169
      %p171 = scmp.ne.s32.totalorder %s163, %s165
      %p172 = scmp.eq.s32.totalorder %s56, 1
      %p173 = por %p171, %p172
      %p174 = scmp.ne.s32.totalorder %s165, %s166
      %p175 = scmp.eq.s32.totalorder %s56, 0
      %p176 = por %p174, %p175
      %p177 = scmp.ne.s32.totalorder %s165, %s166
      %p178 = scmp.eq.s32.totalorder %s57, 1
      %p179 = por %p177, %p178
      %p181 = scmp.ne.s32.totalorder %s166, %s180
      %p182 = scmp.eq.s32.totalorder %s57, 0
      %p183 = por %p181, %p182
      %s185 = sadd.s32 %s184, 1
      %p188 = scmp.eq.s32.totalorder %s51, 1
      %p189 = scmp.ne.s32.totalorder %s184, %s186
      %p190 = scmp.eq.s32.totalorder %s51, 0
      %p191 = por %p189, %p190
      %p192 = scmp.ne.s32.totalorder %s184, %s186
      %p193 = scmp.eq.s32.totalorder %s56, 1
      %p194 = por %p192, %p193
      %p195 = scmp.ne.s32.totalorder %s186, %s187
      %p196 = scmp.eq.s32.totalorder %s56, 0
      %p197 = por %p195, %p196
      %p198 = scmp.ne.s32.totalorder %s186, %s187
      %p199 = scmp.eq.s32.totalorder %s57, 1
      %p200 = por %p198, %p199
      %p202 = scmp.ne.s32.totalorder %s187, %s201
      %p203 = scmp.eq.s32.totalorder %s57, 0
      %p204 = por %p202, %p203
      %s206 = sadd.s32 %s205, 1
      %p209 = scmp.eq.s32.totalorder %s51, 1
      %p210 = scmp.ne.s32.totalorder %s205, %s207
      %p211 = scmp.eq.s32.totalorder %s51, 0
      %p212 = por %p210, %p211
      %p213 = scmp.ne.s32.totalorder %s205, %s207
      %p214 = scmp.eq.s32.totalorder %s56, 1
      %p215 = por %p213, %p214
      %p216 = scmp.ne.s32.totalorder %s207, %s208
      %p217 = scmp.eq.s32.totalorder %s56, 0
      %p218 = por %p216, %p217
      %p219 = scmp.ne.s32.totalorder %s207, %s208
      %p220 = scmp.eq.s32.totalorder %s57, 1
      %p221 = por %p219, %p220
      %p223 = scmp.ne.s32.totalorder %s208, %s222
      %p224 = scmp.eq.s32.totalorder %s57, 0
      %p225 = por %p223, %p224
      %s227 = sadd.s32 %s226, 1
      %p230 = scmp.eq.s32.totalorder %s51, 1
      %p231 = scmp.ne.s32.totalorder %s226, %s228
      %p232 = scmp.eq.s32.totalorder %s51, 0
      %p233 = por %p231, %p232
      %p234 = scmp.ne.s32.totalorder %s226, %s228
      %p235 = scmp.eq.s32.totalorder %s56, 1
      %p236 = por %p234, %p235
      %p237 = scmp.ne.s32.totalorder %s228, %s229
      %p238 = scmp.eq.s32.totalorder %s56, 0
      %p239 = por %p237, %p238
      %p240 = scmp.ne.s32.totalorder %s228, %s229
      %p241 = scmp.eq.s32.totalorder %s57, 1
      %p242 = por %p240, %p241
      %p244 = scmp.ne.s32.totalorder %s229, %s243
      %p245 = scmp.eq.s32.totalorder %s57, 0
      %p246 = por %p244, %p245
      %s248 = sadd.s32 %s247, 1
      %p251 = scmp.eq.s32.totalorder %s51, 1
      %p252 = scmp.ne.s32.totalorder %s247, %s249
      %p253 = scmp.eq.s32.totalorder %s51, 0
      %p254 = por %p252, %p253
      %p255 = scmp.ne.s32.totalorder %s247, %s249
      %p256 = scmp.eq.s32.totalorder %s56, 1
      %p257 = por %p255, %p256
      %p258 = scmp.ne.s32.totalorder %s249, %s250
      %p259 = scmp.eq.s32.totalorder %s56, 0
      %p260 = por %p258, %p259
      %p261 = scmp.ne.s32.totalorder %s249, %s250
      %p262 = scmp.eq.s32.totalorder %s57, 1
      %p263 = por %p261, %p262
      %p265 = scmp.ne.s32.totalorder %s250, %s264
      %p266 = scmp.eq.s32.totalorder %s57, 0
      %p267 = por %p265, %p266
      %s269 = sadd.s32 %s268, 1
      %p272 = scmp.eq.s32.totalorder %s51, 1
      %p273 = scmp.ne.s32.totalorder %s268, %s270
      %p274 = scmp.eq.s32.totalorder %s51, 0
      %p275 = por %p273, %p274
      %p276 = scmp.ne.s32.totalorder %s268, %s270
      %p277 = scmp.eq.s32.totalorder %s56, 1
      %p278 = por %p276, %p277
      %p279 = scmp.ne.s32.totalorder %s270, %s271
      %p280 = scmp.eq.s32.totalorder %s56, 0
      %p281 = por %p279, %p280
      %p282 = scmp.ne.s32.totalorder %s270, %s271
      %p283 = scmp.eq.s32.totalorder %s57, 1
      %p284 = por %p282, %p283
      %p286 = scmp.ne.s32.totalorder %s271, %s285
      %p287 = scmp.eq.s32.totalorder %s57, 0
      %p288 = por %p286, %p287
      %s290 = sadd.s32 %s289, 1
      %p293 = scmp.eq.s32.totalorder %s51, 1
      %p294 = scmp.ne.s32.totalorder %s289, %s291
      %p295 = scmp.eq.s32.totalorder %s51, 0
      %p296 = por %p294, %p295
      %p297 = scmp.ne.s32.totalorder %s289, %s291
      %p298 = scmp.eq.s32.totalorder %s56, 1
      %p299 = por %p297, %p298
      %p300 = scmp.ne.s32.totalorder %s291, %s292
      %p301 = scmp.eq.s32.totalorder %s56, 0
      %p302 = por %p300, %p301
      %p303 = scmp.ne.s32.totalorder %s291, %s292
      %p304 = scmp.eq.s32.totalorder %s57, 1
      %p305 = por %p303, %p304
      %p307 = scmp.ne.s32.totalorder %s292, %s306
      %p308 = scmp.eq.s32.totalorder %s57, 0
      %p309 = por %p307, %p308
      %s311 = sadd.s32 %s310, 1
      %p314 = scmp.eq.s32.totalorder %s51, 1
      %p315 = scmp.ne.s32.totalorder %s310, %s312
      %p316 = scmp.eq.s32.totalorder %s51, 0
      %p317 = por %p315, %p316
      %p318 = scmp.ne.s32.totalorder %s310, %s312
      %p319 = scmp.eq.s32.totalorder %s56, 1
      %p320 = por %p318, %p319
      %p321 = scmp.ne.s32.totalorder %s312, %s313
      %p322 = scmp.eq.s32.totalorder %s56, 0
      %p323 = por %p321, %p322
      %p324 = scmp.ne.s32.totalorder %s312, %s313
      %p325 = scmp.eq.s32.totalorder %s57, 1
      %p326 = por %p324, %p325
      %p328 = scmp.ne.s32.totalorder %s313, %s327
      %p329 = scmp.eq.s32.totalorder %s57, 0
      %p330 = por %p328, %p329
      %s332 = sadd.s32 %s331, 1
      %p335 = scmp.eq.s32.totalorder %s51, 1
      %p336 = scmp.ne.s32.totalorder %s331, %s333
      %p337 = scmp.eq.s32.totalorder %s51, 0
      %p338 = por %p336, %p337
      %p339 = scmp.ne.s32.totalorder %s331, %s333
      %p340 = scmp.eq.s32.totalorder %s56, 1
      %p341 = por %p339, %p340
      %p342 = scmp.ne.s32.totalorder %s333, %s334
      %p343 = scmp.eq.s32.totalorder %s56, 0
      %p344 = por %p342, %p343
      %p345 = scmp.ne.s32.totalorder %s333, %s334
      %p346 = scmp.eq.s32.totalorder %s57, 1
      %p347 = por %p345, %p346
      %p349 = scmp.ne.s32.totalorder %s334, %s348
      %p350 = scmp.eq.s32.totalorder %s57, 0
      %p351 = por %p349, %p350
      %s353 = sadd.s32 %s352, 1
      %p356 = scmp.eq.s32.totalorder %s51, 1
      %p357 = scmp.ne.s32.totalorder %s352, %s354
      %p358 = scmp.eq.s32.totalorder %s51, 0
      %p359 = por %p357, %p358
      %p360 = scmp.ne.s32.totalorder %s352, %s354
      %p361 = scmp.eq.s32.totalorder %s56, 1
      %p362 = por %p360, %p361
      %p363 = scmp.ne.s32.totalorder %s354, %s355
      %p364 = scmp.eq.s32.totalorder %s56, 0
      %p365 = por %p363, %p364
      %p366 = scmp.ne.s32.totalorder %s354, %s355
      %p367 = scmp.eq.s32.totalorder %s57, 1
      %p368 = por %p366, %p367
      %p370 = scmp.ne.s32.totalorder %s355, %s369
      %p371 = scmp.eq.s32.totalorder %s57, 0
      %p372 = por %p370, %p371
      %s374 = sadd.s32 %s373, 1
      %p377 = scmp.eq.s32.totalorder %s51, 1
      %p378 = scmp.ne.s32.totalorder %s373, %s375
      %p379 = scmp.eq.s32.totalorder %s51, 0
      %p380 = por %p378, %p379
      %p381 = scmp.ne.s32.totalorder %s373, %s375
      %p382 = scmp.eq.s32.totalorder %s56, 1
      %p383 = por %p381, %p382
      %p384 = scmp.ne.s32.totalorder %s375, %s376
      %p385 = scmp.eq.s32.totalorder %s56, 0
      %p386 = por %p384, %p385
      %p387 = scmp.ne.s32.totalorder %s375, %s376
      %p388 = scmp.eq.s32.totalorder %s57, 1
      %p389 = por %p387, %p388
      %p391 = scmp.ne.s32.totalorder %s376, %s390
      %p392 = scmp.eq.s32.totalorder %s57, 0
      %p393 = por %p391, %p392
      %s394 = ssub.s32 %s51, %s58
      %p395 = scmp.eq.s32.totalorder %s394, 0
      %s397 = sadd.s32 %s396, 1
      %s398 = scalar_select %p395, %s396, %s397
      %p401 = pneg %p395
      %p402 = scmp.eq.s32.totalorder %s51, 1
      %p403 = por %p401, %p402
      %p404 = scmp.ne.s32.totalorder %s396, %s399
      %p405 = scmp.eq.s32.totalorder %s51, 0
      %p406 = por %p404, %p405
      %p407 = scmp.ne.s32.totalorder %s396, %s399
      %p408 = scmp.eq.s32.totalorder %s56, 1
      %p409 = por %p407, %p408
      %p410 = scmp.ne.s32.totalorder %s399, %s400
      %p411 = scmp.eq.s32.totalorder %s56, 0
      %p412 = por %p410, %p411
      %p413 = scmp.ne.s32.totalorder %s399, %s400
      %p414 = scmp.eq.s32.totalorder %s57, 1
      %p415 = por %p413, %p414
      %p417 = scmp.ne.s32.totalorder %s400, %s416
      %p418 = scmp.eq.s32.totalorder %s57, 0
      %p419 = por %p417, %p418
      %s420 = ssub.s32 %s51, %s58
      %p421 = scmp.eq.s32.totalorder %s420, 0
      %s423 = sadd.s32 %s422, 1
      %s424 = scalar_select %p421, %s422, %s423
      %p427 = pneg %p421
      %p428 = scmp.eq.s32.totalorder %s51, 1
      %p429 = por %p427, %p428
      %p430 = scmp.ne.s32.totalorder %s422, %s425
      %p431 = scmp.eq.s32.totalorder %s51, 0
      %p432 = por %p430, %p431
      %p433 = scmp.ne.s32.totalorder %s422, %s425
      %p434 = scmp.eq.s32.totalorder %s56, 1
      %p435 = por %p433, %p434
      %p436 = scmp.ne.s32.totalorder %s425, %s426
      %p437 = scmp.eq.s32.totalorder %s56, 0
      %p438 = por %p436, %p437
      %p439 = scmp.ne.s32.totalorder %s425, %s426
      %p440 = scmp.eq.s32.totalorder %s57, 1
      %p441 = por %p439, %p440
      %p443 = scmp.ne.s32.totalorder %s426, %s442
      %p444 = scmp.eq.s32.totalorder %s57, 0
      %p445 = por %p443, %p444
      %s446 = ssub.s32 %s51, %s58
      %p447 = scmp.eq.s32.totalorder %s446, 0
      %s449 = sadd.s32 %s448, 1
      %s450 = scalar_select %p447, %s448, %s449
      %p453 = pneg %p447
      %p454 = scmp.eq.s32.totalorder %s51, 1
      %p455 = por %p453, %p454
      %p456 = scmp.ne.s32.totalorder %s448, %s451
      %p457 = scmp.eq.s32.totalorder %s51, 0
      %p458 = por %p456, %p457
      %p459 = scmp.ne.s32.totalorder %s448, %s451
      %p460 = scmp.eq.s32.totalorder %s56, 1
      %p461 = por %p459, %p460
      %p462 = scmp.ne.s32.totalorder %s451, %s452
      %p463 = scmp.eq.s32.totalorder %s56, 0
      %p464 = por %p462, %p463
      %p465 = scmp.ne.s32.totalorder %s451, %s452
      %p466 = scmp.eq.s32.totalorder %s57, 1
      %p467 = por %p465, %p466
      %p469 = scmp.ne.s32.totalorder %s452, %s468
      %p470 = scmp.eq.s32.totalorder %s57, 0
      %p471 = por %p469, %p470
      %s472 = ssub.s32 %s51, %s58
      %p473 = scmp.eq.s32.totalorder %s472, 0
      %s475 = sadd.s32 %s474, 1
      %s476 = scalar_select %p473, %s474, %s475
      %p479 = pneg %p473
      %p480 = scmp.eq.s32.totalorder %s51, 1
      %p481 = por %p479, %p480
      %p482 = scmp.ne.s32.totalorder %s474, %s477
      %p483 = scmp.eq.s32.totalorder %s51, 0
      %p484 = por %p482, %p483
      %p485 = scmp.ne.s32.totalorder %s474, %s477
      %p486 = scmp.eq.s32.totalorder %s56, 1
      %p487 = por %p485, %p486
      %p488 = scmp.ne.s32.totalorder %s477, %s478
      %p489 = scmp.eq.s32.totalorder %s56, 0
      %p490 = por %p488, %p489
      %p491 = scmp.ne.s32.totalorder %s477, %s478
      %p492 = scmp.eq.s32.totalorder %s57, 1
      %p493 = por %p491, %p492
      %p495 = scmp.ne.s32.totalorder %s478, %s494
      %p496 = scmp.eq.s32.totalorder %s57, 0
      %p497 = por %p495, %p496
      %s498 = ssub.s32 %s51, %s58
      %p499 = scmp.eq.s32.totalorder %s498, 0
      %s501 = sadd.s32 %s500, 1
      %s502 = scalar_select %p499, %s500, %s501
      %p505 = pneg %p499
      %p506 = scmp.eq.s32.totalorder %s51, 1
      %p507 = por %p505, %p506
      %p508 = scmp.ne.s32.totalorder %s500, %s503
      %p509 = scmp.eq.s32.totalorder %s51, 0
      %p510 = por %p508, %p509
      %p511 = scmp.ne.s32.totalorder %s500, %s503
      %p512 = scmp.eq.s32.totalorder %s56, 1
      %p513 = por %p511, %p512
      %p514 = scmp.ne.s32.totalorder %s503, %s504
      %p515 = scmp.eq.s32.totalorder %s56, 0
      %p516 = por %p514, %p515
      %p517 = scmp.ne.s32.totalorder %s503, %s504
      %p518 = scmp.eq.s32.totalorder %s57, 1
      %p519 = por %p517, %p518
      %p521 = scmp.ne.s32.totalorder %s504, %s520
      %p522 = scmp.eq.s32.totalorder %s57, 0
      %p523 = por %p521, %p522
      %s524 = ssub.s32 %s51, %s58
      %p525 = scmp.eq.s32.totalorder %s524, 0
      %s527 = sadd.s32 %s526, 1
      %s528 = scalar_select %p525, %s526, %s527
      %p531 = pneg %p525
      %p532 = scmp.eq.s32.totalorder %s51, 1
      %p533 = por %p531, %p532
      %p534 = scmp.ne.s32.totalorder %s526, %s529
      %p535 = scmp.eq.s32.totalorder %s51, 0
      %p536 = por %p534, %p535
      %p537 = scmp.ne.s32.totalorder %s526, %s529
      %p538 = scmp.eq.s32.totalorder %s56, 1
      %p539 = por %p537, %p538
      %p540 = scmp.ne.s32.totalorder %s529, %s530
      %p541 = scmp.eq.s32.totalorder %s56, 0
      %p542 = por %p540, %p541
      %p543 = scmp.ne.s32.totalorder %s529, %s530
      %p544 = scmp.eq.s32.totalorder %s57, 1
      %p545 = por %p543, %p544
      %p547 = scmp.ne.s32.totalorder %s530, %s546
      %p548 = scmp.eq.s32.totalorder %s57, 0
      %p549 = por %p547, %p548
      %s550 = ssub.s32 %s51, %s58
      %p551 = scmp.eq.s32.totalorder %s550, 0
      %s553 = sadd.s32 %s552, 1
      %s554 = scalar_select %p551, %s552, %s553
      %p557 = pneg %p551
      %p558 = scmp.eq.s32.totalorder %s51, 1
      %p559 = por %p557, %p558
      %p560 = scmp.ne.s32.totalorder %s552, %s555
      %p561 = scmp.eq.s32.totalorder %s51, 0
      %p562 = por %p560, %p561
      %p563 = scmp.ne.s32.totalorder %s552, %s555
      %p564 = scmp.eq.s32.totalorder %s56, 1
      %p565 = por %p563, %p564
      %p566 = scmp.ne.s32.totalorder %s555, %s556
      %p567 = scmp.eq.s32.totalorder %s56, 0
      %p568 = por %p566, %p567
      %p569 = scmp.ne.s32.totalorder %s555, %s556
      %p570 = scmp.eq.s32.totalorder %s57, 1
      %p571 = por %p569, %p570
      %p573 = scmp.ne.s32.totalorder %s556, %s572
      %p574 = scmp.eq.s32.totalorder %s57, 0
      %p575 = por %p573, %p574
      %s576 = ssub.s32 %s51, %s58
      %p577 = scmp.eq.s32.totalorder %s576, 0
      %s579 = sadd.s32 %s578, 1
      %s580 = scalar_select %p577, %s578, %s579
      %p583 = pneg %p577
      %p584 = scmp.eq.s32.totalorder %s51, 1
      %p585 = por %p583, %p584
      %p586 = scmp.ne.s32.totalorder %s578, %s581
      %p587 = scmp.eq.s32.totalorder %s51, 0
      %p588 = por %p586, %p587
      %p589 = scmp.ne.s32.totalorder %s578, %s581
      %p590 = scmp.eq.s32.totalorder %s56, 1
      %p591 = por %p589, %p590
      %p592 = scmp.ne.s32.totalorder %s581, %s582
      %p593 = scmp.eq.s32.totalorder %s56, 0
      %p594 = por %p592, %p593
      %p595 = scmp.ne.s32.totalorder %s581, %s582
      %p596 = scmp.eq.s32.totalorder %s57, 1
      %p597 = por %p595, %p596
      %p599 = scmp.ne.s32.totalorder %s582, %s598
      %p600 = scmp.eq.s32.totalorder %s57, 0
      %p601 = por %p599, %p600
      %s602 = ssub.s32 %s51, %s58
      %p603 = scmp.eq.s32.totalorder %s602, 0
      %s605 = sadd.s32 %s604, 1
      %s606 = scalar_select %p603, %s604, %s605
      %p609 = pneg %p603
      %p610 = scmp.eq.s32.totalorder %s51, 1
      %p611 = por %p609, %p610
      %p612 = scmp.ne.s32.totalorder %s604, %s607
      %p613 = scmp.eq.s32.totalorder %s51, 0
      %p614 = por %p612, %p613
      %p615 = scmp.ne.s32.totalorder %s604, %s607
      %p616 = scmp.eq.s32.totalorder %s56, 1
      %p617 = por %p615, %p616
      %p618 = scmp.ne.s32.totalorder %s607, %s608
      %p619 = scmp.eq.s32.totalorder %s56, 0
      %p620 = por %p618, %p619
      %p621 = scmp.ne.s32.totalorder %s607, %s608
      %p622 = scmp.eq.s32.totalorder %s57, 1
      %p623 = por %p621, %p622
      %p625 = scmp.ne.s32.totalorder %s608, %s624
      %p626 = scmp.eq.s32.totalorder %s57, 0
      %p627 = por %p625, %p626
      %s628 = ssub.s32 %s51, %s58
      %p629 = scmp.eq.s32.totalorder %s628, 0
      %s631 = sadd.s32 %s630, 1
      %s632 = scalar_select %p629, %s630, %s631
      %p635 = pneg %p629
      %p636 = scmp.eq.s32.totalorder %s51, 1
      %p637 = por %p635, %p636
      %p638 = scmp.ne.s32.totalorder %s630, %s633
      %p639 = scmp.eq.s32.totalorder %s51, 0
      %p640 = por %p638, %p639
      %p641 = scmp.ne.s32.totalorder %s630, %s633
      %p642 = scmp.eq.s32.totalorder %s56, 1
      %p643 = por %p641, %p642
      %p644 = scmp.ne.s32.totalorder %s633, %s634
      %p645 = scmp.eq.s32.totalorder %s56, 0
      %p646 = por %p644, %p645
      %p647 = scmp.ne.s32.totalorder %s633, %s634
      %p648 = scmp.eq.s32.totalorder %s57, 1
      %p649 = por %p647, %p648
      %p651 = scmp.ne.s32.totalorder %s634, %s650
      %p652 = scmp.eq.s32.totalorder %s57, 0
      %p653 = por %p651, %p652
      %p654 = scmp.le.s32.totalorder 1, %s51
      %p655 = scmp.lt.s32.totalorder %s51, 3
      %p656 = pnand %p654, %p655
      %p657 = pneg %p656
      // Predicated region
      $region9: #{tpu_custom_call.1} parent=5 // pred_check
        _
      $region10: #{tpu_custom_call.1} parent=5 // pred_check_branch
        %659 = sbr.rel (%p656) target = $region12
      $region11: #{tpu_custom_call.1} parent=5 // pred_region
        %s660 = ssub.s32 %s51, 1
        // Predicated region
        $region13: #{tpu_custom_call.1} parent=11 // pred_check
          %p661 = pneg %p176
        $region14: #{tpu_custom_call.1} parent=11 // pred_check_branch
          %663 = sbr.rel (%p661) target = $region16
        $region15: #{tpu_custom_call.1} parent=11 // pred_region
          _
        $region16: #{tpu_custom_call.1} parent=11 // pred_fallthru
          _
        // Predicated region
        $region17: #{tpu_custom_call.1} parent=11 // pred_check
          %p664 = pneg %p197
        $region18: #{tpu_custom_call.1} parent=11 // pred_check_branch
          %666 = sbr.rel (%p664) target = $region20
        $region19: #{tpu_custom_call.1} parent=11 // pred_region
          _
        $region20: #{tpu_custom_call.1} parent=11 // pred_fallthru
          _
        // Predicated region
        $region21: #{tpu_custom_call.1} parent=11 // pred_check
          %p667 = pneg %p218
        $region22: #{tpu_custom_call.1} parent=11 // pred_check_branch
          %669 = sbr.rel (%p667) target = $region24
        $region23: #{tpu_custom_call.1} parent=11 // pred_region
          _
        $region24: #{tpu_custom_call.1} parent=11 // pred_fallthru
          _
        // Predicated region
        $region25: #{tpu_custom_call.1} parent=11 // pred_check
          %p670 = pneg %p239
        $region26: #{tpu_custom_call.1} parent=11 // pred_check_branch
          %672 = sbr.rel (%p670) target = $region28
        $region27: #{tpu_custom_call.1} parent=11 // pred_region
          %s674 = ssub.s32 256, 256
          %675 = vsyncadd [#allocation4], %s674
          %s676 = sshll.u32 [#allocation3], 4
          %s677 = int_to_ptr.vmem [resolvable:$true] %s676
          %682 = dma.hbm_to_vmem [thread:$0]  %s7, 256, %s677, [#allocation4], 64, 64, 4
        $region28: #{tpu_custom_call.1} parent=11 // pred_fallthru
          _
        // Predicated region
        $region29: #{tpu_custom_call.1} parent=11 // pred_check
          %p683 = pneg %p260
        $region30: #{tpu_custom_call.1} parent=11 // pred_check_branch
          %685 = sbr.rel (%p683) target = $region32
        $region31: #{tpu_custom_call.1} parent=11 // pred_region
          %s687 = ssub.s32 16, 16
          %688 = vsyncadd [#allocation7], %s687
          %s690 = sshll.u32 [#allocation6], 4
          %s691 = int_to_ptr.vmem [resolvable:$true] %s690
          %693 = dma.hbm_to_vmem [thread:$0]  %s8, 16, %s691, [#allocation7]
        $region32: #{tpu_custom_call.1} parent=11 // pred_fallthru
          _
        // Predicated region
        $region33: #{tpu_custom_call.1} parent=11 // pred_check
          %p694 = pneg %p281
        $region34: #{tpu_custom_call.1} parent=11 // pred_check_branch
          %696 = sbr.rel (%p694) target = $region36
        $region35: #{tpu_custom_call.1} parent=11 // pred_region
          %s698 = ssub.s32 16, 16
          %699 = vsyncadd [#allocation7], %s698
          %s701 = sshll.u32 [#allocation8], 4
          %s702 = int_to_ptr.vmem [resolvable:$true] %s701
          %704 = dma.hbm_to_vmem [thread:$0]  %s9, 16, %s702, [#allocation7]
        $region36: #{tpu_custom_call.1} parent=11 // pred_fallthru
          _
        // Predicated region
        $region37: #{tpu_custom_call.1} parent=11 // pred_check
          %p705 = pneg %p302
        $region38: #{tpu_custom_call.1} parent=11 // pred_check_branch
          %707 = sbr.rel (%p705) target = $region40
        $region39: #{tpu_custom_call.1} parent=11 // pred_region
          _
        $region40: #{tpu_custom_call.1} parent=11 // pred_fallthru
          _
        // Predicated region
        $region41: #{tpu_custom_call.1} parent=11 // pred_check
          %p708 = pneg %p323
        $region42: #{tpu_custom_call.1} parent=11 // pred_check_branch
          %710 = sbr.rel (%p708) target = $region44
        $region43: #{tpu_custom_call.1} parent=11 // pred_region
          _
        $region44: #{tpu_custom_call.1} parent=11 // pred_fallthru
          _
        // Predicated region
        $region45: #{tpu_custom_call.1} parent=11 // pred_check
          %p711 = pneg %p344
        $region46: #{tpu_custom_call.1} parent=11 // pred_check_branch
          %713 = sbr.rel (%p711) target = $region48
        $region47: #{tpu_custom_call.1} parent=11 // pred_region
          _
        $region48: #{tpu_custom_call.1} parent=11 // pred_fallthru
          _
        // Predicated region
        $region49: #{tpu_custom_call.1} parent=11 // pred_check
          %p714 = pneg %p365
        $region50: #{tpu_custom_call.1} parent=11 // pred_check_branch
          %716 = sbr.rel (%p714) target = $region52
        $region51: #{tpu_custom_call.1} parent=11 // pred_region
          _
        $region52: #{tpu_custom_call.1} parent=11 // pred_fallthru
          _
        // Predicated region
        $region53: #{tpu_custom_call.1} parent=11 // pred_check
          %p717 = pneg %p386
        $region54: #{tpu_custom_call.1} parent=11 // pred_check_branch
          %719 = sbr.rel (%p717) target = $region56
        $region55: #{tpu_custom_call.1} parent=11 // pred_region
          _
        $region56: #{tpu_custom_call.1} parent=11 // pred_fallthru
          _
      $region12: #{tpu_custom_call.1} parent=5 // pred_fallthru
        _
      %p720 = scmp.lt.s32.totalorder %s51, 2
      // Predicated region
      $region57: #{tpu_custom_call.1} parent=5 // pred_check
        %p721 = pneg %p720
      $region58: #{tpu_custom_call.1} parent=5 // pred_check_branch
        %723 = sbr.rel (%p721) target = $region60
      $region59: #{tpu_custom_call.1} parent=5 // pred_region
        // Predicated region
        $region61: #{tpu_custom_call.1} parent=59 // pred_check
          %p724 = pneg %p71
        $region62: #{tpu_custom_call.1} parent=59 // pred_check_branch
          %726 = sbr.rel (%p724) target = $region64
        $region63: #{tpu_custom_call.1} parent=59 // pred_region
          %p727 = scmp.lt.s32.totalorder %s51, 1
          %s728 = scalar_select %p727, %s51, 1
          %s729 = smul.addr %s728, 8
          %s730 = scalar_lea.vmem %s0, %s729
        $region64: #{tpu_custom_call.1} parent=59 // pred_fallthru
          _
        // Predicated region
        $region65: #{tpu_custom_call.1} parent=59 // pred_check
          %p731 = pneg %p97
        $region66: #{tpu_custom_call.1} parent=59 // pred_check_branch
          %733 = sbr.rel (%p731) target = $region68
        $region67: #{tpu_custom_call.1} parent=59 // pred_region
          %p734 = scmp.lt.s32.totalorder %s51, 1
          %s735 = scalar_select %p734, %s51, 1
          %s736 = smul.addr %s735, 8
          %s737 = scalar_lea.vmem %s1, %s736
        $region68: #{tpu_custom_call.1} parent=59 // pred_fallthru
          _
        // Predicated region
        $region69: #{tpu_custom_call.1} parent=59 // pred_check
          %p738 = pneg %p123
        $region70: #{tpu_custom_call.1} parent=59 // pred_check_branch
          %740 = sbr.rel (%p738) target = $region72
        $region71: #{tpu_custom_call.1} parent=59 // pred_region
          %p741 = scmp.lt.s32.totalorder %s51, 1
          %s742 = scalar_select %p741, %s51, 1
          %s743 = smul.addr %s742, 8
          %s744 = scalar_lea.vmem %s2, %s743
        $region72: #{tpu_custom_call.1} parent=59 // pred_fallthru
          _
        // Predicated region
        $region73: #{tpu_custom_call.1} parent=59 // pred_check
          %p745 = pneg %p149
        $region74: #{tpu_custom_call.1} parent=59 // pred_check_branch
          %747 = sbr.rel (%p745) target = $region76
        $region75: #{tpu_custom_call.1} parent=59 // pred_region
          %p748 = scmp.lt.s32.totalorder %s51, 1
          %s749 = scalar_select %p748, %s51, 1
          %s750 = smul.addr %s749, 8
          %s751 = scalar_lea.vmem %s3, %s750
        $region76: #{tpu_custom_call.1} parent=59 // pred_fallthru
          _
      $region60: #{tpu_custom_call.1} parent=5 // pred_fallthru
        _
      %p752 = scmp.le.s32.totalorder 1, %s51
      %p753 = scmp.lt.s32.totalorder %s51, 3
      %p754 = pnand %p752, %p753
      %p755 = pneg %p754
      // Predicated region
      $region77: #{tpu_custom_call.1} parent=5 // pred_check
        _
      $region78: #{tpu_custom_call.1} parent=5 // pred_check_branch
        %757 = sbr.rel (%p754) target = $region80
      $region79: #{tpu_custom_call.1} parent=5 // pred_region
        %s758 = ssub.s32 %s51, 1
        // Predicated region
        $region81: #{tpu_custom_call.1} parent=79 // pred_check
          %p759 = pneg %p239
        $region82: #{tpu_custom_call.1} parent=79 // pred_check_branch
          %761 = sbr.rel (%p759) target = $region84
        $region83: #{tpu_custom_call.1} parent=79 // pred_region
          %762 = dma.done [#allocation4], 256
        $region84: #{tpu_custom_call.1} parent=79 // pred_fallthru
          _
        // Predicated region
        $region85: #{tpu_custom_call.1} parent=79 // pred_check
          %p763 = pneg %p260
        $region86: #{tpu_custom_call.1} parent=79 // pred_check_branch
          %765 = sbr.rel (%p763) target = $region88
        $region87: #{tpu_custom_call.1} parent=79 // pred_region
          %766 = dma.done [#allocation7], 16
        $region88: #{tpu_custom_call.1} parent=79 // pred_fallthru
          _
        // Predicated region
        $region89: #{tpu_custom_call.1} parent=79 // pred_check
          %p767 = pneg %p281
        $region90: #{tpu_custom_call.1} parent=79 // pred_check_branch
          %769 = sbr.rel (%p767) target = $region92
        $region91: #{tpu_custom_call.1} parent=79 // pred_region
          %770 = dma.done [#allocation7], 16
        $region92: #{tpu_custom_call.1} parent=79 // pred_fallthru
          _
        %p771 = scmp.lt.s32.totalorder %s56, 1
        %s772 = scalar_select %p771, %s56, 1
        %s773 = smul.addr %s772, 8
        %s774 = scalar_lea.vmem %s0, %s773
        %p775 = pneg %p77
        %p776 = pneg %p74
        %p777 = scmp.lt.s32.totalorder %s56, 1
        %s778 = scalar_select %p777, %s56, 1
        %s779 = smul.addr %s778, 8
        %s780 = scalar_lea.vmem %s1, %s779
        %p781 = pneg %p103
        %p782 = pneg %p100
        %p783 = scmp.lt.s32.totalorder %s56, 1
        %s784 = scalar_select %p783, %s56, 1
        %s785 = smul.addr %s784, 8
        %s786 = scalar_lea.vmem %s2, %s785
        %p787 = pneg %p129
        %p788 = pneg %p126
        %p789 = scmp.lt.s32.totalorder %s56, 1
        %s790 = scalar_select %p789, %s56, 1
        %s791 = smul.addr %s790, 8
        %s792 = scalar_lea.vmem %s3, %s791
        %p793 = pneg %p155
        %p794 = pneg %p152
        %p795 = pneg %p176
        %p796 = pneg %p173
        %p797 = pneg %p197
        %p798 = pneg %p194
        %p799 = pneg %p218
        %p800 = pneg %p215
        %p801 = pneg %p239
        %p802 = pneg %p236
        %p803 = pneg %p260
        %p804 = pneg %p257
        %p805 = pneg %p281
        %p806 = pneg %p278
        %p807 = pneg %p302
        %p808 = pneg %p299
        %p809 = pneg %p323
        %p810 = pneg %p320
        %p811 = pneg %p344
        %p812 = pneg %p341
        %p813 = pneg %p365
        %p814 = pneg %p362
        %p815 = pneg %p386
        %p816 = pneg %p383
        %p817 = pneg %p412
        %p818 = pneg %p409
        %s819 = sand.u32 %s399, 1
        %s820 = scalar_lea.sflag [#allocation5], %s819
        %s821 = sand.u32 %s399, 1
        %s822 = smul.addr %s821, 8
        %s823 = scalar_lea.vmem [#allocation9], %s822
        %p824 = pneg %p438
        %p825 = pneg %p435
        %s826 = sand.u32 %s56, 1
        %s827 = scalar_lea.sflag [#allocation11], %s826
        %s828 = sand.u32 %s425, 1
        %s829 = smul.addr %s828, 8
        %s830 = scalar_lea.vmem [#allocation10], %s829
        %p831 = pneg %p464
        %p832 = pneg %p461
        %s833 = sand.u32 %s56, 1
        %s834 = scalar_lea.sflag [#allocation11], %s833
        %s835 = sand.u32 %s451, 1
        %s836 = smul.addr %s835, 8
        %s837 = scalar_lea.vmem [#allocation12], %s836
        %p838 = pneg %p490
        %p839 = pneg %p487
        %s840 = sand.u32 %s56, 1
        %s841 = scalar_lea.sflag [#allocation14], %s840
        %s842 = sand.u32 %s477, 1
        %s843 = smul.addr %s842, 8
        %s844 = scalar_lea.vmem [#allocation13], %s843
        %p845 = pneg %p516
        %p846 = pneg %p513
        %s847 = sand.u32 %s56, 1
        %s848 = scalar_lea.sflag [#allocation14], %s847
        %s849 = sand.u32 %s503, 1
        %s850 = smul.addr %s849, 32
        %s851 = scalar_lea.vmem [#allocation15], %s850
        %p852 = pneg %p542
        %p853 = pneg %p539
        %s854 = sand.u32 %s56, 1
        %s855 = scalar_lea.sflag [#allocation17], %s854
        %s856 = sand.u32 %s529, 1
        %s857 = smul.addr %s856, 32
        %s858 = scalar_lea.vmem [#allocation16], %s857
        %p859 = pneg %p568
        %p860 = pneg %p565
        %s861 = sand.u32 %s56, 1
        %s862 = scalar_lea.sflag [#allocation17], %s861
        %s863 = sand.u32 %s555, 1
        %s864 = smul.addr %s863, 32
        %s865 = scalar_lea.vmem [#allocation18], %s864
        %p866 = pneg %p594
        %p867 = pneg %p591
        %s868 = sand.u32 %s56, 1
        %s869 = scalar_lea.sflag [#allocation20], %s868
        %s870 = sand.u32 %s581, 1
        %s871 = smul.addr %s870, 32
        %s872 = scalar_lea.vmem [#allocation19], %s871
        %p873 = pneg %p620
        %p874 = pneg %p617
        %s875 = sand.u32 %s56, 1
        %s876 = scalar_lea.sflag [#allocation20], %s875
        %s877 = sand.u32 %s607, 1
        %s878 = smul.addr %s877, 8
        %s879 = scalar_lea.vmem [#allocation21], %s878
        %p880 = pneg %p646
        %p881 = pneg %p643
        %s882 = sand.u32 %s633, 1
        %s883 = scalar_lea.sflag [#allocation23], %s882
        %s884 = sand.u32 %s633, 1
        %s885 = smul.addr %s884, 8
        %s886 = scalar_lea.vmem [#allocation22], %s885
        %p887 = scmp.lt.s32.totalorder %s56, 1
        %s888 = scalar_select %p887, %s56, 1
        %s889 = smul.addr %s888, 8
        %s890 = scalar_lea.vmem %s0, %s889
        %p891 = scmp.lt.s32.totalorder %s56, 1
        %s892 = scalar_select %p891, %s56, 1
        %s893 = smul.addr %s892, 8
        %s894 = scalar_lea.vmem %s1, %s893
        %p895 = scmp.lt.s32.totalorder %s56, 1
        %s896 = scalar_select %p895, %s56, 1
        %s897 = smul.addr %s896, 8
        %s898 = scalar_lea.vmem %s2, %s897
        %p899 = scmp.lt.s32.totalorder %s56, 1
        %s900 = scalar_select %p899, %s56, 1
        %s901 = smul.addr %s900, 8
        %s902 = scalar_lea.vmem %s3, %s901
        %v904 = vld [vmem:[%s890] sm:$0xff]
        %v905 = vld [vmem:[%s894] sm:$0xff]
        %v906 = vld [vmem:[%s4] sm:$0x1]
        %v907 = vld [vmem:[%s5] sm:$0x1]
        %vm908 = vcmask 261120
        %v909 = vsel %vm908, %v904, 0.0
        %910 = vadd.xlane.f32.xlu0 %v909
        %v911 = vpop.xlane.xlu0 %910
        %v912 = vsel %vm908, %v905, 0.0
        %913 = vadd.xlane.f32.xlu0 %v912
        %v914 = vpop.xlane.xlu0 %913
        %v915 = vrcp.pop 32.0
        %v916 = vmul.f32 %v911, %v915
        %v917 = vmul.f32 %v914, %v915
        %v918 = vsub.f32 %v904, %v916
        %v919 = vsub.f32 %v905, %v917
        %v920 = vmul.f32 %v918, %v918
        %v921 = vmul.f32 %v919, %v919
        %v922 = vsel %vm908, %v920, 0.0
        %923 = vadd.xlane.f32.xlu0 %v922
        %v924 = vpop.xlane.xlu0 %923
        %v925 = vsel %vm908, %v921, 0.0
        %926 = vadd.xlane.f32.xlu0 %v925
        %v927 = vpop.xlane.xlu0 %926
        %v928 = vmul.f32 %v924, %v915
        %v929 = vmul.f32 %v927, %v915
        %v930 = vadd.f32 %v928, 1e-05
        %v931 = vadd.f32 %v929, 1e-05
        %v932 = vrsqrt.pop %v930
        %v933 = vrsqrt.pop %v931
        %v934 = vmul.f32 %v918, %v932
        %v935 = vmul.f32 %v919, %v933
        %v937 = vlaneseq
        %v938 = vshrl.u32 %v937, 7
        %v939 = vsub.s32 0, %v938
        %v940 = vrot.slane %v906, %v939
        %v942 = vmul.f32 %v934, %v940
        %v943 = vmul.f32 %v935, %v940
        %v945 = vlaneseq
        %v946 = vshrl.u32 %v945, 7
        %v947 = vsub.s32 0, %v946
        %v948 = vrot.slane %v907, %v947
        %v950 = vadd.f32 %v942, %v948
        %v951 = vadd.f32 %v943, %v948
        %v952 = vpack.c.bf16 %v951, %v950
        %v953 = vld [vmem:[%s6] sm:$0xf]
        %v954 = vld [vmem:[%s6 + $0x4] sm:$0xf]
        %v955 = vld [vmem:[%s6 + $0x8] sm:$0xf]
        %v956 = vld [vmem:[%s6 + $0xc] sm:$0xf]
        %v961 = vunpack.c.l.b16 %v953
        %v962 = vunpack.c.l.b16 %v954
        %v963 = vunpack.c.l.b16 %v955
        %v964 = vunpack.c.l.b16 %v956
        %v965 = vpack.c.b16 %v962, %v961
        %v966 = vpack.c.b16 %v964, %v963
        %v970 = vsel %vm908, %v952, 0
        %972 = vmatprep.subr.bf16.mxu0 0
        %973 = vmatpush1.bf16.msra.mxu0 %v965
        %974 = vmatprep.subr.bf16.mxu0 0
        %975 = vmatpush1.bf16.msra.mxu0 %v966
        %976 = vmatprep.subr.bf16.mxu0 0
        %977 = vmatpush1.bf16.msra.mxu0 0
        %978 = vmatprep.subr.bf16.mxu0 0
        %979 = vmatpush1.bf16.msra.mxu0 0
        %980 = vmatprep.subr.bf16.mxu0 0
        %981 = vmatpush1.bf16.msra.mxu0 0
        %982 = vmatprep.subr.bf16.mxu0 0
        %983 = vmatpush1.bf16.msra.mxu0 0
        %984 = vmatprep.subr.bf16.mxu0 0
        %985 = vmatpush1.bf16.msra.mxu0 0
        %986 = vmatprep.subr.bf16.mxu0 0
        %987 = vmatpush1.bf16.msra.mxu0 0
        %988 = vmatprep.subr.bf16.mxu0 0
        %989 = vmatpush1.bf16.msra.mxu0 0
        %990 = vmatprep.subr.bf16.mxu0 0
        %991 = vmatpush1.bf16.msra.mxu0 0
        %992 = vmatprep.subr.bf16.mxu0 0
        %993 = vmatpush1.bf16.msra.mxu0 0
        %994 = vmatprep.subr.bf16.mxu0 0
        %995 = vmatpush1.bf16.msra.mxu0 0
        %996 = vmatprep.subr.bf16.mxu0 0
        %997 = vmatpush1.bf16.msra.mxu0 0
        %998 = vmatprep.subr.bf16.mxu0 0
        %999 = vmatpush1.bf16.msra.mxu0 0
        %1000 = vmatprep.subr.bf16.mxu0 0
        %1001 = vmatpush1.bf16.msra.mxu0 0
        %1002 = vmatprep.subr.bf16.mxu0 0
        %1003 = vmatpush1.bf16.msra.mxu0 0
        %1004 = vmatprep.mubr.bf16.mxu0 0
        %1005 = vmatmul.mubr.bf16.gmra.mrb[0].mxu0 %v970
        %v1006 = vpop.f32.mrb[0].mxu0
        %v1007 = vadd.f32 0.0, %v1006
        %v1008 = vpop.f32.mrb[0].mxu0
        %v1009 = vpop.f32.mrb[0].mxu0
        %v1010 = vadd.f32 0.0, %v1009
        %v1011 = vpop.f32.mrb[0].mxu0
        %1012 = vdwg.mxu0
        %1014 = vrot.lane.b32.xlu0 %v1007, 64
        %v1015 = vpop.permute.xlu0 %1014
        %1017 = vst.msk [vmem:[%s879] sm:$0xff] %vm908, %v1015
        %1019 = vrot.lane.b32.xlu0 %v1010, 64
        %v1020 = vpop.permute.xlu0 %1019
        %1022 = vst.msk [vmem:[%s886] sm:$0xff] %vm908, %v1020
        %v1023 = vpack.c.bf16 %v1010, %v1007
        %1024 = vrot.lane.b32.xlu0 %v1007, 96
        %v1025 = vpop.permute.xlu0 %1024
        %vm1026 = vcmask 64512
        %v1027 = vsel %vm1026, %v1007, 0
        %v1029 = vsel %vm1026, %v1010, 0
        %v1031 = vsel %vm1026, %v1025, 0
        %1033 = vmatprep.subr.mxu0 0.0
        %1034 = vmatpush1.xpose.msra.mxu0 %v1031
        %1035 = vmatprep.subr.mxu0 0.0
        %1036 = vmatpush1.xpose.msra.mxu0 0.0
        %1037 = vmatprep.subr.mxu0 0.0
        %1038 = vmatpush1.xpose.msra.mxu0 0.0
        %1039 = vmatprep.subr.mxu0 0.0
        %1040 = vmatpush1.xpose.msra.mxu0 0.0
        %1041 = vmatprep.subr.mxu0 0.0
        %1042 = vmatpush1.xpose.msra.mxu0 0.0
        %1043 = vmatprep.subr.mxu0 0.0
        %1044 = vmatpush1.xpose.msra.mxu0 0.0
        %1045 = vmatprep.subr.mxu0 0.0
        %1046 = vmatpush1.xpose.msra.mxu0 0.0
        %1047 = vmatprep.subr.mxu0 0.0
        %1048 = vmatpush1.xpose.msra.mxu0 0.0
        %1049 = vmatprep.subr.mxu0 0.0
        %1050 = vmatpush1.xpose.msra.mxu0 0.0
        %1051 = vmatprep.subr.mxu0 0.0
        %1052 = vmatpush1.xpose.msra.mxu0 0.0
        %1053 = vmatprep.subr.mxu0 0.0
        %1054 = vmatpush1.xpose.msra.mxu0 0.0
        %1055 = vmatprep.subr.mxu0 0.0
        %1056 = vmatpush1.xpose.msra.mxu0 0.0
        %1057 = vmatprep.subr.mxu0 0.0
        %1058 = vmatpush1.xpose.msra.mxu0 0.0
        %1059 = vmatprep.subr.mxu0 0.0
        %1060 = vmatpush1.xpose.msra.mxu0 0.0
        %1061 = vmatprep.subr.mxu0 0.0
        %1062 = vmatpush1.xpose.msra.mxu0 0.0
        %1063 = vmatprep.subr.mxu0 0.0
        %1064 = vmatpush1.xpose.msra.mxu0 0.0
        %1065 = vmatprep.subr.mxu0 0.0
        %1066 = vmatpush1.xpose.msra.mxu0 0.0
        %1067 = vmatprep.subr.mxu0 0.0
        %1068 = vmatpush1.xpose.msra.mxu0 0.0
        %1069 = vmatprep.subr.mxu0 0.0
        %1070 = vmatpush1.xpose.msra.mxu0 0.0
        %1071 = vmatprep.subr.mxu0 0.0
        %1072 = vmatpush1.xpose.msra.mxu0 0.0
        %1073 = vmatprep.subr.mxu0 0.0
        %1074 = vmatpush1.xpose.msra.mxu0 0.0
        %1075 = vmatprep.subr.mxu0 0.0
        %1076 = vmatpush1.xpose.msra.mxu0 0.0
        %1077 = vmatprep.subr.mxu0 0.0
        %1078 = vmatpush1.xpose.msra.mxu0 0.0
        %1079 = vmatprep.subr.mxu0 0.0
        %1080 = vmatpush1.xpose.msra.mxu0 0.0
        %1081 = vmatprep.subr.mxu0 0.0
        %1082 = vmatpush1.xpose.msra.mxu0 0.0
        %1083 = vmatprep.subr.mxu0 0.0
        %1084 = vmatpush1.xpose.msra.mxu0 0.0
        %1085 = vmatprep.subr.mxu0 0.0
        %1086 = vmatpush1.xpose.msra.mxu0 0.0
        %1087 = vmatprep.subr.mxu0 0.0
        %1088 = vmatpush1.xpose.msra.mxu0 0.0
        %1089 = vmatprep.subr.mxu0 0.0
        %1090 = vmatpush1.xpose.msra.mxu0 0.0
        %1091 = vmatprep.subr.mxu0 0.0
        %1092 = vmatpush1.xpose.msra.mxu0 0.0
        %1093 = vmatprep.subr.mxu0 0.0
        %1094 = vmatpush1.xpose.msra.mxu0 0.0
        %1095 = vmatprep.subr.mxu0 0.0
        %1096 = vmatpush1.xpose.msra.mxu0 0.0
        %1097 = vmatprep.mubr.f32.mxu0 0.0
        %1098 = vmatmul.mubr.f32.gmra.mrb[0].mxu0 %v1027
        %v1099 = vpop.f32.mrb[0].mxu0
        %v1100 = vadd.f32 0.0, %v1099
        %v1101 = vpop.f32.mrb[0].mxu0
        %1102 = vmatprep.mubr.f32.mxu0 0.0
        %1103 = vmatmul.mubr.f32.gmra.mrb[0].mxu0 %v1029
        %v1104 = vpop.f32.mrb[0].mxu0
        %v1105 = vadd.f32 0.0, %v1104
        %v1106 = vpop.f32.mrb[0].mxu0
        %1107 = vdwg.mxu0
        %v1108 = vmul.f32 %v1100, 0.35355338
        %v1109 = vmul.f32 %v1105, 0.35355338
        %v1110 = vsel %vm1026, %v1108, -inf
        %1111 = vmax.xlane.f32.xlu0 %v1110
        %v1112 = vpop.xlane.xlu0 %1111
        %v1113 = vsel %vm1026, %v1109, -inf
        %1114 = vmax.xlane.f32.xlu0 %v1113
        %v1115 = vpop.xlane.xlu0 %1114
        %v1116 = vsub.f32 %v1108, %v1112
        %v1117 = vsub.f32 %v1109, %v1115
        %v1118 = vmul.f32 %v1116, 1.442695
        %v1119 = vpow.pop %v1118
        %v1120 = vmul.f32 %v1117, 1.442695
        %v1121 = vpow.pop %v1120
        %v1122 = vsel %vm1026, %v1119, 0.0
        %1123 = vadd.xlane.f32.xlu0 %v1122
        %v1124 = vpop.xlane.xlu0 %1123
        %v1125 = vsel %vm1026, %v1121, 0.0
        %1126 = vadd.xlane.f32.xlu0 %v1125
        %v1127 = vpop.xlane.xlu0 %1126
        %v1128 = vrcp.pop %v1124
        %v1129 = vrcp.pop %v1127
        %v1130 = vmul.f32 %v1119, %v1128
        %v1131 = vmul.f32 %v1121, %v1129
        %1132 = vrot.lane.b32.xlu0 %v1010, 96
        %v1133 = vpop.permute.xlu0 %1132
        %v1134 = vsel %vm1026, %v1133, 0
        %1136 = vmatprep.subr.mxu0 0.0
        %1137 = vmatpush1.xpose.msra.mxu0 %v1134
        %1138 = vmatprep.subr.mxu0 0.0
        %1139 = vmatpush1.xpose.msra.mxu0 0.0
        %1140 = vmatprep.subr.mxu0 0.0
        %1141 = vmatpush1.xpose.msra.mxu0 0.0
        %1142 = vmatprep.subr.mxu0 0.0
        %1143 = vmatpush1.xpose.msra.mxu0 0.0
        %1144 = vmatprep.subr.mxu0 0.0
        %1145 = vmatpush1.xpose.msra.mxu0 0.0
        %1146 = vmatprep.subr.mxu0 0.0
        %1147 = vmatpush1.xpose.msra.mxu0 0.0
        %1148 = vmatprep.subr.mxu0 0.0
        %1149 = vmatpush1.xpose.msra.mxu0 0.0
        %1150 = vmatprep.subr.mxu0 0.0
        %1151 = vmatpush1.xpose.msra.mxu0 0.0
        %1152 = vmatprep.subr.mxu0 0.0
        %1153 = vmatpush1.xpose.msra.mxu0 0.0
        %1154 = vmatprep.subr.mxu0 0.0
        %1155 = vmatpush1.xpose.msra.mxu0 0.0
        %1156 = vmatprep.subr.mxu0 0.0
        %1157 = vmatpush1.xpose.msra.mxu0 0.0
        %1158 = vmatprep.subr.mxu0 0.0
        %1159 = vmatpush1.xpose.msra.mxu0 0.0
        %1160 = vmatprep.subr.mxu0 0.0
        %1161 = vmatpush1.xpose.msra.mxu0 0.0
        %1162 = vmatprep.subr.mxu0 0.0
        %1163 = vmatpush1.xpose.msra.mxu0 0.0
        %1164 = vmatprep.subr.mxu0 0.0
        %1165 = vmatpush1.xpose.msra.mxu0 0.0
        %1166 = vmatprep.subr.mxu0 0.0
        %1167 = vmatpush1.xpose.msra.mxu0 0.0
        %1168 = vmatprep.subr.mxu0 0.0
        %1169 = vmatpush1.xpose.msra.mxu0 0.0
        %1170 = vmatprep.subr.mxu0 0.0
        %1171 = vmatpush1.xpose.msra.mxu0 0.0
        %1172 = vmatprep.subr.mxu0 0.0
        %1173 = vmatpush1.xpose.msra.mxu0 0.0
        %1174 = vmatprep.subr.mxu0 0.0
        %1175 = vmatpush1.xpose.msra.mxu0 0.0
        %1176 = vmatprep.subr.mxu0 0.0
        %1177 = vmatpush1.xpose.msra.mxu0 0.0
        %1178 = vmatprep.subr.mxu0 0.0
        %1179 = vmatpush1.xpose.msra.mxu0 0.0
        %1180 = vmatprep.subr.mxu0 0.0
        %1181 = vmatpush1.xpose.msra.mxu0 0.0
        %1182 = vmatprep.subr.mxu0 0.0
        %1183 = vmatpush1.xpose.msra.mxu0 0.0
        %1184 = vmatprep.subr.mxu0 0.0
        %1185 = vmatpush1.xpose.msra.mxu0 0.0
        %1186 = vmatprep.subr.mxu0 0.0
        %1187 = vmatpush1.xpose.msra.mxu0 0.0
        %1188 = vmatprep.subr.mxu0 0.0
        %1189 = vmatpush1.xpose.msra.mxu0 0.0
        %1190 = vmatprep.subr.mxu0 0.0
        %1191 = vmatpush1.xpose.msra.mxu0 0.0
        %1192 = vmatprep.subr.mxu0 0.0
        %1193 = vmatpush1.xpose.msra.mxu0 0.0
        %1194 = vmatprep.subr.mxu0 0.0
        %1195 = vmatpush1.xpose.msra.mxu0 0.0
        %1196 = vmatprep.subr.mxu0 0.0
        %1197 = vmatpush1.xpose.msra.mxu0 0.0
        %1198 = vmatprep.subr.mxu0 0.0
        %1199 = vmatpush1.xpose.msra.mxu0 0.0
        %1200 = vmatprep.mubr.f32.mxu0 0.0
        %1201 = vmatmul.mubr.f32.gmra.mrb[0].mxu0 %v1027
        %v1202 = vpop.f32.mrb[0].mxu0
        %v1203 = vadd.f32 0.0, %v1202
        %v1204 = vpop.f32.mrb[0].mxu0
        %1205 = vmatprep.mubr.f32.mxu0 0.0
        %1206 = vmatmul.mubr.f32.gmra.mrb[0].mxu0 %v1029
        %v1207 = vpop.f32.mrb[0].mxu0
        %v1208 = vadd.f32 0.0, %v1207
        %v1209 = vpop.f32.mrb[0].mxu0
        %1210 = vdwg.mxu0
        %v1211 = vmul.f32 %v1203, 0.35355338
        %v1212 = vmul.f32 %v1208, 0.35355338
        %v1213 = vsel %vm1026, %v1211, -inf
        %1214 = vmax.xlane.f32.xlu0 %v1213
        %v1215 = vpop.xlane.xlu0 %1214
        %v1216 = vsel %vm1026, %v1212, -inf
        %1217 = vmax.xlane.f32.xlu0 %v1216
        %v1218 = vpop.xlane.xlu0 %1217
        %v1219 = vsub.f32 %v1211, %v1215
        %v1220 = vsub.f32 %v1212, %v1218
        %v1221 = vmul.f32 %v1219, 1.442695
        %v1222 = vpow.pop %v1221
        %v1223 = vmul.f32 %v1220, 1.442695
        %v1224 = vpow.pop %v1223
        %v1225 = vsel %vm1026, %v1222, 0.0
        %1226 = vadd.xlane.f32.xlu0 %v1225
        %v1227 = vpop.xlane.xlu0 %1226
        %v1228 = vsel %vm1026, %v1224, 0.0
        %1229 = vadd.xlane.f32.xlu0 %v1228
        %v1230 = vpop.xlane.xlu0 %1229
        %v1231 = vrcp.pop %v1227
        %v1232 = vrcp.pop %v1230
        %v1233 = vmul.f32 %v1222, %v1231
        %v1234 = vmul.f32 %v1224, %v1232
        %1235 = vst.msk [vmem:[%s851] sm:$0xff] %vm1026, %v1130
        %1236 = vst.msk [vmem:[%s872] sm:$0xff] %vm1026, %v1131
        %1237 = vst.msk [vmem:[%s865] sm:$0xff] %vm1026, %v1233
        %1238 = vst.msk [vmem:[%s858] sm:$0xff] %vm1026, %v1234
        %v1239 = vpack.c.bf16 %v1131, %v1130
        %1241 = vrot.lane.b32.xlu0 %v1023, 64
        %v1242 = vpop.permute.xlu0 %1241
        %v1244 = vsel %vm1026, %v1239, 0
        %vm1246 = vcmask 1043456
        %v1248 = vsel %vm1246, %v1242, 0
        %1250 = vmatprep.subr.bf16.mxu0 0
        %1251 = vmatpush1.bf16.msra.mxu0 %v1248
        %1252 = vmatprep.subr.bf16.mxu0 0
        %1253 = vmatpush1.bf16.msra.mxu0 0
        %1254 = vmatprep.subr.bf16.mxu0 0
        %1255 = vmatpush1.bf16.msra.mxu0 0
        %1256 = vmatprep.subr.bf16.mxu0 0
        %1257 = vmatpush1.bf16.msra.mxu0 0
        %1258 = vmatprep.subr.bf16.mxu0 0
        %1259 = vmatpush1.bf16.msra.mxu0 0
        %1260 = vmatprep.subr.bf16.mxu0 0
        %1261 = vmatpush1.bf16.msra.mxu0 0
        %1262 = vmatprep.subr.bf16.mxu0 0
        %1263 = vmatpush1.bf16.msra.mxu0 0
        %1264 = vmatprep.subr.bf16.mxu0 0
        %1265 = vmatpush1.bf16.msra.mxu0 0
        %1266 = vmatprep.subr.bf16.mxu0 0
        %1267 = vmatpush1.bf16.msra.mxu0 0
        %1268 = vmatprep.subr.bf16.mxu0 0
        %1269 = vmatpush1.bf16.msra.mxu0 0
        %1270 = vmatprep.subr.bf16.mxu0 0
        %1271 = vmatpush1.bf16.msra.mxu0 0
        %1272 = vmatprep.subr.bf16.mxu0 0
        %1273 = vmatpush1.bf16.msra.mxu0 0
        %1274 = vmatprep.subr.bf16.mxu0 0
        %1275 = vmatpush1.bf16.msra.mxu0 0
        %1276 = vmatprep.subr.bf16.mxu0 0
        %1277 = vmatpush1.bf16.msra.mxu0 0
        %1278 = vmatprep.subr.bf16.mxu0 0
        %1279 = vmatpush1.bf16.msra.mxu0 0
        %1280 = vmatprep.subr.bf16.mxu0 0
        %1281 = vmatpush1.bf16.msra.mxu0 0
        %1282 = vmatprep.mubr.bf16.mxu0 0
        %1283 = vmatmul.mubr.bf16.gmra.mrb[0].mxu0 %v1244
        %v1284 = vpop.f32.mrb[0].mxu0
        %v1285 = vadd.f32 0.0, %v1284
        %v1286 = vpop.f32.mrb[0].mxu0
        %v1287 = vpop.f32.mrb[0].mxu0
        %v1288 = vadd.f32 0.0, %v1287
        %v1289 = vpop.f32.mrb[0].mxu0
        %1290 = vdwg.mxu0
        %v1291 = vpack.c.bf16 %v1234, %v1233
        %v1292 = vrot.slane %v1023, 4
        %1293 = vrot.lane.b32.xlu0 %v1292, 64
        %v1294 = vpop.permute.xlu0 %1293
        %v1296 = vsel %vm1026, %v1291, 0
        %v1299 = vsel %vm1246, %v1294, 0
        %1301 = vmatprep.subr.bf16.mxu0 0
        %1302 = vmatpush1.bf16.msra.mxu0 %v1299
        %1303 = vmatprep.subr.bf16.mxu0 0
        %1304 = vmatpush1.bf16.msra.mxu0 0
        %1305 = vmatprep.subr.bf16.mxu0 0
        %1306 = vmatpush1.bf16.msra.mxu0 0
        %1307 = vmatprep.subr.bf16.mxu0 0
        %1308 = vmatpush1.bf16.msra.mxu0 0
        %1309 = vmatprep.subr.bf16.mxu0 0
        %1310 = vmatpush1.bf16.msra.mxu0 0
        %1311 = vmatprep.subr.bf16.mxu0 0
        %1312 = vmatpush1.bf16.msra.mxu0 0
        %1313 = vmatprep.subr.bf16.mxu0 0
        %1314 = vmatpush1.bf16.msra.mxu0 0
        %1315 = vmatprep.subr.bf16.mxu0 0
        %1316 = vmatpush1.bf16.msra.mxu0 0
        %1317 = vmatprep.subr.bf16.mxu0 0
        %1318 = vmatpush1.bf16.msra.mxu0 0
        %1319 = vmatprep.subr.bf16.mxu0 0
        %1320 = vmatpush1.bf16.msra.mxu0 0
        %1321 = vmatprep.subr.bf16.mxu0 0
        %1322 = vmatpush1.bf16.msra.mxu0 0
        %1323 = vmatprep.subr.bf16.mxu0 0
        %1324 = vmatpush1.bf16.msra.mxu0 0
        %1325 = vmatprep.subr.bf16.mxu0 0
        %1326 = vmatpush1.bf16.msra.mxu0 0
        %1327 = vmatprep.subr.bf16.mxu0 0
        %1328 = vmatpush1.bf16.msra.mxu0 0
        %1329 = vmatprep.subr.bf16.mxu0 0
        %1330 = vmatpush1.bf16.msra.mxu0 0
        %1331 = vmatprep.subr.bf16.mxu0 0
        %1332 = vmatpush1.bf16.msra.mxu0 0
        %1333 = vmatprep.mubr.bf16.mxu0 0
        %1334 = vmatmul.mubr.bf16.gmra.mrb[0].mxu0 %v1296
        %v1335 = vpop.f32.mrb[0].mxu0
        %v1336 = vadd.f32 0.0, %v1335
        %v1337 = vpop.f32.mrb[0].mxu0
        %v1338 = vpop.f32.mrb[0].mxu0
        %v1339 = vadd.f32 0.0, %v1338
        %v1340 = vpop.f32.mrb[0].mxu0
        %1341 = vdwg.mxu0
        %1342 = vrot.lane.b32.xlu0 %v1007, 120
        %v1343 = vpop.permute.xlu0 %1342
        %1344 = vrot.lane.b32.xlu0 %v1010, 120
        %v1345 = vpop.permute.xlu0 %1344
        %1346 = vrot.lane.b32.xlu0 %v1007, 88
        %v1347 = vpop.permute.xlu0 %1346
        %v1348 = vsel %vm1026, %v1343, 0
        %v1350 = vsel %vm1026, %v1345, 0
        %v1352 = vsel %vm1026, %v1347, 0
        %1354 = vmatprep.subr.mxu0 0.0
        %1355 = vmatpush1.xpose.msra.mxu0 %v1352
        %1356 = vmatprep.subr.mxu0 0.0
        %1357 = vmatpush1.xpose.msra.mxu0 0.0
        %1358 = vmatprep.subr.mxu0 0.0
        %1359 = vmatpush1.xpose.msra.mxu0 0.0
        %1360 = vmatprep.subr.mxu0 0.0
        %1361 = vmatpush1.xpose.msra.mxu0 0.0
        %1362 = vmatprep.subr.mxu0 0.0
        %1363 = vmatpush1.xpose.msra.mxu0 0.0
        %1364 = vmatprep.subr.mxu0 0.0
        %1365 = vmatpush1.xpose.msra.mxu0 0.0
        %1366 = vmatprep.subr.mxu0 0.0
        %1367 = vmatpush1.xpose.msra.mxu0 0.0
        %1368 = vmatprep.subr.mxu0 0.0
        %1369 = vmatpush1.xpose.msra.mxu0 0.0
        %1370 = vmatprep.subr.mxu0 0.0
        %1371 = vmatpush1.xpose.msra.mxu0 0.0
        %1372 = vmatprep.subr.mxu0 0.0
        %1373 = vmatpush1.xpose.msra.mxu0 0.0
        %1374 = vmatprep.subr.mxu0 0.0
        %1375 = vmatpush1.xpose.msra.mxu0 0.0
        %1376 = vmatprep.subr.mxu0 0.0
        %1377 = vmatpush1.xpose.msra.mxu0 0.0
        %1378 = vmatprep.subr.mxu0 0.0
        %1379 = vmatpush1.xpose.msra.mxu0 0.0
        %1380 = vmatprep.subr.mxu0 0.0
        %1381 = vmatpush1.xpose.msra.mxu0 0.0
        %1382 = vmatprep.subr.mxu0 0.0
        %1383 = vmatpush1.xpose.msra.mxu0 0.0
        %1384 = vmatprep.subr.mxu0 0.0
        %1385 = vmatpush1.xpose.msra.mxu0 0.0
        %1386 = vmatprep.subr.mxu0 0.0
        %1387 = vmatpush1.xpose.msra.mxu0 0.0
        %1388 = vmatprep.subr.mxu0 0.0
        %1389 = vmatpush1.xpose.msra.mxu0 0.0
        %1390 = vmatprep.subr.mxu0 0.0
        %1391 = vmatpush1.xpose.msra.mxu0 0.0
        %1392 = vmatprep.subr.mxu0 0.0
        %1393 = vmatpush1.xpose.msra.mxu0 0.0
        %1394 = vmatprep.subr.mxu0 0.0
        %1395 = vmatpush1.xpose.msra.mxu0 0.0
        %1396 = vmatprep.subr.mxu0 0.0
        %1397 = vmatpush1.xpose.msra.mxu0 0.0
        %1398 = vmatprep.subr.mxu0 0.0
        %1399 = vmatpush1.xpose.msra.mxu0 0.0
        %1400 = vmatprep.subr.mxu0 0.0
        %1401 = vmatpush1.xpose.msra.mxu0 0.0
        %1402 = vmatprep.subr.mxu0 0.0
        %1403 = vmatpush1.xpose.msra.mxu0 0.0
        %1404 = vmatprep.subr.mxu0 0.0
        %1405 = vmatpush1.xpose.msra.mxu0 0.0
        %1406 = vmatprep.subr.mxu0 0.0
        %1407 = vmatpush1.xpose.msra.mxu0 0.0
        %1408 = vmatprep.subr.mxu0 0.0
        %1409 = vmatpush1.xpose.msra.mxu0 0.0
        %1410 = vmatprep.subr.mxu0 0.0
        %1411 = vmatpush1.xpose.msra.mxu0 0.0
        %1412 = vmatprep.subr.mxu0 0.0
        %1413 = vmatpush1.xpose.msra.mxu0 0.0
        %1414 = vmatprep.subr.mxu0 0.0
        %1415 = vmatpush1.xpose.msra.mxu0 0.0
        %1416 = vmatprep.subr.mxu0 0.0
        %1417 = vmatpush1.xpose.msra.mxu0 0.0
        %1418 = vmatprep.mubr.f32.mxu0 0.0
        %1419 = vmatmul.mubr.f32.gmra.mrb[0].mxu0 %v1348
        %v1420 = vpop.f32.mrb[0].mxu0
        %v1421 = vadd.f32 0.0, %v1420
        %v1422 = vpop.f32.mrb[0].mxu0
        %1423 = vmatprep.mubr.f32.mxu0 0.0
        %1424 = vmatmul.mubr.f32.gmra.mrb[0].mxu0 %v1350
        %v1425 = vpop.f32.mrb[0].mxu0
        %v1426 = vadd.f32 0.0, %v1425
        %v1427 = vpop.f32.mrb[0].mxu0
        %1428 = vdwg.mxu0
        %v1429 = vmul.f32 %v1421, 0.35355338
        %v1430 = vmul.f32 %v1426, 0.35355338
        %v1431 = vsel %vm1026, %v1429, -inf
        %1432 = vmax.xlane.f32.xlu0 %v1431
        %v1433 = vpop.xlane.xlu0 %1432
        %v1434 = vsel %vm1026, %v1430, -inf
        %1435 = vmax.xlane.f32.xlu0 %v1434
        %v1436 = vpop.xlane.xlu0 %1435
        %v1437 = vsub.f32 %v1429, %v1433
        %v1438 = vsub.f32 %v1430, %v1436
        %v1439 = vmul.f32 %v1437, 1.442695
        %v1440 = vpow.pop %v1439
        %v1441 = vmul.f32 %v1438, 1.442695
        %v1442 = vpow.pop %v1441
        %v1443 = vsel %vm1026, %v1440, 0.0
        %1444 = vadd.xlane.f32.xlu0 %v1443
        %v1445 = vpop.xlane.xlu0 %1444
        %v1446 = vsel %vm1026, %v1442, 0.0
        %1447 = vadd.xlane.f32.xlu0 %v1446
        %v1448 = vpop.xlane.xlu0 %1447
        %v1449 = vrcp.pop %v1445
        %v1450 = vrcp.pop %v1448
        %v1451 = vmul.f32 %v1440, %v1449
        %v1452 = vmul.f32 %v1442, %v1450
        %1453 = vrot.lane.b32.xlu0 %v1010, 88
        %v1454 = vpop.permute.xlu0 %1453
        %v1455 = vsel %vm1026, %v1454, 0
        %1457 = vmatprep.subr.mxu0 0.0
        %1458 = vmatpush1.xpose.msra.mxu0 %v1455
        %1459 = vmatprep.subr.mxu0 0.0
        %1460 = vmatpush1.xpose.msra.mxu0 0.0
        %1461 = vmatprep.subr.mxu0 0.0
        %1462 = vmatpush1.xpose.msra.mxu0 0.0
        %1463 = vmatprep.subr.mxu0 0.0
        %1464 = vmatpush1.xpose.msra.mxu0 0.0
        %1465 = vmatprep.subr.mxu0 0.0
        %1466 = vmatpush1.xpose.msra.mxu0 0.0
        %1467 = vmatprep.subr.mxu0 0.0
        %1468 = vmatpush1.xpose.msra.mxu0 0.0
        %1469 = vmatprep.subr.mxu0 0.0
        %1470 = vmatpush1.xpose.msra.mxu0 0.0
        %1471 = vmatprep.subr.mxu0 0.0
        %1472 = vmatpush1.xpose.msra.mxu0 0.0
        %1473 = vmatprep.subr.mxu0 0.0
        %1474 = vmatpush1.xpose.msra.mxu0 0.0
        %1475 = vmatprep.subr.mxu0 0.0
        %1476 = vmatpush1.xpose.msra.mxu0 0.0
        %1477 = vmatprep.subr.mxu0 0.0
        %1478 = vmatpush1.xpose.msra.mxu0 0.0
        %1479 = vmatprep.subr.mxu0 0.0
        %1480 = vmatpush1.xpose.msra.mxu0 0.0
        %1481 = vmatprep.subr.mxu0 0.0
        %1482 = vmatpush1.xpose.msra.mxu0 0.0
        %1483 = vmatprep.subr.mxu0 0.0
        %1484 = vmatpush1.xpose.msra.mxu0 0.0
        %1485 = vmatprep.subr.mxu0 0.0
        %1486 = vmatpush1.xpose.msra.mxu0 0.0
        %1487 = vmatprep.subr.mxu0 0.0
        %1488 = vmatpush1.xpose.msra.mxu0 0.0
        %1489 = vmatprep.subr.mxu0 0.0
        %1490 = vmatpush1.xpose.msra.mxu0 0.0
        %1491 = vmatprep.subr.mxu0 0.0
        %1492 = vmatpush1.xpose.msra.mxu0 0.0
        %1493 = vmatprep.subr.mxu0 0.0
        %1494 = vmatpush1.xpose.msra.mxu0 0.0
        %1495 = vmatprep.subr.mxu0 0.0
        %1496 = vmatpush1.xpose.msra.mxu0 0.0
        %1497 = vmatprep.subr.mxu0 0.0
        %1498 = vmatpush1.xpose.msra.mxu0 0.0
        %1499 = vmatprep.subr.mxu0 0.0
        %1500 = vmatpush1.xpose.msra.mxu0 0.0
        %1501 = vmatprep.subr.mxu0 0.0
        %1502 = vmatpush1.xpose.msra.mxu0 0.0
        %1503 = vmatprep.subr.mxu0 0.0
        %1504 = vmatpush1.xpose.msra.mxu0 0.0
        %1505 = vmatprep.subr.mxu0 0.0
        %1506 = vmatpush1.xpose.msra.mxu0 0.0
        %1507 = vmatprep.subr.mxu0 0.0
        %1508 = vmatpush1.xpose.msra.mxu0 0.0
        %1509 = vmatprep.subr.mxu0 0.0
        %1510 = vmatpush1.xpose.msra.mxu0 0.0
        %1511 = vmatprep.subr.mxu0 0.0
        %1512 = vmatpush1.xpose.msra.mxu0 0.0
        %1513 = vmatprep.subr.mxu0 0.0
        %1514 = vmatpush1.xpose.msra.mxu0 0.0
        %1515 = vmatprep.subr.mxu0 0.0
        %1516 = vmatpush1.xpose.msra.mxu0 0.0
        %1517 = vmatprep.subr.mxu0 0.0
        %1518 = vmatpush1.xpose.msra.mxu0 0.0
        %1519 = vmatprep.subr.mxu0 0.0
        %1520 = vmatpush1.xpose.msra.mxu0 0.0
        %1521 = vmatprep.mubr.f32.mxu0 0.0
        %1522 = vmatmul.mubr.f32.gmra.mrb[0].mxu0 %v1348
        %v1523 = vpop.f32.mrb[0].mxu0
        %v1524 = vadd.f32 0.0, %v1523
        %v1525 = vpop.f32.mrb[0].mxu0
        %1526 = vmatprep.mubr.f32.mxu0 0.0
        %1527 = vmatmul.mubr.f32.gmra.mrb[0].mxu0 %v1350
        %v1528 = vpop.f32.mrb[0].mxu0
        %v1529 = vadd.f32 0.0, %v1528
        %v1530 = vpop.f32.mrb[0].mxu0
        %1531 = vdwg.mxu0
        %v1532 = vmul.f32 %v1524, 0.35355338
        %v1533 = vmul.f32 %v1529, 0.35355338
        %v1534 = vsel %vm1026, %v1532, -inf
        %1535 = vmax.xlane.f32.xlu0 %v1534
        %v1536 = vpop.xlane.xlu0 %1535
        %v1537 = vsel %vm1026, %v1533, -inf
        %1538 = vmax.xlane.f32.xlu0 %v1537
        %v1539 = vpop.xlane.xlu0 %1538
        %v1540 = vsub.f32 %v1532, %v1536
        %v1541 = vsub.f32 %v1533, %v1539
        %v1542 = vmul.f32 %v1540, 1.442695
        %v1543 = vpow.pop %v1542
        %v1544 = vmul.f32 %v1541, 1.442695
        %v1545 = vpow.pop %v1544
        %v1546 = vsel %vm1026, %v1543, 0.0
        %1547 = vadd.xlane.f32.xlu0 %v1546
        %v1548 = vpop.xlane.xlu0 %1547
        %v1549 = vsel %vm1026, %v1545, 0.0
        %1550 = vadd.xlane.f32.xlu0 %v1549
        %v1551 = vpop.xlane.xlu0 %1550
        %v1552 = vrcp.pop %v1548
        %v1553 = vrcp.pop %v1551
        %v1554 = vmul.f32 %v1543, %v1552
        %v1555 = vmul.f32 %v1545, %v1553
        %s1556 = scalar_lea.vmem %s851, 8 [#allocation15]
        %1557 = vst.msk [vmem:[%s1556] sm:$0xff] %vm1026, %v1451
        %s1558 = scalar_lea.vmem %s872, 8 [#allocation19]
        %1559 = vst.msk [vmem:[%s1558] sm:$0xff] %vm1026, %v1452
        %s1560 = scalar_lea.vmem %s865, 8 [#allocation18]
        %1561 = vst.msk [vmem:[%s1560] sm:$0xff] %vm1026, %v1554
        %s1562 = scalar_lea.vmem %s858, 8 [#allocation16]
        %1563 = vst.msk [vmem:[%s1562] sm:$0xff] %vm1026, %v1555
        %v1564 = vpack.c.bf16 %v1452, %v1451
        %1565 = vrot.lane.b32.xlu0 %v1023, 56
        %v1566 = vpop.permute.xlu0 %1565
        %v1568 = vsel %vm1026, %v1564, 0
        %v1571 = vsel %vm1246, %v1566, 0
        %1573 = vmatprep.subr.bf16.mxu0 0
        %1574 = vmatpush1.bf16.msra.mxu0 %v1571
        %1575 = vmatprep.subr.bf16.mxu0 0
        %1576 = vmatpush1.bf16.msra.mxu0 0
        %1577 = vmatprep.subr.bf16.mxu0 0
        %1578 = vmatpush1.bf16.msra.mxu0 0
        %1579 = vmatprep.subr.bf16.mxu0 0
        %1580 = vmatpush1.bf16.msra.mxu0 0
        %1581 = vmatprep.subr.bf16.mxu0 0
        %1582 = vmatpush1.bf16.msra.mxu0 0
        %1583 = vmatprep.subr.bf16.mxu0 0
        %1584 = vmatpush1.bf16.msra.mxu0 0
        %1585 = vmatprep.subr.bf16.mxu0 0
        %1586 = vmatpush1.bf16.msra.mxu0 0
        %1587 = vmatprep.subr.bf16.mxu0 0
        %1588 = vmatpush1.bf16.msra.mxu0 0
        %1589 = vmatprep.subr.bf16.mxu0 0
        %1590 = vmatpush1.bf16.msra.mxu0 0
        %1591 = vmatprep.subr.bf16.mxu0 0
        %1592 = vmatpush1.bf16.msra.mxu0 0
        %1593 = vmatprep.subr.bf16.mxu0 0
        %1594 = vmatpush1.bf16.msra.mxu0 0
        %1595 = vmatprep.subr.bf16.mxu0 0
        %1596 = vmatpush1.bf16.msra.mxu0 0
        %1597 = vmatprep.subr.bf16.mxu0 0
        %1598 = vmatpush1.bf16.msra.mxu0 0
        %1599 = vmatprep.subr.bf16.mxu0 0
        %1600 = vmatpush1.bf16.msra.mxu0 0
        %1601 = vmatprep.subr.bf16.mxu0 0
        %1602 = vmatpush1.bf16.msra.mxu0 0
        %1603 = vmatprep.subr.bf16.mxu0 0
        %1604 = vmatpush1.bf16.msra.mxu0 0
        %1605 = vmatprep.mubr.bf16.mxu0 0
        %1606 = vmatmul.mubr.bf16.gmra.mrb[0].mxu0 %v1568
        %v1607 = vpop.f32.mrb[0].mxu0
        %v1608 = vadd.f32 0.0, %v1607
        %v1609 = vpop.f32.mrb[0].mxu0
        %v1610 = vpop.f32.mrb[0].mxu0
        %v1611 = vadd.f32 0.0, %v1610
        %v1612 = vpop.f32.mrb[0].mxu0
        %1613 = vdwg.mxu0
        %v1614 = vpack.c.bf16 %v1555, %v1554
        %1615 = vrot.lane.b32.xlu0 %v1292, 56
        %v1616 = vpop.permute.xlu0 %1615
        %v1618 = vsel %vm1026, %v1614, 0
        %v1621 = vsel %vm1246, %v1616, 0
        %1623 = vmatprep.subr.bf16.mxu0 0
        %1624 = vmatpush1.bf16.msra.mxu0 %v1621
        %1625 = vmatprep.subr.bf16.mxu0 0
        %1626 = vmatpush1.bf16.msra.mxu0 0
        %1627 = vmatprep.subr.bf16.mxu0 0
        %1628 = vmatpush1.bf16.msra.mxu0 0
        %1629 = vmatprep.subr.bf16.mxu0 0
        %1630 = vmatpush1.bf16.msra.mxu0 0
        %1631 = vmatprep.subr.bf16.mxu0 0
        %1632 = vmatpush1.bf16.msra.mxu0 0
        %1633 = vmatprep.subr.bf16.mxu0 0
        %1634 = vmatpush1.bf16.msra.mxu0 0
        %1635 = vmatprep.subr.bf16.mxu0 0
        %1636 = vmatpush1.bf16.msra.mxu0 0
        %1637 = vmatprep.subr.bf16.mxu0 0
        %1638 = vmatpush1.bf16.msra.mxu0 0
        %1639 = vmatprep.subr.bf16.mxu0 0
        %1640 = vmatpush1.bf16.msra.mxu0 0
        %1641 = vmatprep.subr.bf16.mxu0 0
        %1642 = vmatpush1.bf16.msra.mxu0 0
        %1643 = vmatprep.subr.bf16.mxu0 0
        %1644 = vmatpush1.bf16.msra.mxu0 0
        %1645 = vmatprep.subr.bf16.mxu0 0
        %1646 = vmatpush1.bf16.msra.mxu0 0
        %1647 = vmatprep.subr.bf16.mxu0 0
        %1648 = vmatpush1.bf16.msra.mxu0 0
        %1649 = vmatprep.subr.bf16.mxu0 0
        %1650 = vmatpush1.bf16.msra.mxu0 0
        %1651 = vmatprep.subr.bf16.mxu0 0
        %1652 = vmatpush1.bf16.msra.mxu0 0
        %1653 = vmatprep.subr.bf16.mxu0 0
        %1654 = vmatpush1.bf16.msra.mxu0 0
        %1655 = vmatprep.mubr.bf16.mxu0 0
        %1656 = vmatmul.mubr.bf16.gmra.mrb[0].mxu0 %v1618
        %v1657 = vpop.f32.mrb[0].mxu0
        %v1658 = vadd.f32 0.0, %v1657
        %v1659 = vpop.f32.mrb[0].mxu0
        %v1660 = vpop.f32.mrb[0].mxu0
        %v1661 = vadd.f32 0.0, %v1660
        %v1662 = vpop.f32.mrb[0].mxu0
        %1663 = vdwg.mxu0
        %1666 = vrot.lane.b32.xlu0 %v1608, 8
        %v1667 = vpop.permute.xlu0 %1666
        %1668 = vrot.lane.b32.xlu0 %v1611, 8
        %v1669 = vpop.permute.xlu0 %1668
        %v1672 = vsel %vm1026, %v1285, %v1667
        %v1673 = vsel %vm1026, %v1288, %v1669
        %vm1674 = vcmask 130048
        %1675 = vst.msk [vmem:[#allocation2] sm:$0xff] %vm1674, %v1672
        %1676 = vst.msk [vmem:[#allocation2 + $0x8] sm:$0xff] %vm1674, %v1673
        %1679 = vrot.lane.b32.xlu0 %v1658, 8
        %v1680 = vpop.permute.xlu0 %1679
        %1681 = vrot.lane.b32.xlu0 %v1661, 8
        %v1682 = vpop.permute.xlu0 %1681
        %v1685 = vsel %vm1026, %v1336, %v1680
        %v1686 = vsel %vm1026, %v1339, %v1682
        %1687 = vst.msk [vmem:[#allocation2 + $0x10] sm:$0xff] %vm1674, %v1685
        %1688 = vst.msk [vmem:[#allocation2 + $0x18] sm:$0xff] %vm1674, %v1686
        %1689 = vrot.lane.b32.xlu0 %v1007, 112
        %v1690 = vpop.permute.xlu0 %1689
        %1691 = vrot.lane.b32.xlu0 %v1010, 112
        %v1692 = vpop.permute.xlu0 %1691
        %1693 = vrot.lane.b32.xlu0 %v1007, 80
        %v1694 = vpop.permute.xlu0 %1693
        %v1695 = vsel %vm1026, %v1690, 0
        %v1697 = vsel %vm1026, %v1692, 0
        %v1699 = vsel %vm1026, %v1694, 0
        %1701 = vmatprep.subr.mxu0 0.0
        %1702 = vmatpush1.xpose.msra.mxu0 %v1699
        %1703 = vmatprep.subr.mxu0 0.0
        %1704 = vmatpush1.xpose.msra.mxu0 0.0
        %1705 = vmatprep.subr.mxu0 0.0
        %1706 = vmatpush1.xpose.msra.mxu0 0.0
        %1707 = vmatprep.subr.mxu0 0.0
        %1708 = vmatpush1.xpose.msra.mxu0 0.0
        %1709 = vmatprep.subr.mxu0 0.0
        %1710 = vmatpush1.xpose.msra.mxu0 0.0
        %1711 = vmatprep.subr.mxu0 0.0
        %1712 = vmatpush1.xpose.msra.mxu0 0.0
        %1713 = vmatprep.subr.mxu0 0.0
        %1714 = vmatpush1.xpose.msra.mxu0 0.0
        %1715 = vmatprep.subr.mxu0 0.0
        %1716 = vmatpush1.xpose.msra.mxu0 0.0
        %1717 = vmatprep.subr.mxu0 0.0
        %1718 = vmatpush1.xpose.msra.mxu0 0.0
        %1719 = vmatprep.subr.mxu0 0.0
        %1720 = vmatpush1.xpose.msra.mxu0 0.0
        %1721 = vmatprep.subr.mxu0 0.0
        %1722 = vmatpush1.xpose.msra.mxu0 0.0
        %1723 = vmatprep.subr.mxu0 0.0
        %1724 = vmatpush1.xpose.msra.mxu0 0.0
        %1725 = vmatprep.subr.mxu0 0.0
        %1726 = vmatpush1.xpose.msra.mxu0 0.0
        %1727 = vmatprep.subr.mxu0 0.0
        %1728 = vmatpush1.xpose.msra.mxu0 0.0
        %1729 = vmatprep.subr.mxu0 0.0
        %1730 = vmatpush1.xpose.msra.mxu0 0.0
        %1731 = vmatprep.subr.mxu0 0.0
        %1732 = vmatpush1.xpose.msra.mxu0 0.0
        %1733 = vmatprep.subr.mxu0 0.0
        %1734 = vmatpush1.xpose.msra.mxu0 0.0
        %1735 = vmatprep.subr.mxu0 0.0
        %1736 = vmatpush1.xpose.msra.mxu0 0.0
        %1737 = vmatprep.subr.mxu0 0.0
        %1738 = vmatpush1.xpose.msra.mxu0 0.0
        %1739 = vmatprep.subr.mxu0 0.0
        %1740 = vmatpush1.xpose.msra.mxu0 0.0
        %1741 = vmatprep.subr.mxu0 0.0
        %1742 = vmatpush1.xpose.msra.mxu0 0.0
        %1743 = vmatprep.subr.mxu0 0.0
        %1744 = vmatpush1.xpose.msra.mxu0 0.0
        %1745 = vmatprep.subr.mxu0 0.0
        %1746 = vmatpush1.xpose.msra.mxu0 0.0
        %1747 = vmatprep.subr.mxu0 0.0
        %1748 = vmatpush1.xpose.msra.mxu0 0.0
        %1749 = vmatprep.subr.mxu0 0.0
        %1750 = vmatpush1.xpose.msra.mxu0 0.0
        %1751 = vmatprep.subr.mxu0 0.0
        %1752 = vmatpush1.xpose.msra.mxu0 0.0
        %1753 = vmatprep.subr.mxu0 0.0
        %1754 = vmatpush1.xpose.msra.mxu0 0.0
        %1755 = vmatprep.subr.mxu0 0.0
        %1756 = vmatpush1.xpose.msra.mxu0 0.0
        %1757 = vmatprep.subr.mxu0 0.0
        %1758 = vmatpush1.xpose.msra.mxu0 0.0
        %1759 = vmatprep.subr.mxu0 0.0
        %1760 = vmatpush1.xpose.msra.mxu0 0.0
        %1761 = vmatprep.subr.mxu0 0.0
        %1762 = vmatpush1.xpose.msra.mxu0 0.0
        %1763 = vmatprep.subr.mxu0 0.0
        %1764 = vmatpush1.xpose.msra.mxu0 0.0
        %1765 = vmatprep.mubr.f32.mxu0 0.0
        %1766 = vmatmul.mubr.f32.gmra.mrb[0].mxu0 %v1695
        %v1767 = vpop.f32.mrb[0].mxu0
        %v1768 = vadd.f32 0.0, %v1767
        %v1769 = vpop.f32.mrb[0].mxu0
        %1770 = vmatprep.mubr.f32.mxu0 0.0
        %1771 = vmatmul.mubr.f32.gmra.mrb[0].mxu0 %v1697
        %v1772 = vpop.f32.mrb[0].mxu0
        %v1773 = vadd.f32 0.0, %v1772
        %v1774 = vpop.f32.mrb[0].mxu0
        %1775 = vdwg.mxu0
        %v1776 = vmul.f32 %v1768, 0.35355338
        %v1777 = vmul.f32 %v1773, 0.35355338
        %v1778 = vsel %vm1026, %v1776, -inf
        %1779 = vmax.xlane.f32.xlu0 %v1778
        %v1780 = vpop.xlane.xlu0 %1779
        %v1781 = vsel %vm1026, %v1777, -inf
        %1782 = vmax.xlane.f32.xlu0 %v1781
        %v1783 = vpop.xlane.xlu0 %1782
        %v1784 = vsub.f32 %v1776, %v1780
        %v1785 = vsub.f32 %v1777, %v1783
        %v1786 = vmul.f32 %v1784, 1.442695
        %v1787 = vpow.pop %v1786
        %v1788 = vmul.f32 %v1785, 1.442695
        %v1789 = vpow.pop %v1788
        %v1790 = vsel %vm1026, %v1787, 0.0
        %1791 = vadd.xlane.f32.xlu0 %v1790
        %v1792 = vpop.xlane.xlu0 %1791
        %v1793 = vsel %vm1026, %v1789, 0.0
        %1794 = vadd.xlane.f32.xlu0 %v1793
        %v1795 = vpop.xlane.xlu0 %1794
        %v1796 = vrcp.pop %v1792
        %v1797 = vrcp.pop %v1795
        %v1798 = vmul.f32 %v1787, %v1796
        %v1799 = vmul.f32 %v1789, %v1797
        %1800 = vrot.lane.b32.xlu0 %v1010, 80
        %v1801 = vpop.permute.xlu0 %1800
        %v1802 = vsel %vm1026, %v1801, 0
        %1804 = vmatprep.subr.mxu0 0.0
        %1805 = vmatpush1.xpose.msra.mxu0 %v1802
        %1806 = vmatprep.subr.mxu0 0.0
        %1807 = vmatpush1.xpose.msra.mxu0 0.0
        %1808 = vmatprep.subr.mxu0 0.0
        %1809 = vmatpush1.xpose.msra.mxu0 0.0
        %1810 = vmatprep.subr.mxu0 0.0
        %1811 = vmatpush1.xpose.msra.mxu0 0.0
        %1812 = vmatprep.subr.mxu0 0.0
        %1813 = vmatpush1.xpose.msra.mxu0 0.0
        %1814 = vmatprep.subr.mxu0 0.0
        %1815 = vmatpush1.xpose.msra.mxu0 0.0
        %1816 = vmatprep.subr.mxu0 0.0
        %1817 = vmatpush1.xpose.msra.mxu0 0.0
        %1818 = vmatprep.subr.mxu0 0.0
        %1819 = vmatpush1.xpose.msra.mxu0 0.0
        %1820 = vmatprep.subr.mxu0 0.0
        %1821 = vmatpush1.xpose.msra.mxu0 0.0
        %1822 = vmatprep.subr.mxu0 0.0
        %1823 = vmatpush1.xpose.msra.mxu0 0.0
        %1824 = vmatprep.subr.mxu0 0.0
        %1825 = vmatpush1.xpose.msra.mxu0 0.0
        %1826 = vmatprep.subr.mxu0 0.0
        %1827 = vmatpush1.xpose.msra.mxu0 0.0
        %1828 = vmatprep.subr.mxu0 0.0
        %1829 = vmatpush1.xpose.msra.mxu0 0.0
        %1830 = vmatprep.subr.mxu0 0.0
        %1831 = vmatpush1.xpose.msra.mxu0 0.0
        %1832 = vmatprep.subr.mxu0 0.0
        %1833 = vmatpush1.xpose.msra.mxu0 0.0
        %1834 = vmatprep.subr.mxu0 0.0
        %1835 = vmatpush1.xpose.msra.mxu0 0.0
        %1836 = vmatprep.subr.mxu0 0.0
        %1837 = vmatpush1.xpose.msra.mxu0 0.0
        %1838 = vmatprep.subr.mxu0 0.0
        %1839 = vmatpush1.xpose.msra.mxu0 0.0
        %1840 = vmatprep.subr.mxu0 0.0
        %1841 = vmatpush1.xpose.msra.mxu0 0.0
        %1842 = vmatprep.subr.mxu0 0.0
        %1843 = vmatpush1.xpose.msra.mxu0 0.0
        %1844 = vmatprep.subr.mxu0 0.0
        %1845 = vmatpush1.xpose.msra.mxu0 0.0
        %1846 = vmatprep.subr.mxu0 0.0
        %1847 = vmatpush1.xpose.msra.mxu0 0.0
        %1848 = vmatprep.subr.mxu0 0.0
        %1849 = vmatpush1.xpose.msra.mxu0 0.0
        %1850 = vmatprep.subr.mxu0 0.0
        %1851 = vmatpush1.xpose.msra.mxu0 0.0
        %1852 = vmatprep.subr.mxu0 0.0
        %1853 = vmatpush1.xpose.msra.mxu0 0.0
        %1854 = vmatprep.subr.mxu0 0.0
        %1855 = vmatpush1.xpose.msra.mxu0 0.0
        %1856 = vmatprep.subr.mxu0 0.0
        %1857 = vmatpush1.xpose.msra.mxu0 0.0
        %1858 = vmatprep.subr.mxu0 0.0
        %1859 = vmatpush1.xpose.msra.mxu0 0.0
        %1860 = vmatprep.subr.mxu0 0.0
        %1861 = vmatpush1.xpose.msra.mxu0 0.0
        %1862 = vmatprep.subr.mxu0 0.0
        %1863 = vmatpush1.xpose.msra.mxu0 0.0
        %1864 = vmatprep.subr.mxu0 0.0
        %1865 = vmatpush1.xpose.msra.mxu0 0.0
        %1866 = vmatprep.subr.mxu0 0.0
        %1867 = vmatpush1.xpose.msra.mxu0 0.0
        %1868 = vmatprep.mubr.f32.mxu0 0.0
        %1869 = vmatmul.mubr.f32.gmra.mrb[0].mxu0 %v1695
        %v1870 = vpop.f32.mrb[0].mxu0
        %v1871 = vadd.f32 0.0, %v1870
        %v1872 = vpop.f32.mrb[0].mxu0
        %1873 = vmatprep.mubr.f32.mxu0 0.0
        %1874 = vmatmul.mubr.f32.gmra.mrb[0].mxu0 %v1697
        %v1875 = vpop.f32.mrb[0].mxu0
        %v1876 = vadd.f32 0.0, %v1875
        %v1877 = vpop.f32.mrb[0].mxu0
        %1878 = vdwg.mxu0
        %v1879 = vmul.f32 %v1871, 0.35355338
        %v1880 = vmul.f32 %v1876, 0.35355338
        %v1881 = vsel %vm1026, %v1879, -inf
        %1882 = vmax.xlane.f32.xlu0 %v1881
        %v1883 = vpop.xlane.xlu0 %1882
        %v1884 = vsel %vm1026, %v1880, -inf
        %1885 = vmax.xlane.f32.xlu0 %v1884
        %v1886 = vpop.xlane.xlu0 %1885
        %v1887 = vsub.f32 %v1879, %v1883
        %v1888 = vsub.f32 %v1880, %v1886
        %v1889 = vmul.f32 %v1887, 1.442695
        %v1890 = vpow.pop %v1889
        %v1891 = vmul.f32 %v1888, 1.442695
        %v1892 = vpow.pop %v1891
        %v1893 = vsel %vm1026, %v1890, 0.0
        %1894 = vadd.xlane.f32.xlu0 %v1893
        %v1895 = vpop.xlane.xlu0 %1894
        %v1896 = vsel %vm1026, %v1892, 0.0
        %1897 = vadd.xlane.f32.xlu0 %v1896
        %v1898 = vpop.xlane.xlu0 %1897
        %v1899 = vrcp.pop %v1895
        %v1900 = vrcp.pop %v1898
        %v1901 = vmul.f32 %v1890, %v1899
        %v1902 = vmul.f32 %v1892, %v1900
        %s1903 = scalar_lea.vmem %s851, 16 [#allocation15]
        %1904 = vst.msk [vmem:[%s1903] sm:$0xff] %vm1026, %v1798
        %s1905 = scalar_lea.vmem %s872, 16 [#allocation19]
        %1906 = vst.msk [vmem:[%s1905] sm:$0xff] %vm1026, %v1799
        %s1907 = scalar_lea.vmem %s865, 16 [#allocation18]
        %1908 = vst.msk [vmem:[%s1907] sm:$0xff] %vm1026, %v1901
        %s1909 = scalar_lea.vmem %s858, 16 [#allocation16]
        %1910 = vst.msk [vmem:[%s1909] sm:$0xff] %vm1026, %v1902
        %v1911 = vpack.c.bf16 %v1799, %v1798
        %1912 = vrot.lane.b32.xlu0 %v1023, 48
        %v1913 = vpop.permute.xlu0 %1912
        %v1915 = vsel %vm1026, %v1911, 0
        %v1918 = vsel %vm1246, %v1913, 0
        %1920 = vmatprep.subr.bf16.mxu0 0
        %1921 = vmatpush1.bf16.msra.mxu0 %v1918
        %1922 = vmatprep.subr.bf16.mxu0 0
        %1923 = vmatpush1.bf16.msra.mxu0 0
        %1924 = vmatprep.subr.bf16.mxu0 0
        %1925 = vmatpush1.bf16.msra.mxu0 0
        %1926 = vmatprep.subr.bf16.mxu0 0
        %1927 = vmatpush1.bf16.msra.mxu0 0
        %1928 = vmatprep.subr.bf16.mxu0 0
        %1929 = vmatpush1.bf16.msra.mxu0 0
        %1930 = vmatprep.subr.bf16.mxu0 0
        %1931 = vmatpush1.bf16.msra.mxu0 0
        %1932 = vmatprep.subr.bf16.mxu0 0
        %1933 = vmatpush1.bf16.msra.mxu0 0
        %1934 = vmatprep.subr.bf16.mxu0 0
        %1935 = vmatpush1.bf16.msra.mxu0 0
        %1936 = vmatprep.subr.bf16.mxu0 0
        %1937 = vmatpush1.bf16.msra.mxu0 0
        %1938 = vmatprep.subr.bf16.mxu0 0
        %1939 = vmatpush1.bf16.msra.mxu0 0
        %1940 = vmatprep.subr.bf16.mxu0 0
        %1941 = vmatpush1.bf16.msra.mxu0 0
        %1942 = vmatprep.subr.bf16.mxu0 0
        %1943 = vmatpush1.bf16.msra.mxu0 0
        %1944 = vmatprep.subr.bf16.mxu0 0
        %1945 = vmatpush1.bf16.msra.mxu0 0
        %1946 = vmatprep.subr.bf16.mxu0 0
        %1947 = vmatpush1.bf16.msra.mxu0 0
        %1948 = vmatprep.subr.bf16.mxu0 0
        %1949 = vmatpush1.bf16.msra.mxu0 0
        %1950 = vmatprep.subr.bf16.mxu0 0
        %1951 = vmatpush1.bf16.msra.mxu0 0
        %1952 = vmatprep.mubr.bf16.mxu0 0
        %1953 = vmatmul.mubr.bf16.gmra.mrb[0].mxu0 %v1915
        %v1954 = vpop.f32.mrb[0].mxu0
        %v1955 = vadd.f32 0.0, %v1954
        %v1956 = vpop.f32.mrb[0].mxu0
        %v1957 = vpop.f32.mrb[0].mxu0
        %v1958 = vadd.f32 0.0, %v1957
        %v1959 = vpop.f32.mrb[0].mxu0
        %1960 = vdwg.mxu0
        %v1961 = vpack.c.bf16 %v1902, %v1901
        %1962 = vrot.lane.b32.xlu0 %v1292, 48
        %v1963 = vpop.permute.xlu0 %1962
        %v1965 = vsel %vm1026, %v1961, 0
        %v1968 = vsel %vm1246, %v1963, 0
        %1970 = vmatprep.subr.bf16.mxu0 0
        %1971 = vmatpush1.bf16.msra.mxu0 %v1968
        %1972 = vmatprep.subr.bf16.mxu0 0
        %1973 = vmatpush1.bf16.msra.mxu0 0
        %1974 = vmatprep.subr.bf16.mxu0 0
        %1975 = vmatpush1.bf16.msra.mxu0 0
        %1976 = vmatprep.subr.bf16.mxu0 0
        %1977 = vmatpush1.bf16.msra.mxu0 0
        %1978 = vmatprep.subr.bf16.mxu0 0
        %1979 = vmatpush1.bf16.msra.mxu0 0
        %1980 = vmatprep.subr.bf16.mxu0 0
        %1981 = vmatpush1.bf16.msra.mxu0 0
        %1982 = vmatprep.subr.bf16.mxu0 0
        %1983 = vmatpush1.bf16.msra.mxu0 0
        %1984 = vmatprep.subr.bf16.mxu0 0
        %1985 = vmatpush1.bf16.msra.mxu0 0
        %1986 = vmatprep.subr.bf16.mxu0 0
        %1987 = vmatpush1.bf16.msra.mxu0 0
        %1988 = vmatprep.subr.bf16.mxu0 0
        %1989 = vmatpush1.bf16.msra.mxu0 0
        %1990 = vmatprep.subr.bf16.mxu0 0
        %1991 = vmatpush1.bf16.msra.mxu0 0
        %1992 = vmatprep.subr.bf16.mxu0 0
        %1993 = vmatpush1.bf16.msra.mxu0 0
        %1994 = vmatprep.subr.bf16.mxu0 0
        %1995 = vmatpush1.bf16.msra.mxu0 0
        %1996 = vmatprep.subr.bf16.mxu0 0
        %1997 = vmatpush1.bf16.msra.mxu0 0
        %1998 = vmatprep.subr.bf16.mxu0 0
        %1999 = vmatpush1.bf16.msra.mxu0 0
        %2000 = vmatprep.subr.bf16.mxu0 0
        %2001 = vmatpush1.bf16.msra.mxu0 0
        %2002 = vmatprep.mubr.bf16.mxu0 0
        %2003 = vmatmul.mubr.bf16.gmra.mrb[0].mxu0 %v1965
        %v2004 = vpop.f32.mrb[0].mxu0
        %v2005 = vadd.f32 0.0, %v2004
        %v2006 = vpop.f32.mrb[0].mxu0
        %v2007 = vpop.f32.mrb[0].mxu0
        %v2008 = vadd.f32 0.0, %v2007
        %v2009 = vpop.f32.mrb[0].mxu0
        %2010 = vdwg.mxu0
        %2011 = vrot.lane.b32.xlu0 %v1007, 104
        %v2012 = vpop.permute.xlu0 %2011
        %2013 = vrot.lane.b32.xlu0 %v1010, 104
        %v2014 = vpop.permute.xlu0 %2013
        %2015 = vrot.lane.b32.xlu0 %v1007, 72
        %v2016 = vpop.permute.xlu0 %2015
        %v2017 = vsel %vm1026, %v2012, 0
        %v2019 = vsel %vm1026, %v2014, 0
        %v2021 = vsel %vm1026, %v2016, 0
        %2023 = vmatprep.subr.mxu0 0.0
        %2024 = vmatpush1.xpose.msra.mxu0 %v2021
        %2025 = vmatprep.subr.mxu0 0.0
        %2026 = vmatpush1.xpose.msra.mxu0 0.0
        %2027 = vmatprep.subr.mxu0 0.0
        %2028 = vmatpush1.xpose.msra.mxu0 0.0
        %2029 = vmatprep.subr.mxu0 0.0
        %2030 = vmatpush1.xpose.msra.mxu0 0.0
        %2031 = vmatprep.subr.mxu0 0.0
        %2032 = vmatpush1.xpose.msra.mxu0 0.0
        %2033 = vmatprep.subr.mxu0 0.0
        %2034 = vmatpush1.xpose.msra.mxu0 0.0
        %2035 = vmatprep.subr.mxu0 0.0
        %2036 = vmatpush1.xpose.msra.mxu0 0.0
        %2037 = vmatprep.subr.mxu0 0.0
        %2038 = vmatpush1.xpose.msra.mxu0 0.0
        %2039 = vmatprep.subr.mxu0 0.0
        %2040 = vmatpush1.xpose.msra.mxu0 0.0
        %2041 = vmatprep.subr.mxu0 0.0
        %2042 = vmatpush1.xpose.msra.mxu0 0.0
        %2043 = vmatprep.subr.mxu0 0.0
        %2044 = vmatpush1.xpose.msra.mxu0 0.0
        %2045 = vmatprep.subr.mxu0 0.0
        %2046 = vmatpush1.xpose.msra.mxu0 0.0
        %2047 = vmatprep.subr.mxu0 0.0
        %2048 = vmatpush1.xpose.msra.mxu0 0.0
        %2049 = vmatprep.subr.mxu0 0.0
        %2050 = vmatpush1.xpose.msra.mxu0 0.0
        %2051 = vmatprep.subr.mxu0 0.0
        %2052 = vmatpush1.xpose.msra.mxu0 0.0
        %2053 = vmatprep.subr.mxu0 0.0
        %2054 = vmatpush1.xpose.msra.mxu0 0.0
        %2055 = vmatprep.subr.mxu0 0.0
        %2056 = vmatpush1.xpose.msra.mxu0 0.0
        %2057 = vmatprep.subr.mxu0 0.0
        %2058 = vmatpush1.xpose.msra.mxu0 0.0
        %2059 = vmatprep.subr.mxu0 0.0
        %2060 = vmatpush1.xpose.msra.mxu0 0.0
        %2061 = vmatprep.subr.mxu0 0.0
        %2062 = vmatpush1.xpose.msra.mxu0 0.0
        %2063 = vmatprep.subr.mxu0 0.0
        %2064 = vmatpush1.xpose.msra.mxu0 0.0
        %2065 = vmatprep.subr.mxu0 0.0
        %2066 = vmatpush1.xpose.msra.mxu0 0.0
        %2067 = vmatprep.subr.mxu0 0.0
        %2068 = vmatpush1.xpose.msra.mxu0 0.0
        %2069 = vmatprep.subr.mxu0 0.0
        %2070 = vmatpush1.xpose.msra.mxu0 0.0
        %2071 = vmatprep.subr.mxu0 0.0
        %2072 = vmatpush1.xpose.msra.mxu0 0.0
        %2073 = vmatprep.subr.mxu0 0.0
        %2074 = vmatpush1.xpose.msra.mxu0 0.0
        %2075 = vmatprep.subr.mxu0 0.0
        %2076 = vmatpush1.xpose.msra.mxu0 0.0
        %2077 = vmatprep.subr.mxu0 0.0
        %2078 = vmatpush1.xpose.msra.mxu0 0.0
        %2079 = vmatprep.subr.mxu0 0.0
        %2080 = vmatpush1.xpose.msra.mxu0 0.0
        %2081 = vmatprep.subr.mxu0 0.0
        %2082 = vmatpush1.xpose.msra.mxu0 0.0
        %2083 = vmatprep.subr.mxu0 0.0
        %2084 = vmatpush1.xpose.msra.mxu0 0.0
        %2085 = vmatprep.subr.mxu0 0.0
        %2086 = vmatpush1.xpose.msra.mxu0 0.0
        %2087 = vmatprep.mubr.f32.mxu0 0.0
        %2088 = vmatmul.mubr.f32.gmra.mrb[0].mxu0 %v2017
        %v2089 = vpop.f32.mrb[0].mxu0
        %v2090 = vadd.f32 0.0, %v2089
        %v2091 = vpop.f32.mrb[0].mxu0
        %2092 = vmatprep.mubr.f32.mxu0 0.0
        %2093 = vmatmul.mubr.f32.gmra.mrb[0].mxu0 %v2019
        %v2094 = vpop.f32.mrb[0].mxu0
        %v2095 = vadd.f32 0.0, %v2094
        %v2096 = vpop.f32.mrb[0].mxu0
        %2097 = vdwg.mxu0
        %v2098 = vmul.f32 %v2090, 0.35355338
        %v2099 = vmul.f32 %v2095, 0.35355338
        %v2100 = vsel %vm1026, %v2098, -inf
        %2101 = vmax.xlane.f32.xlu0 %v2100
        %v2102 = vpop.xlane.xlu0 %2101
        %v2103 = vsel %vm1026, %v2099, -inf
        %2104 = vmax.xlane.f32.xlu0 %v2103
        %v2105 = vpop.xlane.xlu0 %2104
        %v2106 = vsub.f32 %v2098, %v2102
        %v2107 = vsub.f32 %v2099, %v2105
        %v2108 = vmul.f32 %v2106, 1.442695
        %v2109 = vpow.pop %v2108
        %v2110 = vmul.f32 %v2107, 1.442695
        %v2111 = vpow.pop %v2110
        %v2112 = vsel %vm1026, %v2109, 0.0
        %2113 = vadd.xlane.f32.xlu0 %v2112
        %v2114 = vpop.xlane.xlu0 %2113
        %v2115 = vsel %vm1026, %v2111, 0.0
        %2116 = vadd.xlane.f32.xlu0 %v2115
        %v2117 = vpop.xlane.xlu0 %2116
        %v2118 = vrcp.pop %v2114
        %v2119 = vrcp.pop %v2117
        %v2120 = vmul.f32 %v2109, %v2118
        %v2121 = vmul.f32 %v2111, %v2119
        %2122 = vrot.lane.b32.xlu0 %v1010, 72
        %v2123 = vpop.permute.xlu0 %2122
        %v2124 = vsel %vm1026, %v2123, 0
        %2126 = vmatprep.subr.mxu0 0.0
        %2127 = vmatpush1.xpose.msra.mxu0 %v2124
        %2128 = vmatprep.subr.mxu0 0.0
        %2129 = vmatpush1.xpose.msra.mxu0 0.0
        %2130 = vmatprep.subr.mxu0 0.0
        %2131 = vmatpush1.xpose.msra.mxu0 0.0
        %2132 = vmatprep.subr.mxu0 0.0
        %2133 = vmatpush1.xpose.msra.mxu0 0.0
        %2134 = vmatprep.subr.mxu0 0.0
        %2135 = vmatpush1.xpose.msra.mxu0 0.0
        %2136 = vmatprep.subr.mxu0 0.0
        %2137 = vmatpush1.xpose.msra.mxu0 0.0
        %2138 = vmatprep.subr.mxu0 0.0
        %2139 = vmatpush1.xpose.msra.mxu0 0.0
        %2140 = vmatprep.subr.mxu0 0.0
        %2141 = vmatpush1.xpose.msra.mxu0 0.0
        %2142 = vmatprep.subr.mxu0 0.0
        %2143 = vmatpush1.xpose.msra.mxu0 0.0
        %2144 = vmatprep.subr.mxu0 0.0
        %2145 = vmatpush1.xpose.msra.mxu0 0.0
        %2146 = vmatprep.subr.mxu0 0.0
        %2147 = vmatpush1.xpose.msra.mxu0 0.0
        %2148 = vmatprep.subr.mxu0 0.0
        %2149 = vmatpush1.xpose.msra.mxu0 0.0
        %2150 = vmatprep.subr.mxu0 0.0
        %2151 = vmatpush1.xpose.msra.mxu0 0.0
        %2152 = vmatprep.subr.mxu0 0.0
        %2153 = vmatpush1.xpose.msra.mxu0 0.0
        %2154 = vmatprep.subr.mxu0 0.0
        %2155 = vmatpush1.xpose.msra.mxu0 0.0
        %2156 = vmatprep.subr.mxu0 0.0
        %2157 = vmatpush1.xpose.msra.mxu0 0.0
        %2158 = vmatprep.subr.mxu0 0.0
        %2159 = vmatpush1.xpose.msra.mxu0 0.0
        %2160 = vmatprep.subr.mxu0 0.0
        %2161 = vmatpush1.xpose.msra.mxu0 0.0
        %2162 = vmatprep.subr.mxu0 0.0
        %2163 = vmatpush1.xpose.msra.mxu0 0.0
        %2164 = vmatprep.subr.mxu0 0.0
        %2165 = vmatpush1.xpose.msra.mxu0 0.0
        %2166 = vmatprep.subr.mxu0 0.0
        %2167 = vmatpush1.xpose.msra.mxu0 0.0
        %2168 = vmatprep.subr.mxu0 0.0
        %2169 = vmatpush1.xpose.msra.mxu0 0.0
        %2170 = vmatprep.subr.mxu0 0.0
        %2171 = vmatpush1.xpose.msra.mxu0 0.0
        %2172 = vmatprep.subr.mxu0 0.0
        %2173 = vmatpush1.xpose.msra.mxu0 0.0
        %2174 = vmatprep.subr.mxu0 0.0
        %2175 = vmatpush1.xpose.msra.mxu0 0.0
        %2176 = vmatprep.subr.mxu0 0.0
        %2177 = vmatpush1.xpose.msra.mxu0 0.0
        %2178 = vmatprep.subr.mxu0 0.0
        %2179 = vmatpush1.xpose.msra.mxu0 0.0
        %2180 = vmatprep.subr.mxu0 0.0
        %2181 = vmatpush1.xpose.msra.mxu0 0.0
        %2182 = vmatprep.subr.mxu0 0.0
        %2183 = vmatpush1.xpose.msra.mxu0 0.0
        %2184 = vmatprep.subr.mxu0 0.0
        %2185 = vmatpush1.xpose.msra.mxu0 0.0
        %2186 = vmatprep.subr.mxu0 0.0
        %2187 = vmatpush1.xpose.msra.mxu0 0.0
        %2188 = vmatprep.subr.mxu0 0.0
        %2189 = vmatpush1.xpose.msra.mxu0 0.0
        %2190 = vmatprep.mubr.f32.mxu0 0.0
        %2191 = vmatmul.mubr.f32.gmra.mrb[0].mxu0 %v2017
        %v2192 = vpop.f32.mrb[0].mxu0
        %v2193 = vadd.f32 0.0, %v2192
        %v2194 = vpop.f32.mrb[0].mxu0
        %2195 = vmatprep.mubr.f32.mxu0 0.0
        %2196 = vmatmul.mubr.f32.gmra.mrb[0].mxu0 %v2019
        %v2197 = vpop.f32.mrb[0].mxu0
        %v2198 = vadd.f32 0.0, %v2197
        %v2199 = vpop.f32.mrb[0].mxu0
        %2200 = vdwg.mxu0
        %v2201 = vmul.f32 %v2193, 0.35355338
        %v2202 = vmul.f32 %v2198, 0.35355338
        %v2203 = vsel %vm1026, %v2201, -inf
        %2204 = vmax.xlane.f32.xlu0 %v2203
        %v2205 = vpop.xlane.xlu0 %2204
        %v2206 = vsel %vm1026, %v2202, -inf
        %2207 = vmax.xlane.f32.xlu0 %v2206
        %v2208 = vpop.xlane.xlu0 %2207
        %v2209 = vsub.f32 %v2201, %v2205
        %v2210 = vsub.f32 %v2202, %v2208
        %v2211 = vmul.f32 %v2209, 1.442695
        %v2212 = vpow.pop %v2211
        %v2213 = vmul.f32 %v2210, 1.442695
        %v2214 = vpow.pop %v2213
        %v2215 = vsel %vm1026, %v2212, 0.0
        %2216 = vadd.xlane.f32.xlu0 %v2215
        %v2217 = vpop.xlane.xlu0 %2216
        %v2218 = vsel %vm1026, %v2214, 0.0
        %2219 = vadd.xlane.f32.xlu0 %v2218
        %v2220 = vpop.xlane.xlu0 %2219
        %v2221 = vrcp.pop %v2217
        %v2222 = vrcp.pop %v2220
        %v2223 = vmul.f32 %v2212, %v2221
        %v2224 = vmul.f32 %v2214, %v2222
        %s2225 = scalar_lea.vmem %s851, 24 [#allocation15]
        %2226 = vst.msk [vmem:[%s2225] sm:$0xff] %vm1026, %v2120
        %s2227 = scalar_lea.vmem %s872, 24 [#allocation19]
        %2228 = vst.msk [vmem:[%s2227] sm:$0xff] %vm1026, %v2121
        %s2229 = scalar_lea.vmem %s865, 24 [#allocation18]
        %2230 = vst.msk [vmem:[%s2229] sm:$0xff] %vm1026, %v2223
        %s2231 = scalar_lea.vmem %s858, 24 [#allocation16]
        %2232 = vst.msk [vmem:[%s2231] sm:$0xff] %vm1026, %v2224
        %v2233 = vpack.c.bf16 %v2121, %v2120
        %2234 = vrot.lane.b32.xlu0 %v1023, 40
        %v2235 = vpop.permute.xlu0 %2234
        %v2237 = vsel %vm1026, %v2233, 0
        %v2240 = vsel %vm1246, %v2235, 0
        %2242 = vmatprep.subr.bf16.mxu0 0
        %2243 = vmatpush1.bf16.msra.mxu0 %v2240
        %2244 = vmatprep.subr.bf16.mxu0 0
        %2245 = vmatpush1.bf16.msra.mxu0 0
        %2246 = vmatprep.subr.bf16.mxu0 0
        %2247 = vmatpush1.bf16.msra.mxu0 0
        %2248 = vmatprep.subr.bf16.mxu0 0
        %2249 = vmatpush1.bf16.msra.mxu0 0
        %2250 = vmatprep.subr.bf16.mxu0 0
        %2251 = vmatpush1.bf16.msra.mxu0 0
        %2252 = vmatprep.subr.bf16.mxu0 0
        %2253 = vmatpush1.bf16.msra.mxu0 0
        %2254 = vmatprep.subr.bf16.mxu0 0
        %2255 = vmatpush1.bf16.msra.mxu0 0
        %2256 = vmatprep.subr.bf16.mxu0 0
        %2257 = vmatpush1.bf16.msra.mxu0 0
        %2258 = vmatprep.subr.bf16.mxu0 0
        %2259 = vmatpush1.bf16.msra.mxu0 0
        %2260 = vmatprep.subr.bf16.mxu0 0
        %2261 = vmatpush1.bf16.msra.mxu0 0
        %2262 = vmatprep.subr.bf16.mxu0 0
        %2263 = vmatpush1.bf16.msra.mxu0 0
        %2264 = vmatprep.subr.bf16.mxu0 0
        %2265 = vmatpush1.bf16.msra.mxu0 0
        %2266 = vmatprep.subr.bf16.mxu0 0
        %2267 = vmatpush1.bf16.msra.mxu0 0
        %2268 = vmatprep.subr.bf16.mxu0 0
        %2269 = vmatpush1.bf16.msra.mxu0 0
        %2270 = vmatprep.subr.bf16.mxu0 0
        %2271 = vmatpush1.bf16.msra.mxu0 0
        %2272 = vmatprep.subr.bf16.mxu0 0
        %2273 = vmatpush1.bf16.msra.mxu0 0
        %2274 = vmatprep.mubr.bf16.mxu0 0
        %2275 = vmatmul.mubr.bf16.gmra.mrb[0].mxu0 %v2237
        %v2276 = vpop.f32.mrb[0].mxu0
        %v2277 = vadd.f32 0.0, %v2276
        %v2278 = vpop.f32.mrb[0].mxu0
        %v2279 = vpop.f32.mrb[0].mxu0
        %v2280 = vadd.f32 0.0, %v2279
        %v2281 = vpop.f32.mrb[0].mxu0
        %2282 = vdwg.mxu0
        %v2283 = vpack.c.bf16 %v2224, %v2223
        %2284 = vrot.lane.b32.xlu0 %v1292, 40
        %v2285 = vpop.permute.xlu0 %2284
        %v2287 = vsel %vm1026, %v2283, 0
        %v2290 = vsel %vm1246, %v2285, 0
        %2292 = vmatprep.subr.bf16.mxu0 0
        %2293 = vmatpush1.bf16.msra.mxu0 %v2290
        %2294 = vmatprep.subr.bf16.mxu0 0
        %2295 = vmatpush1.bf16.msra.mxu0 0
        %2296 = vmatprep.subr.bf16.mxu0 0
        %2297 = vmatpush1.bf16.msra.mxu0 0
        %2298 = vmatprep.subr.bf16.mxu0 0
        %2299 = vmatpush1.bf16.msra.mxu0 0
        %2300 = vmatprep.subr.bf16.mxu0 0
        %2301 = vmatpush1.bf16.msra.mxu0 0
        %2302 = vmatprep.subr.bf16.mxu0 0
        %2303 = vmatpush1.bf16.msra.mxu0 0
        %2304 = vmatprep.subr.bf16.mxu0 0
        %2305 = vmatpush1.bf16.msra.mxu0 0
        %2306 = vmatprep.subr.bf16.mxu0 0
        %2307 = vmatpush1.bf16.msra.mxu0 0
        %2308 = vmatprep.subr.bf16.mxu0 0
        %2309 = vmatpush1.bf16.msra.mxu0 0
        %2310 = vmatprep.subr.bf16.mxu0 0
        %2311 = vmatpush1.bf16.msra.mxu0 0
        %2312 = vmatprep.subr.bf16.mxu0 0
        %2313 = vmatpush1.bf16.msra.mxu0 0
        %2314 = vmatprep.subr.bf16.mxu0 0
        %2315 = vmatpush1.bf16.msra.mxu0 0
        %2316 = vmatprep.subr.bf16.mxu0 0
        %2317 = vmatpush1.bf16.msra.mxu0 0
        %2318 = vmatprep.subr.bf16.mxu0 0
        %2319 = vmatpush1.bf16.msra.mxu0 0
        %2320 = vmatprep.subr.bf16.mxu0 0
        %2321 = vmatpush1.bf16.msra.mxu0 0
        %2322 = vmatprep.subr.bf16.mxu0 0
        %2323 = vmatpush1.bf16.msra.mxu0 0
        %2324 = vmatprep.mubr.bf16.mxu0 0
        %2325 = vmatmul.mubr.bf16.gmra.mrb[0].mxu0 %v2287
        %v2326 = vpop.f32.mrb[0].mxu0
        %v2327 = vadd.f32 0.0, %v2326
        %v2328 = vpop.f32.mrb[0].mxu0
        %v2329 = vpop.f32.mrb[0].mxu0
        %v2330 = vadd.f32 0.0, %v2329
        %v2331 = vpop.f32.mrb[0].mxu0
        %2332 = vdwg.mxu0
        %2335 = vrot.lane.b32.xlu0 %v2277, 8
        %v2336 = vpop.permute.xlu0 %2335
        %2337 = vrot.lane.b32.xlu0 %v2280, 8
        %v2338 = vpop.permute.xlu0 %2337
        %v2341 = vsel %vm1026, %v1955, %v2336
        %v2342 = vsel %vm1026, %v1958, %v2338
        %2345 = vrot.lane.b32.xlu0 %v2341, 16
        %v2346 = vpop.permute.xlu0 %2345
        %2347 = vrot.lane.b32.xlu0 %v2342, 16
        %v2348 = vpop.permute.xlu0 %2347
        %vm2351 = vcmask 261248
        %2352 = vst.msk [vmem:[#allocation2] sm:$0xff] %vm2351, %v2346
        %2353 = vst.msk [vmem:[#allocation2 + $0x8] sm:$0xff] %vm2351, %v2348
        %2356 = vrot.lane.b32.xlu0 %v2327, 8
        %v2357 = vpop.permute.xlu0 %2356
        %2358 = vrot.lane.b32.xlu0 %v2330, 8
        %v2359 = vpop.permute.xlu0 %2358
        %v2362 = vsel %vm1026, %v2005, %v2357
        %v2363 = vsel %vm1026, %v2008, %v2359
        %2366 = vrot.lane.b32.xlu0 %v2362, 16
        %v2367 = vpop.permute.xlu0 %2366
        %2368 = vrot.lane.b32.xlu0 %v2363, 16
        %v2369 = vpop.permute.xlu0 %2368
        %2372 = vst.msk [vmem:[#allocation2 + $0x10] sm:$0xff] %vm2351, %v2367
        %2373 = vst.msk [vmem:[#allocation2 + $0x18] sm:$0xff] %vm2351, %v2369
        %v2374 = vld [vmem:[#allocation2] sm:$0xff]
        %v2375 = vld [vmem:[#allocation2 + $0x8] sm:$0xff]
        %v2376 = vld [vmem:[#allocation2 + $0x10] sm:$0xff]
        %v2377 = vld [vmem:[#allocation2 + $0x18] sm:$0xff]
        %v2378 = vpack.c.bf16 %v2375, %v2374
        %v2379 = vpack.c.bf16 %v2377, %v2376
        %v2380 = vld [vmem:[#allocation3] sm:$0xf]
        %v2381 = vld [vmem:[#allocation3 + $0x4] sm:$0xf]
        %v2382 = vld [vmem:[#allocation3 + $0x8] sm:$0xf]
        %v2383 = vld [vmem:[#allocation3 + $0xc] sm:$0xf]
        %v2384 = vld [vmem:[#allocation6] sm:$0x1]
        %v2386 = vlaneseq
        %v2387 = vshrl.u32 %v2386, 7
        %v2388 = vsub.s32 0, %v2387
        %v2389 = vrot.slane %v2384, %v2388
        %v2395 = vunpack.c.l.b16 %v2380
        %v2396 = vunpack.c.l.b16 %v2381
        %v2397 = vunpack.c.l.b16 %v2382
        %v2398 = vunpack.c.l.b16 %v2383
        %v2399 = vpack.c.b16 %v2396, %v2395
        %v2400 = vpack.c.b16 %v2398, %v2397
        %v2404 = vsel %vm908, %v2378, 0
        %v2407 = vsel %vm908, %v2379, 0
        %2409 = vmatprep.subr.bf16.mxu0 0
        %2410 = vmatpush1.bf16.msra.mxu0 %v2399
        %2411 = vmatprep.subr.bf16.mxu0 0
        %2412 = vmatpush1.bf16.msra.mxu0 %v2400
        %2413 = vmatprep.subr.bf16.mxu0 0
        %2414 = vmatpush1.bf16.msra.mxu0 0
        %2415 = vmatprep.subr.bf16.mxu0 0
        %2416 = vmatpush1.bf16.msra.mxu0 0
        %2417 = vmatprep.subr.bf16.mxu0 0
        %2418 = vmatpush1.bf16.msra.mxu0 0
        %2419 = vmatprep.subr.bf16.mxu0 0
        %2420 = vmatpush1.bf16.msra.mxu0 0
        %2421 = vmatprep.subr.bf16.mxu0 0
        %2422 = vmatpush1.bf16.msra.mxu0 0
        %2423 = vmatprep.subr.bf16.mxu0 0
        %2424 = vmatpush1.bf16.msra.mxu0 0
        %2425 = vmatprep.subr.bf16.mxu0 0
        %2426 = vmatpush1.bf16.msra.mxu0 0
        %2427 = vmatprep.subr.bf16.mxu0 0
        %2428 = vmatpush1.bf16.msra.mxu0 0
        %2429 = vmatprep.subr.bf16.mxu0 0
        %2430 = vmatpush1.bf16.msra.mxu0 0
        %2431 = vmatprep.subr.bf16.mxu0 0
        %2432 = vmatpush1.bf16.msra.mxu0 0
        %2433 = vmatprep.subr.bf16.mxu0 0
        %2434 = vmatpush1.bf16.msra.mxu0 0
        %2435 = vmatprep.subr.bf16.mxu0 0
        %2436 = vmatpush1.bf16.msra.mxu0 0
        %2437 = vmatprep.subr.bf16.mxu0 0
        %2438 = vmatpush1.bf16.msra.mxu0 0
        %2439 = vmatprep.subr.bf16.mxu0 0
        %2440 = vmatpush1.bf16.msra.mxu0 0
        %2441 = vmatprep.mubr.bf16.mxu0 0
        %2442 = vmatmul.mubr.bf16.gmra.mrb[0].mxu0 %v2404
        %v2443 = vpop.f32.mrb[0].mxu0
        %v2444 = vadd.f32 %v2389, %v2443
        %v2445 = vpop.f32.mrb[0].mxu0
        %v2446 = vpop.f32.mrb[0].mxu0
        %v2447 = vadd.f32 %v2389, %v2446
        %v2448 = vpop.f32.mrb[0].mxu0
        %2449 = vmatprep.mubr.bf16.mxu0 0
        %2450 = vmatmul.mubr.bf16.gmra.mrb[0].mxu0 %v2407
        %v2451 = vpop.f32.mrb[0].mxu0
        %v2452 = vadd.f32 %v2389, %v2451
        %v2453 = vpop.f32.mrb[0].mxu0
        %v2454 = vpop.f32.mrb[0].mxu0
        %v2455 = vadd.f32 %v2389, %v2454
        %v2456 = vpop.f32.mrb[0].mxu0
        %2457 = vdwg.mxu0
        %v2458 = vld [vmem:[#allocation8] sm:$0x1]
        %v2459 = vld [vmem:[%s10] sm:$0x1]
        %v2460 = vld [vmem:[%s12] sm:$0x1]
        %v2461 = vld [vmem:[%s14] sm:$0x1]
        %v2462 = vadd.f32 %v904, %v2444
        %v2463 = vsel %vm908, %v2462, 0.0
        %2464 = vadd.xlane.f32.xlu0 %v2463
        %v2465 = vpop.xlane.xlu0 %2464
        %v2466 = vmul.f32 %v2465, %v915
        %v2467 = vsub.f32 %v2462, %v2466
        %v2468 = vmul.f32 %v2467, %v2467
        %v2469 = vsel %vm908, %v2468, 0.0
        %2470 = vadd.xlane.f32.xlu0 %v2469
        %v2471 = vpop.xlane.xlu0 %2470
        %v2472 = vmul.f32 %v2471, %v915
        %v2473 = vadd.f32 %v2472, 1e-05
        %v2474 = vrsqrt.pop %v2473
        %v2475 = vmul.f32 %v2467, %v2474
        %v2477 = vlaneseq
        %v2478 = vshrl.u32 %v2477, 7
        %v2479 = vsub.s32 0, %v2478
        %v2480 = vrot.slane %v2458, %v2479
        %v2482 = vmul.f32 %v2475, %v2480
        %v2484 = vlaneseq
        %v2485 = vshrl.u32 %v2484, 7
        %v2486 = vsub.s32 0, %v2485
        %v2487 = vrot.slane %v2459, %v2486
        %v2489 = vadd.f32 %v2482, %v2487
        %v2490 = vpack.c.bf16 %v2489, %v2489
        %v2491 = vld [vmem:[%s11] sm:$0xf]
        %v2492 = vld [vmem:[%s11 + $0x4] sm:$0xf]
        %v2493 = vld [vmem:[%s11 + $0x8] sm:$0xf]
        %v2494 = vld [vmem:[%s11 + $0xc] sm:$0xf]
        %v2496 = vlaneseq
        %v2497 = vshrl.u32 %v2496, 7
        %v2498 = vsub.s32 0, %v2497
        %v2499 = vrot.slane %v2460, %v2498
        %v2505 = vunpack.c.l.b16 %v2491
        %v2506 = vunpack.c.l.b16 %v2492
        %v2507 = vunpack.c.l.b16 %v2493
        %v2508 = vunpack.c.l.b16 %v2494
        %v2509 = vpack.c.b16 %v2506, %v2505
        %v2510 = vpack.c.b16 %v2508, %v2507
        %v2514 = vsel %vm908, %v2490, 0
        %2516 = vmatprep.subr.bf16.mxu0 0
        %2517 = vmatpush1.bf16.msra.mxu0 %v2509
        %2518 = vmatprep.subr.bf16.mxu0 0
        %2519 = vmatpush1.bf16.msra.mxu0 %v2510
        %2520 = vmatprep.subr.bf16.mxu0 0
        %2521 = vmatpush1.bf16.msra.mxu0 0
        %2522 = vmatprep.subr.bf16.mxu0 0
        %2523 = vmatpush1.bf16.msra.mxu0 0
        %2524 = vmatprep.subr.bf16.mxu0 0
        %2525 = vmatpush1.bf16.msra.mxu0 0
        %2526 = vmatprep.subr.bf16.mxu0 0
        %2527 = vmatpush1.bf16.msra.mxu0 0
        %2528 = vmatprep.subr.bf16.mxu0 0
        %2529 = vmatpush1.bf16.msra.mxu0 0
        %2530 = vmatprep.subr.bf16.mxu0 0
        %2531 = vmatpush1.bf16.msra.mxu0 0
        %2532 = vmatprep.subr.bf16.mxu0 0
        %2533 = vmatpush1.bf16.msra.mxu0 0
        %2534 = vmatprep.subr.bf16.mxu0 0
        %2535 = vmatpush1.bf16.msra.mxu0 0
        %2536 = vmatprep.subr.bf16.mxu0 0
        %2537 = vmatpush1.bf16.msra.mxu0 0
        %2538 = vmatprep.subr.bf16.mxu0 0
        %2539 = vmatpush1.bf16.msra.mxu0 0
        %2540 = vmatprep.subr.bf16.mxu0 0
        %2541 = vmatpush1.bf16.msra.mxu0 0
        %2542 = vmatprep.subr.bf16.mxu0 0
        %2543 = vmatpush1.bf16.msra.mxu0 0
        %2544 = vmatprep.subr.bf16.mxu0 0
        %2545 = vmatpush1.bf16.msra.mxu0 0
        %2546 = vmatprep.subr.bf16.mxu0 0
        %2547 = vmatpush1.bf16.msra.mxu0 0
        %2548 = vmatprep.mubr.bf16.mxu0 0
        %2549 = vmatmul.mubr.bf16.gmra.mrb[0].mxu0 %v2514
        %v2550 = vpop.f32.mrb[0].mxu0
        %v2551 = vadd.f32 %v2499, %v2550
        %v2552 = vpop.f32.mrb[0].mxu0
        %v2553 = vpop.f32.mrb[0].mxu0
        %v2554 = vpop.f32.mrb[0].mxu0
        %2555 = vdwg.mxu0
        %v2556 = vmul.f32 %v2551, 0.5
        %v2557 = vmul.f32 %v2551, 0.70710677
        %v2558 = verf.f32.pop %v2557
        %v2559 = vadd.f32 %v2558, 1.0
        %v2560 = vmul.f32 %v2556, %v2559
        %v2561 = vpack.c.bf16 %v2560, %v2560
        %v2562 = vld [vmem:[%s13] sm:$0xf]
        %v2563 = vld [vmem:[%s13 + $0x4] sm:$0xf]
        %v2564 = vld [vmem:[%s13 + $0x8] sm:$0xf]
        %v2565 = vld [vmem:[%s13 + $0xc] sm:$0xf]
        %v2566 = vld [vmem:[%s13 + $0x10] sm:$0xf]
        %v2567 = vld [vmem:[%s13 + $0x14] sm:$0xf]
        %v2568 = vld [vmem:[%s13 + $0x18] sm:$0xf]
        %v2569 = vld [vmem:[%s13 + $0x1c] sm:$0xf]
        %v2570 = vld [vmem:[%s13 + $0x20] sm:$0xf]
        %v2571 = vld [vmem:[%s13 + $0x24] sm:$0xf]
        %v2572 = vld [vmem:[%s13 + $0x28] sm:$0xf]
        %v2573 = vld [vmem:[%s13 + $0x2c] sm:$0xf]
        %v2574 = vld [vmem:[%s13 + $0x30] sm:$0xf]
        %v2575 = vld [vmem:[%s13 + $0x34] sm:$0xf]
        %v2576 = vld [vmem:[%s13 + $0x38] sm:$0xf]
        %v2577 = vld [vmem:[%s13 + $0x3c] sm:$0xf]
        %v2579 = vlaneseq
        %v2580 = vshrl.u32 %v2579, 7
        %v2581 = vsub.s32 0, %v2580
        %v2582 = vrot.slane %v2461, %v2581
        %v2600 = vunpack.c.l.b16 %v2562
        %v2601 = vunpack.c.l.b16 %v2563
        %v2602 = vunpack.c.l.b16 %v2564
        %v2603 = vunpack.c.l.b16 %v2565
        %v2604 = vunpack.c.l.b16 %v2566
        %v2605 = vunpack.c.l.b16 %v2567
        %v2606 = vunpack.c.l.b16 %v2568
        %v2607 = vunpack.c.l.b16 %v2569
        %v2608 = vunpack.c.l.b16 %v2570
        %v2609 = vunpack.c.l.b16 %v2571
        %v2610 = vunpack.c.l.b16 %v2572
        %v2611 = vunpack.c.l.b16 %v2573
        %v2612 = vunpack.c.l.b16 %v2574
        %v2613 = vunpack.c.l.b16 %v2575
        %v2614 = vunpack.c.l.b16 %v2576
        %v2615 = vunpack.c.l.b16 %v2577
        %v2616 = vpack.c.b16 %v2601, %v2600
        %v2617 = vpack.c.b16 %v2603, %v2602
        %v2618 = vpack.c.b16 %v2605, %v2604
        %v2619 = vpack.c.b16 %v2607, %v2606
        %v2620 = vpack.c.b16 %v2609, %v2608
        %v2621 = vpack.c.b16 %v2611, %v2610
        %v2622 = vpack.c.b16 %v2613, %v2612
        %v2623 = vpack.c.b16 %v2615, %v2614
        %2632 = vmatprep.subr.bf16.mxu0 0
        %2633 = vmatpush1.bf16.msra.mxu0 %v2616
        %2634 = vmatprep.subr.bf16.mxu0 0
        %2635 = vmatpush1.bf16.msra.mxu0 %v2617
        %2636 = vmatprep.subr.bf16.mxu0 0
        %2637 = vmatpush1.bf16.msra.mxu0 %v2618
        %2638 = vmatprep.subr.bf16.mxu0 0
        %2639 = vmatpush1.bf16.msra.mxu0 %v2619
        %2640 = vmatprep.subr.bf16.mxu0 0
        %2641 = vmatpush1.bf16.msra.mxu0 %v2620
        %2642 = vmatprep.subr.bf16.mxu0 0
        %2643 = vmatpush1.bf16.msra.mxu0 %v2621
        %2644 = vmatprep.subr.bf16.mxu0 0
        %2645 = vmatpush1.bf16.msra.mxu0 %v2622
        %2646 = vmatprep.subr.bf16.mxu0 0
        %2647 = vmatpush1.bf16.msra.mxu0 %v2623
        %2648 = vmatprep.subr.bf16.mxu0 0
        %2649 = vmatpush1.bf16.msra.mxu0 0
        %2650 = vmatprep.subr.bf16.mxu0 0
        %2651 = vmatpush1.bf16.msra.mxu0 0
        %2652 = vmatprep.subr.bf16.mxu0 0
        %2653 = vmatpush1.bf16.msra.mxu0 0
        %2654 = vmatprep.subr.bf16.mxu0 0
        %2655 = vmatpush1.bf16.msra.mxu0 0
        %2656 = vmatprep.subr.bf16.mxu0 0
        %2657 = vmatpush1.bf16.msra.mxu0 0
        %2658 = vmatprep.subr.bf16.mxu0 0
        %2659 = vmatpush1.bf16.msra.mxu0 0
        %2660 = vmatprep.subr.bf16.mxu0 0
        %2661 = vmatpush1.bf16.msra.mxu0 0
        %2662 = vmatprep.subr.bf16.mxu0 0
        %2663 = vmatpush1.bf16.msra.mxu0 0
        %2664 = vmatprep.mubr.bf16.mxu0 0
        %2665 = vmatmul.mubr.bf16.gmra.mrb[0].mxu0 %v2561
        %v2666 = vpop.f32.mrb[0].mxu0
        %v2667 = vadd.f32 %v2582, %v2666
        %v2668 = vpop.f32.mrb[0].mxu0
        %v2669 = vpop.f32.mrb[0].mxu0
        %v2670 = vpop.f32.mrb[0].mxu0
        %2671 = vdwg.mxu0
        %v2672 = vadd.f32 %v2462, %v2667
        %2673 = vst.msk [vmem:[%s823] sm:$0xff] %vm908, %v2672
        %v2674 = vld [vmem:[%s902] sm:$0xff]
        %v2675 = vadd.f32 %v2674, %v2447
        %v2676 = vsel %vm908, %v2675, 0.0
        %2677 = vadd.xlane.f32.xlu0 %v2676
        %v2678 = vpop.xlane.xlu0 %2677
        %v2679 = vmul.f32 %v2678, %v915
        %v2680 = vsub.f32 %v2675, %v2679
        %v2681 = vmul.f32 %v2680, %v2680
        %v2682 = vsel %vm908, %v2681, 0.0
        %2683 = vadd.xlane.f32.xlu0 %v2682
        %v2684 = vpop.xlane.xlu0 %2683
        %v2685 = vmul.f32 %v2684, %v915
        %v2686 = vadd.f32 %v2685, 1e-05
        %v2687 = vrsqrt.pop %v2686
        %v2688 = vmul.f32 %v2680, %v2687
        %v2689 = vmul.f32 %v2688, %v2480
        %v2690 = vadd.f32 %v2689, %v2487
        %v2691 = vpack.c.bf16 %v2690, %v2690
        %v2692 = vld [vmem:[%s11] sm:$0xf]
        %v2693 = vld [vmem:[%s11 + $0x4] sm:$0xf]
        %v2694 = vld [vmem:[%s11 + $0x8] sm:$0xf]
        %v2695 = vld [vmem:[%s11 + $0xc] sm:$0xf]
        %v2700 = vunpack.c.l.b16 %v2692
        %v2701 = vunpack.c.l.b16 %v2693
        %v2702 = vunpack.c.l.b16 %v2694
        %v2703 = vunpack.c.l.b16 %v2695
        %v2704 = vpack.c.b16 %v2701, %v2700
        %v2705 = vpack.c.b16 %v2703, %v2702
        %v2709 = vsel %vm908, %v2691, 0
        %2711 = vmatprep.subr.bf16.mxu0 0
        %2712 = vmatpush1.bf16.msra.mxu0 %v2704
        %2713 = vmatprep.subr.bf16.mxu0 0
        %2714 = vmatpush1.bf16.msra.mxu0 %v2705
        %2715 = vmatprep.subr.bf16.mxu0 0
        %2716 = vmatpush1.bf16.msra.mxu0 0
        %2717 = vmatprep.subr.bf16.mxu0 0
        %2718 = vmatpush1.bf16.msra.mxu0 0
        %2719 = vmatprep.subr.bf16.mxu0 0
        %2720 = vmatpush1.bf16.msra.mxu0 0
        %2721 = vmatprep.subr.bf16.mxu0 0
        %2722 = vmatpush1.bf16.msra.mxu0 0
        %2723 = vmatprep.subr.bf16.mxu0 0
        %2724 = vmatpush1.bf16.msra.mxu0 0
        %2725 = vmatprep.subr.bf16.mxu0 0
        %2726 = vmatpush1.bf16.msra.mxu0 0
        %2727 = vmatprep.subr.bf16.mxu0 0
        %2728 = vmatpush1.bf16.msra.mxu0 0
        %2729 = vmatprep.subr.bf16.mxu0 0
        %2730 = vmatpush1.bf16.msra.mxu0 0
        %2731 = vmatprep.subr.bf16.mxu0 0
        %2732 = vmatpush1.bf16.msra.mxu0 0
        %2733 = vmatprep.subr.bf16.mxu0 0
        %2734 = vmatpush1.bf16.msra.mxu0 0
        %2735 = vmatprep.subr.bf16.mxu0 0
        %2736 = vmatpush1.bf16.msra.mxu0 0
        %2737 = vmatprep.subr.bf16.mxu0 0
        %2738 = vmatpush1.bf16.msra.mxu0 0
        %2739 = vmatprep.subr.bf16.mxu0 0
        %2740 = vmatpush1.bf16.msra.mxu0 0
        %2741 = vmatprep.subr.bf16.mxu0 0
        %2742 = vmatpush1.bf16.msra.mxu0 0
        %2743 = vmatprep.mubr.bf16.mxu0 0
        %2744 = vmatmul.mubr.bf16.gmra.mrb[0].mxu0 %v2709
        %v2745 = vpop.f32.mrb[0].mxu0
        %v2746 = vadd.f32 %v2499, %v2745
        %v2747 = vpop.f32.mrb[0].mxu0
        %v2748 = vpop.f32.mrb[0].mxu0
        %v2749 = vpop.f32.mrb[0].mxu0
        %2750 = vdwg.mxu0
        %v2751 = vmul.f32 %v2746, 0.5
        %v2752 = vmul.f32 %v2746, 0.70710677
        %v2753 = verf.f32.pop %v2752
        %v2754 = vadd.f32 %v2753, 1.0
        %v2755 = vmul.f32 %v2751, %v2754
        %v2756 = vpack.c.bf16 %v2755, %v2755
        %v2757 = vld [vmem:[%s13] sm:$0xf]
        %v2758 = vld [vmem:[%s13 + $0x4] sm:$0xf]
        %v2759 = vld [vmem:[%s13 + $0x8] sm:$0xf]
        %v2760 = vld [vmem:[%s13 + $0xc] sm:$0xf]
        %v2761 = vld [vmem:[%s13 + $0x10] sm:$0xf]
        %v2762 = vld [vmem:[%s13 + $0x14] sm:$0xf]
        %v2763 = vld [vmem:[%s13 + $0x18] sm:$0xf]
        %v2764 = vld [vmem:[%s13 + $0x1c] sm:$0xf]
        %v2765 = vld [vmem:[%s13 + $0x20] sm:$0xf]
        %v2766 = vld [vmem:[%s13 + $0x24] sm:$0xf]
        %v2767 = vld [vmem:[%s13 + $0x28] sm:$0xf]
        %v2768 = vld [vmem:[%s13 + $0x2c] sm:$0xf]
        %v2769 = vld [vmem:[%s13 + $0x30] sm:$0xf]
        %v2770 = vld [vmem:[%s13 + $0x34] sm:$0xf]
        %v2771 = vld [vmem:[%s13 + $0x38] sm:$0xf]
        %v2772 = vld [vmem:[%s13 + $0x3c] sm:$0xf]
        %v2789 = vunpack.c.l.b16 %v2757
        %v2790 = vunpack.c.l.b16 %v2758
        %v2791 = vunpack.c.l.b16 %v2759
        %v2792 = vunpack.c.l.b16 %v2760
        %v2793 = vunpack.c.l.b16 %v2761
        %v2794 = vunpack.c.l.b16 %v2762
        %v2795 = vunpack.c.l.b16 %v2763
        %v2796 = vunpack.c.l.b16 %v2764
        %v2797 = vunpack.c.l.b16 %v2765
        %v2798 = vunpack.c.l.b16 %v2766
        %v2799 = vunpack.c.l.b16 %v2767
        %v2800 = vunpack.c.l.b16 %v2768
        %v2801 = vunpack.c.l.b16 %v2769
        %v2802 = vunpack.c.l.b16 %v2770
        %v2803 = vunpack.c.l.b16 %v2771
        %v2804 = vunpack.c.l.b16 %v2772
        %v2805 = vpack.c.b16 %v2790, %v2789
        %v2806 = vpack.c.b16 %v2792, %v2791
        %v2807 = vpack.c.b16 %v2794, %v2793
        %v2808 = vpack.c.b16 %v2796, %v2795
        %v2809 = vpack.c.b16 %v2798, %v2797
        %v2810 = vpack.c.b16 %v2800, %v2799
        %v2811 = vpack.c.b16 %v2802, %v2801
        %v2812 = vpack.c.b16 %v2804, %v2803
        %2821 = vmatprep.subr.bf16.mxu0 0
        %2822 = vmatpush1.bf16.msra.mxu0 %v2805
        %2823 = vmatprep.subr.bf16.mxu0 0
        %2824 = vmatpush1.bf16.msra.mxu0 %v2806
        %2825 = vmatprep.subr.bf16.mxu0 0
        %2826 = vmatpush1.bf16.msra.mxu0 %v2807
        %2827 = vmatprep.subr.bf16.mxu0 0
        %2828 = vmatpush1.bf16.msra.mxu0 %v2808
        %2829 = vmatprep.subr.bf16.mxu0 0
        %2830 = vmatpush1.bf16.msra.mxu0 %v2809
        %2831 = vmatprep.subr.bf16.mxu0 0
        %2832 = vmatpush1.bf16.msra.mxu0 %v2810
        %2833 = vmatprep.subr.bf16.mxu0 0
        %2834 = vmatpush1.bf16.msra.mxu0 %v2811
        %2835 = vmatprep.subr.bf16.mxu0 0
        %2836 = vmatpush1.bf16.msra.mxu0 %v2812
        %2837 = vmatprep.subr.bf16.mxu0 0
        %2838 = vmatpush1.bf16.msra.mxu0 0
        %2839 = vmatprep.subr.bf16.mxu0 0
        %2840 = vmatpush1.bf16.msra.mxu0 0
        %2841 = vmatprep.subr.bf16.mxu0 0
        %2842 = vmatpush1.bf16.msra.mxu0 0
        %2843 = vmatprep.subr.bf16.mxu0 0
        %2844 = vmatpush1.bf16.msra.mxu0 0
        %2845 = vmatprep.subr.bf16.mxu0 0
        %2846 = vmatpush1.bf16.msra.mxu0 0
        %2847 = vmatprep.subr.bf16.mxu0 0
        %2848 = vmatpush1.bf16.msra.mxu0 0
        %2849 = vmatprep.subr.bf16.mxu0 0
        %2850 = vmatpush1.bf16.msra.mxu0 0
        %2851 = vmatprep.subr.bf16.mxu0 0
        %2852 = vmatpush1.bf16.msra.mxu0 0
        %2853 = vmatprep.mubr.bf16.mxu0 0
        %2854 = vmatmul.mubr.bf16.gmra.mrb[0].mxu0 %v2756
        %v2855 = vpop.f32.mrb[0].mxu0
        %v2856 = vadd.f32 %v2582, %v2855
        %v2857 = vpop.f32.mrb[0].mxu0
        %v2858 = vpop.f32.mrb[0].mxu0
        %v2859 = vpop.f32.mrb[0].mxu0
        %2860 = vdwg.mxu0
        %v2861 = vadd.f32 %v2675, %v2856
        %2862 = vst.msk [vmem:[%s844] sm:$0xff] %vm908, %v2861
        %v2863 = vld [vmem:[%s898] sm:$0xff]
        %v2864 = vadd.f32 %v2863, %v2452
        %v2865 = vsel %vm908, %v2864, 0.0
        %2866 = vadd.xlane.f32.xlu0 %v2865
        %v2867 = vpop.xlane.xlu0 %2866
        %v2868 = vmul.f32 %v2867, %v915
        %v2869 = vsub.f32 %v2864, %v2868
        %v2870 = vmul.f32 %v2869, %v2869
        %v2871 = vsel %vm908, %v2870, 0.0
        %2872 = vadd.xlane.f32.xlu0 %v2871
        %v2873 = vpop.xlane.xlu0 %2872
        %v2874 = vmul.f32 %v2873, %v915
        %v2875 = vadd.f32 %v2874, 1e-05
        %v2876 = vrsqrt.pop %v2875
        %v2877 = vmul.f32 %v2869, %v2876
        %v2878 = vmul.f32 %v2877, %v2480
        %v2879 = vadd.f32 %v2878, %v2487
        %v2880 = vpack.c.bf16 %v2879, %v2879
        %v2881 = vld [vmem:[%s11] sm:$0xf]
        %v2882 = vld [vmem:[%s11 + $0x4] sm:$0xf]
        %v2883 = vld [vmem:[%s11 + $0x8] sm:$0xf]
        %v2884 = vld [vmem:[%s11 + $0xc] sm:$0xf]
        %v2889 = vunpack.c.l.b16 %v2881
        %v2890 = vunpack.c.l.b16 %v2882
        %v2891 = vunpack.c.l.b16 %v2883
        %v2892 = vunpack.c.l.b16 %v2884
        %v2893 = vpack.c.b16 %v2890, %v2889
        %v2894 = vpack.c.b16 %v2892, %v2891
        %v2898 = vsel %vm908, %v2880, 0
        %2900 = vmatprep.subr.bf16.mxu0 0
        %2901 = vmatpush1.bf16.msra.mxu0 %v2893
        %2902 = vmatprep.subr.bf16.mxu0 0
        %2903 = vmatpush1.bf16.msra.mxu0 %v2894
        %2904 = vmatprep.subr.bf16.mxu0 0
        %2905 = vmatpush1.bf16.msra.mxu0 0
        %2906 = vmatprep.subr.bf16.mxu0 0
        %2907 = vmatpush1.bf16.msra.mxu0 0
        %2908 = vmatprep.subr.bf16.mxu0 0
        %2909 = vmatpush1.bf16.msra.mxu0 0
        %2910 = vmatprep.subr.bf16.mxu0 0
        %2911 = vmatpush1.bf16.msra.mxu0 0
        %2912 = vmatprep.subr.bf16.mxu0 0
        %2913 = vmatpush1.bf16.msra.mxu0 0
        %2914 = vmatprep.subr.bf16.mxu0 0
        %2915 = vmatpush1.bf16.msra.mxu0 0
        %2916 = vmatprep.subr.bf16.mxu0 0
        %2917 = vmatpush1.bf16.msra.mxu0 0
        %2918 = vmatprep.subr.bf16.mxu0 0
        %2919 = vmatpush1.bf16.msra.mxu0 0
        %2920 = vmatprep.subr.bf16.mxu0 0
        %2921 = vmatpush1.bf16.msra.mxu0 0
        %2922 = vmatprep.subr.bf16.mxu0 0
        %2923 = vmatpush1.bf16.msra.mxu0 0
        %2924 = vmatprep.subr.bf16.mxu0 0
        %2925 = vmatpush1.bf16.msra.mxu0 0
        %2926 = vmatprep.subr.bf16.mxu0 0
        %2927 = vmatpush1.bf16.msra.mxu0 0
        %2928 = vmatprep.subr.bf16.mxu0 0
        %2929 = vmatpush1.bf16.msra.mxu0 0
        %2930 = vmatprep.subr.bf16.mxu0 0
        %2931 = vmatpush1.bf16.msra.mxu0 0
        %2932 = vmatprep.mubr.bf16.mxu0 0
        %2933 = vmatmul.mubr.bf16.gmra.mrb[0].mxu0 %v2898
        %v2934 = vpop.f32.mrb[0].mxu0
        %v2935 = vadd.f32 %v2499, %v2934
        %v2936 = vpop.f32.mrb[0].mxu0
        %v2937 = vpop.f32.mrb[0].mxu0
        %v2938 = vpop.f32.mrb[0].mxu0
        %2939 = vdwg.mxu0
        %v2940 = vmul.f32 %v2935, 0.5
        %v2941 = vmul.f32 %v2935, 0.70710677
        %v2942 = verf.f32.pop %v2941
        %v2943 = vadd.f32 %v2942, 1.0
        %v2944 = vmul.f32 %v2940, %v2943
        %v2945 = vpack.c.bf16 %v2944, %v2944
        %v2946 = vld [vmem:[%s13] sm:$0xf]
        %v2947 = vld [vmem:[%s13 + $0x4] sm:$0xf]
        %v2948 = vld [vmem:[%s13 + $0x8] sm:$0xf]
        %v2949 = vld [vmem:[%s13 + $0xc] sm:$0xf]
        %v2950 = vld [vmem:[%s13 + $0x10] sm:$0xf]
        %v2951 = vld [vmem:[%s13 + $0x14] sm:$0xf]
        %v2952 = vld [vmem:[%s13 + $0x18] sm:$0xf]
        %v2953 = vld [vmem:[%s13 + $0x1c] sm:$0xf]
        %v2954 = vld [vmem:[%s13 + $0x20] sm:$0xf]
        %v2955 = vld [vmem:[%s13 + $0x24] sm:$0xf]
        %v2956 = vld [vmem:[%s13 + $0x28] sm:$0xf]
        %v2957 = vld [vmem:[%s13 + $0x2c] sm:$0xf]
        %v2958 = vld [vmem:[%s13 + $0x30] sm:$0xf]
        %v2959 = vld [vmem:[%s13 + $0x34] sm:$0xf]
        %v2960 = vld [vmem:[%s13 + $0x38] sm:$0xf]
        %v2961 = vld [vmem:[%s13 + $0x3c] sm:$0xf]
        %v2978 = vunpack.c.l.b16 %v2946
        %v2979 = vunpack.c.l.b16 %v2947
        %v2980 = vunpack.c.l.b16 %v2948
        %v2981 = vunpack.c.l.b16 %v2949
        %v2982 = vunpack.c.l.b16 %v2950
        %v2983 = vunpack.c.l.b16 %v2951
        %v2984 = vunpack.c.l.b16 %v2952
        %v2985 = vunpack.c.l.b16 %v2953
        %v2986 = vunpack.c.l.b16 %v2954
        %v2987 = vunpack.c.l.b16 %v2955
        %v2988 = vunpack.c.l.b16 %v2956
        %v2989 = vunpack.c.l.b16 %v2957
        %v2990 = vunpack.c.l.b16 %v2958
        %v2991 = vunpack.c.l.b16 %v2959
        %v2992 = vunpack.c.l.b16 %v2960
        %v2993 = vunpack.c.l.b16 %v2961
        %v2994 = vpack.c.b16 %v2979, %v2978
        %v2995 = vpack.c.b16 %v2981, %v2980
        %v2996 = vpack.c.b16 %v2983, %v2982
        %v2997 = vpack.c.b16 %v2985, %v2984
        %v2998 = vpack.c.b16 %v2987, %v2986
        %v2999 = vpack.c.b16 %v2989, %v2988
        %v3000 = vpack.c.b16 %v2991, %v2990
        %v3001 = vpack.c.b16 %v2993, %v2992
        %3010 = vmatprep.subr.bf16.mxu0 0
        %3011 = vmatpush1.bf16.msra.mxu0 %v2994
        %3012 = vmatprep.subr.bf16.mxu0 0
        %3013 = vmatpush1.bf16.msra.mxu0 %v2995
        %3014 = vmatprep.subr.bf16.mxu0 0
        %3015 = vmatpush1.bf16.msra.mxu0 %v2996
        %3016 = vmatprep.subr.bf16.mxu0 0
        %3017 = vmatpush1.bf16.msra.mxu0 %v2997
        %3018 = vmatprep.subr.bf16.mxu0 0
        %3019 = vmatpush1.bf16.msra.mxu0 %v2998
        %3020 = vmatprep.subr.bf16.mxu0 0
        %3021 = vmatpush1.bf16.msra.mxu0 %v2999
        %3022 = vmatprep.subr.bf16.mxu0 0
        %3023 = vmatpush1.bf16.msra.mxu0 %v3000
        %3024 = vmatprep.subr.bf16.mxu0 0
        %3025 = vmatpush1.bf16.msra.mxu0 %v3001
        %3026 = vmatprep.subr.bf16.mxu0 0
        %3027 = vmatpush1.bf16.msra.mxu0 0
        %3028 = vmatprep.subr.bf16.mxu0 0
        %3029 = vmatpush1.bf16.msra.mxu0 0
        %3030 = vmatprep.subr.bf16.mxu0 0
        %3031 = vmatpush1.bf16.msra.mxu0 0
        %3032 = vmatprep.subr.bf16.mxu0 0
        %3033 = vmatpush1.bf16.msra.mxu0 0
        %3034 = vmatprep.subr.bf16.mxu0 0
        %3035 = vmatpush1.bf16.msra.mxu0 0
        %3036 = vmatprep.subr.bf16.mxu0 0
        %3037 = vmatpush1.bf16.msra.mxu0 0
        %3038 = vmatprep.subr.bf16.mxu0 0
        %3039 = vmatpush1.bf16.msra.mxu0 0
        %3040 = vmatprep.subr.bf16.mxu0 0
        %3041 = vmatpush1.bf16.msra.mxu0 0
        %3042 = vmatprep.mubr.bf16.mxu0 0
        %3043 = vmatmul.mubr.bf16.gmra.mrb[0].mxu0 %v2945
        %v3044 = vpop.f32.mrb[0].mxu0
        %v3045 = vadd.f32 %v2582, %v3044
        %v3046 = vpop.f32.mrb[0].mxu0
        %v3047 = vpop.f32.mrb[0].mxu0
        %v3048 = vpop.f32.mrb[0].mxu0
        %3049 = vdwg.mxu0
        %v3050 = vadd.f32 %v2864, %v3045
        %3051 = vst.msk [vmem:[%s837] sm:$0xff] %vm908, %v3050
        %v3052 = vadd.f32 %v905, %v2455
        %v3053 = vsel %vm908, %v3052, 0.0
        %3054 = vadd.xlane.f32.xlu0 %v3053
        %v3055 = vpop.xlane.xlu0 %3054
        %v3056 = vmul.f32 %v3055, %v915
        %v3057 = vsub.f32 %v3052, %v3056
        %v3058 = vmul.f32 %v3057, %v3057
        %v3059 = vsel %vm908, %v3058, 0.0
        %3060 = vadd.xlane.f32.xlu0 %v3059
        %v3061 = vpop.xlane.xlu0 %3060
        %v3062 = vmul.f32 %v3061, %v915
        %v3063 = vadd.f32 %v3062, 1e-05
        %v3064 = vrsqrt.pop %v3063
        %v3065 = vmul.f32 %v3057, %v3064
        %v3066 = vmul.f32 %v3065, %v2480
        %v3067 = vadd.f32 %v3066, %v2487
        %v3068 = vpack.c.bf16 %v3067, %v3067
        %v3069 = vld [vmem:[%s11] sm:$0xf]
        %v3070 = vld [vmem:[%s11 + $0x4] sm:$0xf]
        %v3071 = vld [vmem:[%s11 + $0x8] sm:$0xf]
        %v3072 = vld [vmem:[%s11 + $0xc] sm:$0xf]
        %v3077 = vunpack.c.l.b16 %v3069
        %v3078 = vunpack.c.l.b16 %v3070
        %v3079 = vunpack.c.l.b16 %v3071
        %v3080 = vunpack.c.l.b16 %v3072
        %v3081 = vpack.c.b16 %v3078, %v3077
        %v3082 = vpack.c.b16 %v3080, %v3079
        %v3086 = vsel %vm908, %v3068, 0
        %3088 = vmatprep.subr.bf16.mxu0 0
        %3089 = vmatpush1.bf16.msra.mxu0 %v3081
        %3090 = vmatprep.subr.bf16.mxu0 0
        %3091 = vmatpush1.bf16.msra.mxu0 %v3082
        %3092 = vmatprep.subr.bf16.mxu0 0
        %3093 = vmatpush1.bf16.msra.mxu0 0
        %3094 = vmatprep.subr.bf16.mxu0 0
        %3095 = vmatpush1.bf16.msra.mxu0 0
        %3096 = vmatprep.subr.bf16.mxu0 0
        %3097 = vmatpush1.bf16.msra.mxu0 0
        %3098 = vmatprep.subr.bf16.mxu0 0
        %3099 = vmatpush1.bf16.msra.mxu0 0
        %3100 = vmatprep.subr.bf16.mxu0 0
        %3101 = vmatpush1.bf16.msra.mxu0 0
        %3102 = vmatprep.subr.bf16.mxu0 0
        %3103 = vmatpush1.bf16.msra.mxu0 0
        %3104 = vmatprep.subr.bf16.mxu0 0
        %3105 = vmatpush1.bf16.msra.mxu0 0
        %3106 = vmatprep.subr.bf16.mxu0 0
        %3107 = vmatpush1.bf16.msra.mxu0 0
        %3108 = vmatprep.subr.bf16.mxu0 0
        %3109 = vmatpush1.bf16.msra.mxu0 0
        %3110 = vmatprep.subr.bf16.mxu0 0
        %3111 = vmatpush1.bf16.msra.mxu0 0
        %3112 = vmatprep.subr.bf16.mxu0 0
        %3113 = vmatpush1.bf16.msra.mxu0 0
        %3114 = vmatprep.subr.bf16.mxu0 0
        %3115 = vmatpush1.bf16.msra.mxu0 0
        %3116 = vmatprep.subr.bf16.mxu0 0
        %3117 = vmatpush1.bf16.msra.mxu0 0
        %3118 = vmatprep.subr.bf16.mxu0 0
        %3119 = vmatpush1.bf16.msra.mxu0 0
        %3120 = vmatprep.mubr.bf16.mxu0 0
        %3121 = vmatmul.mubr.bf16.gmra.mrb[0].mxu0 %v3086
        %v3122 = vpop.f32.mrb[0].mxu0
        %v3123 = vadd.f32 %v2499, %v3122
        %v3124 = vpop.f32.mrb[0].mxu0
        %v3125 = vpop.f32.mrb[0].mxu0
        %v3126 = vpop.f32.mrb[0].mxu0
        %3127 = vdwg.mxu0
        %v3128 = vmul.f32 %v3123, 0.5
        %v3129 = vmul.f32 %v3123, 0.70710677
        %v3130 = verf.f32.pop %v3129
        %v3131 = vadd.f32 %v3130, 1.0
        %v3132 = vmul.f32 %v3128, %v3131
        %v3133 = vpack.c.bf16 %v3132, %v3132
        %v3134 = vld [vmem:[%s13] sm:$0xf]
        %v3135 = vld [vmem:[%s13 + $0x4] sm:$0xf]
        %v3136 = vld [vmem:[%s13 + $0x8] sm:$0xf]
        %v3137 = vld [vmem:[%s13 + $0xc] sm:$0xf]
        %v3138 = vld [vmem:[%s13 + $0x10] sm:$0xf]
        %v3139 = vld [vmem:[%s13 + $0x14] sm:$0xf]
        %v3140 = vld [vmem:[%s13 + $0x18] sm:$0xf]
        %v3141 = vld [vmem:[%s13 + $0x1c] sm:$0xf]
        %v3142 = vld [vmem:[%s13 + $0x20] sm:$0xf]
        %v3143 = vld [vmem:[%s13 + $0x24] sm:$0xf]
        %v3144 = vld [vmem:[%s13 + $0x28] sm:$0xf]
        %v3145 = vld [vmem:[%s13 + $0x2c] sm:$0xf]
        %v3146 = vld [vmem:[%s13 + $0x30] sm:$0xf]
        %v3147 = vld [vmem:[%s13 + $0x34] sm:$0xf]
        %v3148 = vld [vmem:[%s13 + $0x38] sm:$0xf]
        %v3149 = vld [vmem:[%s13 + $0x3c] sm:$0xf]
        %v3166 = vunpack.c.l.b16 %v3134
        %v3167 = vunpack.c.l.b16 %v3135
        %v3168 = vunpack.c.l.b16 %v3136
        %v3169 = vunpack.c.l.b16 %v3137
        %v3170 = vunpack.c.l.b16 %v3138
        %v3171 = vunpack.c.l.b16 %v3139
        %v3172 = vunpack.c.l.b16 %v3140
        %v3173 = vunpack.c.l.b16 %v3141
        %v3174 = vunpack.c.l.b16 %v3142
        %v3175 = vunpack.c.l.b16 %v3143
        %v3176 = vunpack.c.l.b16 %v3144
        %v3177 = vunpack.c.l.b16 %v3145
        %v3178 = vunpack.c.l.b16 %v3146
        %v3179 = vunpack.c.l.b16 %v3147
        %v3180 = vunpack.c.l.b16 %v3148
        %v3181 = vunpack.c.l.b16 %v3149
        %v3182 = vpack.c.b16 %v3167, %v3166
        %v3183 = vpack.c.b16 %v3169, %v3168
        %v3184 = vpack.c.b16 %v3171, %v3170
        %v3185 = vpack.c.b16 %v3173, %v3172
        %v3186 = vpack.c.b16 %v3175, %v3174
        %v3187 = vpack.c.b16 %v3177, %v3176
        %v3188 = vpack.c.b16 %v3179, %v3178
        %v3189 = vpack.c.b16 %v3181, %v3180
        %3198 = vmatprep.subr.bf16.mxu0 0
        %3199 = vmatpush1.bf16.msra.mxu0 %v3182
        %3200 = vmatprep.subr.bf16.mxu0 0
        %3201 = vmatpush1.bf16.msra.mxu0 %v3183
        %3202 = vmatprep.subr.bf16.mxu0 0
        %3203 = vmatpush1.bf16.msra.mxu0 %v3184
        %3204 = vmatprep.subr.bf16.mxu0 0
        %3205 = vmatpush1.bf16.msra.mxu0 %v3185
        %3206 = vmatprep.subr.bf16.mxu0 0
        %3207 = vmatpush1.bf16.msra.mxu0 %v3186
        %3208 = vmatprep.subr.bf16.mxu0 0
        %3209 = vmatpush1.bf16.msra.mxu0 %v3187
        %3210 = vmatprep.subr.bf16.mxu0 0
        %3211 = vmatpush1.bf16.msra.mxu0 %v3188
        %3212 = vmatprep.subr.bf16.mxu0 0
        %3213 = vmatpush1.bf16.msra.mxu0 %v3189
        %3214 = vmatprep.subr.bf16.mxu0 0
        %3215 = vmatpush1.bf16.msra.mxu0 0
        %3216 = vmatprep.subr.bf16.mxu0 0
        %3217 = vmatpush1.bf16.msra.mxu0 0
        %3218 = vmatprep.subr.bf16.mxu0 0
        %3219 = vmatpush1.bf16.msra.mxu0 0
        %3220 = vmatprep.subr.bf16.mxu0 0
        %3221 = vmatpush1.bf16.msra.mxu0 0
        %3222 = vmatprep.subr.bf16.mxu0 0
        %3223 = vmatpush1.bf16.msra.mxu0 0
        %3224 = vmatprep.subr.bf16.mxu0 0
        %3225 = vmatpush1.bf16.msra.mxu0 0
        %3226 = vmatprep.subr.bf16.mxu0 0
        %3227 = vmatpush1.bf16.msra.mxu0 0
        %3228 = vmatprep.subr.bf16.mxu0 0
        %3229 = vmatpush1.bf16.msra.mxu0 0
        %3230 = vmatprep.mubr.bf16.mxu0 0
        %3231 = vmatmul.mubr.bf16.gmra.mrb[0].mxu0 %v3133
        %v3232 = vpop.f32.mrb[0].mxu0
        %v3233 = vadd.f32 %v2582, %v3232
        %v3234 = vpop.f32.mrb[0].mxu0
        %v3235 = vpop.f32.mrb[0].mxu0
        %v3236 = vpop.f32.mrb[0].mxu0
        %3237 = vdwg.mxu0
        %v3238 = vadd.f32 %v3052, %v3233
        %3239 = vst.msk [vmem:[%s830] sm:$0xff] %vm908, %v3238
        %s3240 = sand.u32 %s399, 1
        %s3241 = scalar_lea.sflag [#allocation5], %s3240
        %s3242 = sand.u32 %s399, 1
        %s3243 = smul.addr %s3242, 8
        %s3244 = scalar_lea.vmem [#allocation9], %s3243
        %s3245 = sand.u32 %s56, 1
        %s3246 = scalar_lea.sflag [#allocation11], %s3245
        %s3247 = sand.u32 %s425, 1
        %s3248 = smul.addr %s3247, 8
        %s3249 = scalar_lea.vmem [#allocation10], %s3248
        %s3250 = sand.u32 %s56, 1
        %s3251 = scalar_lea.sflag [#allocation11], %s3250
        %s3252 = sand.u32 %s451, 1
        %s3253 = smul.addr %s3252, 8
        %s3254 = scalar_lea.vmem [#allocation12], %s3253
        %s3255 = sand.u32 %s56, 1
        %s3256 = scalar_lea.sflag [#allocation14], %s3255
        %s3257 = sand.u32 %s477, 1
        %s3258 = smul.addr %s3257, 8
        %s3259 = scalar_lea.vmem [#allocation13], %s3258
        %s3260 = sand.u32 %s56, 1
        %s3261 = scalar_lea.sflag [#allocation14], %s3260
        %s3262 = sand.u32 %s503, 1
        %s3263 = smul.addr %s3262, 32
        %s3264 = scalar_lea.vmem [#allocation15], %s3263
        %s3265 = sand.u32 %s56, 1
        %s3266 = scalar_lea.sflag [#allocation17], %s3265
        %s3267 = sand.u32 %s529, 1
        %s3268 = smul.addr %s3267, 32
        %s3269 = scalar_lea.vmem [#allocation16], %s3268
        %s3270 = sand.u32 %s56, 1
        %s3271 = scalar_lea.sflag [#allocation17], %s3270
        %s3272 = sand.u32 %s555, 1
        %s3273 = smul.addr %s3272, 32
        %s3274 = scalar_lea.vmem [#allocation18], %s3273
        %s3275 = sand.u32 %s56, 1
        %s3276 = scalar_lea.sflag [#allocation20], %s3275
        %s3277 = sand.u32 %s581, 1
        %s3278 = smul.addr %s3277, 32
        %s3279 = scalar_lea.vmem [#allocation19], %s3278
        %s3280 = sand.u32 %s56, 1
        %s3281 = scalar_lea.sflag [#allocation20], %s3280
        %s3282 = sand.u32 %s607, 1
        %s3283 = smul.addr %s3282, 8
        %s3284 = scalar_lea.vmem [#allocation21], %s3283
        %s3285 = sand.u32 %s633, 1
        %s3286 = scalar_lea.sflag [#allocation23], %s3285
        %s3287 = sand.u32 %s633, 1
        %s3288 = smul.addr %s3287, 8
        %s3289 = scalar_lea.vmem [#allocation22], %s3288
        // Predicated region
        $region93: #{tpu_custom_call.1} parent=79 // pred_check
          %p3290 = pneg %p409
        $region94: #{tpu_custom_call.1} parent=79 // pred_check_branch
          %3292 = sbr.rel (%p3290) target = $region96
        $region95: #{tpu_custom_call.1} parent=79 // pred_region
          %s3294 = ssub.s32 128, 128
          %3295 = vsyncadd %s3241, %s3294
          %s3296 = smul.addr %s56, 128
          %s3297 = scalar_lea.hbm %s15, %s3296
          %s3299 = sshll.u32 %s3244, 4
          %s3300 = int_to_ptr.vmem [resolvable:$true] %s3299
          %3302 = dma.vmem_to_hbm [thread:$0]  %s3300, 128, %s3297, %s3241
        $region96: #{tpu_custom_call.1} parent=79 // pred_fallthru
          _
        // Predicated region
        $region97: #{tpu_custom_call.1} parent=79 // pred_check
          %p3303 = pneg %p435
        $region98: #{tpu_custom_call.1} parent=79 // pred_check_branch
          %3305 = sbr.rel (%p3303) target = $region100
        $region99: #{tpu_custom_call.1} parent=79 // pred_region
          %s3307 = ssub.s32 128, 128
          %3308 = vsyncadd %s3246, %s3307
          %s3309 = smul.addr %s56, 128
          %s3310 = scalar_lea.hbm %s16, %s3309
          %s3312 = sshll.u32 %s3249, 4
          %s3313 = int_to_ptr.vmem [resolvable:$true] %s3312
          %3315 = dma.vmem_to_hbm [thread:$0]  %s3313, 128, %s3310, %s3246
        $region100: #{tpu_custom_call.1} parent=79 // pred_fallthru
          _
        // Predicated region
        $region101: #{tpu_custom_call.1} parent=79 // pred_check
          %p3316 = pneg %p461
        $region102: #{tpu_custom_call.1} parent=79 // pred_check_branch
          %3318 = sbr.rel (%p3316) target = $region104
        $region103: #{tpu_custom_call.1} parent=79 // pred_region
          %s3320 = ssub.s32 128, 128
          %3321 = vsyncadd %s3251, %s3320
          %s3322 = smul.addr %s56, 128
          %s3323 = scalar_lea.hbm %s17, %s3322
          %s3325 = sshll.u32 %s3254, 4
          %s3326 = int_to_ptr.vmem [resolvable:$true] %s3325
          %3328 = dma.vmem_to_hbm [thread:$0]  %s3326, 128, %s3323, %s3251
        $region104: #{tpu_custom_call.1} parent=79 // pred_fallthru
          _
        // Predicated region
        $region105: #{tpu_custom_call.1} parent=79 // pred_check
          %p3329 = pneg %p487
        $region106: #{tpu_custom_call.1} parent=79 // pred_check_branch
          %3331 = sbr.rel (%p3329) target = $region108
        $region107: #{tpu_custom_call.1} parent=79 // pred_region
          %s3333 = ssub.s32 128, 128
          %3334 = vsyncadd %s3256, %s3333
          %s3335 = smul.addr %s56, 128
          %s3336 = scalar_lea.hbm %s18, %s3335
          %s3338 = sshll.u32 %s3259, 4
          %s3339 = int_to_ptr.vmem [resolvable:$true] %s3338
          %3341 = dma.vmem_to_hbm [thread:$0]  %s3339, 128, %s3336, %s3256
        $region108: #{tpu_custom_call.1} parent=79 // pred_fallthru
          _
        // Predicated region
        $region109: #{tpu_custom_call.1} parent=79 // pred_check
          %p3342 = pneg %p513
        $region110: #{tpu_custom_call.1} parent=79 // pred_check_branch
          %3344 = sbr.rel (%p3342) target = $region112
        $region111: #{tpu_custom_call.1} parent=79 // pred_region
          %s3346 = ssub.s32 512, 512
          %3347 = vsyncadd %s3261, %s3346
          %s3348 = smul.addr %s56, 4
          %s3349 = smul.addr %s3348, 128
          %s3350 = scalar_lea.hbm %s19, %s3349
          %s3351 = sshll.u32 %s3264, 4
          %s3352 = int_to_ptr.vmem [resolvable:$true] %s3351
          %3357 = dma.vmem_to_hbm [thread:$0]  %s3352, 512, %s3350, %s3261, 128, 128, 8
        $region112: #{tpu_custom_call.1} parent=79 // pred_fallthru
          _
        // Predicated region
        $region113: #{tpu_custom_call.1} parent=79 // pred_check
          %p3358 = pneg %p539
        $region114: #{tpu_custom_call.1} parent=79 // pred_check_branch
          %3360 = sbr.rel (%p3358) target = $region116
        $region115: #{tpu_custom_call.1} parent=79 // pred_region
          %s3362 = ssub.s32 512, 512
          %3363 = vsyncadd %s3266, %s3362
          %s3364 = smul.addr %s56, 4
          %s3365 = smul.addr %s3364, 128
          %s3366 = scalar_lea.hbm %s20, %s3365
          %s3367 = sshll.u32 %s3269, 4
          %s3368 = int_to_ptr.vmem [resolvable:$true] %s3367
          %3373 = dma.vmem_to_hbm [thread:$0]  %s3368, 512, %s3366, %s3266, 128, 128, 8
        $region116: #{tpu_custom_call.1} parent=79 // pred_fallthru
          _
        // Predicated region
        $region117: #{tpu_custom_call.1} parent=79 // pred_check
          %p3374 = pneg %p565
        $region118: #{tpu_custom_call.1} parent=79 // pred_check_branch
          %3376 = sbr.rel (%p3374) target = $region120
        $region119: #{tpu_custom_call.1} parent=79 // pred_region
          %s3378 = ssub.s32 512, 512
          %3379 = vsyncadd %s3271, %s3378
          %s3380 = smul.addr %s56, 4
          %s3381 = smul.addr %s3380, 128
          %s3382 = scalar_lea.hbm %s21, %s3381
          %s3383 = sshll.u32 %s3274, 4
          %s3384 = int_to_ptr.vmem [resolvable:$true] %s3383
          %3389 = dma.vmem_to_hbm [thread:$0]  %s3384, 512, %s3382, %s3271, 128, 128, 8
        $region120: #{tpu_custom_call.1} parent=79 // pred_fallthru
          _
        // Predicated region
        $region121: #{tpu_custom_call.1} parent=79 // pred_check
          %p3390 = pneg %p591
        $region122: #{tpu_custom_call.1} parent=79 // pred_check_branch
          %3392 = sbr.rel (%p3390) target = $region124
        $region123: #{tpu_custom_call.1} parent=79 // pred_region
          %s3394 = ssub.s32 512, 512
          %3395 = vsyncadd %s3276, %s3394
          %s3396 = smul.addr %s56, 4
          %s3397 = smul.addr %s3396, 128
          %s3398 = scalar_lea.hbm %s22, %s3397
          %s3399 = sshll.u32 %s3279, 4
          %s3400 = int_to_ptr.vmem [resolvable:$true] %s3399
          %3405 = dma.vmem_to_hbm [thread:$0]  %s3400, 512, %s3398, %s3276, 128, 128, 8
        $region124: #{tpu_custom_call.1} parent=79 // pred_fallthru
          _
        // Predicated region
        $region125: #{tpu_custom_call.1} parent=79 // pred_check
          %p3406 = pneg %p617
        $region126: #{tpu_custom_call.1} parent=79 // pred_check_branch
          %3408 = sbr.rel (%p3406) target = $region128
        $region127: #{tpu_custom_call.1} parent=79 // pred_region
          %s3410 = ssub.s32 128, 128
          %3411 = vsyncadd %s3281, %s3410
          %s3412 = smul.addr %s56, 128
          %s3413 = scalar_lea.hbm %s23, %s3412
          %s3415 = sshll.u32 %s3284, 4
          %s3416 = int_to_ptr.vmem [resolvable:$true] %s3415
          %3418 = dma.vmem_to_hbm [thread:$0]  %s3416, 128, %s3413, %s3281
        $region128: #{tpu_custom_call.1} parent=79 // pred_fallthru
          _
        // Predicated region
        $region129: #{tpu_custom_call.1} parent=79 // pred_check
          %p3419 = pneg %p643
        $region130: #{tpu_custom_call.1} parent=79 // pred_check_branch
          %3421 = sbr.rel (%p3419) target = $region132
        $region131: #{tpu_custom_call.1} parent=79 // pred_region
          %s3423 = ssub.s32 128, 128
          %3424 = vsyncadd %s3286, %s3423
          %s3425 = smul.addr %s56, 128
          %s3426 = scalar_lea.hbm %s24, %s3425
          %s3428 = sshll.u32 %s3289, 4
          %s3429 = int_to_ptr.vmem [resolvable:$true] %s3428
          %3431 = dma.vmem_to_hbm [thread:$0]  %s3429, 128, %s3426, %s3286
        $region132: #{tpu_custom_call.1} parent=79 // pred_fallthru
          _
      $region80: #{tpu_custom_call.1} parent=5 // pred_fallthru
        _
      %p3432 = scmp.le.s32.totalorder 2, %s51
      // Predicated region
      $region133: #{tpu_custom_call.1} parent=5 // pred_check
        %p3433 = pneg %p3432
      $region134: #{tpu_custom_call.1} parent=5 // pred_check_branch
        %3435 = sbr.rel (%p3433) target = $region136
      $region135: #{tpu_custom_call.1} parent=5 // pred_region
        %s3436 = ssub.s32 %s51, 2
        // Predicated region
        $region137: #{tpu_custom_call.1} parent=135 // pred_check
          %p3437 = pneg %p415
        $region138: #{tpu_custom_call.1} parent=135 // pred_check_branch
          %3439 = sbr.rel (%p3437) target = $region140
        $region139: #{tpu_custom_call.1} parent=135 // pred_region
          %s3440 = sand.u32 %s400, 1
          %s3441 = scalar_lea.sflag [#allocation5], %s3440
          %s3442 = sand.u32 %s400, 1
          %s3443 = smul.addr %s3442, 8
          %s3444 = scalar_lea.vmem [#allocation9], %s3443
          %3445 = dma.done %s3441, 128
        $region140: #{tpu_custom_call.1} parent=135 // pred_fallthru
          _
        // Predicated region
        $region141: #{tpu_custom_call.1} parent=135 // pred_check
          %p3446 = pneg %p441
        $region142: #{tpu_custom_call.1} parent=135 // pred_check_branch
          %3448 = sbr.rel (%p3446) target = $region144
        $region143: #{tpu_custom_call.1} parent=135 // pred_region
          %s3449 = sand.u32 %s57, 1
          %s3450 = scalar_lea.sflag [#allocation11], %s3449
          %s3451 = sand.u32 %s426, 1
          %s3452 = smul.addr %s3451, 8
          %s3453 = scalar_lea.vmem [#allocation10], %s3452
          %3454 = dma.done %s3450, 128
        $region144: #{tpu_custom_call.1} parent=135 // pred_fallthru
          _
        // Predicated region
        $region145: #{tpu_custom_call.1} parent=135 // pred_check
          %p3455 = pneg %p467
        $region146: #{tpu_custom_call.1} parent=135 // pred_check_branch
          %3457 = sbr.rel (%p3455) target = $region148
        $region147: #{tpu_custom_call.1} parent=135 // pred_region
          %s3458 = sand.u32 %s57, 1
          %s3459 = scalar_lea.sflag [#allocation11], %s3458
          %s3460 = sand.u32 %s452, 1
          %s3461 = smul.addr %s3460, 8
          %s3462 = scalar_lea.vmem [#allocation12], %s3461
          %3463 = dma.done %s3459, 128
        $region148: #{tpu_custom_call.1} parent=135 // pred_fallthru
          _
        // Predicated region
        $region149: #{tpu_custom_call.1} parent=135 // pred_check
          %p3464 = pneg %p493
        $region150: #{tpu_custom_call.1} parent=135 // pred_check_branch
          %3466 = sbr.rel (%p3464) target = $region152
        $region151: #{tpu_custom_call.1} parent=135 // pred_region
          %s3467 = sand.u32 %s57, 1
          %s3468 = scalar_lea.sflag [#allocation14], %s3467
          %s3469 = sand.u32 %s478, 1
          %s3470 = smul.addr %s3469, 8
          %s3471 = scalar_lea.vmem [#allocation13], %s3470
          %3472 = dma.done %s3468, 128
        $region152: #{tpu_custom_call.1} parent=135 // pred_fallthru
          _
        // Predicated region
        $region153: #{tpu_custom_call.1} parent=135 // pred_check
          %p3473 = pneg %p519
        $region154: #{tpu_custom_call.1} parent=135 // pred_check_branch
          %3475 = sbr.rel (%p3473) target = $region156
        $region155: #{tpu_custom_call.1} parent=135 // pred_region
          %s3476 = sand.u32 %s57, 1
          %s3477 = scalar_lea.sflag [#allocation14], %s3476
          %s3478 = sand.u32 %s504, 1
          %s3479 = smul.addr %s3478, 32
          %s3480 = scalar_lea.vmem [#allocation15], %s3479
          %3481 = dma.done %s3477, 512
        $region156: #{tpu_custom_call.1} parent=135 // pred_fallthru
          _
        // Predicated region
        $region157: #{tpu_custom_call.1} parent=135 // pred_check
          %p3482 = pneg %p545
        $region158: #{tpu_custom_call.1} parent=135 // pred_check_branch
          %3484 = sbr.rel (%p3482) target = $region160
        $region159: #{tpu_custom_call.1} parent=135 // pred_region
          %s3485 = sand.u32 %s57, 1
          %s3486 = scalar_lea.sflag [#allocation17], %s3485
          %s3487 = sand.u32 %s530, 1
          %s3488 = smul.addr %s3487, 32
          %s3489 = scalar_lea.vmem [#allocation16], %s3488
          %3490 = dma.done %s3486, 512
        $region160: #{tpu_custom_call.1} parent=135 // pred_fallthru
          _
        // Predicated region
        $region161: #{tpu_custom_call.1} parent=135 // pred_check
          %p3491 = pneg %p571
        $region162: #{tpu_custom_call.1} parent=135 // pred_check_branch
          %3493 = sbr.rel (%p3491) target = $region164
        $region163: #{tpu_custom_call.1} parent=135 // pred_region
          %s3494 = sand.u32 %s57, 1
          %s3495 = scalar_lea.sflag [#allocation17], %s3494
          %s3496 = sand.u32 %s556, 1
          %s3497 = smul.addr %s3496, 32
          %s3498 = scalar_lea.vmem [#allocation18], %s3497
          %3499 = dma.done %s3495, 512
        $region164: #{tpu_custom_call.1} parent=135 // pred_fallthru
          _
        // Predicated region
        $region165: #{tpu_custom_call.1} parent=135 // pred_check
          %p3500 = pneg %p597
        $region166: #{tpu_custom_call.1} parent=135 // pred_check_branch
          %3502 = sbr.rel (%p3500) target = $region168
        $region167: #{tpu_custom_call.1} parent=135 // pred_region
          %s3503 = sand.u32 %s57, 1
          %s3504 = scalar_lea.sflag [#allocation20], %s3503
          %s3505 = sand.u32 %s582, 1
          %s3506 = smul.addr %s3505, 32
          %s3507 = scalar_lea.vmem [#allocation19], %s3506
          %3508 = dma.done %s3504, 512
        $region168: #{tpu_custom_call.1} parent=135 // pred_fallthru
          _
        // Predicated region
        $region169: #{tpu_custom_call.1} parent=135 // pred_check
          %p3509 = pneg %p623
        $region170: #{tpu_custom_call.1} parent=135 // pred_check_branch
          %3511 = sbr.rel (%p3509) target = $region172
        $region171: #{tpu_custom_call.1} parent=135 // pred_region
          %s3512 = sand.u32 %s57, 1
          %s3513 = scalar_lea.sflag [#allocation20], %s3512
          %s3514 = sand.u32 %s608, 1
          %s3515 = smul.addr %s3514, 8
          %s3516 = scalar_lea.vmem [#allocation21], %s3515
          %3517 = dma.done %s3513, 128
        $region172: #{tpu_custom_call.1} parent=135 // pred_fallthru
          _
        // Predicated region
        $region173: #{tpu_custom_call.1} parent=135 // pred_check
          %p3518 = pneg %p649
        $region174: #{tpu_custom_call.1} parent=135 // pred_check_branch
          %3520 = sbr.rel (%p3518) target = $region176
        $region175: #{tpu_custom_call.1} parent=135 // pred_region
          %s3521 = sand.u32 %s634, 1
          %s3522 = scalar_lea.sflag [#allocation23], %s3521
          %s3523 = sand.u32 %s634, 1
          %s3524 = smul.addr %s3523, 8
          %s3525 = scalar_lea.vmem [#allocation22], %s3524
          %3526 = dma.done %s3522, 128
        $region176: #{tpu_custom_call.1} parent=135 // pred_fallthru
          _
      $region136: #{tpu_custom_call.1} parent=5 // pred_fallthru
        _
    $region6: #{tpu_custom_call.1} parent=1 // loop_footer
      %s55 = sadd.s32 1, %s51
    $region7: #{tpu_custom_call.1} parent=1 // loop_footer_branch
      %50 = sbr.rel target = $region3
    $region8: #{tpu_custom_call.1} parent=1 // loop_exit
      _
    %3527 = vsyncpa [#allocation4], 1
    %s3528 = scalar_lea.sflag [#allocation4], 1
    %3529 = vsyncpa %s3528, 1
    %3530 = vsyncpa [#allocation7], 1
    %3531 = vsyncpa [#allocation5], 1
    %s3532 = scalar_lea.sflag [#allocation5], 1
    %3533 = vsyncpa %s3532, 1
    %3534 = vsyncpa [#allocation11], 1
    %s3535 = scalar_lea.sflag [#allocation11], 1
    %3536 = vsyncpa %s3535, 1
    %3537 = vsyncpa [#allocation14], 1
    %s3538 = scalar_lea.sflag [#allocation14], 1
    %3539 = vsyncpa %s3538, 1
    %3540 = vsyncpa [#allocation17], 1
    %s3541 = scalar_lea.sflag [#allocation17], 1
    %3542 = vsyncpa %s3541, 1
    %3543 = vsyncpa [#allocation20], 1
    %s3544 = scalar_lea.sflag [#allocation20], 1
    %3545 = vsyncpa %s3544, 1
    %3546 = vsyncpa [#allocation23], 1
    %s3547 = scalar_lea.sflag [#allocation23], 1
    %3548 = vsyncpa %s3547, 1

// kernel: tpu_custom_call.1
$region0: #{tpu_custom_call.1}
  #allocation0 [shape = 'u32[]', space=smem, size = 0x4, offset = 0x4, fixed_abs, tag = 'smem constant byte address 0x4 - core index']
  #allocation1 [shape = 'u32[144,128]{1,0:T(1,128)}', space=vmem, size = 0x12000, scoped, tag = 'internal scratch']
  #allocation2 [shape = 'f32[32,32]{1,0:T(8,128)}', space=vmem, size = 0x4000, scoped, tag = 'scratch operand']
  %s0 = inlined_call_operand.vmem [shape: f32[2,8,32], index: 0, kind: input, shape index: {}]
  %s1 = inlined_call_operand.vmem [shape: f32[2,8,32], index: 1, kind: input, shape index: {}]
  %s2 = inlined_call_operand.vmem [shape: f32[2,8,32], index: 2, kind: input, shape index: {}]
  %s3 = inlined_call_operand.vmem [shape: f32[2,8,32], index: 3, kind: input, shape index: {}]
  %s4 = inlined_call_operand.vmem [shape: f32[1,32], index: 4, kind: input, shape index: {}]
  %s5 = inlined_call_operand.vmem [shape: f32[1,32], index: 5, kind: input, shape index: {}]
  %s6 = inlined_call_operand.vmem [shape: bf16[32,96], index: 6, kind: input, shape index: {}]
  %s7 = inlined_call_operand.hbm [shape: bf16[32,32], index: 7, kind: input, shape index: {}]
  %s8 = inlined_call_operand.hbm [shape: f32[1,32], index: 8, kind: input, shape index: {}]
  %s9 = inlined_call_operand.hbm [shape: f32[1,32], index: 9, kind: input, shape index: {}]
  %s10 = inlined_call_operand.vmem [shape: f32[1,32], index: 10, kind: input, shape index: {}]
  %s11 = inlined_call_operand.vmem [shape: bf16[32,128], index: 11, kind: input, shape index: {}]
  %s12 = inlined_call_operand.vmem [shape: f32[1,128], index: 12, kind: input, shape index: {}]
  %s13 = inlined_call_operand.vmem [shape: bf16[128,32], index: 13, kind: input, shape index: {}]
  %s14 = inlined_call_operand.vmem [shape: f32[1,32], index: 14, kind: input, shape index: {}]
  %s15 = inlined_call_operand.hbm [shape: f32[2,8,32], index: 15, kind: output, shape index: {0}]
  %s16 = inlined_call_operand.hbm [shape: f32[2,8,32], index: 16, kind: output, shape index: {1}]
  %s17 = inlined_call_operand.hbm [shape: f32[2,8,32], index: 17, kind: output, shape index: {2}]
  %s18 = inlined_call_operand.hbm [shape: f32[2,8,32], index: 18, kind: output, shape index: {3}]
  %s19 = inlined_call_operand.hbm [shape: f32[2,4,8,8], index: 19, kind: output, shape index: {4}]
  %s20 = inlined_call_operand.hbm [shape: f32[2,4,8,8], index: 20, kind: output, shape index: {5}]
  %s21 = inlined_call_operand.hbm [shape: f32[2,4,8,8], index: 21, kind: output, shape index: {6}]
  %s22 = inlined_call_operand.hbm [shape: f32[2,4,8,8], index: 22, kind: output, shape index: {7}]
  %s23 = inlined_call_operand.hbm [shape: f32[2,8,32], index: 23, kind: output, shape index: {8}]
  %s24 = inlined_call_operand.hbm [shape: f32[2,8,32], index: 24, kind: output, shape index: {9}]
  %25 = xla_tuple %s15, %s16, %s17, %s18, %s19, %s20, %s21, %s22, %s23, %s24
  %s26 = sld [smem:[#allocation0]]
  $region177: #{tpu_custom_call.1} parent=0
    _
  %s28 = ssub.s32 1, %s26
  %s29 = scalar_select 0, %s28, %s26
  $region1: #{tpu_custom_call.1} parent=0
    #allocation3 [shape = 'u8[8192]{0}', space=vmem, size = 0x2000, scoped, tag = 'input window, operand 7, single buffered']
    #allocation4 [shape = 's32[2]{0}', space=sflag, size = 0x8, scoped, tag = 'scoped memory for tpu_custom_call.1']
    #allocation5 [shape = 's32[2]{0}', space=sflag, size = 0x8, scoped, tag = 'scoped memory for tpu_custom_call.1']
    #allocation6 [shape = 'u8[512]{0}', space=vmem, size = 0x400, scoped, tag = 'input window, operand 8, single buffered']
    #allocation7 [shape = 's32[1]{0}', space=sflag, size = 0x4, scoped, tag = 'scoped memory for tpu_custom_call.1']
    #allocation8 [shape = 'u8[512]{0}', space=vmem, size = 0x400, scoped, tag = 'input window, operand 9, single buffered']
    #allocation9 [shape = 'u8[8192]{0}', space=vmem, size = 0x2000, scoped, tag = 'output window, operand 0']
    #allocation10 [shape = 'u8[8192]{0}', space=vmem, size = 0x2000, scoped, tag = 'output window, operand 1']
    #allocation11 [shape = 's32[2]{0}', space=sflag, size = 0x8, scoped, tag = 'scoped memory for tpu_custom_call.1']
    #allocation12 [shape = 'u8[8192]{0}', space=vmem, size = 0x2000, scoped, tag = 'output window, operand 2']
    #allocation13 [shape = 'u8[8192]{0}', space=vmem, size = 0x2000, scoped, tag = 'output window, operand 3']
    #allocation14 [shape = 's32[2]{0}', space=sflag, size = 0x8, scoped, tag = 'scoped memory for tpu_custom_call.1']
    #allocation15 [shape = 'u8[32768]{0}', space=vmem, size = 0x8000, scoped, tag = 'output window, operand 4']
    #allocation16 [shape = 'u8[32768]{0}', space=vmem, size = 0x8000, scoped, tag = 'output window, operand 5']
    #allocation17 [shape = 's32[2]{0}', space=sflag, size = 0x8, scoped, tag = 'scoped memory for tpu_custom_call.1']
    #allocation18 [shape = 'u8[32768]{0}', space=vmem, size = 0x8000, scoped, tag = 'output window, operand 6']
    #allocation19 [shape = 'u8[32768]{0}', space=vmem, size = 0x8000, scoped, tag = 'output window, operand 7']
    #allocation20 [shape = 's32[2]{0}', space=sflag, size = 0x8, scoped, tag = 'scoped memory for tpu_custom_call.1']
    #allocation21 [shape = 'u8[8192]{0}', space=vmem, size = 0x2000, scoped, tag = 'output window, operand 8']
    #allocation22 [shape = 'u8[8192]{0}', space=vmem, size = 0x2000, scoped, tag = 'output window, operand 9']
    #allocation23 [shape = 's32[2]{0}', space=sflag, size = 0x8, scoped, tag = 'scoped memory for tpu_custom_call.1']
    %30 = vsyncpa [#allocation4], 0
    %31 = vsyncpa [#allocation7], 0
    %32 = vsyncpa [#allocation5], 0
    %s33 = scalar_lea.sflag [#allocation5], 1
    %34 = vsyncpa %s33, 0
    %35 = vsyncpa [#allocation11], 0
    %s36 = scalar_lea.sflag [#allocation11], 1
    %37 = vsyncpa %s36, 0
    %38 = vsyncpa [#allocation14], 0
    %s39 = scalar_lea.sflag [#allocation14], 1
    %40 = vsyncpa %s39, 0
    %41 = vsyncpa [#allocation17], 0
    %s42 = scalar_lea.sflag [#allocation17], 1
    %43 = vsyncpa %s42, 0
    %44 = vsyncpa [#allocation20], 0
    %s45 = scalar_lea.sflag [#allocation20], 1
    %46 = vsyncpa %s45, 0
    %47 = vsyncpa [#allocation23], 0
    %s48 = scalar_lea.sflag [#allocation23], 1
    %49 = vsyncpa %s48, 0
    loop: start=0, step=1, limit=4
    $region2: #{tpu_custom_call.1} parent=1 // loop_pre_header
      _
    $region3: #{tpu_custom_call.1} parent=1 // loop_header
      %s51 = sphi 0, %s55
      %p52 = scmp.ge.s32.totalorder %s51, 4
      %s61 = sphi 0, %s63
      %s64 = sphi 0, %s61
      %s65 = sphi 0, %s64
      %s81 = sphi 0, %s65
      %s87 = sphi 0, %s89
      %s90 = sphi 0, %s87
      %s91 = sphi 0, %s90
      %s107 = sphi 0, %s91
      %s113 = sphi 0, %s115
      %s116 = sphi 0, %s113
      %s117 = sphi 0, %s116
      %s133 = sphi 0, %s117
      %s139 = sphi 0, %s141
      %s142 = sphi 0, %s139
      %s143 = sphi 0, %s142
      %s159 = sphi 0, %s143
      %s163 = sphi 0, %s163
      %s165 = sphi 0, %s163
      %s166 = sphi 0, %s165
      %s180 = sphi 0, %s166
      %s184 = sphi 0, %s184
      %s186 = sphi 0, %s184
      %s187 = sphi 0, %s186
      %s201 = sphi 0, %s187
      %s205 = sphi 0, %s205
      %s207 = sphi 0, %s205
      %s208 = sphi 0, %s207
      %s222 = sphi 0, %s208
      %s226 = sphi 0, %s226
      %s228 = sphi 0, %s226
      %s229 = sphi 0, %s228
      %s243 = sphi 0, %s229
      %s247 = sphi 0, %s247
      %s249 = sphi 0, %s247
      %s250 = sphi 0, %s249
      %s264 = sphi 0, %s250
      %s268 = sphi 0, %s268
      %s270 = sphi 0, %s268
      %s271 = sphi 0, %s270
      %s285 = sphi 0, %s271
      %s289 = sphi 0, %s289
      %s291 = sphi 0, %s289
      %s292 = sphi 0, %s291
      %s306 = sphi 0, %s292
      %s310 = sphi 0, %s310
      %s312 = sphi 0, %s310
      %s313 = sphi 0, %s312
      %s327 = sphi 0, %s313
      %s331 = sphi 0, %s331
      %s333 = sphi 0, %s331
      %s334 = sphi 0, %s333
      %s348 = sphi 0, %s334
      %s352 = sphi 0, %s352
      %s354 = sphi 0, %s352
      %s355 = sphi 0, %s354
      %s369 = sphi 0, %s355
      %s373 = sphi 0, %s373
      %s375 = sphi 0, %s373
      %s376 = sphi 0, %s375
      %s390 = sphi 0, %s376
      %s396 = sphi 0, %s398
      %s399 = sphi 0, %s396
      %s400 = sphi 0, %s399
      %s416 = sphi 0, %s400
      %s422 = sphi 0, %s424
      %s425 = sphi 0, %s422
      %s426 = sphi 0, %s425
      %s442 = sphi 0, %s426
      %s448 = sphi 0, %s450
      %s451 = sphi 0, %s448
      %s452 = sphi 0, %s451
      %s468 = sphi 0, %s452
      %s474 = sphi 0, %s476
      %s477 = sphi 0, %s474
      %s478 = sphi 0, %s477
      %s494 = sphi 0, %s478
      %s500 = sphi 0, %s502
      %s503 = sphi 0, %s500
      %s504 = sphi 0, %s503
      %s520 = sphi 0, %s504
      %s526 = sphi 0, %s528
      %s529 = sphi 0, %s526
      %s530 = sphi 0, %s529
      %s546 = sphi 0, %s530
      %s552 = sphi 0, %s554
      %s555 = sphi 0, %s552
      %s556 = sphi 0, %s555
      %s572 = sphi 0, %s556
      %s578 = sphi 0, %s580
      %s581 = sphi 0, %s578
      %s582 = sphi 0, %s581
      %s598 = sphi 0, %s582
      %s604 = sphi 0, %s606
      %s607 = sphi 0, %s604
      %s608 = sphi 0, %s607
      %s624 = sphi 0, %s608
      %s630 = sphi 0, %s632
      %s633 = sphi 0, %s630
      %s634 = sphi 0, %s633
      %s650 = sphi 0, %s634
    $region4: #{tpu_custom_call.1} parent=1 // loop_header_branch
      %54 = sbr.rel (%p52) target = $region8
    $region5: #{tpu_custom_call.1} parent=1 // loop_body
      %s56 = ssub.s32 %s51, 1
      %s57 = ssub.s32 %s51, 2
      %s58 = sadd.s32 %s51, 1
      %s59 = ssub.s32 %s51, %s58
      %p60 = scmp.eq.s32.totalorder %s59, 0
      %s62 = sadd.s32 %s61, 1
      %s63 = scalar_select %p60, %s61, %s62
      %p66 = pneg %p60
      %p67 = scmp.eq.s32.totalorder %s51, 1
      %p68 = por %p66, %p67
      %p69 = scmp.ne.s32.totalorder %s61, %s64
      %p70 = scmp.eq.s32.totalorder %s51, 0
      %p71 = por %p69, %p70
      %p72 = scmp.ne.s32.totalorder %s61, %s64
      %p73 = scmp.eq.s32.totalorder %s56, 1
      %p74 = por %p72, %p73
      %p75 = scmp.ne.s32.totalorder %s64, %s65
      %p76 = scmp.eq.s32.totalorder %s56, 0
      %p77 = por %p75, %p76
      %p78 = scmp.ne.s32.totalorder %s64, %s65
      %p79 = scmp.eq.s32.totalorder %s57, 1
      %p80 = por %p78, %p79
      %p82 = scmp.ne.s32.totalorder %s65, %s81
      %p83 = scmp.eq.s32.totalorder %s57, 0
      %p84 = por %p82, %p83
      %s85 = ssub.s32 %s51, %s58
      %p86 = scmp.eq.s32.totalorder %s85, 0
      %s88 = sadd.s32 %s87, 1
      %s89 = scalar_select %p86, %s87, %s88
      %p92 = pneg %p86
      %p93 = scmp.eq.s32.totalorder %s51, 1
      %p94 = por %p92, %p93
      %p95 = scmp.ne.s32.totalorder %s87, %s90
      %p96 = scmp.eq.s32.totalorder %s51, 0
      %p97 = por %p95, %p96
      %p98 = scmp.ne.s32.totalorder %s87, %s90
      %p99 = scmp.eq.s32.totalorder %s56, 1
      %p100 = por %p98, %p99
      %p101 = scmp.ne.s32.totalorder %s90, %s91
      %p102 = scmp.eq.s32.totalorder %s56, 0
      %p103 = por %p101, %p102
      %p104 = scmp.ne.s32.totalorder %s90, %s91
      %p105 = scmp.eq.s32.totalorder %s57, 1
      %p106 = por %p104, %p105
      %p108 = scmp.ne.s32.totalorder %s91, %s107
      %p109 = scmp.eq.s32.totalorder %s57, 0
      %p110 = por %p108, %p109
      %s111 = ssub.s32 %s51, %s58
      %p112 = scmp.eq.s32.totalorder %s111, 0
      %s114 = sadd.s32 %s113, 1
      %s115 = scalar_select %p112, %s113, %s114
      %p118 = pneg %p112
      %p119 = scmp.eq.s32.totalorder %s51, 1
      %p120 = por %p118, %p119
      %p121 = scmp.ne.s32.totalorder %s113, %s116
      %p122 = scmp.eq.s32.totalorder %s51, 0
      %p123 = por %p121, %p122
      %p124 = scmp.ne.s32.totalorder %s113, %s116
      %p125 = scmp.eq.s32.totalorder %s56, 1
      %p126 = por %p124, %p125
      %p127 = scmp.ne.s32.totalorder %s116, %s117
      %p128 = scmp.eq.s32.totalorder %s56, 0
      %p129 = por %p127, %p128
      %p130 = scmp.ne.s32.totalorder %s116, %s117
      %p131 = scmp.eq.s32.totalorder %s57, 1
      %p132 = por %p130, %p131
      %p134 = scmp.ne.s32.totalorder %s117, %s133
      %p135 = scmp.eq.s32.totalorder %s57, 0
      %p136 = por %p134, %p135
      %s137 = ssub.s32 %s51, %s58
      %p138 = scmp.eq.s32.totalorder %s137, 0
      %s140 = sadd.s32 %s139, 1
      %s141 = scalar_select %p138, %s139, %s140
      %p144 = pneg %p138
      %p145 = scmp.eq.s32.totalorder %s51, 1
      %p146 = por %p144, %p145
      %p147 = scmp.ne.s32.totalorder %s139, %s142
      %p148 = scmp.eq.s32.totalorder %s51, 0
      %p149 = por %p147, %p148
      %p150 = scmp.ne.s32.totalorder %s139, %s142
      %p151 = scmp.eq.s32.totalorder %s56, 1
      %p152 = por %p150, %p151
      %p153 = scmp.ne.s32.totalorder %s142, %s143
      %p154 = scmp.eq.s32.totalorder %s56, 0
      %p155 = por %p153, %p154
      %p156 = scmp.ne.s32.totalorder %s142, %s143
      %p157 = scmp.eq.s32.totalorder %s57, 1
      %p158 = por %p156, %p157
      %p160 = scmp.ne.s32.totalorder %s143, %s159
      %p161 = scmp.eq.s32.totalorder %s57, 0
      %p162 = por %p160, %p161
      %s164 = sadd.s32 %s163, 1
      %p167 = scmp.eq.s32.totalorder %s51, 1
      %p168 = scmp.ne.s32.totalorder %s163, %s165
      %p169 = scmp.eq.s32.totalorder %s51, 0
      %p170 = por %p168, %p169
      %p171 = scmp.ne.s32.totalorder %s163, %s165
      %p172 = scmp.eq.s32.totalorder %s56, 1
      %p173 = por %p171, %p172
      %p174 = scmp.ne.s32.totalorder %s165, %s166
      %p175 = scmp.eq.s32.totalorder %s56, 0
      %p176 = por %p174, %p175
      %p177 = scmp.ne.s32.totalorder %s165, %s166
      %p178 = scmp.eq.s32.totalorder %s57, 1
      %p179 = por %p177, %p178
      %p181 = scmp.ne.s32.totalorder %s166, %s180
      %p182 = scmp.eq.s32.totalorder %s57, 0
      %p183 = por %p181, %p182
      %s185 = sadd.s32 %s184, 1
      %p188 = scmp.eq.s32.totalorder %s51, 1
      %p189 = scmp.ne.s32.totalorder %s184, %s186
      %p190 = scmp.eq.s32.totalorder %s51, 0
      %p191 = por %p189, %p190
      %p192 = scmp.ne.s32.totalorder %s184, %s186
      %p193 = scmp.eq.s32.totalorder %s56, 1
      %p194 = por %p192, %p193
      %p195 = scmp.ne.s32.totalorder %s186, %s187
      %p196 = scmp.eq.s32.totalorder %s56, 0
      %p197 = por %p195, %p196
      %p198 = scmp.ne.s32.totalorder %s186, %s187
      %p199 = scmp.eq.s32.totalorder %s57, 1
      %p200 = por %p198, %p199
      %p202 = scmp.ne.s32.totalorder %s187, %s201
      %p203 = scmp.eq.s32.totalorder %s57, 0
      %p204 = por %p202, %p203
      %s206 = sadd.s32 %s205, 1
      %p209 = scmp.eq.s32.totalorder %s51, 1
      %p210 = scmp.ne.s32.totalorder %s205, %s207
      %p211 = scmp.eq.s32.totalorder %s51, 0
      %p212 = por %p210, %p211
      %p213 = scmp.ne.s32.totalorder %s205, %s207
      %p214 = scmp.eq.s32.totalorder %s56, 1
      %p215 = por %p213, %p214
      %p216 = scmp.ne.s32.totalorder %s207, %s208
      %p217 = scmp.eq.s32.totalorder %s56, 0
      %p218 = por %p216, %p217
      %p219 = scmp.ne.s32.totalorder %s207, %s208
      %p220 = scmp.eq.s32.totalorder %s57, 1
      %p221 = por %p219, %p220
      %p223 = scmp.ne.s32.totalorder %s208, %s222
      %p224 = scmp.eq.s32.totalorder %s57, 0
      %p225 = por %p223, %p224
      %s227 = sadd.s32 %s226, 1
      %p230 = scmp.eq.s32.totalorder %s51, 1
      %p231 = scmp.ne.s32.totalorder %s226, %s228
      %p232 = scmp.eq.s32.totalorder %s51, 0
      %p233 = por %p231, %p232
      %p234 = scmp.ne.s32.totalorder %s226, %s228
      %p235 = scmp.eq.s32.totalorder %s56, 1
      %p236 = por %p234, %p235
      %p237 = scmp.ne.s32.totalorder %s228, %s229
      %p238 = scmp.eq.s32.totalorder %s56, 0
      %p239 = por %p237, %p238
      %p240 = scmp.ne.s32.totalorder %s228, %s229
      %p241 = scmp.eq.s32.totalorder %s57, 1
      %p242 = por %p240, %p241
      %p244 = scmp.ne.s32.totalorder %s229, %s243
      %p245 = scmp.eq.s32.totalorder %s57, 0
      %p246 = por %p244, %p245
      %s248 = sadd.s32 %s247, 1
      %p251 = scmp.eq.s32.totalorder %s51, 1
      %p252 = scmp.ne.s32.totalorder %s247, %s249
      %p253 = scmp.eq.s32.totalorder %s51, 0
      %p254 = por %p252, %p253
      %p255 = scmp.ne.s32.totalorder %s247, %s249
      %p256 = scmp.eq.s32.totalorder %s56, 1
      %p257 = por %p255, %p256
      %p258 = scmp.ne.s32.totalorder %s249, %s250
      %p259 = scmp.eq.s32.totalorder %s56, 0
      %p260 = por %p258, %p259
      %p261 = scmp.ne.s32.totalorder %s249, %s250
      %p262 = scmp.eq.s32.totalorder %s57, 1
      %p263 = por %p261, %p262
      %p265 = scmp.ne.s32.totalorder %s250, %s264
      %p266 = scmp.eq.s32.totalorder %s57, 0
      %p267 = por %p265, %p266
      %s269 = sadd.s32 %s268, 1
      %p272 = scmp.eq.s32.totalorder %s51, 1
      %p273 = scmp.ne.s32.totalorder %s268, %s270
      %p274 = scmp.eq.s32.totalorder %s51, 0
      %p275 = por %p273, %p274
      %p276 = scmp.ne.s32.totalorder %s268, %s270
      %p277 = scmp.eq.s32.totalorder %s56, 1
      %p278 = por %p276, %p277
      %p279 = scmp.ne.s32.totalorder %s270, %s271
      %p280 = scmp.eq.s32.totalorder %s56, 0
      %p281 = por %p279, %p280
      %p282 = scmp.ne.s32.totalorder %s270, %s271
      %p283 = scmp.eq.s32.totalorder %s57, 1
      %p284 = por %p282, %p283
      %p286 = scmp.ne.s32.totalorder %s271, %s285
      %p287 = scmp.eq.s32.totalorder %s57, 0
      %p288 = por %p286, %p287
      %s290 = sadd.s32 %s289, 1
      %p293 = scmp.eq.s32.totalorder %s51, 1
      %p294 = scmp.ne.s32.totalorder %s289, %s291
      %p295 = scmp.eq.s32.totalorder %s51, 0
      %p296 = por %p294, %p295
      %p297 = scmp.ne.s32.totalorder %s289, %s291
      %p298 = scmp.eq.s32.totalorder %s56, 1
      %p299 = por %p297, %p298
      %p300 = scmp.ne.s32.totalorder %s291, %s292
      %p301 = scmp.eq.s32.totalorder %s56, 0
      %p302 = por %p300, %p301
      %p303 = scmp.ne.s32.totalorder %s291, %s292
      %p304 = scmp.eq.s32.totalorder %s57, 1
      %p305 = por %p303, %p304
      %p307 = scmp.ne.s32.totalorder %s292, %s306
      %p308 = scmp.eq.s32.totalorder %s57, 0
      %p309 = por %p307, %p308
      %s311 = sadd.s32 %s310, 1
      %p314 = scmp.eq.s32.totalorder %s51, 1
      %p315 = scmp.ne.s32.totalorder %s310, %s312
      %p316 = scmp.eq.s32.totalorder %s51, 0
      %p317 = por %p315, %p316
      %p318 = scmp.ne.s32.totalorder %s310, %s312
      %p319 = scmp.eq.s32.totalorder %s56, 1
      %p320 = por %p318, %p319
      %p321 = scmp.ne.s32.totalorder %s312, %s313
      %p322 = scmp.eq.s32.totalorder %s56, 0
      %p323 = por %p321, %p322
      %p324 = scmp.ne.s32.totalorder %s312, %s313
      %p325 = scmp.eq.s32.totalorder %s57, 1
      %p326 = por %p324, %p325
      %p328 = scmp.ne.s32.totalorder %s313, %s327
      %p329 = scmp.eq.s32.totalorder %s57, 0
      %p330 = por %p328, %p329
      %s332 = sadd.s32 %s331, 1
      %p335 = scmp.eq.s32.totalorder %s51, 1
      %p336 = scmp.ne.s32.totalorder %s331, %s333
      %p337 = scmp.eq.s32.totalorder %s51, 0
      %p338 = por %p336, %p337
      %p339 = scmp.ne.s32.totalorder %s331, %s333
      %p340 = scmp.eq.s32.totalorder %s56, 1
      %p341 = por %p339, %p340
      %p342 = scmp.ne.s32.totalorder %s333, %s334
      %p343 = scmp.eq.s32.totalorder %s56, 0
      %p344 = por %p342, %p343
      %p345 = scmp.ne.s32.totalorder %s333, %s334
      %p346 = scmp.eq.s32.totalorder %s57, 1
      %p347 = por %p345, %p346
      %p349 = scmp.ne.s32.totalorder %s334, %s348
      %p350 = scmp.eq.s32.totalorder %s57, 0
      %p351 = por %p349, %p350
      %s353 = sadd.s32 %s352, 1
      %p356 = scmp.eq.s32.totalorder %s51, 1
      %p357 = scmp.ne.s32.totalorder %s352, %s354
      %p358 = scmp.eq.s32.totalorder %s51, 0
      %p359 = por %p357, %p358
      %p360 = scmp.ne.s32.totalorder %s352, %s354
      %p361 = scmp.eq.s32.totalorder %s56, 1
      %p362 = por %p360, %p361
      %p363 = scmp.ne.s32.totalorder %s354, %s355
      %p364 = scmp.eq.s32.totalorder %s56, 0
      %p365 = por %p363, %p364
      %p366 = scmp.ne.s32.totalorder %s354, %s355
      %p367 = scmp.eq.s32.totalorder %s57, 1
      %p368 = por %p366, %p367
      %p370 = scmp.ne.s32.totalorder %s355, %s369
      %p371 = scmp.eq.s32.totalorder %s57, 0
      %p372 = por %p370, %p371
      %s374 = sadd.s32 %s373, 1
      %p377 = scmp.eq.s32.totalorder %s51, 1
      %p378 = scmp.ne.s32.totalorder %s373, %s375
      %p379 = scmp.eq.s32.totalorder %s51, 0
      %p380 = por %p378, %p379
      %p381 = scmp.ne.s32.totalorder %s373, %s375
      %p382 = scmp.eq.s32.totalorder %s56, 1
      %p383 = por %p381, %p382
      %p384 = scmp.ne.s32.totalorder %s375, %s376
      %p385 = scmp.eq.s32.totalorder %s56, 0
      %p386 = por %p384, %p385
      %p387 = scmp.ne.s32.totalorder %s375, %s376
      %p388 = scmp.eq.s32.totalorder %s57, 1
      %p389 = por %p387, %p388
      %p391 = scmp.ne.s32.totalorder %s376, %s390
      %p392 = scmp.eq.s32.totalorder %s57, 0
      %p393 = por %p391, %p392
      %s394 = ssub.s32 %s51, %s58
      %p395 = scmp.eq.s32.totalorder %s394, 0
      %s397 = sadd.s32 %s396, 1
      %s398 = scalar_select %p395, %s396, %s397
      %p401 = pneg %p395
      %p402 = scmp.eq.s32.totalorder %s51, 1
      %p403 = por %p401, %p402
      %p404 = scmp.ne.s32.totalorder %s396, %s399
      %p405 = scmp.eq.s32.totalorder %s51, 0
      %p406 = por %p404, %p405
      %p407 = scmp.ne.s32.totalorder %s396, %s399
      %p408 = scmp.eq.s32.totalorder %s56, 1
      %p409 = por %p407, %p408
      %p410 = scmp.ne.s32.totalorder %s399, %s400
      %p411 = scmp.eq.s32.totalorder %s56, 0
      %p412 = por %p410, %p411
      %p413 = scmp.ne.s32.totalorder %s399, %s400
      %p414 = scmp.eq.s32.totalorder %s57, 1
      %p415 = por %p413, %p414
      %p417 = scmp.ne.s32.totalorder %s400, %s416
      %p418 = scmp.eq.s32.totalorder %s57, 0
      %p419 = por %p417, %p418
      %s420 = ssub.s32 %s51, %s58
      %p421 = scmp.eq.s32.totalorder %s420, 0
      %s423 = sadd.s32 %s422, 1
      %s424 = scalar_select %p421, %s422, %s423
      %p427 = pneg %p421
      %p428 = scmp.eq.s32.totalorder %s51, 1
      %p429 = por %p427, %p428
      %p430 = scmp.ne.s32.totalorder %s422, %s425
      %p431 = scmp.eq.s32.totalorder %s51, 0
      %p432 = por %p430, %p431
      %p433 = scmp.ne.s32.totalorder %s422, %s425
      %p434 = scmp.eq.s32.totalorder %s56, 1
      %p435 = por %p433, %p434
      %p436 = scmp.ne.s32.totalorder %s425, %s426
      %p437 = scmp.eq.s32.totalorder %s56, 0
      %p438 = por %p436, %p437
      %p439 = scmp.ne.s32.totalorder %s425, %s426
      %p440 = scmp.eq.s32.totalorder %s57, 1
      %p441 = por %p439, %p440
      %p443 = scmp.ne.s32.totalorder %s426, %s442
      %p444 = scmp.eq.s32.totalorder %s57, 0
      %p445 = por %p443, %p444
      %s446 = ssub.s32 %s51, %s58
      %p447 = scmp.eq.s32.totalorder %s446, 0
      %s449 = sadd.s32 %s448, 1
      %s450 = scalar_select %p447, %s448, %s449
      %p453 = pneg %p447
      %p454 = scmp.eq.s32.totalorder %s51, 1
      %p455 = por %p453, %p454
      %p456 = scmp.ne.s32.totalorder %s448, %s451
      %p457 = scmp.eq.s32.totalorder %s51, 0
      %p458 = por %p456, %p457
      %p459 = scmp.ne.s32.totalorder %s448, %s451
      %p460 = scmp.eq.s32.totalorder %s56, 1
      %p461 = por %p459, %p460
      %p462 = scmp.ne.s32.totalorder %s451, %s452
      %p463 = scmp.eq.s32.totalorder %s56, 0
      %p464 = por %p462, %p463
      %p465 = scmp.ne.s32.totalorder %s451, %s452
      %p466 = scmp.eq.s32.totalorder %s57, 1
      %p467 = por %p465, %p466
      %p469 = scmp.ne.s32.totalorder %s452, %s468
      %p470 = scmp.eq.s32.totalorder %s57, 0
      %p471 = por %p469, %p470
      %s472 = ssub.s32 %s51, %s58
      %p473 = scmp.eq.s32.totalorder %s472, 0
      %s475 = sadd.s32 %s474, 1
      %s476 = scalar_select %p473, %s474, %s475
      %p479 = pneg %p473
      %p480 = scmp.eq.s32.totalorder %s51, 1
      %p481 = por %p479, %p480
      %p482 = scmp.ne.s32.totalorder %s474, %s477
      %p483 = scmp.eq.s32.totalorder %s51, 0
      %p484 = por %p482, %p483
      %p485 = scmp.ne.s32.totalorder %s474, %s477
      %p486 = scmp.eq.s32.totalorder %s56, 1
      %p487 = por %p485, %p486
      %p488 = scmp.ne.s32.totalorder %s477, %s478
      %p489 = scmp.eq.s32.totalorder %s56, 0
      %p490 = por %p488, %p489
      %p491 = scmp.ne.s32.totalorder %s477, %s478
      %p492 = scmp.eq.s32.totalorder %s57, 1
      %p493 = por %p491, %p492
      %p495 = scmp.ne.s32.totalorder %s478, %s494
      %p496 = scmp.eq.s32.totalorder %s57, 0
      %p497 = por %p495, %p496
      %s498 = ssub.s32 %s51, %s58
      %p499 = scmp.eq.s32.totalorder %s498, 0
      %s501 = sadd.s32 %s500, 1
      %s502 = scalar_select %p499, %s500, %s501
      %p505 = pneg %p499
      %p506 = scmp.eq.s32.totalorder %s51, 1
      %p507 = por %p505, %p506
      %p508 = scmp.ne.s32.totalorder %s500, %s503
      %p509 = scmp.eq.s32.totalorder %s51, 0
      %p510 = por %p508, %p509
      %p511 = scmp.ne.s32.totalorder %s500, %s503
      %p512 = scmp.eq.s32.totalorder %s56, 1
      %p513 = por %p511, %p512
      %p514 = scmp.ne.s32.totalorder %s503, %s504
      %p515 = scmp.eq.s32.totalorder %s56, 0
      %p516 = por %p514, %p515
      %p517 = scmp.ne.s32.totalorder %s503, %s504
      %p518 = scmp.eq.s32.totalorder %s57, 1
      %p519 = por %p517, %p518
      %p521 = scmp.ne.s32.totalorder %s504, %s520
      %p522 = scmp.eq.s32.totalorder %s57, 0
      %p523 = por %p521, %p522
      %s524 = ssub.s32 %s51, %s58
      %p525 = scmp.eq.s32.totalorder %s524, 0
      %s527 = sadd.s32 %s526, 1
      %s528 = scalar_select %p525, %s526, %s527
      %p531 = pneg %p525
      %p532 = scmp.eq.s32.totalorder %s51, 1
      %p533 = por %p531, %p532
      %p534 = scmp.ne.s32.totalorder %s526, %s529
      %p535 = scmp.eq.s32.totalorder %s51, 0
      %p536 = por %p534, %p535
      %p537 = scmp.ne.s32.totalorder %s526, %s529
      %p538 = scmp.eq.s32.totalorder %s56, 1
      %p539 = por %p537, %p538
      %p540 = scmp.ne.s32.totalorder %s529, %s530
      %p541 = scmp.eq.s32.totalorder %s56, 0
      %p542 = por %p540, %p541
      %p543 = scmp.ne.s32.totalorder %s529, %s530
      %p544 = scmp.eq.s32.totalorder %s57, 1
      %p545 = por %p543, %p544
      %p547 = scmp.ne.s32.totalorder %s530, %s546
      %p548 = scmp.eq.s32.totalorder %s57, 0
      %p549 = por %p547, %p548
      %s550 = ssub.s32 %s51, %s58
      %p551 = scmp.eq.s32.totalorder %s550, 0
      %s553 = sadd.s32 %s552, 1
      %s554 = scalar_select %p551, %s552, %s553
      %p557 = pneg %p551
      %p558 = scmp.eq.s32.totalorder %s51, 1
      %p559 = por %p557, %p558
      %p560 = scmp.ne.s32.totalorder %s552, %s555
      %p561 = scmp.eq.s32.totalorder %s51, 0
      %p562 = por %p560, %p561
      %p563 = scmp.ne.s32.totalorder %s552, %s555
      %p564 = scmp.eq.s32.totalorder %s56, 1
      %p565 = por %p563, %p564
      %p566 = scmp.ne.s32.totalorder %s555, %s556
      %p567 = scmp.eq.s32.totalorder %s56, 0
      %p568 = por %p566, %p567
      %p569 = scmp.ne.s32.totalorder %s555, %s556
      %p570 = scmp.eq.s32.totalorder %s57, 1
      %p571 = por %p569, %p570
      %p573 = scmp.ne.s32.totalorder %s556, %s572
      %p574 = scmp.eq.s32.totalorder %s57, 0
      %p575 = por %p573, %p574
      %s576 = ssub.s32 %s51, %s58
      %p577 = scmp.eq.s32.totalorder %s576, 0
      %s579 = sadd.s32 %s578, 1
      %s580 = scalar_select %p577, %s578, %s579
      %p583 = pneg %p577
      %p584 = scmp.eq.s32.totalorder %s51, 1
      %p585 = por %p583, %p584
      %p586 = scmp.ne.s32.totalorder %s578, %s581
      %p587 = scmp.eq.s32.totalorder %s51, 0
      %p588 = por %p586, %p587
      %p589 = scmp.ne.s32.totalorder %s578, %s581
      %p590 = scmp.eq.s32.totalorder %s56, 1
      %p591 = por %p589, %p590
      %p592 = scmp.ne.s32.totalorder %s581, %s582
      %p593 = scmp.eq.s32.totalorder %s56, 0
      %p594 = por %p592, %p593
      %p595 = scmp.ne.s32.totalorder %s581, %s582
      %p596 = scmp.eq.s32.totalorder %s57, 1
      %p597 = por %p595, %p596
      %p599 = scmp.ne.s32.totalorder %s582, %s598
      %p600 = scmp.eq.s32.totalorder %s57, 0
      %p601 = por %p599, %p600
      %s602 = ssub.s32 %s51, %s58
      %p603 = scmp.eq.s32.totalorder %s602, 0
      %s605 = sadd.s32 %s604, 1
      %s606 = scalar_select %p603, %s604, %s605
      %p609 = pneg %p603
      %p610 = scmp.eq.s32.totalorder %s51, 1
      %p611 = por %p609, %p610
      %p612 = scmp.ne.s32.totalorder %s604, %s607
      %p613 = scmp.eq.s32.totalorder %s51, 0
      %p614 = por %p612, %p613
      %p615 = scmp.ne.s32.totalorder %s604, %s607
      %p616 = scmp.eq.s32.totalorder %s56, 1
      %p617 = por %p615, %p616
      %p618 = scmp.ne.s32.totalorder %s607, %s608
      %p619 = scmp.eq.s32.totalorder %s56, 0
      %p620 = por %p618, %p619
      %p621 = scmp.ne.s32.totalorder %s607, %s608
      %p622 = scmp.eq.s32.totalorder %s57, 1
      %p623 = por %p621, %p622
      %p625 = scmp.ne.s32.totalorder %s608, %s624
      %p626 = scmp.eq.s32.totalorder %s57, 0
      %p627 = por %p625, %p626
      %s628 = ssub.s32 %s51, %s58
      %p629 = scmp.eq.s32.totalorder %s628, 0
      %s631 = sadd.s32 %s630, 1
      %s632 = scalar_select %p629, %s630, %s631
      %p635 = pneg %p629
      %p636 = scmp.eq.s32.totalorder %s51, 1
      %p637 = por %p635, %p636
      %p638 = scmp.ne.s32.totalorder %s630, %s633
      %p639 = scmp.eq.s32.totalorder %s51, 0
      %p640 = por %p638, %p639
      %p641 = scmp.ne.s32.totalorder %s630, %s633
      %p642 = scmp.eq.s32.totalorder %s56, 1
      %p643 = por %p641, %p642
      %p644 = scmp.ne.s32.totalorder %s633, %s634
      %p645 = scmp.eq.s32.totalorder %s56, 0
      %p646 = por %p644, %p645
      %p647 = scmp.ne.s32.totalorder %s633, %s634
      %p648 = scmp.eq.s32.totalorder %s57, 1
      %p649 = por %p647, %p648
      %p651 = scmp.ne.s32.totalorder %s634, %s650
      %p652 = scmp.eq.s32.totalorder %s57, 0
      %p653 = por %p651, %p652
      %p654 = scmp.le.s32.totalorder 1, %s51
      %p655 = scmp.lt.s32.totalorder %s51, 3
      %p656 = pnand %p654, %p655
      %p657 = pneg %p656
      // Predicated region
      $region9: #{tpu_custom_call.1} parent=5 // pred_check
        _
      $region10: #{tpu_custom_call.1} parent=5 // pred_check_branch
        %659 = sbr.rel (%p656) target = $region12
      $region11: #{tpu_custom_call.1} parent=5 // pred_region
        %s660 = ssub.s32 %s51, 1
        // Predicated region
        $region13: #{tpu_custom_call.1} parent=11 // pred_check
          %p661 = pneg %p176
        $region14: #{tpu_custom_call.1} parent=11 // pred_check_branch
          %663 = sbr.rel (%p661) target = $region16
        $region15: #{tpu_custom_call.1} parent=11 // pred_region
          _
        $region16: #{tpu_custom_call.1} parent=11 // pred_fallthru
          _
        // Predicated region
        $region17: #{tpu_custom_call.1} parent=11 // pred_check
          %p664 = pneg %p197
        $region18: #{tpu_custom_call.1} parent=11 // pred_check_branch
          %666 = sbr.rel (%p664) target = $region20
        $region19: #{tpu_custom_call.1} parent=11 // pred_region
          _
        $region20: #{tpu_custom_call.1} parent=11 // pred_fallthru
          _
        // Predicated region
        $region21: #{tpu_custom_call.1} parent=11 // pred_check
          %p667 = pneg %p218
        $region22: #{tpu_custom_call.1} parent=11 // pred_check_branch
          %669 = sbr.rel (%p667) target = $region24
        $region23: #{tpu_custom_call.1} parent=11 // pred_region
          _
        $region24: #{tpu_custom_call.1} parent=11 // pred_fallthru
          _
        // Predicated region
        $region25: #{tpu_custom_call.1} parent=11 // pred_check
          %p670 = pneg %p239
        $region26: #{tpu_custom_call.1} parent=11 // pred_check_branch
          %672 = sbr.rel (%p670) target = $region28
        $region27: #{tpu_custom_call.1} parent=11 // pred_region
          %s674 = ssub.s32 256, 256
          %675 = vsyncadd [#allocation4], %s674
          %s676 = sshll.u32 [#allocation3], 4
          %s677 = int_to_ptr.vmem [resolvable:$true] %s676
          %682 = dma.hbm_to_vmem [thread:$0]  %s7, 256, %s677, [#allocation4], 64, 64, 4
        $region28: #{tpu_custom_call.1} parent=11 // pred_fallthru
          _
        // Predicated region
        $region29: #{tpu_custom_call.1} parent=11 // pred_check
          %p683 = pneg %p260
        $region30: #{tpu_custom_call.1} parent=11 // pred_check_branch
          %685 = sbr.rel (%p683) target = $region32
        $region31: #{tpu_custom_call.1} parent=11 // pred_region
          %s687 = ssub.s32 16, 16
          %688 = vsyncadd [#allocation7], %s687
          %s690 = sshll.u32 [#allocation6], 4
          %s691 = int_to_ptr.vmem [resolvable:$true] %s690
          %693 = dma.hbm_to_vmem [thread:$0]  %s8, 16, %s691, [#allocation7]
        $region32: #{tpu_custom_call.1} parent=11 // pred_fallthru
          _
        // Predicated region
        $region33: #{tpu_custom_call.1} parent=11 // pred_check
          %p694 = pneg %p281
        $region34: #{tpu_custom_call.1} parent=11 // pred_check_branch
          %696 = sbr.rel (%p694) target = $region36
        $region35: #{tpu_custom_call.1} parent=11 // pred_region
          %s698 = ssub.s32 16, 16
          %699 = vsyncadd [#allocation7], %s698
          %s701 = sshll.u32 [#allocation8], 4
          %s702 = int_to_ptr.vmem [resolvable:$true] %s701
          %704 = dma.hbm_to_vmem [thread:$0]  %s9, 16, %s702, [#allocation7]
        $region36: #{tpu_custom_call.1} parent=11 // pred_fallthru
          _
        // Predicated region
        $region37: #{tpu_custom_call.1} parent=11 // pred_check
          %p705 = pneg %p302
        $region38: #{tpu_custom_call.1} parent=11 // pred_check_branch
          %707 = sbr.rel (%p705) target = $region40
        $region39: #{tpu_custom_call.1} parent=11 // pred_region
          _
        $region40: #{tpu_custom_call.1} parent=11 // pred_fallthru
          _
        // Predicated region
        $region41: #{tpu_custom_call.1} parent=11 // pred_check
          %p708 = pneg %p323
        $region42: #{tpu_custom_call.1} parent=11 // pred_check_branch
          %710 = sbr.rel (%p708) target = $region44
        $region43: #{tpu_custom_call.1} parent=11 // pred_region
          _
        $region44: #{tpu_custom_call.1} parent=11 // pred_fallthru
          _
        // Predicated region
        $region45: #{tpu_custom_call.1} parent=11 // pred_check
          %p711 = pneg %p344
        $region46: #{tpu_custom_call.1} parent=11 // pred_check_branch
          %713 = sbr.rel (%p711) target = $region48
        $region47: #{tpu_custom_call.1} parent=11 // pred_region
          _
        $region48: #{tpu_custom_call.1} parent=11 // pred_fallthru
          _
        // Predicated region
        $region49: #{tpu_custom_call.1} parent=11 // pred_check
          %p714 = pneg %p365
        $region50: #{tpu_custom_call.1} parent=11 // pred_check_branch
          %716 = sbr.rel (%p714) target = $region52
        $region51: #{tpu_custom_call.1} parent=11 // pred_region
          _
        $region52: #{tpu_custom_call.1} parent=11 // pred_fallthru
          _
        // Predicated region
        $region53: #{tpu_custom_call.1} parent=11 // pred_check
          %p717 = pneg %p386
        $region54: #{tpu_custom_call.1} parent=11 // pred_check_branch
          %719 = sbr.rel (%p717) target = $region56
        $region55: #{tpu_custom_call.1} parent=11 // pred_region
          _
        $region56: #{tpu_custom_call.1} parent=11 // pred_fallthru
          _
      $region12: #{tpu_custom_call.1} parent=5 // pred_fallthru
        _
      %p720 = scmp.lt.s32.totalorder %s51, 2
      // Predicated region
      $region57: #{tpu_custom_call.1} parent=5 // pred_check
        %p721 = pneg %p720
      $region58: #{tpu_custom_call.1} parent=5 // pred_check_branch
        %723 = sbr.rel (%p721) target = $region60
      $region59: #{tpu_custom_call.1} parent=5 // pred_region
        // Predicated region
        $region61: #{tpu_custom_call.1} parent=59 // pred_check
          %p724 = pneg %p71
        $region62: #{tpu_custom_call.1} parent=59 // pred_check_branch
          %726 = sbr.rel (%p724) target = $region64
        $region63: #{tpu_custom_call.1} parent=59 // pred_region
          %p727 = scmp.lt.s32.totalorder %s51, 1
          %s728 = scalar_select %p727, %s51, 1
          %s729 = smul.addr %s728, 8
          %s730 = scalar_lea.vmem %s0, %s729
        $region64: #{tpu_custom_call.1} parent=59 // pred_fallthru
          _
        // Predicated region
        $region65: #{tpu_custom_call.1} parent=59 // pred_check
          %p731 = pneg %p97
        $region66: #{tpu_custom_call.1} parent=59 // pred_check_branch
          %733 = sbr.rel (%p731) target = $region68
        $region67: #{tpu_custom_call.1} parent=59 // pred_region
          %p734 = scmp.lt.s32.totalorder %s51, 1
          %s735 = scalar_select %p734, %s51, 1
          %s736 = smul.addr %s735, 8
          %s737 = scalar_lea.vmem %s1, %s736
        $region68: #{tpu_custom_call.1} parent=59 // pred_fallthru
          _
        // Predicated region
        $region69: #{tpu_custom_call.1} parent=59 // pred_check
          %p738 = pneg %p123
        $region70: #{tpu_custom_call.1} parent=59 // pred_check_branch
          %740 = sbr.rel (%p738) target = $region72
        $region71: #{tpu_custom_call.1} parent=59 // pred_region
          %p741 = scmp.lt.s32.totalorder %s51, 1
          %s742 = scalar_select %p741, %s51, 1
          %s743 = smul.addr %s742, 8
          %s744 = scalar_lea.vmem %s2, %s743
        $region72: #{tpu_custom_call.1} parent=59 // pred_fallthru
          _
        // Predicated region
        $region73: #{tpu_custom_call.1} parent=59 // pred_check
          %p745 = pneg %p149
        $region74: #{tpu_custom_call.1} parent=59 // pred_check_branch
          %747 = sbr.rel (%p745) target = $region76
        $region75: #{tpu_custom_call.1} parent=59 // pred_region
          %p748 = scmp.lt.s32.totalorder %s51, 1
          %s749 = scalar_select %p748, %s51, 1
          %s750 = smul.addr %s749, 8
          %s751 = scalar_lea.vmem %s3, %s750
        $region76: #{tpu_custom_call.1} parent=59 // pred_fallthru
          _
      $region60: #{tpu_custom_call.1} parent=5 // pred_fallthru
        _
      %p752 = scmp.le.s32.totalorder 1, %s51
      %p753 = scmp.lt.s32.totalorder %s51, 3
      %p754 = pnand %p752, %p753
      %p755 = pneg %p754
      // Predicated region
      $region77: #{tpu_custom_call.1} parent=5 // pred_check
        _
      $region78: #{tpu_custom_call.1} parent=5 // pred_check_branch
        %757 = sbr.rel (%p754) target = $region80
      $region79: #{tpu_custom_call.1} parent=5 // pred_region
        %s758 = ssub.s32 %s51, 1
        // Predicated region
        $region81: #{tpu_custom_call.1} parent=79 // pred_check
          %p759 = pneg %p239
        $region82: #{tpu_custom_call.1} parent=79 // pred_check_branch
          %761 = sbr.rel (%p759) target = $region84
        $region83: #{tpu_custom_call.1} parent=79 // pred_region
          %762 = dma.done [#allocation4], 256
        $region84: #{tpu_custom_call.1} parent=79 // pred_fallthru
          _
        // Predicated region
        $region85: #{tpu_custom_call.1} parent=79 // pred_check
          %p763 = pneg %p260
        $region86: #{tpu_custom_call.1} parent=79 // pred_check_branch
          %765 = sbr.rel (%p763) target = $region88
        $region87: #{tpu_custom_call.1} parent=79 // pred_region
          %766 = dma.done [#allocation7], 16
        $region88: #{tpu_custom_call.1} parent=79 // pred_fallthru
          _
        // Predicated region
        $region89: #{tpu_custom_call.1} parent=79 // pred_check
          %p767 = pneg %p281
        $region90: #{tpu_custom_call.1} parent=79 // pred_check_branch
          %769 = sbr.rel (%p767) target = $region92
        $region91: #{tpu_custom_call.1} parent=79 // pred_region
          %770 = dma.done [#allocation7], 16
        $region92: #{tpu_custom_call.1} parent=79 // pred_fallthru
          _
        %p771 = scmp.lt.s32.totalorder %s56, 1
        %s772 = scalar_select %p771, %s56, 1
        %s773 = smul.addr %s772, 8
        %s774 = scalar_lea.vmem %s0, %s773
        %p775 = pneg %p77
        %p776 = pneg %p74
        %p777 = scmp.lt.s32.totalorder %s56, 1
        %s778 = scalar_select %p777, %s56, 1
        %s779 = smul.addr %s778, 8
        %s780 = scalar_lea.vmem %s1, %s779
        %p781 = pneg %p103
        %p782 = pneg %p100
        %p783 = scmp.lt.s32.totalorder %s56, 1
        %s784 = scalar_select %p783, %s56, 1
        %s785 = smul.addr %s784, 8
        %s786 = scalar_lea.vmem %s2, %s785
        %p787 = pneg %p129
        %p788 = pneg %p126
        %p789 = scmp.lt.s32.totalorder %s56, 1
        %s790 = scalar_select %p789, %s56, 1
        %s791 = smul.addr %s790, 8
        %s792 = scalar_lea.vmem %s3, %s791
        %p793 = pneg %p155
        %p794 = pneg %p152
        %p795 = pneg %p176
        %p796 = pneg %p173
        %p797 = pneg %p197
        %p798 = pneg %p194
        %p799 = pneg %p218
        %p800 = pneg %p215
        %p801 = pneg %p239
        %p802 = pneg %p236
        %p803 = pneg %p260
        %p804 = pneg %p257
        %p805 = pneg %p281
        %p806 = pneg %p278
        %p807 = pneg %p302
        %p808 = pneg %p299
        %p809 = pneg %p323
        %p810 = pneg %p320
        %p811 = pneg %p344
        %p812 = pneg %p341
        %p813 = pneg %p365
        %p814 = pneg %p362
        %p815 = pneg %p386
        %p816 = pneg %p383
        %p817 = pneg %p412
        %p818 = pneg %p409
        %s819 = sand.u32 %s399, 1
        %s820 = scalar_lea.sflag [#allocation5], %s819
        %s821 = sand.u32 %s399, 1
        %s822 = smul.addr %s821, 8
        %s823 = scalar_lea.vmem [#allocation9], %s822
        %p824 = pneg %p438
        %p825 = pneg %p435
        %s826 = sand.u32 %s56, 1
        %s827 = scalar_lea.sflag [#allocation11], %s826
        %s828 = sand.u32 %s425, 1
        %s829 = smul.addr %s828, 8
        %s830 = scalar_lea.vmem [#allocation10], %s829
        %p831 = pneg %p464
        %p832 = pneg %p461
        %s833 = sand.u32 %s56, 1
        %s834 = scalar_lea.sflag [#allocation11], %s833
        %s835 = sand.u32 %s451, 1
        %s836 = smul.addr %s835, 8
        %s837 = scalar_lea.vmem [#allocation12], %s836
        %p838 = pneg %p490
        %p839 = pneg %p487
        %s840 = sand.u32 %s56, 1
        %s841 = scalar_lea.sflag [#allocation14], %s840
        %s842 = sand.u32 %s477, 1
        %s843 = smul.addr %s842, 8
        %s844 = scalar_lea.vmem [#allocation13], %s843
        %p845 = pneg %p516
        %p846 = pneg %p513
        %s847 = sand.u32 %s56, 1
        %s848 = scalar_lea.sflag [#allocation14], %s847
        %s849 = sand.u32 %s503, 1
        %s850 = smul.addr %s849, 32
        %s851 = scalar_lea.vmem [#allocation15], %s850
        %p852 = pneg %p542
        %p853 = pneg %p539
        %s854 = sand.u32 %s56, 1
        %s855 = scalar_lea.sflag [#allocation17], %s854
        %s856 = sand.u32 %s529, 1
        %s857 = smul.addr %s856, 32
        %s858 = scalar_lea.vmem [#allocation16], %s857
        %p859 = pneg %p568
        %p860 = pneg %p565
        %s861 = sand.u32 %s56, 1
        %s862 = scalar_lea.sflag [#allocation17], %s861
        %s863 = sand.u32 %s555, 1
        %s864 = smul.addr %s863, 32
        %s865 = scalar_lea.vmem [#allocation18], %s864
        %p866 = pneg %p594
        %p867 = pneg %p591
        %s868 = sand.u32 %s56, 1
        %s869 = scalar_lea.sflag [#allocation20], %s868
        %s870 = sand.u32 %s581, 1
        %s871 = smul.addr %s870, 32
        %s872 = scalar_lea.vmem [#allocation19], %s871
        %p873 = pneg %p620
        %p874 = pneg %p617
        %s875 = sand.u32 %s56, 1
        %s876 = scalar_lea.sflag [#allocation20], %s875
        %s877 = sand.u32 %s607, 1
        %s878 = smul.addr %s877, 8
        %s879 = scalar_lea.vmem [#allocation21], %s878
        %p880 = pneg %p646
        %p881 = pneg %p643
        %s882 = sand.u32 %s633, 1
        %s883 = scalar_lea.sflag [#allocation23], %s882
        %s884 = sand.u32 %s633, 1
        %s885 = smul.addr %s884, 8
        %s886 = scalar_lea.vmem [#allocation22], %s885
        %p887 = scmp.lt.s32.totalorder %s56, 1
        %s888 = scalar_select %p887, %s56, 1
        %s889 = smul.addr %s888, 8
        %s890 = scalar_lea.vmem %s0, %s889
        %p891 = scmp.lt.s32.totalorder %s56, 1
        %s892 = scalar_select %p891, %s56, 1
        %s893 = smul.addr %s892, 8
        %s894 = scalar_lea.vmem %s1, %s893
        %p895 = scmp.lt.s32.totalorder %s56, 1
        %s896 = scalar_select %p895, %s56, 1
        %s897 = smul.addr %s896, 8
        %s898 = scalar_lea.vmem %s2, %s897
        %p899 = scmp.lt.s32.totalorder %s56, 1
        %s900 = scalar_select %p899, %s56, 1
        %s901 = smul.addr %s900, 8
        %s902 = scalar_lea.vmem %s3, %s901
        %v904 = vld [vmem:[%s890] sm:$0xff]
        %v905 = vld [vmem:[%s894] sm:$0xff]
        %v906 = vld [vmem:[%s4] sm:$0x1]
        %v907 = vld [vmem:[%s5] sm:$0x1]
        %vm908 = vcmask 261120
        %v909 = vsel %vm908, %v904, 0.0
        %910 = vadd.xlane.f32.xlu0 %v909
        %v911 = vpop.xlane.xlu0 %910
        %v912 = vsel %vm908, %v905, 0.0
        %913 = vadd.xlane.f32.xlu0 %v912
        %v914 = vpop.xlane.xlu0 %913
        %v915 = vrcp.pop 32.0
        %v916 = vmul.f32 %v911, %v915
        %v917 = vmul.f32 %v914, %v915
        %v918 = vsub.f32 %v904, %v916
        %v919 = vsub.f32 %v905, %v917
        %v920 = vmul.f32 %v918, %v918
        %v921 = vmul.f32 %v919, %v919
        %v922 = vsel %vm908, %v920, 0.0
        %923 = vadd.xlane.f32.xlu0 %v922
        %v924 = vpop.xlane.xlu0 %923
        %v925 = vsel %vm908, %v921, 0.0
        %926 = vadd.xlane.f32.xlu0 %v925
        %v927 = vpop.xlane.xlu0 %926
        %v928 = vmul.f32 %v924, %v915
        %v929 = vmul.f32 %v927, %v915
        %v930 = vadd.f32 %v928, 1e-05
        %v931 = vadd.f32 %v929, 1e-05
        %v932 = vrsqrt.pop %v930
        %v933 = vrsqrt.pop %v931
        %v934 = vmul.f32 %v918, %v932
        %v935 = vmul.f32 %v919, %v933
        %v937 = vlaneseq
        %v938 = vshrl.u32 %v937, 7
        %v939 = vsub.s32 0, %v938
        %v940 = vrot.slane %v906, %v939
        %v942 = vmul.f32 %v934, %v940
        %v943 = vmul.f32 %v935, %v940
        %v945 = vlaneseq
        %v946 = vshrl.u32 %v945, 7
        %v947 = vsub.s32 0, %v946
        %v948 = vrot.slane %v907, %v947
        %v950 = vadd.f32 %v942, %v948
        %v951 = vadd.f32 %v943, %v948
        %v952 = vpack.c.bf16 %v951, %v950
        %v953 = vld [vmem:[%s6] sm:$0xf]
        %v954 = vld [vmem:[%s6 + $0x4] sm:$0xf]
        %v955 = vld [vmem:[%s6 + $0x8] sm:$0xf]
        %v956 = vld [vmem:[%s6 + $0xc] sm:$0xf]
        %v961 = vunpack.c.l.b16 %v953
        %v962 = vunpack.c.l.b16 %v954
        %v963 = vunpack.c.l.b16 %v955
        %v964 = vunpack.c.l.b16 %v956
        %v965 = vpack.c.b16 %v962, %v961
        %v966 = vpack.c.b16 %v964, %v963
        %v970 = vsel %vm908, %v952, 0
        %972 = vmatprep.subr.bf16.mxu0 0
        %973 = vmatpush1.bf16.msra.mxu0 %v965
        %974 = vmatprep.subr.bf16.mxu0 0
        %975 = vmatpush1.bf16.msra.mxu0 %v966
        %976 = vmatprep.subr.bf16.mxu0 0
        %977 = vmatpush1.bf16.msra.mxu0 0
        %978 = vmatprep.subr.bf16.mxu0 0
        %979 = vmatpush1.bf16.msra.mxu0 0
        %980 = vmatprep.subr.bf16.mxu0 0
        %981 = vmatpush1.bf16.msra.mxu0 0
        %982 = vmatprep.subr.bf16.mxu0 0
        %983 = vmatpush1.bf16.msra.mxu0 0
        %984 = vmatprep.subr.bf16.mxu0 0
        %985 = vmatpush1.bf16.msra.mxu0 0
        %986 = vmatprep.subr.bf16.mxu0 0
        %987 = vmatpush1.bf16.msra.mxu0 0
        %988 = vmatprep.subr.bf16.mxu0 0
        %989 = vmatpush1.bf16.msra.mxu0 0
        %990 = vmatprep.subr.bf16.mxu0 0
        %991 = vmatpush1.bf16.msra.mxu0 0
        %992 = vmatprep.subr.bf16.mxu0 0
        %993 = vmatpush1.bf16.msra.mxu0 0
        %994 = vmatprep.subr.bf16.mxu0 0
        %995 = vmatpush1.bf16.msra.mxu0 0
        %996 = vmatprep.subr.bf16.mxu0 0
        %997 = vmatpush1.bf16.msra.mxu0 0
        %998 = vmatprep.subr.bf16.mxu0 0
        %999 = vmatpush1.bf16.msra.mxu0 0
        %1000 = vmatprep.subr.bf16.mxu0 0
        %1001 = vmatpush1.bf16.msra.mxu0 0
        %1002 = vmatprep.subr.bf16.mxu0 0
        %1003 = vmatpush1.bf16.msra.mxu0 0
        %1004 = vmatprep.mubr.bf16.mxu0 0
        %1005 = vmatmul.mubr.bf16.gmra.mrb[0].mxu0 %v970
        %v1006 = vpop.f32.mrb[0].mxu0
        %v1007 = vadd.f32 0.0, %v1006
        %v1008 = vpop.f32.mrb[0].mxu0
        %v1009 = vpop.f32.mrb[0].mxu0
        %v1010 = vadd.f32 0.0, %v1009
        %v1011 = vpop.f32.mrb[0].mxu0
        %1012 = vdwg.mxu0
        %1014 = vrot.lane.b32.xlu0 %v1007, 64
        %v1015 = vpop.permute.xlu0 %1014
        %1017 = vst.msk [vmem:[%s879] sm:$0xff] %vm908, %v1015
        %1019 = vrot.lane.b32.xlu0 %v1010, 64
        %v1020 = vpop.permute.xlu0 %1019
        %1022 = vst.msk [vmem:[%s886] sm:$0xff] %vm908, %v1020
        %v1023 = vpack.c.bf16 %v1010, %v1007
        %1024 = vrot.lane.b32.xlu0 %v1007, 96
        %v1025 = vpop.permute.xlu0 %1024
        %vm1026 = vcmask 64512
        %v1027 = vsel %vm1026, %v1007, 0
        %v1029 = vsel %vm1026, %v1010, 0
        %v1031 = vsel %vm1026, %v1025, 0
        %1033 = vmatprep.subr.mxu0 0.0
        %1034 = vmatpush1.xpose.msra.mxu0 %v1031
        %1035 = vmatprep.subr.mxu0 0.0
        %1036 = vmatpush1.xpose.msra.mxu0 0.0
        %1037 = vmatprep.subr.mxu0 0.0
        %1038 = vmatpush1.xpose.msra.mxu0 0.0
        %1039 = vmatprep.subr.mxu0 0.0
        %1040 = vmatpush1.xpose.msra.mxu0 0.0
        %1041 = vmatprep.subr.mxu0 0.0
        %1042 = vmatpush1.xpose.msra.mxu0 0.0
        %1043 = vmatprep.subr.mxu0 0.0
        %1044 = vmatpush1.xpose.msra.mxu0 0.0
        %1045 = vmatprep.subr.mxu0 0.0
        %1046 = vmatpush1.xpose.msra.mxu0 0.0
        %1047 = vmatprep.subr.mxu0 0.0
        %1048 = vmatpush1.xpose.msra.mxu0 0.0
        %1049 = vmatprep.subr.mxu0 0.0
        %1050 = vmatpush1.xpose.msra.mxu0 0.0
        %1051 = vmatprep.subr.mxu0 0.0
        %1052 = vmatpush1.xpose.msra.mxu0 0.0
        %1053 = vmatprep.subr.mxu0 0.0
        %1054 = vmatpush1.xpose.msra.mxu0 0.0
        %1055 = vmatprep.subr.mxu0 0.0
        %1056 = vmatpush1.xpose.msra.mxu0 0.0
        %1057 = vmatprep.subr.mxu0 0.0
        %1058 = vmatpush1.xpose.msra.mxu0 0.0
        %1059 = vmatprep.subr.mxu0 0.0
        %1060 = vmatpush1.xpose.msra.mxu0 0.0
        %1061 = vmatprep.subr.mxu0 0.0
        %1062 = vmatpush1.xpose.msra.mxu0 0.0
        %1063 = vmatprep.subr.mxu0 0.0
        %1064 = vmatpush1.xpose.msra.mxu0 0.0
        %1065 = vmatprep.subr.mxu0 0.0
        %1066 = vmatpush1.xpose.msra.mxu0 0.0
        %1067 = vmatprep.subr.mxu0 0.0
        %1068 = vmatpush1.xpose.msra.mxu0 0.0
        %1069 = vmatprep.subr.mxu0 0.0
        %1070 = vmatpush1.xpose.msra.mxu0 0.0
        %1071 = vmatprep.subr.mxu0 0.0
        %1072 = vmatpush1.xpose.msra.mxu0 0.0
        %1073 = vmatprep.subr.mxu0 0.0
        %1074 = vmatpush1.xpose.msra.mxu0 0.0
        %1075 = vmatprep.subr.mxu0 0.0
        %1076 = vmatpush1.xpose.msra.mxu0 0.0
        %1077 = vmatprep.subr.mxu0 0.0
        %1078 = vmatpush1.xpose.msra.mxu0 0.0
        %1079 = vmatprep.subr.mxu0 0.0
        %1080 = vmatpush1.xpose.msra.mxu0 0.0
        %1081 = vmatprep.subr.mxu0 0.0
        %1082 = vmatpush1.xpose.msra.mxu0 0.0
        %1083 = vmatprep.subr.mxu0 0.0
        %1084 = vmatpush1.xpose.msra.mxu0 0.0
        %1085 = vmatprep.subr.mxu0 0.0
        %1086 = vmatpush1.xpose.msra.mxu0 0.0
        %1087 = vmatprep.subr.mxu0 0.0
        %1088 = vmatpush1.xpose.msra.mxu0 0.0
        %1089 = vmatprep.subr.mxu0 0.0
        %1090 = vmatpush1.xpose.msra.mxu0 0.0
        %1091 = vmatprep.subr.mxu0 0.0
        %1092 = vmatpush1.xpose.msra.mxu0 0.0
        %1093 = vmatprep.subr.mxu0 0.0
        %1094 = vmatpush1.xpose.msra.mxu0 0.0
        %1095 = vmatprep.subr.mxu0 0.0
        %1096 = vmatpush1.xpose.msra.mxu0 0.0
        %1097 = vmatprep.mubr.f32.mxu0 0.0
        %1098 = vmatmul.mubr.f32.gmra.mrb[0].mxu0 %v1027
        %v1099 = vpop.f32.mrb[0].mxu0
        %v1100 = vadd.f32 0.0, %v1099
        %v1101 = vpop.f32.mrb[0].mxu0
        %1102 = vmatprep.mubr.f32.mxu0 0.0
        %1103 = vmatmul.mubr.f32.gmra.mrb[0].mxu0 %v1029
        %v1104 = vpop.f32.mrb[0].mxu0
        %v1105 = vadd.f32 0.0, %v1104
        %v1106 = vpop.f32.mrb[0].mxu0
        %1107 = vdwg.mxu0
        %v1108 = vmul.f32 %v1100, 0.35355338
        %v1109 = vmul.f32 %v1105, 0.35355338
        %v1110 = vsel %vm1026, %v1108, -inf
        %1111 = vmax.xlane.f32.xlu0 %v1110
        %v1112 = vpop.xlane.xlu0 %1111
        %v1113 = vsel %vm1026, %v1109, -inf
        %1114 = vmax.xlane.f32.xlu0 %v1113
        %v1115 = vpop.xlane.xlu0 %1114
        %v1116 = vsub.f32 %v1108, %v1112
        %v1117 = vsub.f32 %v1109, %v1115
        %v1118 = vmul.f32 %v1116, 1.442695
        %v1119 = vpow.pop %v1118
        %v1120 = vmul.f32 %v1117, 1.442695
        %v1121 = vpow.pop %v1120
        %v1122 = vsel %vm1026, %v1119, 0.0
        %1123 = vadd.xlane.f32.xlu0 %v1122
        %v1124 = vpop.xlane.xlu0 %1123
        %v1125 = vsel %vm1026, %v1121, 0.0
        %1126 = vadd.xlane.f32.xlu0 %v1125
        %v1127 = vpop.xlane.xlu0 %1126
        %v1128 = vrcp.pop %v1124
        %v1129 = vrcp.pop %v1127
        %v1130 = vmul.f32 %v1119, %v1128
        %v1131 = vmul.f32 %v1121, %v1129
        %1132 = vrot.lane.b32.xlu0 %v1010, 96
        %v1133 = vpop.permute.xlu0 %1132
        %v1134 = vsel %vm1026, %v1133, 0
        %1136 = vmatprep.subr.mxu0 0.0
        %1137 = vmatpush1.xpose.msra.mxu0 %v1134
        %1138 = vmatprep.subr.mxu0 0.0
        %1139 = vmatpush1.xpose.msra.mxu0 0.0
        %1140 = vmatprep.subr.mxu0 0.0
        %1141 = vmatpush1.xpose.msra.mxu0 0.0
        %1142 = vmatprep.subr.mxu0 0.0
        %1143 = vmatpush1.xpose.msra.mxu0 0.0
        %1144 = vmatprep.subr.mxu0 0.0
        %1145 = vmatpush1.xpose.msra.mxu0 0.0
        %1146 = vmatprep.subr.mxu0 0.0
        %1147 = vmatpush1.xpose.msra.mxu0 0.0
        %1148 = vmatprep.subr.mxu0 0.0
        %1149 = vmatpush1.xpose.msra.mxu0 0.0
        %1150 = vmatprep.subr.mxu0 0.0
        %1151 = vmatpush1.xpose.msra.mxu0 0.0
        %1152 = vmatprep.subr.mxu0 0.0
        %1153 = vmatpush1.xpose.msra.mxu0 0.0
        %1154 = vmatprep.subr.mxu0 0.0
        %1155 = vmatpush1.xpose.msra.mxu0 0.0
        %1156 = vmatprep.subr.mxu0 0.0
        %1157 = vmatpush1.xpose.msra.mxu0 0.0
        %1158 = vmatprep.subr.mxu0 0.0
        %1159 = vmatpush1.xpose.msra.mxu0 0.0
        %1160 = vmatprep.subr.mxu0 0.0
        %1161 = vmatpush1.xpose.msra.mxu0 0.0
        %1162 = vmatprep.subr.mxu0 0.0
        %1163 = vmatpush1.xpose.msra.mxu0 0.0
        %1164 = vmatprep.subr.mxu0 0.0
        %1165 = vmatpush1.xpose.msra.mxu0 0.0
        %1166 = vmatprep.subr.mxu0 0.0
        %1167 = vmatpush1.xpose.msra.mxu0 0.0
        %1168 = vmatprep.subr.mxu0 0.0
        %1169 = vmatpush1.xpose.msra.mxu0 0.0
        %1170 = vmatprep.subr.mxu0 0.0
        %1171 = vmatpush1.xpose.msra.mxu0 0.0
        %1172 = vmatprep.subr.mxu0 0.0
        %1173 = vmatpush1.xpose.msra.mxu0 0.0
        %1174 = vmatprep.subr.mxu0 0.0
        %1175 = vmatpush1.xpose.msra.mxu0 0.0
        %1176 = vmatprep.subr.mxu0 0.0
        %1177 = vmatpush1.xpose.msra.mxu0 0.0
        %1178 = vmatprep.subr.mxu0 0.0
        %1179 = vmatpush1.xpose.msra.mxu0 0.0
        %1180 = vmatprep.subr.mxu0 0.0
        %1181 = vmatpush1.xpose.msra.mxu0 0.0
        %1182 = vmatprep.subr.mxu0 0.0
        %1183 = vmatpush1.xpose.msra.mxu0 0.0
        %1184 = vmatprep.subr.mxu0 0.0
        %1185 = vmatpush1.xpose.msra.mxu0 0.0
        %1186 = vmatprep.subr.mxu0 0.0
        %1187 = vmatpush1.xpose.msra.mxu0 0.0
        %1188 = vmatprep.subr.mxu0 0.0
        %1189 = vmatpush1.xpose.msra.mxu0 0.0
        %1190 = vmatprep.subr.mxu0 0.0
        %1191 = vmatpush1.xpose.msra.mxu0 0.0
        %1192 = vmatprep.subr.mxu0 0.0
        %1193 = vmatpush1.xpose.msra.mxu0 0.0
        %1194 = vmatprep.subr.mxu0 0.0
        %1195 = vmatpush1.xpose.msra.mxu0 0.0
        %1196 = vmatprep.subr.mxu0 0.0
        %1197 = vmatpush1.xpose.msra.mxu0 0.0
        %1198 = vmatprep.subr.mxu0 0.0
        %1199 = vmatpush1.xpose.msra.mxu0 0.0
        %1200 = vmatprep.mubr.f32.mxu0 0.0
        %1201 = vmatmul.mubr.f32.gmra.mrb[0].mxu0 %v1027
        %v1202 = vpop.f32.mrb[0].mxu0
        %v1203 = vadd.f32 0.0, %v1202
        %v1204 = vpop.f32.mrb[0].mxu0
        %1205 = vmatprep.mubr.f32.mxu0 0.0
        %1206 = vmatmul.mubr.f32.gmra.mrb[0].mxu0 %v1029
        %v1207 = vpop.f32.mrb[0].mxu0
        %v1208 = vadd.f32 0.0, %v1207
        %v1209 = vpop.f32.mrb[0].mxu0
        %1210 = vdwg.mxu0
        %v1211 = vmul.f32 %v1203, 0.35355338
        %v1212 = vmul.f32 %v1208, 0.35355338
        %v1213 = vsel %vm1026, %v1211, -inf
        %1214 = vmax.xlane.f32.xlu0 %v1213
        %v1215 = vpop.xlane.xlu0 %1214
        %v1216 = vsel %vm1026, %v1212, -inf
        %1217 = vmax.xlane.f32.xlu0 %v1216
        %v1218 = vpop.xlane.xlu0 %1217
        %v1219 = vsub.f32 %v1211, %v1215
        %v1220 = vsub.f32 %v1212, %v1218
        %v1221 = vmul.f32 %v1219, 1.442695
        %v1222 = vpow.pop %v1221
        %v1223 = vmul.f32 %v1220, 1.442695
        %v1224 = vpow.pop %v1223
        %v1225 = vsel %vm1026, %v1222, 0.0
        %1226 = vadd.xlane.f32.xlu0 %v1225
        %v1227 = vpop.xlane.xlu0 %1226
        %v1228 = vsel %vm1026, %v1224, 0.0
        %1229 = vadd.xlane.f32.xlu0 %v1228
        %v1230 = vpop.xlane.xlu0 %1229
        %v1231 = vrcp.pop %v1227
        %v1232 = vrcp.pop %v1230
        %v1233 = vmul.f32 %v1222, %v1231
        %v1234 = vmul.f32 %v1224, %v1232
        %1235 = vst.msk [vmem:[%s851] sm:$0xff] %vm1026, %v1130
        %1236 = vst.msk [vmem:[%s872] sm:$0xff] %vm1026, %v1131
        %1237 = vst.msk [vmem:[%s865] sm:$0xff] %vm1026, %v1233
        %1238 = vst.msk [vmem:[%s858] sm:$0xff] %vm1026, %v1234
        %v1239 = vpack.c.bf16 %v1131, %v1130
        %1241 = vrot.lane.b32.xlu0 %v1023, 64
        %v1242 = vpop.permute.xlu0 %1241
        %v1244 = vsel %vm1026, %v1239, 0
        %vm1246 = vcmask 1043456
        %v1248 = vsel %vm1246, %v1242, 0
        %1250 = vmatprep.subr.bf16.mxu0 0
        %1251 = vmatpush1.bf16.msra.mxu0 %v1248
        %1252 = vmatprep.subr.bf16.mxu0 0
        %1253 = vmatpush1.bf16.msra.mxu0 0
        %1254 = vmatprep.subr.bf16.mxu0 0
        %1255 = vmatpush1.bf16.msra.mxu0 0
        %1256 = vmatprep.subr.bf16.mxu0 0
        %1257 = vmatpush1.bf16.msra.mxu0 0
        %1258 = vmatprep.subr.bf16.mxu0 0
        %1259 = vmatpush1.bf16.msra.mxu0 0
        %1260 = vmatprep.subr.bf16.mxu0 0
        %1261 = vmatpush1.bf16.msra.mxu0 0
        %1262 = vmatprep.subr.bf16.mxu0 0
        %1263 = vmatpush1.bf16.msra.mxu0 0
        %1264 = vmatprep.subr.bf16.mxu0 0
        %1265 = vmatpush1.bf16.msra.mxu0 0
        %1266 = vmatprep.subr.bf16.mxu0 0
        %1267 = vmatpush1.bf16.msra.mxu0 0
        %1268 = vmatprep.subr.bf16.mxu0 0
        %1269 = vmatpush1.bf16.msra.mxu0 0
        %1270 = vmatprep.subr.bf16.mxu0 0
        %1271 = vmatpush1.bf16.msra.mxu0 0
        %1272 = vmatprep.subr.bf16.mxu0 0
        %1273 = vmatpush1.bf16.msra.mxu0 0
        %1274 = vmatprep.subr.bf16.mxu0 0
        %1275 = vmatpush1.bf16.msra.mxu0 0
        %1276 = vmatprep.subr.bf16.mxu0 0
        %1277 = vmatpush1.bf16.msra.mxu0 0
        %1278 = vmatprep.subr.bf16.mxu0 0
        %1279 = vmatpush1.bf16.msra.mxu0 0
        %1280 = vmatprep.subr.bf16.mxu0 0
        %1281 = vmatpush1.bf16.msra.mxu0 0
        %1282 = vmatprep.mubr.bf16.mxu0 0
        %1283 = vmatmul.mubr.bf16.gmra.mrb[0].mxu0 %v1244
        %v1284 = vpop.f32.mrb[0].mxu0
        %v1285 = vadd.f32 0.0, %v1284
        %v1286 = vpop.f32.mrb[0].mxu0
        %v1287 = vpop.f32.mrb[0].mxu0
        %v1288 = vadd.f32 0.0, %v1287
        %v1289 = vpop.f32.mrb[0].mxu0
        %1290 = vdwg.mxu0
        %v1291 = vpack.c.bf16 %v1234, %v1233
        %v1292 = vrot.slane %v1023, 4
        %1293 = vrot.lane.b32.xlu0 %v1292, 64
        %v1294 = vpop.permute.xlu0 %1293
        %v1296 = vsel %vm1026, %v1291, 0
        %v1299 = vsel %vm1246, %v1294, 0
        %1301 = vmatprep.subr.bf16.mxu0 0
        %1302 = vmatpush1.bf16.msra.mxu0 %v1299
        %1303 = vmatprep.subr.bf16.mxu0 0
        %1304 = vmatpush1.bf16.msra.mxu0 0
        %1305 = vmatprep.subr.bf16.mxu0 0
        %1306 = vmatpush1.bf16.msra.mxu0 0
        %1307 = vmatprep.subr.bf16.mxu0 0
        %1308 = vmatpush1.bf16.msra.mxu0 0
        %1309 = vmatprep.subr.bf16.mxu0 0
        %1310 = vmatpush1.bf16.msra.mxu0 0
        %1311 = vmatprep.subr.bf16.mxu0 0
        %1312 = vmatpush1.bf16.msra.mxu0 0
        %1313 = vmatprep.subr.bf16.mxu0 0
        %1314 = vmatpush1.bf16.msra.mxu0 0
        %1315 = vmatprep.subr.bf16.mxu0 0
        %1316 = vmatpush1.bf16.msra.mxu0 0
        %1317 = vmatprep.subr.bf16.mxu0 0
        %1318 = vmatpush1.bf16.msra.mxu0 0
        %1319 = vmatprep.subr.bf16.mxu0 0
        %1320 = vmatpush1.bf16.msra.mxu0 0
        %1321 = vmatprep.subr.bf16.mxu0 0
        %1322 = vmatpush1.bf16.msra.mxu0 0
        %1323 = vmatprep.subr.bf16.mxu0 0
        %1324 = vmatpush1.bf16.msra.mxu0 0
        %1325 = vmatprep.subr.bf16.mxu0 0
        %1326 = vmatpush1.bf16.msra.mxu0 0
        %1327 = vmatprep.subr.bf16.mxu0 0
        %1328 = vmatpush1.bf16.msra.mxu0 0
        %1329 = vmatprep.subr.bf16.mxu0 0
        %1330 = vmatpush1.bf16.msra.mxu0 0
        %1331 = vmatprep.subr.bf16.mxu0 0
        %1332 = vmatpush1.bf16.msra.mxu0 0
        %1333 = vmatprep.mubr.bf16.mxu0 0
        %1334 = vmatmul.mubr.bf16.gmra.mrb[0].mxu0 %v1296
        %v1335 = vpop.f32.mrb[0].mxu0
        %v1336 = vadd.f32 0.0, %v1335
        %v1337 = vpop.f32.mrb[0].mxu0
        %v1338 = vpop.f32.mrb[0].mxu0
        %v1339 = vadd.f32 0.0, %v1338
        %v1340 = vpop.f32.mrb[0].mxu0
        %1341 = vdwg.mxu0
        %1342 = vrot.lane.b32.xlu0 %v1007, 120
        %v1343 = vpop.permute.xlu0 %1342
        %1344 = vrot.lane.b32.xlu0 %v1010, 120
        %v1345 = vpop.permute.xlu0 %1344
        %1346 = vrot.lane.b32.xlu0 %v1007, 88
        %v1347 = vpop.permute.xlu0 %1346
        %v1348 = vsel %vm1026, %v1343, 0
        %v1350 = vsel %vm1026, %v1345, 0
        %v1352 = vsel %vm1026, %v1347, 0
        %1354 = vmatprep.subr.mxu0 0.0
        %1355 = vmatpush1.xpose.msra.mxu0 %v1352
        %1356 = vmatprep.subr.mxu0 0.0
        %1357 = vmatpush1.xpose.msra.mxu0 0.0
        %1358 = vmatprep.subr.mxu0 0.0
        %1359 = vmatpush1.xpose.msra.mxu0 0.0
        %1360 = vmatprep.subr.mxu0 0.0
        %1361 = vmatpush1.xpose.msra.mxu0 0.0
        %1362 = vmatprep.subr.mxu0 0.0
        %1363 = vmatpush1.xpose.msra.mxu0 0.0
        %1364 = vmatprep.subr.mxu0 0.0
        %1365 = vmatpush1.xpose.msra.mxu0 0.0
        %1366 = vmatprep.subr.mxu0 0.0
        %1367 = vmatpush1.xpose.msra.mxu0 0.0
        %1368 = vmatprep.subr.mxu0 0.0
        %1369 = vmatpush1.xpose.msra.mxu0 0.0
        %1370 = vmatprep.subr.mxu0 0.0
        %1371 = vmatpush1.xpose.msra.mxu0 0.0
        %1372 = vmatprep.subr.mxu0 0.0
        %1373 = vmatpush1.xpose.msra.mxu0 0.0
        %1374 = vmatprep.subr.mxu0 0.0
        %1375 = vmatpush1.xpose.msra.mxu0 0.0
        %1376 = vmatprep.subr.mxu0 0.0
        %1377 = vmatpush1.xpose.msra.mxu0 0.0
        %1378 = vmatprep.subr.mxu0 0.0
        %1379 = vmatpush1.xpose.msra.mxu0 0.0
        %1380 = vmatprep.subr.mxu0 0.0
        %1381 = vmatpush1.xpose.msra.mxu0 0.0
        %1382 = vmatprep.subr.mxu0 0.0
        %1383 = vmatpush1.xpose.msra.mxu0 0.0
        %1384 = vmatprep.subr.mxu0 0.0
        %1385 = vmatpush1.xpose.msra.mxu0 0.0
        %1386 = vmatprep.subr.mxu0 0.0
        %1387 = vmatpush1.xpose.msra.mxu0 0.0
        %1388 = vmatprep.subr.mxu0 0.0
        %1389 = vmatpush1.xpose.msra.mxu0 0.0
        %1390 = vmatprep.subr.mxu0 0.0
        %1391 = vmatpush1.xpose.msra.mxu0 0.0
        %1392 = vmatprep.subr.mxu0 0.0
        %1393 = vmatpush1.xpose.msra.mxu0 0.0
        %1394 = vmatprep.subr.mxu0 0.0
        %1395 = vmatpush1.xpose.msra.mxu0 0.0
        %1396 = vmatprep.subr.mxu0 0.0
        %1397 = vmatpush1.xpose.msra.mxu0 0.0
        %1398 = vmatprep.subr.mxu0 0.0
        %1399 = vmatpush1.xpose.msra.mxu0 0.0
        %1400 = vmatprep.subr.mxu0 0.0
        %1401 = vmatpush1.xpose.msra.mxu0 0.0
        %1402 = vmatprep.subr.mxu0 0.0
        %1403 = vmatpush1.xpose.msra.mxu0 0.0
        %1404 = vmatprep.subr.mxu0 0.0
        %1405 = vmatpush1.xpose.msra.mxu0 0.0
        %1406 = vmatprep.subr.mxu0 0.0
        %1407 = vmatpush1.xpose.msra.mxu0 0.0
        %1408 = vmatprep.subr.mxu0 0.0
        %1409 = vmatpush1.xpose.msra.mxu0 0.0
        %1410 = vmatprep.subr.mxu0 0.0
        %1411 = vmatpush1.xpose.msra.mxu0 0.0
        %1412 = vmatprep.subr.mxu0 0.0
        %1413 = vmatpush1.xpose.msra.mxu0 0.0
        %1414 = vmatprep.subr.mxu0 0.0
        %1415 = vmatpush1.xpose.msra.mxu0 0.0
        %1416 = vmatprep.subr.mxu0 0.0
        %1417 = vmatpush1.xpose.msra.mxu0 0.0
        %1418 = vmatprep.mubr.f32.mxu0 0.0
        %1419 = vmatmul.mubr.f32.gmra.mrb[0].mxu0 %v1348
        %v1420 = vpop.f32.mrb[0].mxu0
        %v1421 = vadd.f32 0.0, %v1420
        %v1422 = vpop.f32.mrb[0].mxu0
        %1423 = vmatprep.mubr.f32.mxu0 0.0
        %1424 = vmatmul.mubr.f32.gmra.mrb[0].mxu0 %v1350
        %v1425 = vpop.f32.mrb[0].mxu0
        %v1426 = vadd.f32 0.0, %v1425
        %v1427 = vpop.f32.mrb[0].mxu0
        %1428 = vdwg.mxu0
        %v1429 = vmul.f32 %v1421, 0.35355338
        %v1430 = vmul.f32 %v1426, 0.35355338
        %v1431 = vsel %vm1026, %v1429, -inf
        %1432 = vmax.xlane.f32.xlu0 %v1431
        %v1433 = vpop.xlane.xlu0 %1432
        %v1434 = vsel %vm1026, %v1430, -inf
        %1435 = vmax.xlane.f32.xlu0 %v1434
        %v1436 = vpop.xlane.xlu0 %1435
        %v1437 = vsub.f32 %v1429, %v1433
        %v1438 = vsub.f32 %v1430, %v1436
        %v1439 = vmul.f32 %v1437, 1.442695
        %v1440 = vpow.pop %v1439
        %v1441 = vmul.f32 %v1438, 1.442695
        %v1442 = vpow.pop %v1441
        %v1443 = vsel %vm1026, %v1440, 0.0
        %1444 = vadd.xlane.f32.xlu0 %v1443
        %v1445 = vpop.xlane.xlu0 %1444
        %v1446 = vsel %vm1026, %v1442, 0.0
        %1447 = vadd.xlane.f32.xlu0 %v1446
        %v1448 = vpop.xlane.xlu0 %1447
        %v1449 = vrcp.pop %v1445
        %v1450 = vrcp.pop %v1448
        %v1451 = vmul.f32 %v1440, %v1449
        %v1452 = vmul.f32 %v1442, %v1450
        %1453 = vrot.lane.b32.xlu0 %v1010, 88
        %v1454 = vpop.permute.xlu0 %1453
        %v1455 = vsel %vm1026, %v1454, 0
        %1457 = vmatprep.subr.mxu0 0.0
        %1458 = vmatpush1.xpose.msra.mxu0 %v1455
        %1459 = vmatprep.subr.mxu0 0.0
        %1460 = vmatpush1.xpose.msra.mxu0 0.0
        %1461 = vmatprep.subr.mxu0 0.0
        %1462 = vmatpush1.xpose.msra.mxu0 0.0
        %1463 = vmatprep.subr.mxu0 0.0
        %1464 = vmatpush1.xpose.msra.mxu0 0.0
        %1465 = vmatprep.subr.mxu0 0.0
        %1466 = vmatpush1.xpose.msra.mxu0 0.0
        %1467 = vmatprep.subr.mxu0 0.0
        %1468 = vmatpush1.xpose.msra.mxu0 0.0
        %1469 = vmatprep.subr.mxu0 0.0
        %1470 = vmatpush1.xpose.msra.mxu0 0.0
        %1471 = vmatprep.subr.mxu0 0.0
        %1472 = vmatpush1.xpose.msra.mxu0 0.0
        %1473 = vmatprep.subr.mxu0 0.0
        %1474 = vmatpush1.xpose.msra.mxu0 0.0
        %1475 = vmatprep.subr.mxu0 0.0
        %1476 = vmatpush1.xpose.msra.mxu0 0.0
        %1477 = vmatprep.subr.mxu0 0.0
        %1478 = vmatpush1.xpose.msra.mxu0 0.0
        %1479 = vmatprep.subr.mxu0 0.0
        %1480 = vmatpush1.xpose.msra.mxu0 0.0
        %1481 = vmatprep.subr.mxu0 0.0
        %1482 = vmatpush1.xpose.msra.mxu0 0.0
        %1483 = vmatprep.subr.mxu0 0.0
        %1484 = vmatpush1.xpose.msra.mxu0 0.0
        %1485 = vmatprep.subr.mxu0 0.0
        %1486 = vmatpush1.xpose.msra.mxu0 0.0
        %1487 = vmatprep.subr.mxu0 0.0
        %1488 = vmatpush1.xpose.msra.mxu0 0.0
        %1489 = vmatprep.subr.mxu0 0.0
        %1490 = vmatpush1.xpose.msra.mxu0 0.0
        %1491 = vmatprep.subr.mxu0 0.0
        %1492 = vmatpush1.xpose.msra.mxu0 0.0
        %1493 = vmatprep.subr.mxu0 0.0
        %1494 = vmatpush1.xpose.msra.mxu0 0.0
        %1495 = vmatprep.subr.mxu0 0.0
        %1496 = vmatpush1.xpose.msra.mxu0 0.0
        %1497 = vmatprep.subr.mxu0 0.0
        %1498 = vmatpush1.xpose.msra.mxu0 0.0
        %1499 = vmatprep.subr.mxu0 0.0
        %1500 = vmatpush1.xpose.msra.mxu0 0.0
        %1501 = vmatprep.subr.mxu0 0.0
        %1502 = vmatpush1.xpose.msra.mxu0 0.0
        %1503 = vmatprep.subr.mxu0 0.0
        %1504 = vmatpush1.xpose.msra.mxu0 0.0
        %1505 = vmatprep.subr.mxu0 0.0
        %1506 = vmatpush1.xpose.msra.mxu0 0.0
        %1507 = vmatprep.subr.mxu0 0.0
        %1508 = vmatpush1.xpose.msra.mxu0 0.0
        %1509 = vmatprep.subr.mxu0 0.0
        %1510 = vmatpush1.xpose.msra.mxu0 0.0
        %1511 = vmatprep.subr.mxu0 0.0
        %1512 = vmatpush1.xpose.msra.mxu0 0.0
        %1513 = vmatprep.subr.mxu0 0.0
        %1514 = vmatpush1.xpose.msra.mxu0 0.0
        %1515 = vmatprep.subr.mxu0 0.0
        %1516 = vmatpush1.xpose.msra.mxu0 0.0
        %1517 = vmatprep.subr.mxu0 0.0
        %1518 = vmatpush1.xpose.msra.mxu0 0.0
        %1519 = vmatprep.subr.mxu0 0.0
        %1520 = vmatpush1.xpose.msra.mxu0 0.0
        %1521 = vmatprep.mubr.f32.mxu0 0.0
        %1522 = vmatmul.mubr.f32.gmra.mrb[0].mxu0 %v1348
        %v1523 = vpop.f32.mrb[0].mxu0
        %v1524 = vadd.f32 0.0, %v1523
        %v1525 = vpop.f32.mrb[0].mxu0
        %1526 = vmatprep.mubr.f32.mxu0 0.0
        %1527 = vmatmul.mubr.f32.gmra.mrb[0].mxu0 %v1350
        %v1528 = vpop.f32.mrb[0].mxu0
        %v1529 = vadd.f32 0.0, %v1528
        %v1530 = vpop.f32.mrb[0].mxu0
        %1531 = vdwg.mxu0
        %v1532 = vmul.f32 %v1524, 0.35355338
        %v1533 = vmul.f32 %v1529, 0.35355338
        %v1534 = vsel %vm1026, %v1532, -inf
        %1535 = vmax.xlane.f32.xlu0 %v1534
        %v1536 = vpop.xlane.xlu0 %1535
        %v1537 = vsel %vm1026, %v1533, -inf
        %1538 = vmax.xlane.f32.xlu0 %v1537
        %v1539 = vpop.xlane.xlu0 %1538
        %v1540 = vsub.f32 %v1532, %v1536
        %v1541 = vsub.f32 %v1533, %v1539
        %v1542 = vmul.f32 %v1540, 1.442695
        %v1543 = vpow.pop %v1542
        %v1544 = vmul.f32 %v1541, 1.442695
        %v1545 = vpow.pop %v1544
        %v1546 = vsel %vm1026, %v1543, 0.0
        %1547 = vadd.xlane.f32.xlu0 %v1546
        %v1548 = vpop.xlane.xlu0 %1547
        %v1549 = vsel %vm1026, %v1545, 0.0
        %1550 = vadd.xlane.f32.xlu0 %v1549
        %v1551 = vpop.xlane.xlu0 %1550
        %v1552 = vrcp.pop %v1548
        %v1553 = vrcp.pop %v1551
        %v1554 = vmul.f32 %v1543, %v1552
        %v1555 = vmul.f32 %v1545, %v1553
        %s1556 = scalar_lea.vmem %s851, 8 [#allocation15]
        %1557 = vst.msk [vmem:[%s1556] sm:$0xff] %vm1026, %v1451
        %s1558 = scalar_lea.vmem %s872, 8 [#allocation19]
        %1559 = vst.msk [vmem:[%s1558] sm:$0xff] %vm1026, %v1452
        %s1560 = scalar_lea.vmem %s865, 8 [#allocation18]
        %1561 = vst.msk [vmem:[%s1560] sm:$0xff] %vm1026, %v1554
        %s1562 = scalar_lea.vmem %s858, 8 [#allocation16]
        %1563 = vst.msk [vmem:[%s1562] sm:$0xff] %vm1026, %v1555
        %v1564 = vpack.c.bf16 %v1452, %v1451
        %1565 = vrot.lane.b32.xlu0 %v1023, 56
        %v1566 = vpop.permute.xlu0 %1565
        %v1568 = vsel %vm1026, %v1564, 0
        %v1571 = vsel %vm1246, %v1566, 0
        %1573 = vmatprep.subr.bf16.mxu0 0
        %1574 = vmatpush1.bf16.msra.mxu0 %v1571
        %1575 = vmatprep.subr.bf16.mxu0 0
        %1576 = vmatpush1.bf16.msra.mxu0 0
        %1577 = vmatprep.subr.bf16.mxu0 0
        %1578 = vmatpush1.bf16.msra.mxu0 0
        %1579 = vmatprep.subr.bf16.mxu0 0
        %1580 = vmatpush1.bf16.msra.mxu0 0
        %1581 = vmatprep.subr.bf16.mxu0 0
        %1582 = vmatpush1.bf16.msra.mxu0 0
        %1583 = vmatprep.subr.bf16.mxu0 0
        %1584 = vmatpush1.bf16.msra.mxu0 0
        %1585 = vmatprep.subr.bf16.mxu0 0
        %1586 = vmatpush1.bf16.msra.mxu0 0
        %1587 = vmatprep.subr.bf16.mxu0 0
        %1588 = vmatpush1.bf16.msra.mxu0 0
        %1589 = vmatprep.subr.bf16.mxu0 0
        %1590 = vmatpush1.bf16.msra.mxu0 0
        %1591 = vmatprep.subr.bf16.mxu0 0
        %1592 = vmatpush1.bf16.msra.mxu0 0
        %1593 = vmatprep.subr.bf16.mxu0 0
        %1594 = vmatpush1.bf16.msra.mxu0 0
        %1595 = vmatprep.subr.bf16.mxu0 0
        %1596 = vmatpush1.bf16.msra.mxu0 0
        %1597 = vmatprep.subr.bf16.mxu0 0
        %1598 = vmatpush1.bf16.msra.mxu0 0
        %1599 = vmatprep.subr.bf16.mxu0 0
        %1600 = vmatpush1.bf16.msra.mxu0 0
        %1601 = vmatprep.subr.bf16.mxu0 0
        %1602 = vmatpush1.bf16.msra.mxu0 0
        %1603 = vmatprep.subr.bf16.mxu0 0
        %1604 = vmatpush1.bf16.msra.mxu0 0
        %1605 = vmatprep.mubr.bf16.mxu0 0
        %1606 = vmatmul.mubr.bf16.gmra.mrb[0].mxu0 %v1568
        %v1607 = vpop.f32.mrb[0].mxu0
        %v1608 = vadd.f32 0.0, %v1607
        %v1609 = vpop.f32.mrb[0].mxu0
        %v1610 = vpop.f32.mrb[0].mxu0
        %v1611 = vadd.f32 0.0, %v1610
        %v1612 = vpop.f32.mrb[0].mxu0
        %1613 = vdwg.mxu0
        %v1614 = vpack.c.bf16 %v1555, %v1554
        %1615 = vrot.lane.b32.xlu0 %v1292, 56
        %v1616 = vpop.permute.xlu0 %1615
        %v1618 = vsel %vm1026, %v1614, 0
        %v1621 = vsel %vm1246, %v1616, 0
        %1623 = vmatprep.subr.bf16.mxu0 0
        %1624 = vmatpush1.bf16.msra.mxu0 %v1621
        %1625 = vmatprep.subr.bf16.mxu0 0
        %1626 = vmatpush1.bf16.msra.mxu0 0
        %1627 = vmatprep.subr.bf16.mxu0 0
        %1628 = vmatpush1.bf16.msra.mxu0 0
        %1629 = vmatprep.subr.bf16.mxu0 0
        %1630 = vmatpush1.bf16.msra.mxu0 0
        %1631 = vmatprep.subr.bf16.mxu0 0
        %1632 = vmatpush1.bf16.msra.mxu0 0
        %1633 = vmatprep.subr.bf16.mxu0 0
        %1634 = vmatpush1.bf16.msra.mxu0 0
        %1635 = vmatprep.subr.bf16.mxu0 0
        %1636 = vmatpush1.bf16.msra.mxu0 0
        %1637 = vmatprep.subr.bf16.mxu0 0
        %1638 = vmatpush1.bf16.msra.mxu0 0
        %1639 = vmatprep.subr.bf16.mxu0 0
        %1640 = vmatpush1.bf16.msra.mxu0 0
        %1641 = vmatprep.subr.bf16.mxu0 0
        %1642 = vmatpush1.bf16.msra.mxu0 0
        %1643 = vmatprep.subr.bf16.mxu0 0
        %1644 = vmatpush1.bf16.msra.mxu0 0
        %1645 = vmatprep.subr.bf16.mxu0 0
        %1646 = vmatpush1.bf16.msra.mxu0 0
        %1647 = vmatprep.subr.bf16.mxu0 0
        %1648 = vmatpush1.bf16.msra.mxu0 0
        %1649 = vmatprep.subr.bf16.mxu0 0
        %1650 = vmatpush1.bf16.msra.mxu0 0
        %1651 = vmatprep.subr.bf16.mxu0 0
        %1652 = vmatpush1.bf16.msra.mxu0 0
        %1653 = vmatprep.subr.bf16.mxu0 0
        %1654 = vmatpush1.bf16.msra.mxu0 0
        %1655 = vmatprep.mubr.bf16.mxu0 0
        %1656 = vmatmul.mubr.bf16.gmra.mrb[0].mxu0 %v1618
        %v1657 = vpop.f32.mrb[0].mxu0
        %v1658 = vadd.f32 0.0, %v1657
        %v1659 = vpop.f32.mrb[0].mxu0
        %v1660 = vpop.f32.mrb[0].mxu0
        %v1661 = vadd.f32 0.0, %v1660
        %v1662 = vpop.f32.mrb[0].mxu0
        %1663 = vdwg.mxu0
        %1666 = vrot.lane.b32.xlu0 %v1608, 8
        %v1667 = vpop.permute.xlu0 %1666
        %1668 = vrot.lane.b32.xlu0 %v1611, 8
        %v1669 = vpop.permute.xlu0 %1668
        %v1672 = vsel %vm1026, %v1285, %v1667
        %v1673 = vsel %vm1026, %v1288, %v1669
        %vm1674 = vcmask 130048
        %1675 = vst.msk [vmem:[#allocation2] sm:$0xff] %vm1674, %v1672
        %1676 = vst.msk [vmem:[#allocation2 + $0x8] sm:$0xff] %vm1674, %v1673
        %1679 = vrot.lane.b32.xlu0 %v1658, 8
        %v1680 = vpop.permute.xlu0 %1679
        %1681 = vrot.lane.b32.xlu0 %v1661, 8
        %v1682 = vpop.permute.xlu0 %1681
        %v1685 = vsel %vm1026, %v1336, %v1680
        %v1686 = vsel %vm1026, %v1339, %v1682
        %1687 = vst.msk [vmem:[#allocation2 + $0x10] sm:$0xff] %vm1674, %v1685
        %1688 = vst.msk [vmem:[#allocation2 + $0x18] sm:$0xff] %vm1674, %v1686
        %1689 = vrot.lane.b32.xlu0 %v1007, 112
        %v1690 = vpop.permute.xlu0 %1689
        %1691 = vrot.lane.b32.xlu0 %v1010, 112
        %v1692 = vpop.permute.xlu0 %1691
        %1693 = vrot.lane.b32.xlu0 %v1007, 80
        %v1694 = vpop.permute.xlu0 %1693
        %v1695 = vsel %vm1026, %v1690, 0
        %v1697 = vsel %vm1026, %v1692, 0
        %v1699 = vsel %vm1026, %v1694, 0
        %1701 = vmatprep.subr.mxu0 0.0
        %1702 = vmatpush1.xpose.msra.mxu0 %v1699
        %1703 = vmatprep.subr.mxu0 0.0
        %1704 = vmatpush1.xpose.msra.mxu0 0.0
        %1705 = vmatprep.subr.mxu0 0.0
        %1706 = vmatpush1.xpose.msra.mxu0 0.0
        %1707 = vmatprep.subr.mxu0 0.0
        %1708 = vmatpush1.xpose.msra.mxu0 0.0
        %1709 = vmatprep.subr.mxu0 0.0
        %1710 = vmatpush1.xpose.msra.mxu0 0.0
        %1711 = vmatprep.subr.mxu0 0.0
        %1712 = vmatpush1.xpose.msra.mxu0 0.0
        %1713 = vmatprep.subr.mxu0 0.0
        %1714 = vmatpush1.xpose.msra.mxu0 0.0
        %1715 = vmatprep.subr.mxu0 0.0
        %1716 = vmatpush1.xpose.msra.mxu0 0.0
        %1717 = vmatprep.subr.mxu0 0.0
        %1718 = vmatpush1.xpose.msra.mxu0 0.0
        %1719 = vmatprep.subr.mxu0 0.0
        %1720 = vmatpush1.xpose.msra.mxu0 0.0
        %1721 = vmatprep.subr.mxu0 0.0
        %1722 = vmatpush1.xpose.msra.mxu0 0.0
        %1723 = vmatprep.subr.mxu0 0.0
        %1724 = vmatpush1.xpose.msra.mxu0 0.0
        %1725 = vmatprep.subr.mxu0 0.0
        %1726 = vmatpush1.xpose.msra.mxu0 0.0
        %1727 = vmatprep.subr.mxu0 0.0
        %1728 = vmatpush1.xpose.msra.mxu0 0.0
        %1729 = vmatprep.subr.mxu0 0.0
        %1730 = vmatpush1.xpose.msra.mxu0 0.0
        %1731 = vmatprep.subr.mxu0 0.0
        %1732 = vmatpush1.xpose.msra.mxu0 0.0
        %1733 = vmatprep.subr.mxu0 0.0
        %1734 = vmatpush1.xpose.msra.mxu0 0.0
        %1735 = vmatprep.subr.mxu0 0.0
        %1736 = vmatpush1.xpose.msra.mxu0 0.0
        %1737 = vmatprep.subr.mxu0 0.0
        %1738 = vmatpush1.xpose.msra.mxu0 0.0
        %1739 = vmatprep.subr.mxu0 0.0
        %1740 = vmatpush1.xpose.msra.mxu0 0.0
        %1741 = vmatprep.subr.mxu0 0.0
        %1742 = vmatpush1.xpose.msra.mxu0 0.0
        %1743 = vmatprep.subr.mxu0 0.0
        %1744 = vmatpush1.xpose.msra.mxu0 0.0
        %1745 = vmatprep.subr.mxu0 0.0
        %1746 = vmatpush1.xpose.msra.mxu0 0.0
        %1747 = vmatprep.subr.mxu0 0.0
        %1748 = vmatpush1.xpose.msra.mxu0 0.0
        %1749 = vmatprep.subr.mxu0 0.0
        %1750 = vmatpush1.xpose.msra.mxu0 0.0
        %1751 = vmatprep.subr.mxu0 0.0
        %1752 = vmatpush1.xpose.msra.mxu0 0.0
        %1753 = vmatprep.subr.mxu0 0.0
        %1754 = vmatpush1.xpose.msra.mxu0 0.0
        %1755 = vmatprep.subr.mxu0 0.0
        %1756 = vmatpush1.xpose.msra.mxu0 0.0
        %1757 = vmatprep.subr.mxu0 0.0
        %1758 = vmatpush1.xpose.msra.mxu0 0.0
        %1759 = vmatprep.subr.mxu0 0.0
        %1760 = vmatpush1.xpose.msra.mxu0 0.0
        %1761 = vmatprep.subr.mxu0 0.0
        %1762 = vmatpush1.xpose.msra.mxu0 0.0
        %1763 = vmatprep.subr.mxu0 0.0
        %1764 = vmatpush1.xpose.msra.mxu0 0.0
        %1765 = vmatprep.mubr.f32.mxu0 0.0
        %1766 = vmatmul.mubr.f32.gmra.mrb[0].mxu0 %v1695
        %v1767 = vpop.f32.mrb[0].mxu0
        %v1768 = vadd.f32 0.0, %v1767
        %v1769 = vpop.f32.mrb[0].mxu0
        %1770 = vmatprep.mubr.f32.mxu0 0.0
        %1771 = vmatmul.mubr.f32.gmra.mrb[0].mxu0 %v1697
        %v1772 = vpop.f32.mrb[0].mxu0
        %v1773 = vadd.f32 0.0, %v1772
        %v1774 = vpop.f32.mrb[0].mxu0
        %1775 = vdwg.mxu0
        %v1776 = vmul.f32 %v1768, 0.35355338
        %v1777 = vmul.f32 %v1773, 0.35355338
        %v1778 = vsel %vm1026, %v1776, -inf
        %1779 = vmax.xlane.f32.xlu0 %v1778
        %v1780 = vpop.xlane.xlu0 %1779
        %v1781 = vsel %vm1026, %v1777, -inf
        %1782 = vmax.xlane.f32.xlu0 %v1781
        %v1783 = vpop.xlane.xlu0 %1782
        %v1784 = vsub.f32 %v1776, %v1780
        %v1785 = vsub.f32 %v1777, %v1783
        %v1786 = vmul.f32 %v1784, 1.442695
        %v1787 = vpow.pop %v1786
        %v1788 = vmul.f32 %v1785, 1.442695
        %v1789 = vpow.pop %v1788
        %v1790 = vsel %vm1026, %v1787, 0.0
        %1791 = vadd.xlane.f32.xlu0 %v1790
        %v1792 = vpop.xlane.xlu0 %1791
        %v1793 = vsel %vm1026, %v1789, 0.0
        %1794 = vadd.xlane.f32.xlu0 %v1793
        %v1795 = vpop.xlane.xlu0 %1794
        %v1796 = vrcp.pop %v1792
        %v1797 = vrcp.pop %v1795
        %v1798 = vmul.f32 %v1787, %v1796
        %v1799 = vmul.f32 %v1789, %v1797
        %1800 = vrot.lane.b32.xlu0 %v1010, 80
        %v1801 = vpop.permute.xlu0 %1800
        %v1802 = vsel %vm1026, %v1801, 0
        %1804 = vmatprep.subr.mxu0 0.0
        %1805 = vmatpush1.xpose.msra.mxu0 %v1802
        %1806 = vmatprep.subr.mxu0 0.0
        %1807 = vmatpush1.xpose.msra.mxu0 0.0
        %1808 = vmatprep.subr.mxu0 0.0
        %1809 = vmatpush1.xpose.msra.mxu0 0.0
        %1810 = vmatprep.subr.mxu0 0.0
        %1811 = vmatpush1.xpose.msra.mxu0 0.0
        %1812 = vmatprep.subr.mxu0 0.0
        %1813 = vmatpush1.xpose.msra.mxu0 0.0
        %1814 = vmatprep.subr.mxu0 0.0
        %1815 = vmatpush1.xpose.msra.mxu0 0.0
        %1816 = vmatprep.subr.mxu0 0.0
        %1817 = vmatpush1.xpose.msra.mxu0 0.0
        %1818 = vmatprep.subr.mxu0 0.0
        %1819 = vmatpush1.xpose.msra.mxu0 0.0
        %1820 = vmatprep.subr.mxu0 0.0
        %1821 = vmatpush1.xpose.msra.mxu0 0.0
        %1822 = vmatprep.subr.mxu0 0.0
        %1823 = vmatpush1.xpose.msra.mxu0 0.0
        %1824 = vmatprep.subr.mxu0 0.0
        %1825 = vmatpush1.xpose.msra.mxu0 0.0
        %1826 = vmatprep.subr.mxu0 0.0
        %1827 = vmatpush1.xpose.msra.mxu0 0.0
        %1828 = vmatprep.subr.mxu0 0.0
        %1829 = vmatpush1.xpose.msra.mxu0 0.0
        %1830 = vmatprep.subr.mxu0 0.0
        %1831 = vmatpush1.xpose.msra.mxu0 0.0
        %1832 = vmatprep.subr.mxu0 0.0
        %1833 = vmatpush1.xpose.msra.mxu0 0.0
        %1834 = vmatprep.subr.mxu0 0.0
        %1835 = vmatpush1.xpose.msra.mxu0 0.0
        %1836 = vmatprep.subr.mxu0 0.0
        %1837 = vmatpush1.xpose.msra.mxu0 0.0
        %1838 = vmatprep.subr.mxu0 0.0
        %1839 = vmatpush1.xpose.msra.mxu0 0.0
        %1840 = vmatprep.subr.mxu0 0.0
        %1841 = vmatpush1.xpose.msra.mxu0 0.0
        %1842 = vmatprep.subr.mxu0 0.0
        %1843 = vmatpush1.xpose.msra.mxu0 0.0
        %1844 = vmatprep.subr.mxu0 0.0
        %1845 = vmatpush1.xpose.msra.mxu0 0.0
        %1846 = vmatprep.subr.mxu0 0.0
        %1847 = vmatpush1.xpose.msra.mxu0 0.0
        %1848 = vmatprep.subr.mxu0 0.0
        %1849 = vmatpush1.xpose.msra.mxu0 0.0
        %1850 = vmatprep.subr.mxu0 0.0
        %1851 = vmatpush1.xpose.msra.mxu0 0.0
        %1852 = vmatprep.subr.mxu0 0.0
        %1853 = vmatpush1.xpose.msra.mxu0 0.0
        %1854 = vmatprep.subr.mxu0 0.0
        %1855 = vmatpush1.xpose.msra.mxu0 0.0
        %1856 = vmatprep.subr.mxu0 0.0
        %1857 = vmatpush1.xpose.msra.mxu0 0.0
        %1858 = vmatprep.subr.mxu0 0.0
        %1859 = vmatpush1.xpose.msra.mxu0 0.0
        %1860 = vmatprep.subr.mxu0 0.0
        %1861 = vmatpush1.xpose.msra.mxu0 0.0
        %1862 = vmatprep.subr.mxu0 0.0
        %1863 = vmatpush1.xpose.msra.mxu0 0.0
        %1864 = vmatprep.subr.mxu0 0.0
        %1865 = vmatpush1.xpose.msra.mxu0 0.0
        %1866 = vmatprep.subr.mxu0 0.0
        %1867 = vmatpush1.xpose.msra.mxu0 0.0
        %1868 = vmatprep.mubr.f32.mxu0 0.0
        %1869 = vmatmul.mubr.f32.gmra.mrb[0].mxu0 %v1695
        %v1870 = vpop.f32.mrb[0].mxu0
        %v1871 = vadd.f32 0.0, %v1870
        %v1872 = vpop.f32.mrb[0].mxu0
        %1873 = vmatprep.mubr.f32.mxu0 0.0
        %1874 = vmatmul.mubr.f32.gmra.mrb[0].mxu0 %v1697
        %v1875 = vpop.f32.mrb[0].mxu0
        %v1876 = vadd.f32 0.0, %v1875
        %v1877 = vpop.f32.mrb[0].mxu0
        %1878 = vdwg.mxu0
        %v1879 = vmul.f32 %v1871, 0.35355338
        %v1880 = vmul.f32 %v1876, 0.35355338
        %v1881 = vsel %vm1026, %v1879, -inf
        %1882 = vmax.xlane.f32.xlu0 %v1881
        %v1883 = vpop.xlane.xlu0 %1882
        %v1884 = vsel %vm1026, %v1880, -inf
        %1885 = vmax.xlane.f32.xlu0 %v1884
        %v1886 = vpop.xlane.xlu0 %1885
        %v1887 = vsub.f32 %v1879, %v1883
        %v1888 = vsub.f32 %v1880, %v1886
        %v1889 = vmul.f32 %v1887, 1.442695
        %v1890 = vpow.pop %v1889
        %v1891 = vmul.f32 %v1888, 1.442695
        %v1892 = vpow.pop %v1891
        %v1893 = vsel %vm1026, %v1890, 0.0
        %1894 = vadd.xlane.f32.xlu0 %v1893
        %v1895 = vpop.xlane.xlu0 %1894
        %v1896 = vsel %vm1026, %v1892, 0.0
        %1897 = vadd.xlane.f32.xlu0 %v1896
        %v1898 = vpop.xlane.xlu0 %1897
        %v1899 = vrcp.pop %v1895
        %v1900 = vrcp.pop %v1898
        %v1901 = vmul.f32 %v1890, %v1899
        %v1902 = vmul.f32 %v1892, %v1900
        %s1903 = scalar_lea.vmem %s851, 16 [#allocation15]
        %1904 = vst.msk [vmem:[%s1903] sm:$0xff] %vm1026, %v1798
        %s1905 = scalar_lea.vmem %s872, 16 [#allocation19]
        %1906 = vst.msk [vmem:[%s1905] sm:$0xff] %vm1026, %v1799
        %s1907 = scalar_lea.vmem %s865, 16 [#allocation18]
        %1908 = vst.msk [vmem:[%s1907] sm:$0xff] %vm1026, %v1901
        %s1909 = scalar_lea.vmem %s858, 16 [#allocation16]
        %1910 = vst.msk [vmem:[%s1909] sm:$0xff] %vm1026, %v1902
        %v1911 = vpack.c.bf16 %v1799, %v1798
        %1912 = vrot.lane.b32.xlu0 %v1023, 48
        %v1913 = vpop.permute.xlu0 %1912
        %v1915 = vsel %vm1026, %v1911, 0
        %v1918 = vsel %vm1246, %v1913, 0
        %1920 = vmatprep.subr.bf16.mxu0 0
        %1921 = vmatpush1.bf16.msra.mxu0 %v1918
        %1922 = vmatprep.subr.bf16.mxu0 0
        %1923 = vmatpush1.bf16.msra.mxu0 0
        %1924 = vmatprep.subr.bf16.mxu0 0
        %1925 = vmatpush1.bf16.msra.mxu0 0
        %1926 = vmatprep.subr.bf16.mxu0 0
        %1927 = vmatpush1.bf16.msra.mxu0 0
        %1928 = vmatprep.subr.bf16.mxu0 0
        %1929 = vmatpush1.bf16.msra.mxu0 0
        %1930 = vmatprep.subr.bf16.mxu0 0
        %1931 = vmatpush1.bf16.msra.mxu0 0
        %1932 = vmatprep.subr.bf16.mxu0 0
        %1933 = vmatpush1.bf16.msra.mxu0 0
        %1934 = vmatprep.subr.bf16.mxu0 0
        %1935 = vmatpush1.bf16.msra.mxu0 0
        %1936 = vmatprep.subr.bf16.mxu0 0
        %1937 = vmatpush1.bf16.msra.mxu0 0
        %1938 = vmatprep.subr.bf16.mxu0 0
        %1939 = vmatpush1.bf16.msra.mxu0 0
        %1940 = vmatprep.subr.bf16.mxu0 0
        %1941 = vmatpush1.bf16.msra.mxu0 0
        %1942 = vmatprep.subr.bf16.mxu0 0
        %1943 = vmatpush1.bf16.msra.mxu0 0
        %1944 = vmatprep.subr.bf16.mxu0 0
        %1945 = vmatpush1.bf16.msra.mxu0 0
        %1946 = vmatprep.subr.bf16.mxu0 0
        %1947 = vmatpush1.bf16.msra.mxu0 0
        %1948 = vmatprep.subr.bf16.mxu0 0
        %1949 = vmatpush1.bf16.msra.mxu0 0
        %1950 = vmatprep.subr.bf16.mxu0 0
        %1951 = vmatpush1.bf16.msra.mxu0 0
        %1952 = vmatprep.mubr.bf16.mxu0 0
        %1953 = vmatmul.mubr.bf16.gmra.mrb[0].mxu0 %v1915
        %v1954 = vpop.f32.mrb[0].mxu0
        %v1955 = vadd.f32 0.0, %v1954
        %v1956 = vpop.f32.mrb[0].mxu0
        %v1957 = vpop.f32.mrb[0].mxu0
        %v1958 = vadd.f32 0.0, %v1957
        %v1959 = vpop.f32.mrb[0].mxu0
        %1960 = vdwg.mxu0
        %v1961 = vpack.c.bf16 %v1902, %v1901
        %1962 = vrot.lane.b32.xlu0 %v1292, 48
        %v1963 = vpop.permute.xlu0 %1962
        %v1965 = vsel %vm1026, %v1961, 0
        %v1968 = vsel %vm1246, %v1963, 0
        %1970 = vmatprep.subr.bf16.mxu0 0
        %1971 = vmatpush1.bf16.msra.mxu0 %v1968
        %1972 = vmatprep.subr.bf16.mxu0 0
        %1973 = vmatpush1.bf16.msra.mxu0 0
        %1974 = vmatprep.subr.bf16.mxu0 0
        %1975 = vmatpush1.bf16.msra.mxu0 0
        %1976 = vmatprep.subr.bf16.mxu0 0
        %1977 = vmatpush1.bf16.msra.mxu0 0
        %1978 = vmatprep.subr.bf16.mxu0 0
        %1979 = vmatpush1.bf16.msra.mxu0 0
        %1980 = vmatprep.subr.bf16.mxu0 0
        %1981 = vmatpush1.bf16.msra.mxu0 0
        %1982 = vmatprep.subr.bf16.mxu0 0
        %1983 = vmatpush1.bf16.msra.mxu0 0
        %1984 = vmatprep.subr.bf16.mxu0 0
        %1985 = vmatpush1.bf16.msra.mxu0 0
        %1986 = vmatprep.subr.bf16.mxu0 0
        %1987 = vmatpush1.bf16.msra.mxu0 0
        %1988 = vmatprep.subr.bf16.mxu0 0
        %1989 = vmatpush1.bf16.msra.mxu0 0
        %1990 = vmatprep.subr.bf16.mxu0 0
        %1991 = vmatpush1.bf16.msra.mxu0 0
        %1992 = vmatprep.subr.bf16.mxu0 0
        %1993 = vmatpush1.bf16.msra.mxu0 0
        %1994 = vmatprep.subr.bf16.mxu0 0
        %1995 = vmatpush1.bf16.msra.mxu0 0
        %1996 = vmatprep.subr.bf16.mxu0 0
        %1997 = vmatpush1.bf16.msra.mxu0 0
        %1998 = vmatprep.subr.bf16.mxu0 0
        %1999 = vmatpush1.bf16.msra.mxu0 0
        %2000 = vmatprep.subr.bf16.mxu0 0
        %2001 = vmatpush1.bf16.msra.mxu0 0
        %2002 = vmatprep.mubr.bf16.mxu0 0
        %2003 = vmatmul.mubr.bf16.gmra.mrb[0].mxu0 %v1965
        %v2004 = vpop.f32.mrb[0].mxu0
        %v2005 = vadd.f32 0.0, %v2004
        %v2006 = vpop.f32.mrb[0].mxu0
        %v2007 = vpop.f32.mrb[0].mxu0
        %v2008 = vadd.f32 0.0, %v2007
        %v2009 = vpop.f32.mrb[0].mxu0
        %2010 = vdwg.mxu0
        %2011 = vrot.lane.b32.xlu0 %v1007, 104
        %v2012 = vpop.permute.xlu0 %2011
        %2013 = vrot.lane.b32.xlu0 %v1010, 104
        %v2014 = vpop.permute.xlu0 %2013
        %2015 = vrot.lane.b32.xlu0 %v1007, 72
        %v2016 = vpop.permute.xlu0 %2015
        %v2017 = vsel %vm1026, %v2012, 0
        %v2019 = vsel %vm1026, %v2014, 0
        %v2021 = vsel %vm1026, %v2016, 0
        %2023 = vmatprep.subr.mxu0 0.0
        %2024 = vmatpush1.xpose.msra.mxu0 %v2021
        %2025 = vmatprep.subr.mxu0 0.0
        %2026 = vmatpush1.xpose.msra.mxu0 0.0
        %2027 = vmatprep.subr.mxu0 0.0
        %2028 = vmatpush1.xpose.msra.mxu0 0.0
        %2029 = vmatprep.subr.mxu0 0.0
        %2030 = vmatpush1.xpose.msra.mxu0 0.0
        %2031 = vmatprep.subr.mxu0 0.0
        %2032 = vmatpush1.xpose.msra.mxu0 0.0
        %2033 = vmatprep.subr.mxu0 0.0
        %2034 = vmatpush1.xpose.msra.mxu0 0.0
        %2035 = vmatprep.subr.mxu0 0.0
        %2036 = vmatpush1.xpose.msra.mxu0 0.0
        %2037 = vmatprep.subr.mxu0 0.0
        %2038 = vmatpush1.xpose.msra.mxu0 0.0
        %2039 = vmatprep.subr.mxu0 0.0
        %2040 = vmatpush1.xpose.msra.mxu0 0.0
        %2041 = vmatprep.subr.mxu0 0.0
        %2042 = vmatpush1.xpose.msra.mxu0 0.0
        %2043 = vmatprep.subr.mxu0 0.0
        %2044 = vmatpush1.xpose.msra.mxu0 0.0
        %2045 = vmatprep.subr.mxu0 0.0
        %2046 = vmatpush1.xpose.msra.mxu0 0.0
        %2047 = vmatprep.subr.mxu0 0.0
        %2048 = vmatpush1.xpose.msra.mxu0 0.0
        %2049 = vmatprep.subr.mxu0 0.0
        %2050 = vmatpush1.xpose.msra.mxu0 0.0
        %2051 = vmatprep.subr.mxu0 0.0
        %2052 = vmatpush1.xpose.msra.mxu0 0.0
        %2053 = vmatprep.subr.mxu0 0.0
        %2054 = vmatpush1.xpose.msra.mxu0 0.0
        %2055 = vmatprep.subr.mxu0 0.0
        %2056 = vmatpush1.xpose.msra.mxu0 0.0
        %2057 = vmatprep.subr.mxu0 0.0
        %2058 = vmatpush1.xpose.msra.mxu0 0.0
        %2059 = vmatprep.subr.mxu0 0.0
        %2060 = vmatpush1.xpose.msra.mxu0 0.0
        %2061 = vmatprep.subr.mxu0 0.0
        %2062 = vmatpush1.xpose.msra.mxu0 0.0
        %2063 = vmatprep.subr.mxu0 0.0
        %2064 = vmatpush1.xpose.msra.mxu0 0.0
        %2065 = vmatprep.subr.mxu0 0.0
        %2066 = vmatpush1.xpose.msra.mxu0 0.0
        %2067 = vmatprep.subr.mxu0 0.0
        %2068 = vmatpush1.xpose.msra.mxu0 0.0
        %2069 = vmatprep.subr.mxu0 0.0
        %2070 = vmatpush1.xpose.msra.mxu0 0.0
        %2071 = vmatprep.subr.mxu0 0.0
        %2072 = vmatpush1.xpose.msra.mxu0 0.0
        %2073 = vmatprep.subr.mxu0 0.0
        %2074 = vmatpush1.xpose.msra.mxu0 0.0
        %2075 = vmatprep.subr.mxu0 0.0
        %2076 = vmatpush1.xpose.msra.mxu0 0.0
        %2077 = vmatprep.subr.mxu0 0.0
        %2078 = vmatpush1.xpose.msra.mxu0 0.0
        %2079 = vmatprep.subr.mxu0 0.0
        %2080 = vmatpush1.xpose.msra.mxu0 0.0
        %2081 = vmatprep.subr.mxu0 0.0
        %2082 = vmatpush1.xpose.msra.mxu0 0.0
        %2083 = vmatprep.subr.mxu0 0.0
        %2084 = vmatpush1.xpose.msra.mxu0 0.0
        %2085 = vmatprep.subr.mxu0 0.0
        %2086 = vmatpush1.xpose.msra.mxu0 0.0
        %2087 = vmatprep.mubr.f32.mxu0 0.0
        %2088 = vmatmul.mubr.f32.gmra.mrb[0].mxu0 %v2017
        %v2089 = vpop.f32.mrb[0].mxu0
        %v2090 = vadd.f32 0.0, %v2089
        %v2091 = vpop.f32.mrb[0].mxu0
        %2092 = vmatprep.mubr.f32.mxu0 0.0
        %2093 = vmatmul.mubr.f32.gmra.mrb[0].mxu0 %v2019
        %v2094 = vpop.f32.mrb[0].mxu0
        %v2095 = vadd.f32 0.0, %v2094
        %v2096 = vpop.f32.mrb[0].mxu0
        %2097 = vdwg.mxu0
        %v2098 = vmul.f32 %v2090, 0.35355338
        %v2099 = vmul.f32 %v2095, 0.35355338
        %v2100 = vsel %vm1026, %v2098, -inf
        %2101 = vmax.xlane.f32.xlu0 %v2100
        %v2102 = vpop.xlane.xlu0 %2101
        %v2103 = vsel %vm1026, %v2099, -inf
        %2104 = vmax.xlane.f32.xlu0 %v2103
        %v2105 = vpop.xlane.xlu0 %2104
        %v2106 = vsub.f32 %v2098, %v2102
        %v2107 = vsub.f32 %v2099, %v2105
        %v2108 = vmul.f32 %v2106, 1.442695
        %v2109 = vpow.pop %v2108
        %v2110 = vmul.f32 %v2107, 1.442695
        %v2111 = vpow.pop %v2110
        %v2112 = vsel %vm1026, %v2109, 0.0
        %2113 = vadd.xlane.f32.xlu0 %v2112
        %v2114 = vpop.xlane.xlu0 %2113
        %v2115 = vsel %vm1026, %v2111, 0.0
        %2116 = vadd.xlane.f32.xlu0 %v2115
        %v2117 = vpop.xlane.xlu0 %2116
        %v2118 = vrcp.pop %v2114
        %v2119 = vrcp.pop %v2117
        %v2120 = vmul.f32 %v2109, %v2118
        %v2121 = vmul.f32 %v2111, %v2119
        %2122 = vrot.lane.b32.xlu0 %v1010, 72
        %v2123 = vpop.permute.xlu0 %2122
        %v2124 = vsel %vm1026, %v2123, 0
        %2126 = vmatprep.subr.mxu0 0.0
        %2127 = vmatpush1.xpose.msra.mxu0 %v2124
        %2128 = vmatprep.subr.mxu0 0.0
        %2129 = vmatpush1.xpose.msra.mxu0 0.0
        %2130 = vmatprep.subr.mxu0 0.0
        %2131 = vmatpush1.xpose.msra.mxu0 0.0
        %2132 = vmatprep.subr.mxu0 0.0
        %2133 = vmatpush1.xpose.msra.mxu0 0.0
        %2134 = vmatprep.subr.mxu0 0.0
        %2135 = vmatpush1.xpose.msra.mxu0 0.0
        %2136 = vmatprep.subr.mxu0 0.0
        %2137 = vmatpush1.xpose.msra.mxu0 0.0
        %2138 = vmatprep.subr.mxu0 0.0
        %2139 = vmatpush1.xpose.msra.mxu0 0.0
        %2140 = vmatprep.subr.mxu0 0.0
        %2141 = vmatpush1.xpose.msra.mxu0 0.0
        %2142 = vmatprep.subr.mxu0 0.0
        %2143 = vmatpush1.xpose.msra.mxu0 0.0
        %2144 = vmatprep.subr.mxu0 0.0
        %2145 = vmatpush1.xpose.msra.mxu0 0.0
        %2146 = vmatprep.subr.mxu0 0.0
        %2147 = vmatpush1.xpose.msra.mxu0 0.0
        %2148 = vmatprep.subr.mxu0 0.0
        %2149 = vmatpush1.xpose.msra.mxu0 0.0
        %2150 = vmatprep.subr.mxu0 0.0
        %2151 = vmatpush1.xpose.msra.mxu0 0.0
        %2152 = vmatprep.subr.mxu0 0.0
        %2153 = vmatpush1.xpose.msra.mxu0 0.0
        %2154 = vmatprep.subr.mxu0 0.0
        %2155 = vmatpush1.xpose.msra.mxu0 0.0
        %2156 = vmatprep.subr.mxu0 0.0
        %2157 = vmatpush1.xpose.msra.mxu0 0.0
        %2158 = vmatprep.subr.mxu0 0.0
        %2159 = vmatpush1.xpose.msra.mxu0 0.0
        %2160 = vmatprep.subr.mxu0 0.0
        %2161 = vmatpush1.xpose.msra.mxu0 0.0
        %2162 = vmatprep.subr.mxu0 0.0
        %2163 = vmatpush1.xpose.msra.mxu0 0.0
        %2164 = vmatprep.subr.mxu0 0.0
        %2165 = vmatpush1.xpose.msra.mxu0 0.0
        %2166 = vmatprep.subr.mxu0 0.0
        %2167 = vmatpush1.xpose.msra.mxu0 0.0
        %2168 = vmatprep.subr.mxu0 0.0
        %2169 = vmatpush1.xpose.msra.mxu0 0.0
        %2170 = vmatprep.subr.mxu0 0.0
        %2171 = vmatpush1.xpose.msra.mxu0 0.0
        %2172 = vmatprep.subr.mxu0 0.0
        %2173 = vmatpush1.xpose.msra.mxu0 0.0
        %2174 = vmatprep.subr.mxu0 0.0
        %2175 = vmatpush1.xpose.msra.mxu0 0.0
        %2176 = vmatprep.subr.mxu0 0.0
        %2177 = vmatpush1.xpose.msra.mxu0 0.0
        %2178 = vmatprep.subr.mxu0 0.0
        %2179 = vmatpush1.xpose.msra.mxu0 0.0
        %2180 = vmatprep.subr.mxu0 0.0
        %2181 = vmatpush1.xpose.msra.mxu0 0.0
        %2182 = vmatprep.subr.mxu0 0.0
        %2183 = vmatpush1.xpose.msra.mxu0 0.0
        %2184 = vmatprep.subr.mxu0 0.0
        %2185 = vmatpush1.xpose.msra.mxu0 0.0
        %2186 = vmatprep.subr.mxu0 0.0
        %2187 = vmatpush1.xpose.msra.mxu0 0.0
        %2188 = vmatprep.subr.mxu0 0.0
        %2189 = vmatpush1.xpose.msra.mxu0 0.0
        %2190 = vmatprep.mubr.f32.mxu0 0.0
        %2191 = vmatmul.mubr.f32.gmra.mrb[0].mxu0 %v2017
        %v2192 = vpop.f32.mrb[0].mxu0
        %v2193 = vadd.f32 0.0, %v2192
        %v2194 = vpop.f32.mrb[0].mxu0
        %2195 = vmatprep.mubr.f32.mxu0 0.0
        %2196 = vmatmul.mubr.f32.gmra.mrb[0].mxu0 %v2019
        %v2197 = vpop.f32.mrb[0].mxu0
        %v2198 = vadd.f32 0.0, %v2197
        %v2199 = vpop.f32.mrb[0].mxu0
        %2200 = vdwg.mxu0
        %v2201 = vmul.f32 %v2193, 0.35355338
        %v2202 = vmul.f32 %v2198, 0.35355338
        %v2203 = vsel %vm1026, %v2201, -inf
        %2204 = vmax.xlane.f32.xlu0 %v2203
        %v2205 = vpop.xlane.xlu0 %2204
        %v2206 = vsel %vm1026, %v2202, -inf
        %2207 = vmax.xlane.f32.xlu0 %v2206
        %v2208 = vpop.xlane.xlu0 %2207
        %v2209 = vsub.f32 %v2201, %v2205
        %v2210 = vsub.f32 %v2202, %v2208
        %v2211 = vmul.f32 %v2209, 1.442695
        %v2212 = vpow.pop %v2211
        %v2213 = vmul.f32 %v2210, 1.442695
        %v2214 = vpow.pop %v2213
        %v2215 = vsel %vm1026, %v2212, 0.0
        %2216 = vadd.xlane.f32.xlu0 %v2215
        %v2217 = vpop.xlane.xlu0 %2216
        %v2218 = vsel %vm1026, %v2214, 0.0
        %2219 = vadd.xlane.f32.xlu0 %v2218
        %v2220 = vpop.xlane.xlu0 %2219
        %v2221 = vrcp.pop %v2217
        %v2222 = vrcp.pop %v2220
        %v2223 = vmul.f32 %v2212, %v2221
        %v2224 = vmul.f32 %v2214, %v2222
        %s2225 = scalar_lea.vmem %s851, 24 [#allocation15]
        %2226 = vst.msk [vmem:[%s2225] sm:$0xff] %vm1026, %v2120
        %s2227 = scalar_lea.vmem %s872, 24 [#allocation19]
        %2228 = vst.msk [vmem:[%s2227] sm:$0xff] %vm1026, %v2121
        %s2229 = scalar_lea.vmem %s865, 24 [#allocation18]
        %2230 = vst.msk [vmem:[%s2229] sm:$0xff] %vm1026, %v2223
        %s2231 = scalar_lea.vmem %s858, 24 [#allocation16]
        %2232 = vst.msk [vmem:[%s2231] sm:$0xff] %vm1026, %v2224
        %v2233 = vpack.c.bf16 %v2121, %v2120
        %2234 = vrot.lane.b32.xlu0 %v1023, 40
        %v2235 = vpop.permute.xlu0 %2234
        %v2237 = vsel %vm1026, %v2233, 0
        %v2240 = vsel %vm1246, %v2235, 0
        %2242 = vmatprep.subr.bf16.mxu0 0
        %2243 = vmatpush1.bf16.msra.mxu0 %v2240
        %2244 = vmatprep.subr.bf16.mxu0 0
        %2245 = vmatpush1.bf16.msra.mxu0 0
        %2246 = vmatprep.subr.bf16.mxu0 0
        %2247 = vmatpush1.bf16.msra.mxu0 0
        %2248 = vmatprep.subr.bf16.mxu0 0
        %2249 = vmatpush1.bf16.msra.mxu0 0
        %2250 = vmatprep.subr.bf16.mxu0 0
        %2251 = vmatpush1.bf16.msra.mxu0 0
        %2252 = vmatprep.subr.bf16.mxu0 0
        %2253 = vmatpush1.bf16.msra.mxu0 0
        %2254 = vmatprep.subr.bf16.mxu0 0
        %2255 = vmatpush1.bf16.msra.mxu0 0
        %2256 = vmatprep.subr.bf16.mxu0 0
        %2257 = vmatpush1.bf16.msra.mxu0 0
        %2258 = vmatprep.subr.bf16.mxu0 0
        %2259 = vmatpush1.bf16.msra.mxu0 0
        %2260 = vmatprep.subr.bf16.mxu0 0
        %2261 = vmatpush1.bf16.msra.mxu0 0
        %2262 = vmatprep.subr.bf16.mxu0 0
        %2263 = vmatpush1.bf16.msra.mxu0 0
        %2264 = vmatprep.subr.bf16.mxu0 0
        %2265 = vmatpush1.bf16.msra.mxu0 0
        %2266 = vmatprep.subr.bf16.mxu0 0
        %2267 = vmatpush1.bf16.msra.mxu0 0
        %2268 = vmatprep.subr.bf16.mxu0 0
        %2269 = vmatpush1.bf16.msra.mxu0 0
        %2270 = vmatprep.subr.bf16.mxu0 0
        %2271 = vmatpush1.bf16.msra.mxu0 0
        %2272 = vmatprep.subr.bf16.mxu0 0
        %2273 = vmatpush1.bf16.msra.mxu0 0
        %2274 = vmatprep.mubr.bf16.mxu0 0
        %2275 = vmatmul.mubr.bf16.gmra.mrb[0].mxu0 %v2237
        %v2276 = vpop.f32.mrb[0].mxu0
        %v2277 = vadd.f32 0.0, %v2276
        %v2278 = vpop.f32.mrb[0].mxu0
        %v2279 = vpop.f32.mrb[0].mxu0
        %v2280 = vadd.f32 0.0, %v2279
        %v2281 = vpop.f32.mrb[0].mxu0
        %2282 = vdwg.mxu0
        %v2283 = vpack.c.bf16 %v2224, %v2223
        %2284 = vrot.lane.b32.xlu0 %v1292, 40
        %v2285 = vpop.permute.xlu0 %2284
        %v2287 = vsel %vm1026, %v2283, 0
        %v2290 = vsel %vm1246, %v2285, 0
        %2292 = vmatprep.subr.bf16.mxu0 0
        %2293 = vmatpush1.bf16.msra.mxu0 %v2290
        %2294 = vmatprep.subr.bf16.mxu0 0
        %2295 = vmatpush1.bf16.msra.mxu0 0
        %2296 = vmatprep.subr.bf16.mxu0 0
        %2297 = vmatpush1.bf16.msra.mxu0 0
        %2298 = vmatprep.subr.bf16.mxu0 0
        %2299 = vmatpush1.bf16.msra.mxu0 0
        %2300 = vmatprep.subr.bf16.mxu0 0
        %2301 = vmatpush1.bf16.msra.mxu0 0
        %2302 = vmatprep.subr.bf16.mxu0 0
        %2303 = vmatpush1.bf16.msra.mxu0 0
        %2304 = vmatprep.subr.bf16.mxu0 0
        %2305 = vmatpush1.bf16.msra.mxu0 0
        %2306 = vmatprep.subr.bf16.mxu0 0
        %2307 = vmatpush1.bf16.msra.mxu0 0
        %2308 = vmatprep.subr.bf16.mxu0 0
        %2309 = vmatpush1.bf16.msra.mxu0 0
        %2310 = vmatprep.subr.bf16.mxu0 0
        %2311 = vmatpush1.bf16.msra.mxu0 0
        %2312 = vmatprep.subr.bf16.mxu0 0
        %2313 = vmatpush1.bf16.msra.mxu0 0
        %2314 = vmatprep.subr.bf16.mxu0 0
        %2315 = vmatpush1.bf16.msra.mxu0 0
        %2316 = vmatprep.subr.bf16.mxu0 0
        %2317 = vmatpush1.bf16.msra.mxu0 0
        %2318 = vmatprep.subr.bf16.mxu0 0
        %2319 = vmatpush1.bf16.msra.mxu0 0
        %2320 = vmatprep.subr.bf16.mxu0 0
        %2321 = vmatpush1.bf16.msra.mxu0 0
        %2322 = vmatprep.subr.bf16.mxu0 0
        %2323 = vmatpush1.bf16.msra.mxu0 0
        %2324 = vmatprep.mubr.bf16.mxu0 0
        %2325 = vmatmul.mubr.bf16.gmra.mrb[0].mxu0 %v2287
        %v2326 = vpop.f32.mrb[0].mxu0
        %v2327 = vadd.f32 0.0, %v2326
        %v2328 = vpop.f32.mrb[0].mxu0
        %v2329 = vpop.f32.mrb[0].mxu0
        %v2330 = vadd.f32 0.0, %v2329
        %v2331 = vpop.f32.mrb[0].mxu0
        %2332 = vdwg.mxu0
        %2335 = vrot.lane.b32.xlu0 %v2277, 8
        %v2336 = vpop.permute.xlu0 %2335
        %2337 = vrot.lane.b32.xlu0 %v2280, 8
        %v2338 = vpop.permute.xlu0 %2337
        %v2341 = vsel %vm1026, %v1955, %v2336
        %v2342 = vsel %vm1026, %v1958, %v2338
        %2345 = vrot.lane.b32.xlu0 %v2341, 16
        %v2346 = vpop.permute.xlu0 %2345
        %2347 = vrot.lane.b32.xlu0 %v2342, 16
        %v2348 = vpop.permute.xlu0 %2347
        %vm2351 = vcmask 261248
        %2352 = vst.msk [vmem:[#allocation2] sm:$0xff] %vm2351, %v2346
        %2353 = vst.msk [vmem:[#allocation2 + $0x8] sm:$0xff] %vm2351, %v2348
        %2356 = vrot.lane.b32.xlu0 %v2327, 8
        %v2357 = vpop.permute.xlu0 %2356
        %2358 = vrot.lane.b32.xlu0 %v2330, 8
        %v2359 = vpop.permute.xlu0 %2358
        %v2362 = vsel %vm1026, %v2005, %v2357
        %v2363 = vsel %vm1026, %v2008, %v2359
        %2366 = vrot.lane.b32.xlu0 %v2362, 16
        %v2367 = vpop.permute.xlu0 %2366
        %2368 = vrot.lane.b32.xlu0 %v2363, 16
        %v2369 = vpop.permute.xlu0 %2368
        %2372 = vst.msk [vmem:[#allocation2 + $0x10] sm:$0xff] %vm2351, %v2367
        %2373 = vst.msk [vmem:[#allocation2 + $0x18] sm:$0xff] %vm2351, %v2369
        %v2374 = vld [vmem:[#allocation2] sm:$0xff]
        %v2375 = vld [vmem:[#allocation2 + $0x8] sm:$0xff]
        %v2376 = vld [vmem:[#allocation2 + $0x10] sm:$0xff]
        %v2377 = vld [vmem:[#allocation2 + $0x18] sm:$0xff]
        %v2378 = vpack.c.bf16 %v2375, %v2374
        %v2379 = vpack.c.bf16 %v2377, %v2376
        %v2380 = vld [vmem:[#allocation3] sm:$0xf]
        %v2381 = vld [vmem:[#allocation3 + $0x4] sm:$0xf]
        %v2382 = vld [vmem:[#allocation3 + $0x8] sm:$0xf]
        %v2383 = vld [vmem:[#allocation3 + $0xc] sm:$0xf]
        %v2384 = vld [vmem:[#allocation6] sm:$0x1]
        %v2386 = vlaneseq
        %v2387 = vshrl.u32 %v2386, 7
        %v2388 = vsub.s32 0, %v2387
        %v2389 = vrot.slane %v2384, %v2388
        %v2395 = vunpack.c.l.b16 %v2380
        %v2396 = vunpack.c.l.b16 %v2381
        %v2397 = vunpack.c.l.b16 %v2382
        %v2398 = vunpack.c.l.b16 %v2383
        %v2399 = vpack.c.b16 %v2396, %v2395
        %v2400 = vpack.c.b16 %v2398, %v2397
        %v2404 = vsel %vm908, %v2378, 0
        %v2407 = vsel %vm908, %v2379, 0
        %2409 = vmatprep.subr.bf16.mxu0 0
        %2410 = vmatpush1.bf16.msra.mxu0 %v2399
        %2411 = vmatprep.subr.bf16.mxu0 0
        %2412 = vmatpush1.bf16.msra.mxu0 %v2400
        %2413 = vmatprep.subr.bf16.mxu0 0
        %2414 = vmatpush1.bf16.msra.mxu0 0
        %2415 = vmatprep.subr.bf16.mxu0 0
        %2416 = vmatpush1.bf16.msra.mxu0 0
        %2417 = vmatprep.subr.bf16.mxu0 0
        %2418 = vmatpush1.bf16.msra.mxu0 0
        %2419 = vmatprep.subr.bf16.mxu0 0
        %2420 = vmatpush1.bf16.msra.mxu0 0
        %2421 = vmatprep.subr.bf16.mxu0 0
        %2422 = vmatpush1.bf16.msra.mxu0 0
        %2423 = vmatprep.subr.bf16.mxu0 0
        %2424 = vmatpush1.bf16.msra.mxu0 0
        %2425 = vmatprep.subr.bf16.mxu0 0
        %2426 = vmatpush1.bf16.msra.mxu0 0
        %2427 = vmatprep.subr.bf16.mxu0 0
        %2428 = vmatpush1.bf16.msra.mxu0 0
        %2429 = vmatprep.subr.bf16.mxu0 0
        %2430 = vmatpush1.bf16.msra.mxu0 0
        %2431 = vmatprep.subr.bf16.mxu0 0
        %2432 = vmatpush1.bf16.msra.mxu0 0
        %2433 = vmatprep.subr.bf16.mxu0 0
        %2434 = vmatpush1.bf16.msra.mxu0 0
        %2435 = vmatprep.subr.bf16.mxu0 0
        %2436 = vmatpush1.bf16.msra.mxu0 0
        %2437 = vmatprep.subr.bf16.mxu0 0
        %2438 = vmatpush1.bf16.msra.mxu0 0
        %2439 = vmatprep.subr.bf16.mxu0 0
        %2440 = vmatpush1.bf16.msra.mxu0 0
        %2441 = vmatprep.mubr.bf16.mxu0 0
        %2442 = vmatmul.mubr.bf16.gmra.mrb[0].mxu0 %v2404
        %v2443 = vpop.f32.mrb[0].mxu0
        %v2444 = vadd.f32 %v2389, %v2443
        %v2445 = vpop.f32.mrb[0].mxu0
        %v2446 = vpop.f32.mrb[0].mxu0
        %v2447 = vadd.f32 %v2389, %v2446
        %v2448 = vpop.f32.mrb[0].mxu0
        %2449 = vmatprep.mubr.bf16.mxu0 0
        %2450 = vmatmul.mubr.bf16.gmra.mrb[0].mxu0 %v2407
        %v2451 = vpop.f32.mrb[0].mxu0
        %v2452 = vadd.f32 %v2389, %v2451
        %v2453 = vpop.f32.mrb[0].mxu0
        %v2454 = vpop.f32.mrb[0].mxu0
        %v2455 = vadd.f32 %v2389, %v2454
        %v2456 = vpop.f32.mrb[0].mxu0
        %2457 = vdwg.mxu0
        %v2458 = vld [vmem:[#allocation8] sm:$0x1]
        %v2459 = vld [vmem:[%s10] sm:$0x1]
        %v2460 = vld [vmem:[%s12] sm:$0x1]
        %v2461 = vld [vmem:[%s14] sm:$0x1]
        %v2462 = vadd.f32 %v904, %v2444
        %v2463 = vsel %vm908, %v2462, 0.0
        %2464 = vadd.xlane.f32.xlu0 %v2463
        %v2465 = vpop.xlane.xlu0 %2464
        %v2466 = vmul.f32 %v2465, %v915
        %v2467 = vsub.f32 %v2462, %v2466
        %v2468 = vmul.f32 %v2467, %v2467
        %v2469 = vsel %vm908, %v2468, 0.0
        %2470 = vadd.xlane.f32.xlu0 %v2469
        %v2471 = vpop.xlane.xlu0 %2470
        %v2472 = vmul.f32 %v2471, %v915
        %v2473 = vadd.f32 %v2472, 1e-05
        %v2474 = vrsqrt.pop %v2473
        %v2475 = vmul.f32 %v2467, %v2474
        %v2477 = vlaneseq
        %v2478 = vshrl.u32 %v2477, 7
        %v2479 = vsub.s32 0, %v2478
        %v2480 = vrot.slane %v2458, %v2479
        %v2482 = vmul.f32 %v2475, %v2480
        %v2484 = vlaneseq
        %v2485 = vshrl.u32 %v2484, 7
        %v2486 = vsub.s32 0, %v2485
        %v2487 = vrot.slane %v2459, %v2486
        %v2489 = vadd.f32 %v2482, %v2487
        %v2490 = vpack.c.bf16 %v2489, %v2489
        %v2491 = vld [vmem:[%s11] sm:$0xf]
        %v2492 = vld [vmem:[%s11 + $0x4] sm:$0xf]
        %v2493 = vld [vmem:[%s11 + $0x8] sm:$0xf]
        %v2494 = vld [vmem:[%s11 + $0xc] sm:$0xf]
        %v2496 = vlaneseq
        %v2497 = vshrl.u32 %v2496, 7
        %v2498 = vsub.s32 0, %v2497
        %v2499 = vrot.slane %v2460, %v2498
        %v2505 = vunpack.c.l.b16 %v2491
        %v2506 = vunpack.c.l.b16 %v2492
        %v2507 = vunpack.c.l.b16 %v2493
        %v2508 = vunpack.c.l.b16 %v2494
        %v2509 = vpack.c.b16 %v2506, %v2505
        %v2510 = vpack.c.b16 %v2508, %v2507
        %v2514 = vsel %vm908, %v2490, 0
        %2516 = vmatprep.subr.bf16.mxu0 0
        %2517 = vmatpush1.bf16.msra.mxu0 %v2509
        %2518 = vmatprep.subr.bf16.mxu0 0
        %2519 = vmatpush1.bf16.msra.mxu0 %v2510
        %2520 = vmatprep.subr.bf16.mxu0 0
        %2521 = vmatpush1.bf16.msra.mxu0 0
        %2522 = vmatprep.subr.bf16.mxu0 0
        %2523 = vmatpush1.bf16.msra.mxu0 0
        %2524 = vmatprep.subr.bf16.mxu0 0
        %2525 = vmatpush1.bf16.msra.mxu0 0
        %2526 = vmatprep.subr.bf16.mxu0 0
        %2527 = vmatpush1.bf16.msra.mxu0 0
        %2528 = vmatprep.subr.bf16.mxu0 0
        %2529 = vmatpush1.bf16.msra.mxu0 0
        %2530 = vmatprep.subr.bf16.mxu0 0
        %2531 = vmatpush1.bf16.msra.mxu0 0
        %2532 = vmatprep.subr.bf16.mxu0 0
        %2533 = vmatpush1.bf16.msra.mxu0 0
        %2534 = vmatprep.subr.bf16.mxu0 0
        %2535 = vmatpush1.bf16.msra.mxu0 0
        %2536 = vmatprep.subr.bf16.mxu0 0
        %2537 = vmatpush1.bf16.msra.mxu0 0
        %2538 = vmatprep.subr.bf16.mxu0 0
        %2539 = vmatpush1.bf16.msra.mxu0 0
        %2540 = vmatprep.subr.bf16.mxu0 0
        %2541 = vmatpush1.bf16.msra.mxu0 0
        %2542 = vmatprep.subr.bf16.mxu0 0
        %2543 = vmatpush1.bf16.msra.mxu0 0
        %2544 = vmatprep.subr.bf16.mxu0 0
        %2545 = vmatpush1.bf16.msra.mxu0 0
        %2546 = vmatprep.subr.bf16.mxu0 0
        %2547 = vmatpush1.bf16.msra.mxu0 0
        %2548 = vmatprep.mubr.bf16.mxu0 0
        %2549 = vmatmul.mubr.bf16.gmra.mrb[0].mxu0 %v2514
        %v2550 = vpop.f32.mrb[0].mxu0
        %v2551 = vadd.f32 %v2499, %v2550
        %v2552 = vpop.f32.mrb[0].mxu0
        %v2553 = vpop.f32.mrb[0].mxu0
        %v2554 = vpop.f32.mrb[0].mxu0
        %2555 = vdwg.mxu0
        %v2556 = vmul.f32 %v2551, 0.5
        %v2557 = vmul.f32 %v2551, 0.70710677
        %v2558 = verf.f32.pop %v2557
        %v2559 = vadd.f32 %v2558, 1.0
        %v2560 = vmul.f32 %v2556, %v2559
        %v2561 = vpack.c.bf16 %v2560, %v2560
        %v2562 = vld [vmem:[%s13] sm:$0xf]
        %v2563 = vld [vmem:[%s13 + $0x4] sm:$0xf]
        %v2564 = vld [vmem:[%s13 + $0x8] sm:$0xf]
        %v2565 = vld [vmem:[%s13 + $0xc] sm:$0xf]
        %v2566 = vld [vmem:[%s13 + $0x10] sm:$0xf]
        %v2567 = vld [vmem:[%s13 + $0x14] sm:$0xf]
        %v2568 = vld [vmem:[%s13 + $0x18] sm:$0xf]
        %v2569 = vld [vmem:[%s13 + $0x1c] sm:$0xf]
        %v2570 = vld [vmem:[%s13 + $0x20] sm:$0xf]
        %v2571 = vld [vmem:[%s13 + $0x24] sm:$0xf]
        %v2572 = vld [vmem:[%s13 + $0x28] sm:$0xf]
        %v2573 = vld [vmem:[%s13 + $0x2c] sm:$0xf]
        %v2574 = vld [vmem:[%s13 + $0x30] sm:$0xf]
        %v2575 = vld [vmem:[%s13 + $0x34] sm:$0xf]
        %v2576 = vld [vmem:[%s13 + $0x38] sm:$0xf]
        %v2577 = vld [vmem:[%s13 + $0x3c] sm:$0xf]
        %v2579 = vlaneseq
        %v2580 = vshrl.u32 %v2579, 7
        %v2581 = vsub.s32 0, %v2580
        %v2582 = vrot.slane %v2461, %v2581
        %v2600 = vunpack.c.l.b16 %v2562
        %v2601 = vunpack.c.l.b16 %v2563
        %v2602 = vunpack.c.l.b16 %v2564
        %v2603 = vunpack.c.l.b16 %v2565
        %v2604 = vunpack.c.l.b16 %v2566
        %v2605 = vunpack.c.l.b16 %v2567
        %v2606 = vunpack.c.l.b16 %v2568
        %v2607 = vunpack.c.l.b16 %v2569
        %v2608 = vunpack.c.l.b16 %v2570
        %v2609 = vunpack.c.l.b16 %v2571
        %v2610 = vunpack.c.l.b16 %v2572
        %v2611 = vunpack.c.l.b16 %v2573
        %v2612 = vunpack.c.l.b16 %v2574
        %v2613 = vunpack.c.l.b16 %v2575
        %v2614 = vunpack.c.l.b16 %v2576
        %v2615 = vunpack.c.l.b16 %v2577
        %v2616 = vpack.c.b16 %v2601, %v2600
        %v2617 = vpack.c.b16 %v2603, %v2602
        %v2618 = vpack.c.b16 %v2605, %v2604
        %v2619 = vpack.c.b16 %v2607, %v2606
        %v2620 = vpack.c.b16 %v2609, %v2608
        %v2621 = vpack.c.b16 %v2611, %v2610
        %v2622 = vpack.c.b16 %v2613, %v2612
        %v2623 = vpack.c.b16 %v2615, %v2614
        %2632 = vmatprep.subr.bf16.mxu0 0
        %2633 = vmatpush1.bf16.msra.mxu0 %v2616
        %2634 = vmatprep.subr.bf16.mxu0 0
        %2635 = vmatpush1.bf16.msra.mxu0 %v2617
        %2636 = vmatprep.subr.bf16.mxu0 0
        %2637 = vmatpush1.bf16.msra.mxu0 %v2618
        %2638 = vmatprep.subr.bf16.mxu0 0
        %2639 = vmatpush1.bf16.msra.mxu0 %v2619
        %2640 = vmatprep.subr.bf16.mxu0 0
        %2641 = vmatpush1.bf16.msra.mxu0 %v2620
        %2642 = vmatprep.subr.bf16.mxu0 0
        %2643 = vmatpush1.bf16.msra.mxu0 %v2621
        %2644 = vmatprep.subr.bf16.mxu0 0
        %2645 = vmatpush1.bf16.msra.mxu0 %v2622
        %2646 = vmatprep.subr.bf16.mxu0 0
        %2647 = vmatpush1.bf16.msra.mxu0 %v2623
        %2648 = vmatprep.subr.bf16.mxu0 0
        %2649 = vmatpush1.bf16.msra.mxu0 0
        %2650 = vmatprep.subr.bf16.mxu0 0
        %2651 = vmatpush1.bf16.msra.mxu0 0
        %2652 = vmatprep.subr.bf16.mxu0 0
        %2653 = vmatpush1.bf16.msra.mxu0 0
        %2654 = vmatprep.subr.bf16.mxu0 0
        %2655 = vmatpush1.bf16.msra.mxu0 0
        %2656 = vmatprep.subr.bf16.mxu0 0
        %2657 = vmatpush1.bf16.msra.mxu0 0
        %2658 = vmatprep.subr.bf16.mxu0 0
        %2659 = vmatpush1.bf16.msra.mxu0 0
        %2660 = vmatprep.subr.bf16.mxu0 0
        %2661 = vmatpush1.bf16.msra.mxu0 0
        %2662 = vmatprep.subr.bf16.mxu0 0
        %2663 = vmatpush1.bf16.msra.mxu0 0
        %2664 = vmatprep.mubr.bf16.mxu0 0
        %2665 = vmatmul.mubr.bf16.gmra.mrb[0].mxu0 %v2561
        %v2666 = vpop.f32.mrb[0].mxu0
        %v2667 = vadd.f32 %v2582, %v2666
        %v2668 = vpop.f32.mrb[0].mxu0
        %v2669 = vpop.f32.mrb[0].mxu0
        %v2670 = vpop.f32.mrb[0].mxu0
        %2671 = vdwg.mxu0
        %v2672 = vadd.f32 %v2462, %v2667
        %2673 = vst.msk [vmem:[%s823] sm:$0xff] %vm908, %v2672
        %v2674 = vld [vmem:[%s902] sm:$0xff]
        %v2675 = vadd.f32 %v2674, %v2447
        %v2676 = vsel %vm908, %v2675, 0.0
        %2677 = vadd.xlane.f32.xlu0 %v2676
        %v2678 = vpop.xlane.xlu0 %2677
        %v2679 = vmul.f32 %v2678, %v915
        %v2680 = vsub.f32 %v2675, %v2679
        %v2681 = vmul.f32 %v2680, %v2680
        %v2682 = vsel %vm908, %v2681, 0.0
        %2683 = vadd.xlane.f32.xlu0 %v2682
        %v2684 = vpop.xlane.xlu0 %2683
        %v2685 = vmul.f32 %v2684, %v915
        %v2686 = vadd.f32 %v2685, 1e-05
        %v2687 = vrsqrt.pop %v2686
        %v2688 = vmul.f32 %v2680, %v2687
        %v2689 = vmul.f32 %v2688, %v2480
        %v2690 = vadd.f32 %v2689, %v2487
        %v2691 = vpack.c.bf16 %v2690, %v2690
        %v2692 = vld [vmem:[%s11] sm:$0xf]
        %v2693 = vld [vmem:[%s11 + $0x4] sm:$0xf]
        %v2694 = vld [vmem:[%s11 + $0x8] sm:$0xf]
        %v2695 = vld [vmem:[%s11 + $0xc] sm:$0xf]
        %v2700 = vunpack.c.l.b16 %v2692
        %v2701 = vunpack.c.l.b16 %v2693
        %v2702 = vunpack.c.l.b16 %v2694
        %v2703 = vunpack.c.l.b16 %v2695
        %v2704 = vpack.c.b16 %v2701, %v2700
        %v2705 = vpack.c.b16 %v2703, %v2702
        %v2709 = vsel %vm908, %v2691, 0
        %2711 = vmatprep.subr.bf16.mxu0 0
        %2712 = vmatpush1.bf16.msra.mxu0 %v2704
        %2713 = vmatprep.subr.bf16.mxu0 0
        %2714 = vmatpush1.bf16.msra.mxu0 %v2705
        %2715 = vmatprep.subr.bf16.mxu0 0
        %2716 = vmatpush1.bf16.msra.mxu0 0
        %2717 = vmatprep.subr.bf16.mxu0 0
        %2718 = vmatpush1.bf16.msra.mxu0 0
        %2719 = vmatprep.subr.bf16.mxu0 0
        %2720 = vmatpush1.bf16.msra.mxu0 0
        %2721 = vmatprep.subr.bf16.mxu0 0
        %2722 = vmatpush1.bf16.msra.mxu0 0
        %2723 = vmatprep.subr.bf16.mxu0 0
        %2724 = vmatpush1.bf16.msra.mxu0 0
        %2725 = vmatprep.subr.bf16.mxu0 0
        %2726 = vmatpush1.bf16.msra.mxu0 0
        %2727 = vmatprep.subr.bf16.mxu0 0
        %2728 = vmatpush1.bf16.msra.mxu0 0
        %2729 = vmatprep.subr.bf16.mxu0 0
        %2730 = vmatpush1.bf16.msra.mxu0 0
        %2731 = vmatprep.subr.bf16.mxu0 0
        %2732 = vmatpush1.bf16.msra.mxu0 0
        %2733 = vmatprep.subr.bf16.mxu0 0
        %2734 = vmatpush1.bf16.msra.mxu0 0
        %2735 = vmatprep.subr.bf16.mxu0 0
        %2736 = vmatpush1.bf16.msra.mxu0 0
        %2737 = vmatprep.subr.bf16.mxu0 0
        %2738 = vmatpush1.bf16.msra.mxu0 0
        %2739 = vmatprep.subr.bf16.mxu0 0
        %2740 = vmatpush1.bf16.msra.mxu0 0
        %2741 = vmatprep.subr.bf16.mxu0 0
        %2742 = vmatpush1.bf16.msra.mxu0 0
        %2743 = vmatprep.mubr.bf16.mxu0 0
        %2744 = vmatmul.mubr.bf16.gmra.mrb[0].mxu0 %v2709
        %v2745 = vpop.f32.mrb[0].mxu0
        %v2746 = vadd.f32 %v2499, %v2745
        %v2747 = vpop.f32.mrb[0].mxu0
        %v2748 = vpop.f32.mrb[0].mxu0
        %v2749 = vpop.f32.mrb[0].mxu0
        %2750 = vdwg.mxu0
        %v2751 = vmul.f32 %v2746, 0.5
        %v2752 = vmul.f32 %v2746, 0.70710677
        %v2753 = verf.f32.pop %v2752
        %v2754 = vadd.f32 %v2753, 1.0
        %v2755 = vmul.f32 %v2751, %v2754
        %v2756 = vpack.c.bf16 %v2755, %v2755
        %v2757 = vld [vmem:[%s13] sm:$0xf]
        %v2758 = vld [vmem:[%s13 + $0x4] sm:$0xf]
        %v2759 = vld [vmem:[%s13 + $0x8] sm:$0xf]
        %v2760 = vld [vmem:[%s13 + $0xc] sm:$0xf]
        %v2761 = vld [vmem:[%s13 + $0x10] sm:$0xf]
        %v2762 = vld [vmem:[%s13 + $0x14] sm:$0xf]
        %v2763 = vld [vmem:[%s13 + $0x18] sm:$0xf]
        %v2764 = vld [vmem:[%s13 + $0x1c] sm:$0xf]
        %v2765 = vld [vmem:[%s13 + $0x20] sm:$0xf]
        %v2766 = vld [vmem:[%s13 + $0x24] sm:$0xf]
        %v2767 = vld [vmem:[%s13 + $0x28] sm:$0xf]
        %v2768 = vld [vmem:[%s13 + $0x2c] sm:$0xf]
        %v2769 = vld [vmem:[%s13 + $0x30] sm:$0xf]
        %v2770 = vld [vmem:[%s13 + $0x34] sm:$0xf]
        %v2771 = vld [vmem:[%s13 + $0x38] sm:$0xf]
        %v2772 = vld [vmem:[%s13 + $0x3c] sm:$0xf]
        %v2789 = vunpack.c.l.b16 %v2757
        %v2790 = vunpack.c.l.b16 %v2758
        %v2791 = vunpack.c.l.b16 %v2759
        %v2792 = vunpack.c.l.b16 %v2760
        %v2793 = vunpack.c.l.b16 %v2761
        %v2794 = vunpack.c.l.b16 %v2762
        %v2795 = vunpack.c.l.b16 %v2763
        %v2796 = vunpack.c.l.b16 %v2764
        %v2797 = vunpack.c.l.b16 %v2765
        %v2798 = vunpack.c.l.b16 %v2766
        %v2799 = vunpack.c.l.b16 %v2767
        %v2800 = vunpack.c.l.b16 %v2768
        %v2801 = vunpack.c.l.b16 %v2769
        %v2802 = vunpack.c.l.b16 %v2770
        %v2803 = vunpack.c.l.b16 %v2771
        %v2804 = vunpack.c.l.b16 %v2772
        %v2805 = vpack.c.b16 %v2790, %v2789
        %v2806 = vpack.c.b16 %v2792, %v2791
        %v2807 = vpack.c.b16 %v2794, %v2793
        %v2808 = vpack.c.b16 %v2796, %v2795
        %v2809 = vpack.c.b16 %v2798, %v2797
        %v2810 = vpack.c.b16 %v2800, %v2799
        %v2811 = vpack.c.b16 %v2802, %v2801
        %v2812 = vpack.c.b16 %v2804, %v2803
        %2821 = vmatprep.subr.bf16.mxu0 0
        %2822 = vmatpush1.bf16.msra.mxu0 %v2805
        %2823 = vmatprep.subr.bf16.mxu0 0
        %2824 = vmatpush1.bf16.msra.mxu0 %v2806
        %2825 = vmatprep.subr.bf16.mxu0 0
        %2826 = vmatpush1.bf16.msra.mxu0 %v2807
        %2827 = vmatprep.subr.bf16.mxu0 0
        %2828 = vmatpush1.bf16.msra.mxu0 %v2808
        %2829 = vmatprep.subr.bf16.mxu0 0
        %2830 = vmatpush1.bf16.msra.mxu0 %v2809
        %2831 = vmatprep.subr.bf16.mxu0 0
        %2832 = vmatpush1.bf16.msra.mxu0 %v2810
        %2833 = vmatprep.subr.bf16.mxu0 0
        %2834 = vmatpush1.bf16.msra.mxu0 %v2811
        %2835 = vmatprep.subr.bf16.mxu0 0
        %2836 = vmatpush1.bf16.msra.mxu0 %v2812
        %2837 = vmatprep.subr.bf16.mxu0 0
        %2838 = vmatpush1.bf16.msra.mxu0 0
        %2839 = vmatprep.subr.bf16.mxu0 0
        %2840 = vmatpush1.bf16.msra.mxu0 0
        %2841 = vmatprep.subr.bf16.mxu0 0
        %2842 = vmatpush1.bf16.msra.mxu0 0
        %2843 = vmatprep.subr.bf16.mxu0 0
        %2844 = vmatpush1.bf16.msra.mxu0 0
        %2845 = vmatprep.subr.bf16.mxu0 0
        %2846 = vmatpush1.bf16.msra.mxu0 0
        %2847 = vmatprep.subr.bf16.mxu0 0
        %2848 = vmatpush1.bf16.msra.mxu0 0
        %2849 = vmatprep.subr.bf16.mxu0 0
        %2850 = vmatpush1.bf16.msra.mxu0 0
        %2851 = vmatprep.subr.bf16.mxu0 0
        %2852 = vmatpush1.bf16.msra.mxu0 0
        %2853 = vmatprep.mubr.bf16.mxu0 0
        %2854 = vmatmul.mubr.bf16.gmra.mrb[0].mxu0 %v2756
        %v2855 = vpop.f32.mrb[0].mxu0
        %v2856 = vadd.f32 %v2582, %v2855
        %v2857 = vpop.f32.mrb[0].mxu0
        %v2858 = vpop.f32.mrb[0].mxu0
        %v2859 = vpop.f32.mrb[0].mxu0
        %2860 = vdwg.mxu0
        %v2861 = vadd.f32 %v2675, %v2856
        %2862 = vst.msk [vmem:[%s844] sm:$0xff] %vm908, %v2861
        %v2863 = vld [vmem:[%s898] sm:$0xff]
        %v2864 = vadd.f32 %v2863, %v2452
        %v2865 = vsel %vm908, %v2864, 0.0
        %2866 = vadd.xlane.f32.xlu0 %v2865
        %v2867 = vpop.xlane.xlu0 %2866
        %v2868 = vmul.f32 %v2867, %v915
        %v2869 = vsub.f32 %v2864, %v2868
        %v2870 = vmul.f32 %v2869, %v2869
        %v2871 = vsel %vm908, %v2870, 0.0
        %2872 = vadd.xlane.f32.xlu0 %v2871
        %v2873 = vpop.xlane.xlu0 %2872
        %v2874 = vmul.f32 %v2873, %v915
        %v2875 = vadd.f32 %v2874, 1e-05
        %v2876 = vrsqrt.pop %v2875
        %v2877 = vmul.f32 %v2869, %v2876
        %v2878 = vmul.f32 %v2877, %v2480
        %v2879 = vadd.f32 %v2878, %v2487
        %v2880 = vpack.c.bf16 %v2879, %v2879
        %v2881 = vld [vmem:[%s11] sm:$0xf]
        %v2882 = vld [vmem:[%s11 + $0x4] sm:$0xf]
        %v2883 = vld [vmem:[%s11 + $0x8] sm:$0xf]
        %v2884 = vld [vmem:[%s11 + $0xc] sm:$0xf]
        %v2889 = vunpack.c.l.b16 %v2881
        %v2890 = vunpack.c.l.b16 %v2882
        %v2891 = vunpack.c.l.b16 %v2883
        %v2892 = vunpack.c.l.b16 %v2884
        %v2893 = vpack.c.b16 %v2890, %v2889
        %v2894 = vpack.c.b16 %v2892, %v2891
        %v2898 = vsel %vm908, %v2880, 0
        %2900 = vmatprep.subr.bf16.mxu0 0
        %2901 = vmatpush1.bf16.msra.mxu0 %v2893
        %2902 = vmatprep.subr.bf16.mxu0 0
        %2903 = vmatpush1.bf16.msra.mxu0 %v2894
        %2904 = vmatprep.subr.bf16.mxu0 0
        %2905 = vmatpush1.bf16.msra.mxu0 0
        %2906 = vmatprep.subr.bf16.mxu0 0
        %2907 = vmatpush1.bf16.msra.mxu0 0
        %2908 = vmatprep.subr.bf16.mxu0 0
        %2909 = vmatpush1.bf16.msra.mxu0 0
        %2910 = vmatprep.subr.bf16.mxu0 0
        %2911 = vmatpush1.bf16.msra.mxu0 0
        %2912 = vmatprep.subr.bf16.mxu0 0
        %2913 = vmatpush1.bf16.msra.mxu0 0
        %2914 = vmatprep.subr.bf16.mxu0 0
        %2915 = vmatpush1.bf16.msra.mxu0 0
        %2916 = vmatprep.subr.bf16.mxu0 0
        %2917 = vmatpush1.bf16.msra.mxu0 0
        %2918 = vmatprep.subr.bf16.mxu0 0
        %2919 = vmatpush1.bf16.msra.mxu0 0
        %2920 = vmatprep.subr.bf16.mxu0 0
        %2921 = vmatpush1.bf16.msra.mxu0 0
        %2922 = vmatprep.subr.bf16.mxu0 0
        %2923 = vmatpush1.bf16.msra.mxu0 0
        %2924 = vmatprep.subr.bf16.mxu0 0
        %2925 = vmatpush1.bf16.msra.mxu0 0
        %2926 = vmatprep.subr.bf16.mxu0 0
        %2927 = vmatpush1.bf16.msra.mxu0 0
        %2928 = vmatprep.subr.bf16.mxu0 0
        %2929 = vmatpush1.bf16.msra.mxu0 0
        %2930 = vmatprep.subr.bf16.mxu0 0
        %2931 = vmatpush1.bf16.msra.mxu0 0
        %2932 = vmatprep.mubr.bf16.mxu0 0
        %2933 = vmatmul.mubr.bf16.gmra.mrb[0].mxu0 %v2898
        %v2934 = vpop.f32.mrb[0].mxu0
        %v2935 = vadd.f32 %v2499, %v2934
        %v2936 = vpop.f32.mrb[0].mxu0
        %v2937 = vpop.f32.mrb[0].mxu0
        %v2938 = vpop.f32.mrb[0].mxu0
        %2939 = vdwg.mxu0
        %v2940 = vmul.f32 %v2935, 0.5
        %v2941 = vmul.f32 %v2935, 0.70710677
        %v2942 = verf.f32.pop %v2941
        %v2943 = vadd.f32 %v2942, 1.0
        %v2944 = vmul.f32 %v2940, %v2943
        %v2945 = vpack.c.bf16 %v2944, %v2944
        %v2946 = vld [vmem:[%s13] sm:$0xf]
        %v2947 = vld [vmem:[%s13 + $0x4] sm:$0xf]
        %v2948 = vld [vmem:[%s13 + $0x8] sm:$0xf]
        %v2949 = vld [vmem:[%s13 + $0xc] sm:$0xf]
        %v2950 = vld [vmem:[%s13 + $0x10] sm:$0xf]
        %v2951 = vld [vmem:[%s13 + $0x14] sm:$0xf]
        %v2952 = vld [vmem:[%s13 + $0x18] sm:$0xf]
        %v2953 = vld [vmem:[%s13 + $0x1c] sm:$0xf]
        %v2954 = vld [vmem:[%s13 + $0x20] sm:$0xf]
        %v2955 = vld [vmem:[%s13 + $0x24] sm:$0xf]
        %v2956 = vld [vmem:[%s13 + $0x28] sm:$0xf]
        %v2957 = vld [vmem:[%s13 + $0x2c] sm:$0xf]
        %v2958 = vld [vmem:[%s13 + $0x30] sm:$0xf]
        %v2959 = vld [vmem:[%s13 + $0x34] sm:$0xf]
        %v2960 = vld [vmem:[%s13 + $0x38] sm:$0xf]
        %v2961 = vld [vmem:[%s13 + $0x3c] sm:$0xf]
        %v2978 = vunpack.c.l.b16 %v2946
        %v2979 = vunpack.c.l.b16 %v2947
        %v2980 = vunpack.c.l.b16 %v2948
        %v2981 = vunpack.c.l.b16 %v2949
        %v2982 = vunpack.c.l.b16 %v2950
        %v2983 = vunpack.c.l.b16 %v2951
        %v2984 = vunpack.c.l.b16 %v2952
        %v2985 = vunpack.c.l.b16 %v2953
        %v2986 = vunpack.c.l.b16 %v2954
        %v2987 = vunpack.c.l.b16 %v2955
        %v2988 = vunpack.c.l.b16 %v2956
        %v2989 = vunpack.c.l.b16 %v2957
        %v2990 = vunpack.c.l.b16 %v2958
        %v2991 = vunpack.c.l.b16 %v2959
        %v2992 = vunpack.c.l.b16 %v2960
        %v2993 = vunpack.c.l.b16 %v2961
        %v2994 = vpack.c.b16 %v2979, %v2978
        %v2995 = vpack.c.b16 %v2981, %v2980
        %v2996 = vpack.c.b16 %v2983, %v2982
        %v2997 = vpack.c.b16 %v2985, %v2984
        %v2998 = vpack.c.b16 %v2987, %v2986
        %v2999 = vpack.c.b16 %v2989, %v2988
        %v3000 = vpack.c.b16 %v2991, %v2990
        %v3001 = vpack.c.b16 %v2993, %v2992
        %3010 = vmatprep.subr.bf16.mxu0 0
        %3011 = vmatpush1.bf16.msra.mxu0 %v2994
        %3012 = vmatprep.subr.bf16.mxu0 0
        %3013 = vmatpush1.bf16.msra.mxu0 %v2995
        %3014 = vmatprep.subr.bf16.mxu0 0
        %3015 = vmatpush1.bf16.msra.mxu0 %v2996
        %3016 = vmatprep.subr.bf16.mxu0 0
        %3017 = vmatpush1.bf16.msra.mxu0 %v2997
        %3018 = vmatprep.subr.bf16.mxu0 0
        %3019 = vmatpush1.bf16.msra.mxu0 %v2998
        %3020 = vmatprep.subr.bf16.mxu0 0
        %3021 = vmatpush1.bf16.msra.mxu0 %v2999
        %3022 = vmatprep.subr.bf16.mxu0 0
        %3023 = vmatpush1.bf16.msra.mxu0 %v3000
        %3024 = vmatprep.subr.bf16.mxu0 0
        %3025 = vmatpush1.bf16.msra.mxu0 %v3001
        %3026 = vmatprep.subr.bf16.mxu0 0
        %3027 = vmatpush1.bf16.msra.mxu0 0
        %3028 = vmatprep.subr.bf16.mxu0 0
        %3029 = vmatpush1.bf16.msra.mxu0 0
        %3030 = vmatprep.subr.bf16.mxu0 0
        %3031 = vmatpush1.bf16.msra.mxu0 0
        %3032 = vmatprep.subr.bf16.mxu0 0
        %3033 = vmatpush1.bf16.msra.mxu0 0
        %3034 = vmatprep.subr.bf16.mxu0 0
        %3035 = vmatpush1.bf16.msra.mxu0 0
        %3036 = vmatprep.subr.bf16.mxu0 0
        %3037 = vmatpush1.bf16.msra.mxu0 0
        %3038 = vmatprep.subr.bf16.mxu0 0
        %3039 = vmatpush1.bf16.msra.mxu0 0
        %3040 = vmatprep.subr.bf16.mxu0 0
        %3041 = vmatpush1.bf16.msra.mxu0 0
        %3042 = vmatprep.mubr.bf16.mxu0 0
        %3043 = vmatmul.mubr.bf16.gmra.mrb[0].mxu0 %v2945
        %v3044 = vpop.f32.mrb[0].mxu0
        %v3045 = vadd.f32 %v2582, %v3044
        %v3046 = vpop.f32.mrb[0].mxu0
        %v3047 = vpop.f32.mrb[0].mxu0
        %v3048 = vpop.f32.mrb[0].mxu0
        %3049 = vdwg.mxu0
        %v3050 = vadd.f32 %v2864, %v3045
        %3051 = vst.msk [vmem:[%s837] sm:$0xff] %vm908, %v3050
        %v3052 = vadd.f32 %v905, %v2455
        %v3053 = vsel %vm908, %v3052, 0.0
        %3054 = vadd.xlane.f32.xlu0 %v3053
        %v3055 = vpop.xlane.xlu0 %3054
        %v3056 = vmul.f32 %v3055, %v915
        %v3057 = vsub.f32 %v3052, %v3056
        %v3058 = vmul.f32 %v3057, %v3057
        %v3059 = vsel %vm908, %v3058, 0.0
        %3060 = vadd.xlane.f32.xlu0 %v3059
        %v3061 = vpop.xlane.xlu0 %3060
        %v3062 = vmul.f32 %v3061, %v915
        %v3063 = vadd.f32 %v3062, 1e-05
        %v3064 = vrsqrt.pop %v3063
        %v3065 = vmul.f32 %v3057, %v3064
        %v3066 = vmul.f32 %v3065, %v2480
        %v3067 = vadd.f32 %v3066, %v2487
        %v3068 = vpack.c.bf16 %v3067, %v3067
        %v3069 = vld [vmem:[%s11] sm:$0xf]
        %v3070 = vld [vmem:[%s11 + $0x4] sm:$0xf]
        %v3071 = vld [vmem:[%s11 + $0x8] sm:$0xf]
        %v3072 = vld [vmem:[%s11 + $0xc] sm:$0xf]
        %v3077 = vunpack.c.l.b16 %v3069
        %v3078 = vunpack.c.l.b16 %v3070
        %v3079 = vunpack.c.l.b16 %v3071
        %v3080 = vunpack.c.l.b16 %v3072
        %v3081 = vpack.c.b16 %v3078, %v3077
        %v3082 = vpack.c.b16 %v3080, %v3079
        %v3086 = vsel %vm908, %v3068, 0
        %3088 = vmatprep.subr.bf16.mxu0 0
        %3089 = vmatpush1.bf16.msra.mxu0 %v3081
        %3090 = vmatprep.subr.bf16.mxu0 0
        %3091 = vmatpush1.bf16.msra.mxu0 %v3082
        %3092 = vmatprep.subr.bf16.mxu0 0
        %3093 = vmatpush1.bf16.msra.mxu0 0
        %3094 = vmatprep.subr.bf16.mxu0 0
        %3095 = vmatpush1.bf16.msra.mxu0 0
        %3096 = vmatprep.subr.bf16.mxu0 0
        %3097 = vmatpush1.bf16.msra.mxu0 0
        %3098 = vmatprep.subr.bf16.mxu0 0
        %3099 = vmatpush1.bf16.msra.mxu0 0
        %3100 = vmatprep.subr.bf16.mxu0 0
        %3101 = vmatpush1.bf16.msra.mxu0 0
        %3102 = vmatprep.subr.bf16.mxu0 0
        %3103 = vmatpush1.bf16.msra.mxu0 0
        %3104 = vmatprep.subr.bf16.mxu0 0
        %3105 = vmatpush1.bf16.msra.mxu0 0
        %3106 = vmatprep.subr.bf16.mxu0 0
        %3107 = vmatpush1.bf16.msra.mxu0 0
        %3108 = vmatprep.subr.bf16.mxu0 0
        %3109 = vmatpush1.bf16.msra.mxu0 0
        %3110 = vmatprep.subr.bf16.mxu0 0
        %3111 = vmatpush1.bf16.msra.mxu0 0
        %3112 = vmatprep.subr.bf16.mxu0 0
        %3113 = vmatpush1.bf16.msra.mxu0 0
        %3114 = vmatprep.subr.bf16.mxu0 0
        %3115 = vmatpush1.bf16.msra.mxu0 0
        %3116 = vmatprep.subr.bf16.mxu0 0
        %3117 = vmatpush1.bf16.msra.mxu0 0
        %3118 = vmatprep.subr.bf16.mxu0 0
        %3119 = vmatpush1.bf16.msra.mxu0 0
        %3120 = vmatprep.mubr.bf16.mxu0 0
        %3121 = vmatmul.mubr.bf16.gmra.mrb[0].mxu0 %v3086
        %v3122 = vpop.f32.mrb[0].mxu0
        %v3123 = vadd.f32 %v2499, %v3122
        %v3124 = vpop.f32.mrb[0].mxu0
        %v3125 = vpop.f32.mrb[0].mxu0
        %v3126 = vpop.f32.mrb[0].mxu0
        %3127 = vdwg.mxu0
        %v3128 = vmul.f32 %v3123, 0.5
        %v3129 = vmul.f32 %v3123, 0.70710677
        %v3130 = verf.f32.pop %v3129
        %v3131 = vadd.f32 %v3130, 1.0
        %v3132 = vmul.f32 %v3128, %v3131
        %v3133 = vpack.c.bf16 %v3132, %v3132
        %v3134 = vld [vmem:[%s13] sm:$0xf]
        %v3135 = vld [vmem:[%s13 + $0x4] sm:$0xf]
        %v3136 = vld [vmem:[%s13 + $0x8] sm:$0xf]
        %v3137 = vld [vmem:[%s13 + $0xc] sm:$0xf]
        %v3138 = vld [vmem:[%s13 + $0x10] sm:$0xf]
        %v3139 = vld [vmem:[%s13 + $0x14] sm:$0xf]
        %v3140 = vld [vmem:[%s13 + $0x18] sm:$0xf]
        %v3141 = vld [vmem:[%s13 + $0x1c] sm:$0xf]
        %v3142 = vld [vmem:[%s13 + $0x20] sm:$0xf]
        %v3143 = vld [vmem:[%s13 + $0x24] sm:$0xf]
        %v3144 = vld [vmem:[%s13 + $0x28] sm:$0xf]
        %v3145 = vld [vmem:[%s13 + $0x2c] sm:$0xf]
        %v3146 = vld [vmem:[%s13 + $0x30] sm:$0xf]
        %v3147 = vld [vmem:[%s13 + $0x34] sm:$0xf]
        %v3148 = vld [vmem:[%s13 + $0x38] sm:$0xf]
        %v3149 = vld [vmem:[%s13 + $0x3c] sm:$0xf]
        %v3166 = vunpack.c.l.b16 %v3134
        %v3167 = vunpack.c.l.b16 %v3135
        %v3168 = vunpack.c.l.b16 %v3136
        %v3169 = vunpack.c.l.b16 %v3137
        %v3170 = vunpack.c.l.b16 %v3138
        %v3171 = vunpack.c.l.b16 %v3139
        %v3172 = vunpack.c.l.b16 %v3140
        %v3173 = vunpack.c.l.b16 %v3141
        %v3174 = vunpack.c.l.b16 %v3142
        %v3175 = vunpack.c.l.b16 %v3143
        %v3176 = vunpack.c.l.b16 %v3144
        %v3177 = vunpack.c.l.b16 %v3145
        %v3178 = vunpack.c.l.b16 %v3146
        %v3179 = vunpack.c.l.b16 %v3147
        %v3180 = vunpack.c.l.b16 %v3148
        %v3181 = vunpack.c.l.b16 %v3149
        %v3182 = vpack.c.b16 %v3167, %v3166
        %v3183 = vpack.c.b16 %v3169, %v3168
        %v3184 = vpack.c.b16 %v3171, %v3170
        %v3185 = vpack.c.b16 %v3173, %v3172
        %v3186 = vpack.c.b16 %v3175, %v3174
        %v3187 = vpack.c.b16 %v3177, %v3176
        %v3188 = vpack.c.b16 %v3179, %v3178
        %v3189 = vpack.c.b16 %v3181, %v3180
        %3198 = vmatprep.subr.bf16.mxu0 0
        %3199 = vmatpush1.bf16.msra.mxu0 %v3182
        %3200 = vmatprep.subr.bf16.mxu0 0
        %3201 = vmatpush1.bf16.msra.mxu0 %v3183
        %3202 = vmatprep.subr.bf16.mxu0 0
        %3203 = vmatpush1.bf16.msra.mxu0 %v3184
        %3204 = vmatprep.subr.bf16.mxu0 0
        %3205 = vmatpush1.bf16.msra.mxu0 %v3185
        %3206 = vmatprep.subr.bf16.mxu0 0
        %3207 = vmatpush1.bf16.msra.mxu0 %v3186
        %3208 = vmatprep.subr.bf16.mxu0 0
        %3209 = vmatpush1.bf16.msra.mxu0 %v3187
        %3210 = vmatprep.subr.bf16.mxu0 0
        %3211 = vmatpush1.bf16.msra.mxu0 %v3188
        %3212 = vmatprep.subr.bf16.mxu0 0
        %3213 = vmatpush1.bf16.msra.mxu0 %v3189
        %3214 = vmatprep.subr.bf16.mxu0 0
        %3215 = vmatpush1.bf16.msra.mxu0 0
        %3216 = vmatprep.subr.bf16.mxu0 0
        %3217 = vmatpush1.bf16.msra.mxu0 0
        %3218 = vmatprep.subr.bf16.mxu0 0
        %3219 = vmatpush1.bf16.msra.mxu0 0
        %3220 = vmatprep.subr.bf16.mxu0 0
        %3221 = vmatpush1.bf16.msra.mxu0 0
        %3222 = vmatprep.subr.bf16.mxu0 0
        %3223 = vmatpush1.bf16.msra.mxu0 0
        %3224 = vmatprep.subr.bf16.mxu0 0
        %3225 = vmatpush1.bf16.msra.mxu0 0
        %3226 = vmatprep.subr.bf16.mxu0 0
        %3227 = vmatpush1.bf16.msra.mxu0 0
        %3228 = vmatprep.subr.bf16.mxu0 0
        %3229 = vmatpush1.bf16.msra.mxu0 0
        %3230 = vmatprep.mubr.bf16.mxu0 0
        %3231 = vmatmul.mubr.bf16.gmra.mrb[0].mxu0 %v3133
        %v3232 = vpop.f32.mrb[0].mxu0
        %v3233 = vadd.f32 %v2582, %v3232
        %v3234 = vpop.f32.mrb[0].mxu0
        %v3235 = vpop.f32.mrb[0].mxu0
        %v3236 = vpop.f32.mrb[0].mxu0
        %3237 = vdwg.mxu0
        %v3238 = vadd.f32 %v3052, %v3233
        %3239 = vst.msk [vmem:[%s830] sm:$0xff] %vm908, %v3238
        %s3240 = sand.u32 %s399, 1
        %s3241 = scalar_lea.sflag [#allocation5], %s3240
        %s3242 = sand.u32 %s399, 1
        %s3243 = smul.addr %s3242, 8
        %s3244 = scalar_lea.vmem [#allocation9], %s3243
        %s3245 = sand.u32 %s56, 1
        %s3246 = scalar_lea.sflag [#allocation11], %s3245
        %s3247 = sand.u32 %s425, 1
        %s3248 = smul.addr %s3247, 8
        %s3249 = scalar_lea.vmem [#allocation10], %s3248
        %s3250 = sand.u32 %s56, 1
        %s3251 = scalar_lea.sflag [#allocation11], %s3250
        %s3252 = sand.u32 %s451, 1
        %s3253 = smul.addr %s3252, 8
        %s3254 = scalar_lea.vmem [#allocation12], %s3253
        %s3255 = sand.u32 %s56, 1
        %s3256 = scalar_lea.sflag [#allocation14], %s3255
        %s3257 = sand.u32 %s477, 1
        %s3258 = smul.addr %s3257, 8
        %s3259 = scalar_lea.vmem [#allocation13], %s3258
        %s3260 = sand.u32 %s56, 1
        %s3261 = scalar_lea.sflag [#allocation14], %s3260
        %s3262 = sand.u32 %s503, 1
        %s3263 = smul.addr %s3262, 32
        %s3264 = scalar_lea.vmem [#allocation15], %s3263
        %s3265 = sand.u32 %s56, 1
        %s3266 = scalar_lea.sflag [#allocation17], %s3265
        %s3267 = sand.u32 %s529, 1
        %s3268 = smul.addr %s3267, 32
        %s3269 = scalar_lea.vmem [#allocation16], %s3268
        %s3270 = sand.u32 %s56, 1
        %s3271 = scalar_lea.sflag [#allocation17], %s3270
        %s3272 = sand.u32 %s555, 1
        %s3273 = smul.addr %s3272, 32
        %s3274 = scalar_lea.vmem [#allocation18], %s3273
        %s3275 = sand.u32 %s56, 1
        %s3276 = scalar_lea.sflag [#allocation20], %s3275
        %s3277 = sand.u32 %s581, 1
        %s3278 = smul.addr %s3277, 32
        %s3279 = scalar_lea.vmem [#allocation19], %s3278
        %s3280 = sand.u32 %s56, 1
        %s3281 = scalar_lea.sflag [#allocation20], %s3280
        %s3282 = sand.u32 %s607, 1
        %s3283 = smul.addr %s3282, 8
        %s3284 = scalar_lea.vmem [#allocation21], %s3283
        %s3285 = sand.u32 %s633, 1
        %s3286 = scalar_lea.sflag [#allocation23], %s3285
        %s3287 = sand.u32 %s633, 1
        %s3288 = smul.addr %s3287, 8
        %s3289 = scalar_lea.vmem [#allocation22], %s3288
        // Predicated region
        $region93: #{tpu_custom_call.1} parent=79 // pred_check
          %p3290 = pneg %p409
        $region94: #{tpu_custom_call.1} parent=79 // pred_check_branch
          %3292 = sbr.rel (%p3290) target = $region96
        $region95: #{tpu_custom_call.1} parent=79 // pred_region
          %s3294 = ssub.s32 128, 128
          %3295 = vsyncadd %s3241, %s3294
          %s3296 = smul.addr %s56, 128
          %s3297 = scalar_lea.hbm %s15, %s3296
          %s3299 = sshll.u32 %s3244, 4
          %s3300 = int_to_ptr.vmem [resolvable:$true] %s3299
          %3302 = dma.vmem_to_hbm [thread:$0]  %s3300, 128, %s3297, %s3241
        $region96: #{tpu_custom_call.1} parent=79 // pred_fallthru
          _
        // Predicated region
        $region97: #{tpu_custom_call.1} parent=79 // pred_check
          %p3303 = pneg %p435
        $region98: #{tpu_custom_call.1} parent=79 // pred_check_branch
          %3305 = sbr.rel (%p3303) target = $region100
        $region99: #{tpu_custom_call.1} parent=79 // pred_region
          %s3307 = ssub.s32 128, 128
          %3308 = vsyncadd %s3246, %s3307
          %s3309 = smul.addr %s56, 128
          %s3310 = scalar_lea.hbm %s16, %s3309
          %s3312 = sshll.u32 %s3249, 4
          %s3313 = int_to_ptr.vmem [resolvable:$true] %s3312
          %3315 = dma.vmem_to_hbm [thread:$0]  %s3313, 128, %s3310, %s3246
        $region100: #{tpu_custom_call.1} parent=79 // pred_fallthru
          _
        // Predicated region
        $region101: #{tpu_custom_call.1} parent=79 // pred_check
          %p3316 = pneg %p461
        $region102: #{tpu_custom_call.1} parent=79 // pred_check_branch
          %3318 = sbr.rel (%p3316) target = $region104
        $region103: #{tpu_custom_call.1} parent=79 // pred_region
          %s3320 = ssub.s32 128, 128
          %3321 = vsyncadd %s3251, %s3320
          %s3322 = smul.addr %s56, 128
          %s3323 = scalar_lea.hbm %s17, %s3322
          %s3325 = sshll.u32 %s3254, 4
          %s3326 = int_to_ptr.vmem [resolvable:$true] %s3325
          %3328 = dma.vmem_to_hbm [thread:$0]  %s3326, 128, %s3323, %s3251
        $region104: #{tpu_custom_call.1} parent=79 // pred_fallthru
          _
        // Predicated region
        $region105: #{tpu_custom_call.1} parent=79 // pred_check
          %p3329 = pneg %p487
        $region106: #{tpu_custom_call.1} parent=79 // pred_check_branch
          %3331 = sbr.rel (%p3329) target = $region108
        $region107: #{tpu_custom_call.1} parent=79 // pred_region
          %s3333 = ssub.s32 128, 128
          %3334 = vsyncadd %s3256, %s3333
          %s3335 = smul.addr %s56, 128
          %s3336 = scalar_lea.hbm %s18, %s3335
          %s3338 = sshll.u32 %s3259, 4
          %s3339 = int_to_ptr.vmem [resolvable:$true] %s3338
          %3341 = dma.vmem_to_hbm [thread:$0]  %s3339, 128, %s3336, %s3256
        $region108: #{tpu_custom_call.1} parent=79 // pred_fallthru
          _
        // Predicated region
        $region109: #{tpu_custom_call.1} parent=79 // pred_check
          %p3342 = pneg %p513
        $region110: #{tpu_custom_call.1} parent=79 // pred_check_branch
          %3344 = sbr.rel (%p3342) target = $region112
        $region111: #{tpu_custom_call.1} parent=79 // pred_region
          %s3346 = ssub.s32 512, 512
          %3347 = vsyncadd %s3261, %s3346
          %s3348 = smul.addr %s56, 4
          %s3349 = smul.addr %s3348, 128
          %s3350 = scalar_lea.hbm %s19, %s3349
          %s3351 = sshll.u32 %s3264, 4
          %s3352 = int_to_ptr.vmem [resolvable:$true] %s3351
          %3357 = dma.vmem_to_hbm [thread:$0]  %s3352, 512, %s3350, %s3261, 128, 128, 8
        $region112: #{tpu_custom_call.1} parent=79 // pred_fallthru
          _
        // Predicated region
        $region113: #{tpu_custom_call.1} parent=79 // pred_check
          %p3358 = pneg %p539
        $region114: #{tpu_custom_call.1} parent=79 // pred_check_branch
          %3360 = sbr.rel (%p3358) target = $region116
        $region115: #{tpu_custom_call.1} parent=79 // pred_region
          %s3362 = ssub.s32 512, 512
          %3363 = vsyncadd %s3266, %s3362
          %s3364 = smul.addr %s56, 4
          %s3365 = smul.addr %s3364, 128
          %s3366 = scalar_lea.hbm %s20, %s3365
          %s3367 = sshll.u32 %s3269, 4
          %s3368 = int_to_ptr.vmem [resolvable:$true] %s3367
          %3373 = dma.vmem_to_hbm [thread:$0]  %s3368, 512, %s3366, %s3266, 128, 128, 8
        $region116: #{tpu_custom_call.1} parent=79 // pred_fallthru
          _
        // Predicated region
        $region117: #{tpu_custom_call.1} parent=79 // pred_check
          %p3374 = pneg %p565
        $region118: #{tpu_custom_call.1} parent=79 // pred_check_branch
          %3376 = sbr.rel (%p3374) target = $region120
        $region119: #{tpu_custom_call.1} parent=79 // pred_region
          %s3378 = ssub.s32 512, 512
          %3379 = vsyncadd %s3271, %s3378
          %s3380 = smul.addr %s56, 4
          %s3381 = smul.addr %s3380, 128
          %s3382 = scalar_lea.hbm %s21, %s3381
          %s3383 = sshll.u32 %s3274, 4
          %s3384 = int_to_ptr.vmem [resolvable:$true] %s3383
          %3389 = dma.vmem_to_hbm [thread:$0]  %s3384, 512, %s3382, %s3271, 128, 128, 8
        $region120: #{tpu_custom_call.1} parent=79 // pred_fallthru
          _
        // Predicated region
        $region121: #{tpu_custom_call.1} parent=79 // pred_check
          %p3390 = pneg %p591
        $region122: #{tpu_custom_call.1} parent=79 // pred_check_branch
          %3392 = sbr.rel (%p3390) target = $region124
        $region123: #{tpu_custom_call.1} parent=79 // pred_region
          %s3394 = ssub.s32 512, 512
          %3395 = vsyncadd %s3276, %s3394
          %s3396 = smul.addr %s56, 4
          %s3397 = smul.addr %s3396, 128
          %s3398 = scalar_lea.hbm %s22, %s3397
          %s3399 = sshll.u32 %s3279, 4
          %s3400 = int_to_ptr.vmem [resolvable:$true] %s3399
          %3405 = dma.vmem_to_hbm [thread:$0]  %s3400, 512, %s3398, %s3276, 128, 128, 8
        $region124: #{tpu_custom_call.1} parent=79 // pred_fallthru
          _
        // Predicated region
        $region125: #{tpu_custom_call.1} parent=79 // pred_check
          %p3406 = pneg %p617
        $region126: #{tpu_custom_call.1} parent=79 // pred_check_branch
          %3408 = sbr.rel (%p3406) target = $region128
        $region127: #{tpu_custom_call.1} parent=79 // pred_region
          %s3410 = ssub.s32 128, 128
          %3411 = vsyncadd %s3281, %s3410
          %s3412 = smul.addr %s56, 128
          %s3413 = scalar_lea.hbm %s23, %s3412
          %s3415 = sshll.u32 %s3284, 4
          %s3416 = int_to_ptr.vmem [resolvable:$true] %s3415
          %3418 = dma.vmem_to_hbm [thread:$0]  %s3416, 128, %s3413, %s3281
        $region128: #{tpu_custom_call.1} parent=79 // pred_fallthru
          _
        // Predicated region
        $region129: #{tpu_custom_call.1} parent=79 // pred_check
          %p3419 = pneg %p643
        $region130: #{tpu_custom_call.1} parent=79 // pred_check_branch
          %3421 = sbr.rel (%p3419) target = $region132
        $region131: #{tpu_custom_call.1} parent=79 // pred_region
          %s3423 = ssub.s32 128, 128
          %3424 = vsyncadd %s3286, %s3423
          %s3425 = smul.addr %s56, 128
          %s3426 = scalar_lea.hbm %s24, %s3425
          %s3428 = sshll.u32 %s3289, 4
          %s3429 = int_to_ptr.vmem [resolvable:$true] %s3428
          %3431 = dma.vmem_to_hbm [thread:$0]  %s3429, 128, %s3426, %s3286
        $region132: #{tpu_custom_call.1} parent=79 // pred_fallthru
          _
      $region80: #{tpu_custom_call.1} parent=5 // pred_fallthru
        _
      %p3432 = scmp.le.s32.totalorder 2, %s51
      // Predicated region
      $region133: #{tpu_custom_call.1} parent=5 // pred_check
        %p3433 = pneg %p3432
      $region134: #{tpu_custom_call.1} parent=5 // pred_check_branch
        %3435 = sbr.rel (%p3433) target = $region136
      $region135: #{tpu_custom_call.1} parent=5 // pred_region
        %s3436 = ssub.s32 %s51, 2
        // Predicated region
        $region137: #{tpu_custom_call.1} parent=135 // pred_check
          %p3437 = pneg %p415
        $region138: #{tpu_custom_call.1} parent=135 // pred_check_branch
          %3439 = sbr.rel (%p3437) target = $region140
        $region139: #{tpu_custom_call.1} parent=135 // pred_region
          %s3440 = sand.u32 %s400, 1
          %s3441 = scalar_lea.sflag [#allocation5], %s3440
          %s3442 = sand.u32 %s400, 1
          %s3443 = smul.addr %s3442, 8
          %s3444 = scalar_lea.vmem [#allocation9], %s3443
          %3445 = dma.done %s3441, 128
        $region140: #{tpu_custom_call.1} parent=135 // pred_fallthru
          _
        // Predicated region
        $region141: #{tpu_custom_call.1} parent=135 // pred_check
          %p3446 = pneg %p441
        $region142: #{tpu_custom_call.1} parent=135 // pred_check_branch
          %3448 = sbr.rel (%p3446) target = $region144
        $region143: #{tpu_custom_call.1} parent=135 // pred_region
          %s3449 = sand.u32 %s57, 1
          %s3450 = scalar_lea.sflag [#allocation11], %s3449
          %s3451 = sand.u32 %s426, 1
          %s3452 = smul.addr %s3451, 8
          %s3453 = scalar_lea.vmem [#allocation10], %s3452
          %3454 = dma.done %s3450, 128
        $region144: #{tpu_custom_call.1} parent=135 // pred_fallthru
          _
        // Predicated region
        $region145: #{tpu_custom_call.1} parent=135 // pred_check
          %p3455 = pneg %p467
        $region146: #{tpu_custom_call.1} parent=135 // pred_check_branch
          %3457 = sbr.rel (%p3455) target = $region148
        $region147: #{tpu_custom_call.1} parent=135 // pred_region
          %s3458 = sand.u32 %s57, 1
          %s3459 = scalar_lea.sflag [#allocation11], %s3458
          %s3460 = sand.u32 %s452, 1
          %s3461 = smul.addr %s3460, 8
          %s3462 = scalar_lea.vmem [#allocation12], %s3461
          %3463 = dma.done %s3459, 128
        $region148: #{tpu_custom_call.1} parent=135 // pred_fallthru
          _
        // Predicated region
        $region149: #{tpu_custom_call.1} parent=135 // pred_check
          %p3464 = pneg %p493
        $region150: #{tpu_custom_call.1} parent=135 // pred_check_branch
          %3466 = sbr.rel (%p3464) target = $region152
        $region151: #{tpu_custom_call.1} parent=135 // pred_region
          %s3467 = sand.u32 %s57, 1
          %s3468 = scalar_lea.sflag [#allocation14], %s3467
          %s3469 = sand.u32 %s478, 1
          %s3470 = smul.addr %s3469, 8
          %s3471 = scalar_lea.vmem [#allocation13], %s3470
          %3472 = dma.done %s3468, 128
        $region152: #{tpu_custom_call.1} parent=135 // pred_fallthru
          _
        // Predicated region
        $region153: #{tpu_custom_call.1} parent=135 // pred_check
          %p3473 = pneg %p519
        $region154: #{tpu_custom_call.1} parent=135 // pred_check_branch
          %3475 = sbr.rel (%p3473) target = $region156
        $region155: #{tpu_custom_call.1} parent=135 // pred_region
          %s3476 = sand.u32 %s57, 1
          %s3477 = scalar_lea.sflag [#allocation14], %s3476
          %s3478 = sand.u32 %s504, 1
          %s3479 = smul.addr %s3478, 32
          %s3480 = scalar_lea.vmem [#allocation15], %s3479
          %3481 = dma.done %s3477, 512
        $region156: #{tpu_custom_call.1} parent=135 // pred_fallthru
          _
        // Predicated region
        $region157: #{tpu_custom_call.1} parent=135 // pred_check
          %p3482 = pneg %p545
        $region158: #{tpu_custom_call.1} parent=135 // pred_check_branch
          %3484 = sbr.rel (%p3482) target = $region160
        $region159: #{tpu_custom_call.1} parent=135 // pred_region
          %s3485 = sand.u32 %s57, 1
          %s3486 = scalar_lea.sflag [#allocation17], %s3485
          %s3487 = sand.u32 %s530, 1
          %s3488 = smul.addr %s3487, 32
          %s3489 = scalar_lea.vmem [#allocation16], %s3488
          %3490 = dma.done %s3486, 512
        $region160: #{tpu_custom_call.1} parent=135 // pred_fallthru
          _
        // Predicated region
        $region161: #{tpu_custom_call.1} parent=135 // pred_check
          %p3491 = pneg %p571
        $region162: #{tpu_custom_call.1} parent=135 // pred_check_branch
          %3493 = sbr.rel (%p3491) target = $region164
        $region163: #{tpu_custom_call.1} parent=135 // pred_region
          %s3494 = sand.u32 %s57, 1
          %s3495 = scalar_lea.sflag [#allocation17], %s3494
          %s3496 = sand.u32 %s556, 1
          %s3497 = smul.addr %s3496, 32
          %s3498 = scalar_lea.vmem [#allocation18], %s3497
          %3499 = dma.done %s3495, 512
        $region164: #{tpu_custom_call.1} parent=135 // pred_fallthru
          _
        // Predicated region
        $region165: #{tpu_custom_call.1} parent=135 // pred_check
          %p3500 = pneg %p597
        $region166: #{tpu_custom_call.1} parent=135 // pred_check_branch
          %3502 = sbr.rel (%p3500) target = $region168
        $region167: #{tpu_custom_call.1} parent=135 // pred_region
          %s3503 = sand.u32 %s57, 1
          %s3504 = scalar_lea.sflag [#allocation20], %s3503
          %s3505 = sand.u32 %s582, 1
          %s3506 = smul.addr %s3505, 32
          %s3507 = scalar_lea.vmem [#allocation19], %s3506
          %3508 = dma.done %s3504, 512
        $region168: #{tpu_custom_call.1} parent=135 // pred_fallthru
          _
        // Predicated region
        $region169: #{tpu_custom_call.1} parent=135 // pred_check
          %p3509 = pneg %p623
        $region170: #{tpu_custom_call.1} parent=135 // pred_check_branch
          %3511 = sbr.rel (%p3509) target = $region172
        $region171: #{tpu_custom_call.1} parent=135 // pred_region
          %s3512 = sand.u32 %s57, 1
          %s3513 = scalar_lea.sflag [#allocation20], %s3512
          %s3514 = sand.u32 %s608, 1
          %s3515 = smul.addr %s3514, 8
          %s3516 = scalar_lea.vmem [#allocation21], %s3515
          %3517 = dma.done %s3513, 128
        $region172: #{tpu_custom_call.1} parent=135 // pred_fallthru
          _
        // Predicated region
        $region173: #{tpu_custom_call.1} parent=135 // pred_check
          %p3518 = pneg %p649
        $region174: #{tpu_custom_call.1} parent=135 // pred_check_branch
          %3520 = sbr.rel (%p3518) target = $region176
        $region175: #{tpu_custom_call.1} parent=135 // pred_region
          %s3521 = sand.u32 %s634, 1
          %s3522 = scalar_lea.sflag [#allocation23], %s3521
          %s3523 = sand.u32 %s634, 1
          %s3524 = smul.addr %s3523, 8
          %s3525 = scalar_lea.vmem [#allocation22], %s3524
          %3526 = dma.done %s3522, 128
        $region176: #{tpu_custom_call.1} parent=135 // pred_fallthru
          _
      $region136: #{tpu_custom_call.1} parent=5 // pred_fallthru
        _
    $region6: #{tpu_custom_call.1} parent=1 // loop_footer
      %s55 = sadd.s32 1, %s51
    $region7: #{tpu_custom_call.1} parent=1 // loop_footer_branch
      %50 = sbr.rel target = $region3
    $region8: #{tpu_custom_call.1} parent=1 // loop_exit
      _
    %3527 = vsyncpa [#allocation4], 1
    %s3528 = scalar_lea.sflag [#allocation4], 1
    %3529 = vsyncpa %s3528, 1
    %3530 = vsyncpa [#allocation7], 1
    %3531 = vsyncpa [#allocation5], 1
    %s3532 = scalar_lea.sflag [#allocation5], 1
    %3533 = vsyncpa %s3532, 1
    %3534 = vsyncpa [#allocation11], 1
    %s3535 = scalar_lea.sflag [#allocation11], 1
    %3536 = vsyncpa %s3535, 1
    %3537 = vsyncpa [#allocation14], 1
    %s3538 = scalar_lea.sflag [#allocation14], 1
    %3539 = vsyncpa %s3538, 1
    %3540 = vsyncpa [#allocation17], 1
    %s3541 = scalar_lea.sflag [#allocation17], 1
    %3542 = vsyncpa %s3541, 1
    %3543 = vsyncpa [#allocation20], 1
    %s3544 = scalar_lea.sflag [#allocation20], 1
    %3545 = vsyncpa %s3544, 1
    %3546 = vsyncpa [#allocation23], 1
    %s3547 = scalar_lea.sflag [#allocation23], 1
    %3548 = vsyncpa %s3547, 1

</llo_original>
